<compile_context>
chip_gen: v6e
topology: v6e:2x2x1
jax: 0.10.0
libtpu: 0.0.40
codegen_flags: <defaults>
</compile_context>

<pallas_src>
import jax
import jax.numpy as jnp
from jax.experimental import pallas as pl
from jax.experimental.pallas import tpu as pltpu

INPUT_SIZE = 28
SEQ_LEN = 28
HIDDEN = 64
NUM_CLASSES = 10

H_PAD = 128   # hidden padded to one full lane register per gate
C_PAD = 128   # classifier output padded for a lane-dense store

# PyTorch gate order is i|f|g|o; we pack as i|f|o|g so sigmoid gates are
# contiguous in lanes (one sigmoid over 3*H_PAD, one tanh over H_PAD).
GATE_PERM = (0, 1, 3, 2)


def lstm_kernel(x_ref, w_ih_ref, w_hh_ref, b_ref, w_fc_ref, b_fc_ref,
                o_ref, pre_ref):
    # x_ref:    (T*Bt, I)          time-major, batch-tile flattened
    # w_ih_ref: (I, 4*H_PAD)       gate order i|f|o|g, each gate padded 64->128
    # w_hh_ref: (H_PAD, 4*H_PAD)
    # b_ref:    (1, 4*H_PAD)       b_ih + b_hh pre-summed in the wrapper
    # w_fc_ref: (H_PAD, C_PAD)
    # b_fc_ref: (1, C_PAD)
    # o_ref:    (Bt, C_PAD)
    # pre_ref:  VMEM scratch (T*Bt, 4*H_PAD)
    bt = o_ref.shape[0]
    hp = w_hh_ref.shape[0]

    # Input projection hoisted out of the recurrence: one well-shaped MXU call
    # plus a single bias broadcast, entirely off the 28-step serial chain.
    pre_ref[...] = (
        jnp.dot(x_ref[...], w_ih_ref[...], preferred_element_type=jnp.float32)
        + b_ref[...])

    # h and c stay vreg-resident ((Bt, 128) f32 each); padded hidden lanes stay
    # exactly zero (zero-padded weights/biases keep them at 0 every step).
    h = jnp.zeros((bt, hp), jnp.float32)
    c = jnp.zeros((bt, hp), jnp.float32)

    # Fully unrolled static recurrence (static, sublane-aligned slices of the
    # scratch; only the small recurrent matmul + gate math per step).
    for t in range(SEQ_LEN):
        pre_t = pre_ref[t * bt:(t + 1) * bt, :]          # static slice view
        gates = pre_t + jnp.dot(h, w_hh_ref[...],
                                preferred_element_type=jnp.float32)
        sig = jax.nn.sigmoid(gates[:, :3 * hp])          # i | f | o in one call
        i_g = sig[:, 0 * hp:1 * hp]
        f_g = sig[:, 1 * hp:2 * hp]
        o_g = sig[:, 2 * hp:3 * hp]
        g_g = jnp.tanh(gates[:, 3 * hp:4 * hp])
        c = f_g * c + i_g * g_g
        h = o_g * jnp.tanh(c)

    # Final affine layer on the last hidden state, lane-dense (padded) store.
    o_ref[...] = (jnp.dot(h, w_fc_ref[...], preferred_element_type=jnp.float32)
                  + b_fc_ref[...])


def _round_up(n, m):
    return ((n + m - 1) // m) * m


def _pack_gate_weight(w, hp):
    # w: (4*H, in_dim) PyTorch gate-stacked weight -> (in_dim, 4*hp):
    # transposed to (in, out), gate-permuted to i|f|o|g, zero-padded H -> hp.
    four_h, in_dim = w.shape
    h = four_h // 4
    wg = w.reshape(4, h, in_dim)[jnp.array(GATE_PERM)]   # (4, H, in) permuted
    wg = jnp.transpose(wg, (2, 0, 1))                    # (in, 4, H)
    wg = jnp.pad(wg, ((0, 0), (0, 0), (0, hp - h)))      # (in, 4, hp)
    return wg.reshape(in_dim, 4 * hp)


def _pack_gate_bias(b, hp):
    h = b.shape[0] // 4
    bg = b.reshape(4, h)[jnp.array(GATE_PERM)]           # permuted to i|f|o|g
    bg = jnp.pad(bg, ((0, 0), (0, hp - h)))
    return bg.reshape(1, 4 * hp)


def init_params(key):
    # Matches PyTorch defaults: LSTM params ~ U(-1/sqrt(H), 1/sqrt(H)),
    # Linear params ~ U(-1/sqrt(fan_in), 1/sqrt(fan_in)). Deterministic.
    k = jax.random.split(key, 6)
    bd = 1.0 / jnp.sqrt(HIDDEN)
    w_ih = jax.random.uniform(k[0], (4 * HIDDEN, INPUT_SIZE), jnp.float32, -bd, bd)
    w_hh = jax.random.uniform(k[1], (4 * HIDDEN, HIDDEN), jnp.float32, -bd, bd)
    b_ih = jax.random.uniform(k[2], (4 * HIDDEN,), jnp.float32, -bd, bd)
    b_hh = jax.random.uniform(k[3], (4 * HIDDEN,), jnp.float32, -bd, bd)
    w_fc = jax.random.uniform(k[4], (NUM_CLASSES, HIDDEN), jnp.float32, -bd, bd)
    b_fc = jax.random.uniform(k[5], (NUM_CLASSES,), jnp.float32, -bd, bd)
    return dict(w_ih=w_ih, w_hh=w_hh, b_ih=b_ih, b_hh=b_hh, w_fc=w_fc, b_fc=b_fc)


def lstm_forward(x, params):
    # Mirrors: x.reshape(-1, 28, 28); LSTM with (h0, c0) = 0; take last step;
    # Linear(64 -> 10).
    x = x.reshape(-1, SEQ_LEN, INPUT_SIZE).astype(jnp.float32)
    batch = x.shape[0]

    # Batch tiling: pad batch to a multiple of 8 (sublane) and grid over batch
    # tiles ("parallel" -> megacore sharding; double-buffers the x DMA).
    b_tile = min(128, _round_up(batch, 8))
    b_pad = _round_up(batch, b_tile)
    nbt = b_pad // b_tile

    x = jnp.pad(x, ((0, b_pad - batch), (0, 0), (0, 0)))
    x_tiles = x.reshape(nbt, b_tile, SEQ_LEN, INPUT_SIZE)
    x_tiles = jnp.transpose(x_tiles, (0, 2, 1, 3)).reshape(
        nbt, SEQ_LEN * b_tile, INPUT_SIZE)               # (nbt, T*Bt, I)

    w_ih = _pack_gate_weight(params["w_ih"], H_PAD)                # (I, 4*Hp)
    w_hh = _pack_gate_weight(params["w_hh"], H_PAD)                # (H, 4*Hp)
    w_hh = jnp.pad(w_hh, ((0, H_PAD - HIDDEN), (0, 0)))            # (Hp, 4*Hp)
    b = _pack_gate_bias(params["b_ih"] + params["b_hh"], H_PAD)    # (1, 4*Hp)
    w_fc = jnp.pad(params["w_fc"].T,
                   ((0, H_PAD - HIDDEN), (0, C_PAD - NUM_CLASSES)))  # (Hp, Cp)
    b_fc = jnp.pad(params["b_fc"], (0, C_PAD - NUM_CLASSES)).reshape(1, C_PAD)

    vmem = pl.BlockSpec(memory_space=pltpu.MemorySpace.VMEM)
    out = pl.pallas_call(
        lstm_kernel,
        out_shape=jax.ShapeDtypeStruct((nbt, b_tile, C_PAD), jnp.float32),
        grid_spec=pltpu.PrefetchScalarGridSpec(
            num_scalar_prefetch=0,
            grid=(nbt,),
            in_specs=[
                pl.BlockSpec((None, SEQ_LEN * b_tile, INPUT_SIZE),
                             lambda i: (i, 0, 0)),       # x batch tile
                vmem,                                    # w_ih (whole, resident)
                vmem,                                    # w_hh
                vmem,                                    # b
                vmem,                                    # w_fc
                vmem,                                    # b_fc
            ],
            out_specs=pl.BlockSpec((None, b_tile, C_PAD), lambda i: (i, 0, 0)),
            scratch_shapes=[
                pltpu.VMEM((SEQ_LEN * b_tile, 4 * H_PAD), jnp.float32)],
        ),
        compiler_params=pltpu.CompilerParams(
            dimension_semantics=("parallel",)),
    )(x_tiles, w_ih, w_hh, b, w_fc, b_fc)

    return out.reshape(b_pad, C_PAD)[:batch, :NUM_CLASSES]


def lstm_forward_ref(x, params):
    # Pure-JAX reference implementing torch.nn.LSTM (gate order i|f|g|o) + Linear.
    x = x.reshape(-1, SEQ_LEN, INPUT_SIZE).astype(jnp.float32)
    batch = x.shape[0]
    h = jnp.zeros((batch, HIDDEN), jnp.float32)
    c = jnp.zeros((batch, HIDDEN), jnp.float32)
    b = params["b_ih"] + params["b_hh"]
    for t in range(SEQ_LEN):
        gates = x[:, t, :] @ params["w_ih"].T + h @ params["w_hh"].T + b
        i_g = jax.nn.sigmoid(gates[:, 0 * HIDDEN:1 * HIDDEN])
        f_g = jax.nn.sigmoid(gates[:, 1 * HIDDEN:2 * HIDDEN])
        g_g = jnp.tanh(gates[:, 2 * HIDDEN:3 * HIDDEN])
        o_g = jax.nn.sigmoid(gates[:, 3 * HIDDEN:4 * HIDDEN])
        c = f_g * c + i_g * g_g
        h = o_g * jnp.tanh(c)
    return h @ params["w_fc"].T + params["b_fc"]


if __name__ == "__main__":
    key = jax.random.PRNGKey(0)
    k_param, k_x = jax.random.split(key)
    params = init_params(k_param)

    # MNIST-like input (NCHW); forward reshapes it to (-1, 28, 28).
    x = jax.random.normal(k_x, (2, 1, 28, 28), jnp.float32)

    out = lstm_forward(x, params)
    out = jax.block_until_ready(out)

    ref = lstm_forward_ref(x, params)
    assert out.shape == (2, NUM_CLASSES)
    assert jnp.allclose(out, ref, atol=1e-4, rtol=1e-4)
    print("KERNEL_OK")
</pallas_src>

<mosaic_0001>
module attributes {stable_mosaic.version = 11 : i64} {
  func.func @lstm_kernel(%arg0: i32, %arg1: memref<1x224x28xf32, #tpu.memory_space<vmem>>, %arg2: memref<28x512xf32, #tpu.memory_space<vmem>>, %arg3: memref<128x512xf32, #tpu.memory_space<vmem>>, %arg4: memref<1x512xf32, #tpu.memory_space<vmem>>, %arg5: memref<128x128xf32, #tpu.memory_space<vmem>>, %arg6: memref<1x128xf32, #tpu.memory_space<vmem>>, %arg7: memref<1x8x128xf32, #tpu.memory_space<vmem>>, %arg8: memref<224x512xf32, #tpu.memory_space<vmem>>) attributes {dimension_semantics = [#tpu.dimension_semantics<parallel>], iteration_bounds = array<i64: 1>, scalar_prefetch = 0 : i64, scratch_operands = 1 : i64, tpu.core_type = #tpu.core_type<tc>, window_params = [{transform_indices = @transform_0, window_bounds = array<i64: 1, 224, 28>}, {pipeline_mode = #tpu.pipeline_mode<synchronous>, transform_indices = @transform_1, window_bounds = array<i64: 28, 512>}, {pipeline_mode = #tpu.pipeline_mode<synchronous>, transform_indices = @transform_2, window_bounds = array<i64: 128, 512>}, {pipeline_mode = #tpu.pipeline_mode<synchronous>, transform_indices = @transform_3, window_bounds = array<i64: 1, 512>}, {pipeline_mode = #tpu.pipeline_mode<synchronous>, transform_indices = @transform_4, window_bounds = array<i64: 128, 128>}, {pipeline_mode = #tpu.pipeline_mode<synchronous>, transform_indices = @transform_5, window_bounds = array<i64: 1, 128>}, {transform_indices = @transform_6, window_bounds = array<i64: 1, 8, 128>}]} {
    %c0 = arith.constant 0 : index
    %c0_0 = arith.constant 0 : index
    %c0_1 = arith.constant 0 : index
    %0 = vector.load %arg1[%c0, %c0_0, %c0_1] : memref<1x224x28xf32, #tpu.memory_space<vmem>>, vector<1x224x28xf32>
    %1 = vector.shape_cast %0 : vector<1x224x28xf32> to vector<224x28xf32>
    %c0_2 = arith.constant 0 : index
    %c0_3 = arith.constant 0 : index
    %2 = vector.load %arg2[%c0_2, %c0_3] : memref<28x512xf32, #tpu.memory_space<vmem>>, vector<28x512xf32>
    %cst = arith.constant dense<0.000000e+00> : vector<224x512xf32>
    %3 = tpu.matmul %1, %2, %cst {dimension_numbers = #tpu.dot_dimension_numbers<[1], [0], [0], [1], [0, 0, 1, 1], [], []>} : vector<224x28xf32>, vector<28x512xf32>, vector<224x512xf32> -> vector<224x512xf32>
    %c0_4 = arith.constant 0 : index
    %c0_5 = arith.constant 0 : index
    %4 = vector.load %arg4[%c0_4, %c0_5] : memref<1x512xf32, #tpu.memory_space<vmem>>, vector<1x512xf32>
    %5 = vector.broadcast %4 : vector<1x512xf32> to vector<224x512xf32>
    %6 = arith.addf %3, %5 : vector<224x512xf32>
    %c0_6 = arith.constant 0 : index
    %c0_7 = arith.constant 0 : index
    %7 = vector.load %arg8[%c0_6, %c0_7] : memref<224x512xf32, #tpu.memory_space<vmem>>, vector<224x512xf32>
    tpu.vector_store %arg8[%c0_6, %c0_7], %6 {strides = array<i32>} : memref<224x512xf32, #tpu.memory_space<vmem>>, vector<224x512xf32>,
    %cst_8 = arith.constant 0.000000e+00 : f32
    %8 = vector.broadcast %cst_8 : f32 to vector<8x128xf32>
    %cst_9 = arith.constant 0.000000e+00 : f32
    %9 = vector.broadcast %cst_9 : f32 to vector<8x128xf32>
    %c0_10 = arith.constant 0 : index
    %c0_11 = arith.constant 0 : index
    %10 = vector.load %arg8[%c0_10, %c0_11] : memref<224x512xf32, #tpu.memory_space<vmem>>, vector<8x512xf32>
    %c0_12 = arith.constant 0 : index
    %c0_13 = arith.constant 0 : index
    %11 = vector.load %arg3[%c0_12, %c0_13] : memref<128x512xf32, #tpu.memory_space<vmem>>, vector<128x512xf32>
    %cst_14 = arith.constant dense<0.000000e+00> : vector<8x512xf32>
    %12 = tpu.matmul %8, %11, %cst_14 {dimension_numbers = #tpu.dot_dimension_numbers<[1], [0], [0], [1], [0, 0, 1, 1], [], []>} : vector<8x128xf32>, vector<128x512xf32>, vector<8x512xf32> -> vector<8x512xf32>
    %13 = arith.addf %10, %12 : vector<8x512xf32>
    %14 = vector.extract_strided_slice %13 {offsets = [0, 0], sizes = [8, 384], strides = [1, 1]} : vector<8x512xf32> to vector<8x384xf32>
    %15 = arith.negf %14 : vector<8x384xf32>
    %16 = math.exp %15 : vector<8x384xf32>
    %cst_15 = arith.constant 1.000000e+00 : f32
    %17 = vector.broadcast %cst_15 : f32 to vector<8x384xf32>
    %18 = arith.addf %17, %16 : vector<8x384xf32>
    %19 = arith.divf %17, %18 : vector<8x384xf32>
    %20 = vector.extract_strided_slice %19 {offsets = [0, 0], sizes = [8, 128], strides = [1, 1]} : vector<8x384xf32> to vector<8x128xf32>
    %21 = vector.extract_strided_slice %19 {offsets = [0, 128], sizes = [8, 128], strides = [1, 1]} : vector<8x384xf32> to vector<8x128xf32>
    %22 = vector.extract_strided_slice %19 {offsets = [0, 256], sizes = [8, 128], strides = [1, 1]} : vector<8x384xf32> to vector<8x128xf32>
    %23 = vector.extract_strided_slice %13 {offsets = [0, 384], sizes = [8, 128], strides = [1, 1]} : vector<8x512xf32> to vector<8x128xf32>
    %24 = math.tanh %23 : vector<8x128xf32>
    %25 = arith.mulf %21, %9 : vector<8x128xf32>
    %26 = arith.mulf %20, %24 : vector<8x128xf32>
    %27 = arith.addf %25, %26 : vector<8x128xf32>
    %28 = math.tanh %27 : vector<8x128xf32>
    %29 = arith.mulf %22, %28 : vector<8x128xf32>
    %c8 = arith.constant 8 : index
    %c0_16 = arith.constant 0 : index
    %30 = vector.load %arg8[%c8, %c0_16] : memref<224x512xf32, #tpu.memory_space<vmem>>, vector<8x512xf32>
    %c0_17 = arith.constant 0 : index
    %c0_18 = arith.constant 0 : index
    %31 = vector.load %arg3[%c0_17, %c0_18] : memref<128x512xf32, #tpu.memory_space<vmem>>, vector<128x512xf32>
    %cst_19 = arith.constant dense<0.000000e+00> : vector<8x512xf32>
    %32 = tpu.matmul %29, %31, %cst_19 {dimension_numbers = #tpu.dot_dimension_numbers<[1], [0], [0], [1], [0, 0, 1, 1], [], []>} : vector<8x128xf32>, vector<128x512xf32>, vector<8x512xf32> -> vector<8x512xf32>
    %33 = arith.addf %30, %32 : vector<8x512xf32>
    %34 = vector.extract_strided_slice %33 {offsets = [0, 0], sizes = [8, 384], strides = [1, 1]} : vector<8x512xf32> to vector<8x384xf32>
    %35 = arith.negf %34 : vector<8x384xf32>
    %36 = math.exp %35 : vector<8x384xf32>
    %cst_20 = arith.constant 1.000000e+00 : f32
    %37 = vector.broadcast %cst_20 : f32 to vector<8x384xf32>
    %38 = arith.addf %37, %36 : vector<8x384xf32>
    %39 = arith.divf %37, %38 : vector<8x384xf32>
    %40 = vector.extract_strided_slice %39 {offsets = [0, 0], sizes = [8, 128], strides = [1, 1]} : vector<8x384xf32> to vector<8x128xf32>
    %41 = vector.extract_strided_slice %39 {offsets = [0, 128], sizes = [8, 128], strides = [1, 1]} : vector<8x384xf32> to vector<8x128xf32>
    %42 = vector.extract_strided_slice %39 {offsets = [0, 256], sizes = [8, 128], strides = [1, 1]} : vector<8x384xf32> to vector<8x128xf32>
    %43 = vector.extract_strided_slice %33 {offsets = [0, 384], sizes = [8, 128], strides = [1, 1]} : vector<8x512xf32> to vector<8x128xf32>
    %44 = math.tanh %43 : vector<8x128xf32>
    %45 = arith.mulf %41, %27 : vector<8x128xf32>
    %46 = arith.mulf %40, %44 : vector<8x128xf32>
    %47 = arith.addf %45, %46 : vector<8x128xf32>
    %48 = math.tanh %47 : vector<8x128xf32>
    %49 = arith.mulf %42, %48 : vector<8x128xf32>
    %c16 = arith.constant 16 : index
    %c0_21 = arith.constant 0 : index
    %50 = vector.load %arg8[%c16, %c0_21] : memref<224x512xf32, #tpu.memory_space<vmem>>, vector<8x512xf32>
    %c0_22 = arith.constant 0 : index
    %c0_23 = arith.constant 0 : index
    %51 = vector.load %arg3[%c0_22, %c0_23] : memref<128x512xf32, #tpu.memory_space<vmem>>, vector<128x512xf32>
    %cst_24 = arith.constant dense<0.000000e+00> : vector<8x512xf32>
    %52 = tpu.matmul %49, %51, %cst_24 {dimension_numbers = #tpu.dot_dimension_numbers<[1], [0], [0], [1], [0, 0, 1, 1], [], []>} : vector<8x128xf32>, vector<128x512xf32>, vector<8x512xf32> -> vector<8x512xf32>
    %53 = arith.addf %50, %52 : vector<8x512xf32>
    %54 = vector.extract_strided_slice %53 {offsets = [0, 0], sizes = [8, 384], strides = [1, 1]} : vector<8x512xf32> to vector<8x384xf32>
    %55 = arith.negf %54 : vector<8x384xf32>
    %56 = math.exp %55 : vector<8x384xf32>
    %cst_25 = arith.constant 1.000000e+00 : f32
    %57 = vector.broadcast %cst_25 : f32 to vector<8x384xf32>
    %58 = arith.addf %57, %56 : vector<8x384xf32>
    %59 = arith.divf %57, %58 : vector<8x384xf32>
    %60 = vector.extract_strided_slice %59 {offsets = [0, 0], sizes = [8, 128], strides = [1, 1]} : vector<8x384xf32> to vector<8x128xf32>
    %61 = vector.extract_strided_slice %59 {offsets = [0, 128], sizes = [8, 128], strides = [1, 1]} : vector<8x384xf32> to vector<8x128xf32>
    %62 = vector.extract_strided_slice %59 {offsets = [0, 256], sizes = [8, 128], strides = [1, 1]} : vector<8x384xf32> to vector<8x128xf32>
    %63 = vector.extract_strided_slice %53 {offsets = [0, 384], sizes = [8, 128], strides = [1, 1]} : vector<8x512xf32> to vector<8x128xf32>
    %64 = math.tanh %63 : vector<8x128xf32>
    %65 = arith.mulf %61, %47 : vector<8x128xf32>
    %66 = arith.mulf %60, %64 : vector<8x128xf32>
    %67 = arith.addf %65, %66 : vector<8x128xf32>
    %68 = math.tanh %67 : vector<8x128xf32>
    %69 = arith.mulf %62, %68 : vector<8x128xf32>
    %c24 = arith.constant 24 : index
    %c0_26 = arith.constant 0 : index
    %70 = vector.load %arg8[%c24, %c0_26] : memref<224x512xf32, #tpu.memory_space<vmem>>, vector<8x512xf32>
    %c0_27 = arith.constant 0 : index
    %c0_28 = arith.constant 0 : index
    %71 = vector.load %arg3[%c0_27, %c0_28] : memref<128x512xf32, #tpu.memory_space<vmem>>, vector<128x512xf32>
    %cst_29 = arith.constant dense<0.000000e+00> : vector<8x512xf32>
    %72 = tpu.matmul %69, %71, %cst_29 {dimension_numbers = #tpu.dot_dimension_numbers<[1], [0], [0], [1], [0, 0, 1, 1], [], []>} : vector<8x128xf32>, vector<128x512xf32>, vector<8x512xf32> -> vector<8x512xf32>
    %73 = arith.addf %70, %72 : vector<8x512xf32>
    %74 = vector.extract_strided_slice %73 {offsets = [0, 0], sizes = [8, 384], strides = [1, 1]} : vector<8x512xf32> to vector<8x384xf32>
    %75 = arith.negf %74 : vector<8x384xf32>
    %76 = math.exp %75 : vector<8x384xf32>
    %cst_30 = arith.constant 1.000000e+00 : f32
    %77 = vector.broadcast %cst_30 : f32 to vector<8x384xf32>
    %78 = arith.addf %77, %76 : vector<8x384xf32>
    %79 = arith.divf %77, %78 : vector<8x384xf32>
    %80 = vector.extract_strided_slice %79 {offsets = [0, 0], sizes = [8, 128], strides = [1, 1]} : vector<8x384xf32> to vector<8x128xf32>
    %81 = vector.extract_strided_slice %79 {offsets = [0, 128], sizes = [8, 128], strides = [1, 1]} : vector<8x384xf32> to vector<8x128xf32>
    %82 = vector.extract_strided_slice %79 {offsets = [0, 256], sizes = [8, 128], strides = [1, 1]} : vector<8x384xf32> to vector<8x128xf32>
    %83 = vector.extract_strided_slice %73 {offsets = [0, 384], sizes = [8, 128], strides = [1, 1]} : vector<8x512xf32> to vector<8x128xf32>
    %84 = math.tanh %83 : vector<8x128xf32>
    %85 = arith.mulf %81, %67 : vector<8x128xf32>
    %86 = arith.mulf %80, %84 : vector<8x128xf32>
    %87 = arith.addf %85, %86 : vector<8x128xf32>
    %88 = math.tanh %87 : vector<8x128xf32>
    %89 = arith.mulf %82, %88 : vector<8x128xf32>
    %c32 = arith.constant 32 : index
    %c0_31 = arith.constant 0 : index
    %90 = vector.load %arg8[%c32, %c0_31] : memref<224x512xf32, #tpu.memory_space<vmem>>, vector<8x512xf32>
    %c0_32 = arith.constant 0 : index
    %c0_33 = arith.constant 0 : index
    %91 = vector.load %arg3[%c0_32, %c0_33] : memref<128x512xf32, #tpu.memory_space<vmem>>, vector<128x512xf32>
    %cst_34 = arith.constant dense<0.000000e+00> : vector<8x512xf32>
    %92 = tpu.matmul %89, %91, %cst_34 {dimension_numbers = #tpu.dot_dimension_numbers<[1], [0], [0], [1], [0, 0, 1, 1], [], []>} : vector<8x128xf32>, vector<128x512xf32>, vector<8x512xf32> -> vector<8x512xf32>
    %93 = arith.addf %90, %92 : vector<8x512xf32>
    %94 = vector.extract_strided_slice %93 {offsets = [0, 0], sizes = [8, 384], strides = [1, 1]} : vector<8x512xf32> to vector<8x384xf32>
    %95 = arith.negf %94 : vector<8x384xf32>
    %96 = math.exp %95 : vector<8x384xf32>
    %cst_35 = arith.constant 1.000000e+00 : f32
    %97 = vector.broadcast %cst_35 : f32 to vector<8x384xf32>
    %98 = arith.addf %97, %96 : vector<8x384xf32>
    %99 = arith.divf %97, %98 : vector<8x384xf32>
    %100 = vector.extract_strided_slice %99 {offsets = [0, 0], sizes = [8, 128], strides = [1, 1]} : vector<8x384xf32> to vector<8x128xf32>
    %101 = vector.extract_strided_slice %99 {offsets = [0, 128], sizes = [8, 128], strides = [1, 1]} : vector<8x384xf32> to vector<8x128xf32>
    %102 = vector.extract_strided_slice %99 {offsets = [0, 256], sizes = [8, 128], strides = [1, 1]} : vector<8x384xf32> to vector<8x128xf32>
    %103 = vector.extract_strided_slice %93 {offsets = [0, 384], sizes = [8, 128], strides = [1, 1]} : vector<8x512xf32> to vector<8x128xf32>
    %104 = math.tanh %103 : vector<8x128xf32>
    %105 = arith.mulf %101, %87 : vector<8x128xf32>
    %106 = arith.mulf %100, %104 : vector<8x128xf32>
    %107 = arith.addf %105, %106 : vector<8x128xf32>
    %108 = math.tanh %107 : vector<8x128xf32>
    %109 = arith.mulf %102, %108 : vector<8x128xf32>
    %c40 = arith.constant 40 : index
    %c0_36 = arith.constant 0 : index
    %110 = vector.load %arg8[%c40, %c0_36] : memref<224x512xf32, #tpu.memory_space<vmem>>, vector<8x512xf32>
    %c0_37 = arith.constant 0 : index
    %c0_38 = arith.constant 0 : index
    %111 = vector.load %arg3[%c0_37, %c0_38] : memref<128x512xf32, #tpu.memory_space<vmem>>, vector<128x512xf32>
    %cst_39 = arith.constant dense<0.000000e+00> : vector<8x512xf32>
    %112 = tpu.matmul %109, %111, %cst_39 {dimension_numbers = #tpu.dot_dimension_numbers<[1], [0], [0], [1], [0, 0, 1, 1], [], []>} : vector<8x128xf32>, vector<128x512xf32>, vector<8x512xf32> -> vector<8x512xf32>
    %113 = arith.addf %110, %112 : vector<8x512xf32>
    %114 = vector.extract_strided_slice %113 {offsets = [0, 0], sizes = [8, 384], strides = [1, 1]} : vector<8x512xf32> to vector<8x384xf32>
    %115 = arith.negf %114 : vector<8x384xf32>
    %116 = math.exp %115 : vector<8x384xf32>
    %cst_40 = arith.constant 1.000000e+00 : f32
    %117 = vector.broadcast %cst_40 : f32 to vector<8x384xf32>
    %118 = arith.addf %117, %116 : vector<8x384xf32>
    %119 = arith.divf %117, %118 : vector<8x384xf32>
    %120 = vector.extract_strided_slice %119 {offsets = [0, 0], sizes = [8, 128], strides = [1, 1]} : vector<8x384xf32> to vector<8x128xf32>
    %121 = vector.extract_strided_slice %119 {offsets = [0, 128], sizes = [8, 128], strides = [1, 1]} : vector<8x384xf32> to vector<8x128xf32>
    %122 = vector.extract_strided_slice %119 {offsets = [0, 256], sizes = [8, 128], strides = [1, 1]} : vector<8x384xf32> to vector<8x128xf32>
    %123 = vector.extract_strided_slice %113 {offsets = [0, 384], sizes = [8, 128], strides = [1, 1]} : vector<8x512xf32> to vector<8x128xf32>
    %124 = math.tanh %123 : vector<8x128xf32>
    %125 = arith.mulf %121, %107 : vector<8x128xf32>
    %126 = arith.mulf %120, %124 : vector<8x128xf32>
    %127 = arith.addf %125, %126 : vector<8x128xf32>
    %128 = math.tanh %127 : vector<8x128xf32>
    %129 = arith.mulf %122, %128 : vector<8x128xf32>
    %c48 = arith.constant 48 : index
    %c0_41 = arith.constant 0 : index
    %130 = vector.load %arg8[%c48, %c0_41] : memref<224x512xf32, #tpu.memory_space<vmem>>, vector<8x512xf32>
    %c0_42 = arith.constant 0 : index
    %c0_43 = arith.constant 0 : index
    %131 = vector.load %arg3[%c0_42, %c0_43] : memref<128x512xf32, #tpu.memory_space<vmem>>, vector<128x512xf32>
    %cst_44 = arith.constant dense<0.000000e+00> : vector<8x512xf32>
    %132 = tpu.matmul %129, %131, %cst_44 {dimension_numbers = #tpu.dot_dimension_numbers<[1], [0], [0], [1], [0, 0, 1, 1], [], []>} : vector<8x128xf32>, vector<128x512xf32>, vector<8x512xf32> -> vector<8x512xf32>
    %133 = arith.addf %130, %132 : vector<8x512xf32>
    %134 = vector.extract_strided_slice %133 {offsets = [0, 0], sizes = [8, 384], strides = [1, 1]} : vector<8x512xf32> to vector<8x384xf32>
    %135 = arith.negf %134 : vector<8x384xf32>
    %136 = math.exp %135 : vector<8x384xf32>
    %cst_45 = arith.constant 1.000000e+00 : f32
    %137 = vector.broadcast %cst_45 : f32 to vector<8x384xf32>
    %138 = arith.addf %137, %136 : vector<8x384xf32>
    %139 = arith.divf %137, %138 : vector<8x384xf32>
    %140 = vector.extract_strided_slice %139 {offsets = [0, 0], sizes = [8, 128], strides = [1, 1]} : vector<8x384xf32> to vector<8x128xf32>
    %141 = vector.extract_strided_slice %139 {offsets = [0, 128], sizes = [8, 128], strides = [1, 1]} : vector<8x384xf32> to vector<8x128xf32>
    %142 = vector.extract_strided_slice %139 {offsets = [0, 256], sizes = [8, 128], strides = [1, 1]} : vector<8x384xf32> to vector<8x128xf32>
    %143 = vector.extract_strided_slice %133 {offsets = [0, 384], sizes = [8, 128], strides = [1, 1]} : vector<8x512xf32> to vector<8x128xf32>
    %144 = math.tanh %143 : vector<8x128xf32>
    %145 = arith.mulf %141, %127 : vector<8x128xf32>
    %146 = arith.mulf %140, %144 : vector<8x128xf32>
    %147 = arith.addf %145, %146 : vector<8x128xf32>
    %148 = math.tanh %147 : vector<8x128xf32>
    %149 = arith.mulf %142, %148 : vector<8x128xf32>
    %c56 = arith.constant 56 : index
    %c0_46 = arith.constant 0 : index
    %150 = vector.load %arg8[%c56, %c0_46] : memref<224x512xf32, #tpu.memory_space<vmem>>, vector<8x512xf32>
    %c0_47 = arith.constant 0 : index
    %c0_48 = arith.constant 0 : index
    %151 = vector.load %arg3[%c0_47, %c0_48] : memref<128x512xf32, #tpu.memory_space<vmem>>, vector<128x512xf32>
    %cst_49 = arith.constant dense<0.000000e+00> : vector<8x512xf32>
    %152 = tpu.matmul %149, %151, %cst_49 {dimension_numbers = #tpu.dot_dimension_numbers<[1], [0], [0], [1], [0, 0, 1, 1], [], []>} : vector<8x128xf32>, vector<128x512xf32>, vector<8x512xf32> -> vector<8x512xf32>
    %153 = arith.addf %150, %152 : vector<8x512xf32>
    %154 = vector.extract_strided_slice %153 {offsets = [0, 0], sizes = [8, 384], strides = [1, 1]} : vector<8x512xf32> to vector<8x384xf32>
    %155 = arith.negf %154 : vector<8x384xf32>
    %156 = math.exp %155 : vector<8x384xf32>
    %cst_50 = arith.constant 1.000000e+00 : f32
    %157 = vector.broadcast %cst_50 : f32 to vector<8x384xf32>
    %158 = arith.addf %157, %156 : vector<8x384xf32>
    %159 = arith.divf %157, %158 : vector<8x384xf32>
    %160 = vector.extract_strided_slice %159 {offsets = [0, 0], sizes = [8, 128], strides = [1, 1]} : vector<8x384xf32> to vector<8x128xf32>
    %161 = vector.extract_strided_slice %159 {offsets = [0, 128], sizes = [8, 128], strides = [1, 1]} : vector<8x384xf32> to vector<8x128xf32>
    %162 = vector.extract_strided_slice %159 {offsets = [0, 256], sizes = [8, 128], strides = [1, 1]} : vector<8x384xf32> to vector<8x128xf32>
    %163 = vector.extract_strided_slice %153 {offsets = [0, 384], sizes = [8, 128], strides = [1, 1]} : vector<8x512xf32> to vector<8x128xf32>
    %164 = math.tanh %163 : vector<8x128xf32>
    %165 = arith.mulf %161, %147 : vector<8x128xf32>
    %166 = arith.mulf %160, %164 : vector<8x128xf32>
    %167 = arith.addf %165, %166 : vector<8x128xf32>
    %168 = math.tanh %167 : vector<8x128xf32>
    %169 = arith.mulf %162, %168 : vector<8x128xf32>
    %c64 = arith.constant 64 : index
    %c0_51 = arith.constant 0 : index
    %170 = vector.load %arg8[%c64, %c0_51] : memref<224x512xf32, #tpu.memory_space<vmem>>, vector<8x512xf32>
    %c0_52 = arith.constant 0 : index
    %c0_53 = arith.constant 0 : index
    %171 = vector.load %arg3[%c0_52, %c0_53] : memref<128x512xf32, #tpu.memory_space<vmem>>, vector<128x512xf32>
    %cst_54 = arith.constant dense<0.000000e+00> : vector<8x512xf32>
    %172 = tpu.matmul %169, %171, %cst_54 {dimension_numbers = #tpu.dot_dimension_numbers<[1], [0], [0], [1], [0, 0, 1, 1], [], []>} : vector<8x128xf32>, vector<128x512xf32>, vector<8x512xf32> -> vector<8x512xf32>
    %173 = arith.addf %170, %172 : vector<8x512xf32>
    %174 = vector.extract_strided_slice %173 {offsets = [0, 0], sizes = [8, 384], strides = [1, 1]} : vector<8x512xf32> to vector<8x384xf32>
    %175 = arith.negf %174 : vector<8x384xf32>
    %176 = math.exp %175 : vector<8x384xf32>
    %cst_55 = arith.constant 1.000000e+00 : f32
    %177 = vector.broadcast %cst_55 : f32 to vector<8x384xf32>
    %178 = arith.addf %177, %176 : vector<8x384xf32>
    %179 = arith.divf %177, %178 : vector<8x384xf32>
    %180 = vector.extract_strided_slice %179 {offsets = [0, 0], sizes = [8, 128], strides = [1, 1]} : vector<8x384xf32> to vector<8x128xf32>
    %181 = vector.extract_strided_slice %179 {offsets = [0, 128], sizes = [8, 128], strides = [1, 1]} : vector<8x384xf32> to vector<8x128xf32>
    %182 = vector.extract_strided_slice %179 {offsets = [0, 256], sizes = [8, 128], strides = [1, 1]} : vector<8x384xf32> to vector<8x128xf32>
    %183 = vector.extract_strided_slice %173 {offsets = [0, 384], sizes = [8, 128], strides = [1, 1]} : vector<8x512xf32> to vector<8x128xf32>
    %184 = math.tanh %183 : vector<8x128xf32>
    %185 = arith.mulf %181, %167 : vector<8x128xf32>
    %186 = arith.mulf %180, %184 : vector<8x128xf32>
    %187 = arith.addf %185, %186 : vector<8x128xf32>
    %188 = math.tanh %187 : vector<8x128xf32>
    %189 = arith.mulf %182, %188 : vector<8x128xf32>
    %c72 = arith.constant 72 : index
    %c0_56 = arith.constant 0 : index
    %190 = vector.load %arg8[%c72, %c0_56] : memref<224x512xf32, #tpu.memory_space<vmem>>, vector<8x512xf32>
    %c0_57 = arith.constant 0 : index
    %c0_58 = arith.constant 0 : index
    %191 = vector.load %arg3[%c0_57, %c0_58] : memref<128x512xf32, #tpu.memory_space<vmem>>, vector<128x512xf32>
    %cst_59 = arith.constant dense<0.000000e+00> : vector<8x512xf32>
    %192 = tpu.matmul %189, %191, %cst_59 {dimension_numbers = #tpu.dot_dimension_numbers<[1], [0], [0], [1], [0, 0, 1, 1], [], []>} : vector<8x128xf32>, vector<128x512xf32>, vector<8x512xf32> -> vector<8x512xf32>
    %193 = arith.addf %190, %192 : vector<8x512xf32>
    %194 = vector.extract_strided_slice %193 {offsets = [0, 0], sizes = [8, 384], strides = [1, 1]} : vector<8x512xf32> to vector<8x384xf32>
    %195 = arith.negf %194 : vector<8x384xf32>
    %196 = math.exp %195 : vector<8x384xf32>
    %cst_60 = arith.constant 1.000000e+00 : f32
    %197 = vector.broadcast %cst_60 : f32 to vector<8x384xf32>
    %198 = arith.addf %197, %196 : vector<8x384xf32>
    %199 = arith.divf %197, %198 : vector<8x384xf32>
    %200 = vector.extract_strided_slice %199 {offsets = [0, 0], sizes = [8, 128], strides = [1, 1]} : vector<8x384xf32> to vector<8x128xf32>
    %201 = vector.extract_strided_slice %199 {offsets = [0, 128], sizes = [8, 128], strides = [1, 1]} : vector<8x384xf32> to vector<8x128xf32>
    %202 = vector.extract_strided_slice %199 {offsets = [0, 256], sizes = [8, 128], strides = [1, 1]} : vector<8x384xf32> to vector<8x128xf32>
    %203 = vector.extract_strided_slice %193 {offsets = [0, 384], sizes = [8, 128], strides = [1, 1]} : vector<8x512xf32> to vector<8x128xf32>
    %204 = math.tanh %203 : vector<8x128xf32>
    %205 = arith.mulf %201, %187 : vector<8x128xf32>
    %206 = arith.mulf %200, %204 : vector<8x128xf32>
    %207 = arith.addf %205, %206 : vector<8x128xf32>
    %208 = math.tanh %207 : vector<8x128xf32>
    %209 = arith.mulf %202, %208 : vector<8x128xf32>
    %c80 = arith.constant 80 : index
    %c0_61 = arith.constant 0 : index
    %210 = vector.load %arg8[%c80, %c0_61] : memref<224x512xf32, #tpu.memory_space<vmem>>, vector<8x512xf32>
    %c0_62 = arith.constant 0 : index
    %c0_63 = arith.constant 0 : index
    %211 = vector.load %arg3[%c0_62, %c0_63] : memref<128x512xf32, #tpu.memory_space<vmem>>, vector<128x512xf32>
    %cst_64 = arith.constant dense<0.000000e+00> : vector<8x512xf32>
    %212 = tpu.matmul %209, %211, %cst_64 {dimension_numbers = #tpu.dot_dimension_numbers<[1], [0], [0], [1], [0, 0, 1, 1], [], []>} : vector<8x128xf32>, vector<128x512xf32>, vector<8x512xf32> -> vector<8x512xf32>
    %213 = arith.addf %210, %212 : vector<8x512xf32>
    %214 = vector.extract_strided_slice %213 {offsets = [0, 0], sizes = [8, 384], strides = [1, 1]} : vector<8x512xf32> to vector<8x384xf32>
    %215 = arith.negf %214 : vector<8x384xf32>
    %216 = math.exp %215 : vector<8x384xf32>
    %cst_65 = arith.constant 1.000000e+00 : f32
    %217 = vector.broadcast %cst_65 : f32 to vector<8x384xf32>
    %218 = arith.addf %217, %216 : vector<8x384xf32>
    %219 = arith.divf %217, %218 : vector<8x384xf32>
    %220 = vector.extract_strided_slice %219 {offsets = [0, 0], sizes = [8, 128], strides = [1, 1]} : vector<8x384xf32> to vector<8x128xf32>
    %221 = vector.extract_strided_slice %219 {offsets = [0, 128], sizes = [8, 128], strides = [1, 1]} : vector<8x384xf32> to vector<8x128xf32>
    %222 = vector.extract_strided_slice %219 {offsets = [0, 256], sizes = [8, 128], strides = [1, 1]} : vector<8x384xf32> to vector<8x128xf32>
    %223 = vector.extract_strided_slice %213 {offsets = [0, 384], sizes = [8, 128], strides = [1, 1]} : vector<8x512xf32> to vector<8x128xf32>
    %224 = math.tanh %223 : vector<8x128xf32>
    %225 = arith.mulf %221, %207 : vector<8x128xf32>
    %226 = arith.mulf %220, %224 : vector<8x128xf32>
    %227 = arith.addf %225, %226 : vector<8x128xf32>
    %228 = math.tanh %227 : vector<8x128xf32>
    %229 = arith.mulf %222, %228 : vector<8x128xf32>
    %c88 = arith.constant 88 : index
    %c0_66 = arith.constant 0 : index
    %230 = vector.load %arg8[%c88, %c0_66] : memref<224x512xf32, #tpu.memory_space<vmem>>, vector<8x512xf32>
    %c0_67 = arith.constant 0 : index
    %c0_68 = arith.constant 0 : index
    %231 = vector.load %arg3[%c0_67, %c0_68] : memref<128x512xf32, #tpu.memory_space<vmem>>, vector<128x512xf32>
    %cst_69 = arith.constant dense<0.000000e+00> : vector<8x512xf32>
    %232 = tpu.matmul %229, %231, %cst_69 {dimension_numbers = #tpu.dot_dimension_numbers<[1], [0], [0], [1], [0, 0, 1, 1], [], []>} : vector<8x128xf32>, vector<128x512xf32>, vector<8x512xf32> -> vector<8x512xf32>
    %233 = arith.addf %230, %232 : vector<8x512xf32>
    %234 = vector.extract_strided_slice %233 {offsets = [0, 0], sizes = [8, 384], strides = [1, 1]} : vector<8x512xf32> to vector<8x384xf32>
    %235 = arith.negf %234 : vector<8x384xf32>
    %236 = math.exp %235 : vector<8x384xf32>
    %cst_70 = arith.constant 1.000000e+00 : f32
    %237 = vector.broadcast %cst_70 : f32 to vector<8x384xf32>
    %238 = arith.addf %237, %236 : vector<8x384xf32>
    %239 = arith.divf %237, %238 : vector<8x384xf32>
    %240 = vector.extract_strided_slice %239 {offsets = [0, 0], sizes = [8, 128], strides = [1, 1]} : vector<8x384xf32> to vector<8x128xf32>
    %241 = vector.extract_strided_slice %239 {offsets = [0, 128], sizes = [8, 128], strides = [1, 1]} : vector<8x384xf32> to vector<8x128xf32>
    %242 = vector.extract_strided_slice %239 {offsets = [0, 256], sizes = [8, 128], strides = [1, 1]} : vector<8x384xf32> to vector<8x128xf32>
    %243 = vector.extract_strided_slice %233 {offsets = [0, 384], sizes = [8, 128], strides = [1, 1]} : vector<8x512xf32> to vector<8x128xf32>
    %244 = math.tanh %243 : vector<8x128xf32>
    %245 = arith.mulf %241, %227 : vector<8x128xf32>
    %246 = arith.mulf %240, %244 : vector<8x128xf32>
    %247 = arith.addf %245, %246 : vector<8x128xf32>
    %248 = math.tanh %247 : vector<8x128xf32>
    %249 = arith.mulf %242, %248 : vector<8x128xf32>
    %c96 = arith.constant 96 : index
    %c0_71 = arith.constant 0 : index
    %250 = vector.load %arg8[%c96, %c0_71] : memref<224x512xf32, #tpu.memory_space<vmem>>, vector<8x512xf32>
    %c0_72 = arith.constant 0 : index
    %c0_73 = arith.constant 0 : index
    %251 = vector.load %arg3[%c0_72, %c0_73] : memref<128x512xf32, #tpu.memory_space<vmem>>, vector<128x512xf32>
    %cst_74 = arith.constant dense<0.000000e+00> : vector<8x512xf32>
    %252 = tpu.matmul %249, %251, %cst_74 {dimension_numbers = #tpu.dot_dimension_numbers<[1], [0], [0], [1], [0, 0, 1, 1], [], []>} : vector<8x128xf32>, vector<128x512xf32>, vector<8x512xf32> -> vector<8x512xf32>
    %253 = arith.addf %250, %252 : vector<8x512xf32>
    %254 = vector.extract_strided_slice %253 {offsets = [0, 0], sizes = [8, 384], strides = [1, 1]} : vector<8x512xf32> to vector<8x384xf32>
    %255 = arith.negf %254 : vector<8x384xf32>
    %256 = math.exp %255 : vector<8x384xf32>
    %cst_75 = arith.constant 1.000000e+00 : f32
    %257 = vector.broadcast %cst_75 : f32 to vector<8x384xf32>
    %258 = arith.addf %257, %256 : vector<8x384xf32>
    %259 = arith.divf %257, %258 : vector<8x384xf32>
    %260 = vector.extract_strided_slice %259 {offsets = [0, 0], sizes = [8, 128], strides = [1, 1]} : vector<8x384xf32> to vector<8x128xf32>
    %261 = vector.extract_strided_slice %259 {offsets = [0, 128], sizes = [8, 128], strides = [1, 1]} : vector<8x384xf32> to vector<8x128xf32>
    %262 = vector.extract_strided_slice %259 {offsets = [0, 256], sizes = [8, 128], strides = [1, 1]} : vector<8x384xf32> to vector<8x128xf32>
    %263 = vector.extract_strided_slice %253 {offsets = [0, 384], sizes = [8, 128], strides = [1, 1]} : vector<8x512xf32> to vector<8x128xf32>
    %264 = math.tanh %263 : vector<8x128xf32>
    %265 = arith.mulf %261, %247 : vector<8x128xf32>
    %266 = arith.mulf %260, %264 : vector<8x128xf32>
    %267 = arith.addf %265, %266 : vector<8x128xf32>
    %268 = math.tanh %267 : vector<8x128xf32>
    %269 = arith.mulf %262, %268 : vector<8x128xf32>
    %c104 = arith.constant 104 : index
    %c0_76 = arith.constant 0 : index
    %270 = vector.load %arg8[%c104, %c0_76] : memref<224x512xf32, #tpu.memory_space<vmem>>, vector<8x512xf32>
    %c0_77 = arith.constant 0 : index
    %c0_78 = arith.constant 0 : index
    %271 = vector.load %arg3[%c0_77, %c0_78] : memref<128x512xf32, #tpu.memory_space<vmem>>, vector<128x512xf32>
    %cst_79 = arith.constant dense<0.000000e+00> : vector<8x512xf32>
    %272 = tpu.matmul %269, %271, %cst_79 {dimension_numbers = #tpu.dot_dimension_numbers<[1], [0], [0], [1], [0, 0, 1, 1], [], []>} : vector<8x128xf32>, vector<128x512xf32>, vector<8x512xf32> -> vector<8x512xf32>
    %273 = arith.addf %270, %272 : vector<8x512xf32>
    %274 = vector.extract_strided_slice %273 {offsets = [0, 0], sizes = [8, 384], strides = [1, 1]} : vector<8x512xf32> to vector<8x384xf32>
    %275 = arith.negf %274 : vector<8x384xf32>
    %276 = math.exp %275 : vector<8x384xf32>
    %cst_80 = arith.constant 1.000000e+00 : f32
    %277 = vector.broadcast %cst_80 : f32 to vector<8x384xf32>
    %278 = arith.addf %277, %276 : vector<8x384xf32>
    %279 = arith.divf %277, %278 : vector<8x384xf32>
    %280 = vector.extract_strided_slice %279 {offsets = [0, 0], sizes = [8, 128], strides = [1, 1]} : vector<8x384xf32> to vector<8x128xf32>
    %281 = vector.extract_strided_slice %279 {offsets = [0, 128], sizes = [8, 128], strides = [1, 1]} : vector<8x384xf32> to vector<8x128xf32>
    %282 = vector.extract_strided_slice %279 {offsets = [0, 256], sizes = [8, 128], strides = [1, 1]} : vector<8x384xf32> to vector<8x128xf32>
    %283 = vector.extract_strided_slice %273 {offsets = [0, 384], sizes = [8, 128], strides = [1, 1]} : vector<8x512xf32> to vector<8x128xf32>
    %284 = math.tanh %283 : vector<8x128xf32>
    %285 = arith.mulf %281, %267 : vector<8x128xf32>
    %286 = arith.mulf %280, %284 : vector<8x128xf32>
    %287 = arith.addf %285, %286 : vector<8x128xf32>
    %288 = math.tanh %287 : vector<8x128xf32>
    %289 = arith.mulf %282, %288 : vector<8x128xf32>
    %c112 = arith.constant 112 : index
    %c0_81 = arith.constant 0 : index
    %290 = vector.load %arg8[%c112, %c0_81] : memref<224x512xf32, #tpu.memory_space<vmem>>, vector<8x512xf32>
    %c0_82 = arith.constant 0 : index
    %c0_83 = arith.constant 0 : index
    %291 = vector.load %arg3[%c0_82, %c0_83] : memref<128x512xf32, #tpu.memory_space<vmem>>, vector<128x512xf32>
    %cst_84 = arith.constant dense<0.000000e+00> : vector<8x512xf32>
    %292 = tpu.matmul %289, %291, %cst_84 {dimension_numbers = #tpu.dot_dimension_numbers<[1], [0], [0], [1], [0, 0, 1, 1], [], []>} : vector<8x128xf32>, vector<128x512xf32>, vector<8x512xf32> -> vector<8x512xf32>
    %293 = arith.addf %290, %292 : vector<8x512xf32>
    %294 = vector.extract_strided_slice %293 {offsets = [0, 0], sizes = [8, 384], strides = [1, 1]} : vector<8x512xf32> to vector<8x384xf32>
    %295 = arith.negf %294 : vector<8x384xf32>
    %296 = math.exp %295 : vector<8x384xf32>
    %cst_85 = arith.constant 1.000000e+00 : f32
    %297 = vector.broadcast %cst_85 : f32 to vector<8x384xf32>
    %298 = arith.addf %297, %296 : vector<8x384xf32>
    %299 = arith.divf %297, %298 : vector<8x384xf32>
    %300 = vector.extract_strided_slice %299 {offsets = [0, 0], sizes = [8, 128], strides = [1, 1]} : vector<8x384xf32> to vector<8x128xf32>
    %301 = vector.extract_strided_slice %299 {offsets = [0, 128], sizes = [8, 128], strides = [1, 1]} : vector<8x384xf32> to vector<8x128xf32>
    %302 = vector.extract_strided_slice %299 {offsets = [0, 256], sizes = [8, 128], strides = [1, 1]} : vector<8x384xf32> to vector<8x128xf32>
    %303 = vector.extract_strided_slice %293 {offsets = [0, 384], sizes = [8, 128], strides = [1, 1]} : vector<8x512xf32> to vector<8x128xf32>
    %304 = math.tanh %303 : vector<8x128xf32>
    %305 = arith.mulf %301, %287 : vector<8x128xf32>
    %306 = arith.mulf %300, %304 : vector<8x128xf32>
    %307 = arith.addf %305, %306 : vector<8x128xf32>
    %308 = math.tanh %307 : vector<8x128xf32>
    %309 = arith.mulf %302, %308 : vector<8x128xf32>
    %c120 = arith.constant 120 : index
    %c0_86 = arith.constant 0 : index
    %310 = vector.load %arg8[%c120, %c0_86] : memref<224x512xf32, #tpu.memory_space<vmem>>, vector<8x512xf32>
    %c0_87 = arith.constant 0 : index
    %c0_88 = arith.constant 0 : index
    %311 = vector.load %arg3[%c0_87, %c0_88] : memref<128x512xf32, #tpu.memory_space<vmem>>, vector<128x512xf32>
    %cst_89 = arith.constant dense<0.000000e+00> : vector<8x512xf32>
    %312 = tpu.matmul %309, %311, %cst_89 {dimension_numbers = #tpu.dot_dimension_numbers<[1], [0], [0], [1], [0, 0, 1, 1], [], []>} : vector<8x128xf32>, vector<128x512xf32>, vector<8x512xf32> -> vector<8x512xf32>
    %313 = arith.addf %310, %312 : vector<8x512xf32>
    %314 = vector.extract_strided_slice %313 {offsets = [0, 0], sizes = [8, 384], strides = [1, 1]} : vector<8x512xf32> to vector<8x384xf32>
    %315 = arith.negf %314 : vector<8x384xf32>
    %316 = math.exp %315 : vector<8x384xf32>
    %cst_90 = arith.constant 1.000000e+00 : f32
    %317 = vector.broadcast %cst_90 : f32 to vector<8x384xf32>
    %318 = arith.addf %317, %316 : vector<8x384xf32>
    %319 = arith.divf %317, %318 : vector<8x384xf32>
    %320 = vector.extract_strided_slice %319 {offsets = [0, 0], sizes = [8, 128], strides = [1, 1]} : vector<8x384xf32> to vector<8x128xf32>
    %321 = vector.extract_strided_slice %319 {offsets = [0, 128], sizes = [8, 128], strides = [1, 1]} : vector<8x384xf32> to vector<8x128xf32>
    %322 = vector.extract_strided_slice %319 {offsets = [0, 256], sizes = [8, 128], strides = [1, 1]} : vector<8x384xf32> to vector<8x128xf32>
    %323 = vector.extract_strided_slice %313 {offsets = [0, 384], sizes = [8, 128], strides = [1, 1]} : vector<8x512xf32> to vector<8x128xf32>
    %324 = math.tanh %323 : vector<8x128xf32>
    %325 = arith.mulf %321, %307 : vector<8x128xf32>
    %326 = arith.mulf %320, %324 : vector<8x128xf32>
    %327 = arith.addf %325, %326 : vector<8x128xf32>
    %328 = math.tanh %327 : vector<8x128xf32>
    %329 = arith.mulf %322, %328 : vector<8x128xf32>
    %c128 = arith.constant 128 : index
    %c0_91 = arith.constant 0 : index
    %330 = vector.load %arg8[%c128, %c0_91] : memref<224x512xf32, #tpu.memory_space<vmem>>, vector<8x512xf32>
    %c0_92 = arith.constant 0 : index
    %c0_93 = arith.constant 0 : index
    %331 = vector.load %arg3[%c0_92, %c0_93] : memref<128x512xf32, #tpu.memory_space<vmem>>, vector<128x512xf32>
    %cst_94 = arith.constant dense<0.000000e+00> : vector<8x512xf32>
    %332 = tpu.matmul %329, %331, %cst_94 {dimension_numbers = #tpu.dot_dimension_numbers<[1], [0], [0], [1], [0, 0, 1, 1], [], []>} : vector<8x128xf32>, vector<128x512xf32>, vector<8x512xf32> -> vector<8x512xf32>
    %333 = arith.addf %330, %332 : vector<8x512xf32>
    %334 = vector.extract_strided_slice %333 {offsets = [0, 0], sizes = [8, 384], strides = [1, 1]} : vector<8x512xf32> to vector<8x384xf32>
    %335 = arith.negf %334 : vector<8x384xf32>
    %336 = math.exp %335 : vector<8x384xf32>
    %cst_95 = arith.constant 1.000000e+00 : f32
    %337 = vector.broadcast %cst_95 : f32 to vector<8x384xf32>
    %338 = arith.addf %337, %336 : vector<8x384xf32>
    %339 = arith.divf %337, %338 : vector<8x384xf32>
    %340 = vector.extract_strided_slice %339 {offsets = [0, 0], sizes = [8, 128], strides = [1, 1]} : vector<8x384xf32> to vector<8x128xf32>
    %341 = vector.extract_strided_slice %339 {offsets = [0, 128], sizes = [8, 128], strides = [1, 1]} : vector<8x384xf32> to vector<8x128xf32>
    %342 = vector.extract_strided_slice %339 {offsets = [0, 256], sizes = [8, 128], strides = [1, 1]} : vector<8x384xf32> to vector<8x128xf32>
    %343 = vector.extract_strided_slice %333 {offsets = [0, 384], sizes = [8, 128], strides = [1, 1]} : vector<8x512xf32> to vector<8x128xf32>
    %344 = math.tanh %343 : vector<8x128xf32>
    %345 = arith.mulf %341, %327 : vector<8x128xf32>
    %346 = arith.mulf %340, %344 : vector<8x128xf32>
    %347 = arith.addf %345, %346 : vector<8x128xf32>
    %348 = math.tanh %347 : vector<8x128xf32>
    %349 = arith.mulf %342, %348 : vector<8x128xf32>
    %c136 = arith.constant 136 : index
    %c0_96 = arith.constant 0 : index
    %350 = vector.load %arg8[%c136, %c0_96] : memref<224x512xf32, #tpu.memory_space<vmem>>, vector<8x512xf32>
    %c0_97 = arith.constant 0 : index
    %c0_98 = arith.constant 0 : index
    %351 = vector.load %arg3[%c0_97, %c0_98] : memref<128x512xf32, #tpu.memory_space<vmem>>, vector<128x512xf32>
    %cst_99 = arith.constant dense<0.000000e+00> : vector<8x512xf32>
    %352 = tpu.matmul %349, %351, %cst_99 {dimension_numbers = #tpu.dot_dimension_numbers<[1], [0], [0], [1], [0, 0, 1, 1], [], []>} : vector<8x128xf32>, vector<128x512xf32>, vector<8x512xf32> -> vector<8x512xf32>
    %353 = arith.addf %350, %352 : vector<8x512xf32>
    %354 = vector.extract_strided_slice %353 {offsets = [0, 0], sizes = [8, 384], strides = [1, 1]} : vector<8x512xf32> to vector<8x384xf32>
    %355 = arith.negf %354 : vector<8x384xf32>
    %356 = math.exp %355 : vector<8x384xf32>
    %cst_100 = arith.constant 1.000000e+00 : f32
    %357 = vector.broadcast %cst_100 : f32 to vector<8x384xf32>
    %358 = arith.addf %357, %356 : vector<8x384xf32>
    %359 = arith.divf %357, %358 : vector<8x384xf32>
    %360 = vector.extract_strided_slice %359 {offsets = [0, 0], sizes = [8, 128], strides = [1, 1]} : vector<8x384xf32> to vector<8x128xf32>
    %361 = vector.extract_strided_slice %359 {offsets = [0, 128], sizes = [8, 128], strides = [1, 1]} : vector<8x384xf32> to vector<8x128xf32>
    %362 = vector.extract_strided_slice %359 {offsets = [0, 256], sizes = [8, 128], strides = [1, 1]} : vector<8x384xf32> to vector<8x128xf32>
    %363 = vector.extract_strided_slice %353 {offsets = [0, 384], sizes = [8, 128], strides = [1, 1]} : vector<8x512xf32> to vector<8x128xf32>
    %364 = math.tanh %363 : vector<8x128xf32>
    %365 = arith.mulf %361, %347 : vector<8x128xf32>
    %366 = arith.mulf %360, %364 : vector<8x128xf32>
    %367 = arith.addf %365, %366 : vector<8x128xf32>
    %368 = math.tanh %367 : vector<8x128xf32>
    %369 = arith.mulf %362, %368 : vector<8x128xf32>
    %c144 = arith.constant 144 : index
    %c0_101 = arith.constant 0 : index
    %370 = vector.load %arg8[%c144, %c0_101] : memref<224x512xf32, #tpu.memory_space<vmem>>, vector<8x512xf32>
    %c0_102 = arith.constant 0 : index
    %c0_103 = arith.constant 0 : index
    %371 = vector.load %arg3[%c0_102, %c0_103] : memref<128x512xf32, #tpu.memory_space<vmem>>, vector<128x512xf32>
    %cst_104 = arith.constant dense<0.000000e+00> : vector<8x512xf32>
    %372 = tpu.matmul %369, %371, %cst_104 {dimension_numbers = #tpu.dot_dimension_numbers<[1], [0], [0], [1], [0, 0, 1, 1], [], []>} : vector<8x128xf32>, vector<128x512xf32>, vector<8x512xf32> -> vector<8x512xf32>
    %373 = arith.addf %370, %372 : vector<8x512xf32>
    %374 = vector.extract_strided_slice %373 {offsets = [0, 0], sizes = [8, 384], strides = [1, 1]} : vector<8x512xf32> to vector<8x384xf32>
    %375 = arith.negf %374 : vector<8x384xf32>
    %376 = math.exp %375 : vector<8x384xf32>
    %cst_105 = arith.constant 1.000000e+00 : f32
    %377 = vector.broadcast %cst_105 : f32 to vector<8x384xf32>
    %378 = arith.addf %377, %376 : vector<8x384xf32>
    %379 = arith.divf %377, %378 : vector<8x384xf32>
    %380 = vector.extract_strided_slice %379 {offsets = [0, 0], sizes = [8, 128], strides = [1, 1]} : vector<8x384xf32> to vector<8x128xf32>
    %381 = vector.extract_strided_slice %379 {offsets = [0, 128], sizes = [8, 128], strides = [1, 1]} : vector<8x384xf32> to vector<8x128xf32>
    %382 = vector.extract_strided_slice %379 {offsets = [0, 256], sizes = [8, 128], strides = [1, 1]} : vector<8x384xf32> to vector<8x128xf32>
    %383 = vector.extract_strided_slice %373 {offsets = [0, 384], sizes = [8, 128], strides = [1, 1]} : vector<8x512xf32> to vector<8x128xf32>
    %384 = math.tanh %383 : vector<8x128xf32>
    %385 = arith.mulf %381, %367 : vector<8x128xf32>
    %386 = arith.mulf %380, %384 : vector<8x128xf32>
    %387 = arith.addf %385, %386 : vector<8x128xf32>
    %388 = math.tanh %387 : vector<8x128xf32>
    %389 = arith.mulf %382, %388 : vector<8x128xf32>
    %c152 = arith.constant 152 : index
    %c0_106 = arith.constant 0 : index
    %390 = vector.load %arg8[%c152, %c0_106] : memref<224x512xf32, #tpu.memory_space<vmem>>, vector<8x512xf32>
    %c0_107 = arith.constant 0 : index
    %c0_108 = arith.constant 0 : index
    %391 = vector.load %arg3[%c0_107, %c0_108] : memref<128x512xf32, #tpu.memory_space<vmem>>, vector<128x512xf32>
    %cst_109 = arith.constant dense<0.000000e+00> : vector<8x512xf32>
    %392 = tpu.matmul %389, %391, %cst_109 {dimension_numbers = #tpu.dot_dimension_numbers<[1], [0], [0], [1], [0, 0, 1, 1], [], []>} : vector<8x128xf32>, vector<128x512xf32>, vector<8x512xf32> -> vector<8x512xf32>
    %393 = arith.addf %390, %392 : vector<8x512xf32>
    %394 = vector.extract_strided_slice %393 {offsets = [0, 0], sizes = [8, 384], strides = [1, 1]} : vector<8x512xf32> to vector<8x384xf32>
    %395 = arith.negf %394 : vector<8x384xf32>
    %396 = math.exp %395 : vector<8x384xf32>
    %cst_110 = arith.constant 1.000000e+00 : f32
    %397 = vector.broadcast %cst_110 : f32 to vector<8x384xf32>
    %398 = arith.addf %397, %396 : vector<8x384xf32>
    %399 = arith.divf %397, %398 : vector<8x384xf32>
    %400 = vector.extract_strided_slice %399 {offsets = [0, 0], sizes = [8, 128], strides = [1, 1]} : vector<8x384xf32> to vector<8x128xf32>
    %401 = vector.extract_strided_slice %399 {offsets = [0, 128], sizes = [8, 128], strides = [1, 1]} : vector<8x384xf32> to vector<8x128xf32>
    %402 = vector.extract_strided_slice %399 {offsets = [0, 256], sizes = [8, 128], strides = [1, 1]} : vector<8x384xf32> to vector<8x128xf32>
    %403 = vector.extract_strided_slice %393 {offsets = [0, 384], sizes = [8, 128], strides = [1, 1]} : vector<8x512xf32> to vector<8x128xf32>
    %404 = math.tanh %403 : vector<8x128xf32>
    %405 = arith.mulf %401, %387 : vector<8x128xf32>
    %406 = arith.mulf %400, %404 : vector<8x128xf32>
    %407 = arith.addf %405, %406 : vector<8x128xf32>
    %408 = math.tanh %407 : vector<8x128xf32>
    %409 = arith.mulf %402, %408 : vector<8x128xf32>
    %c160 = arith.constant 160 : index
    %c0_111 = arith.constant 0 : index
    %410 = vector.load %arg8[%c160, %c0_111] : memref<224x512xf32, #tpu.memory_space<vmem>>, vector<8x512xf32>
    %c0_112 = arith.constant 0 : index
    %c0_113 = arith.constant 0 : index
    %411 = vector.load %arg3[%c0_112, %c0_113] : memref<128x512xf32, #tpu.memory_space<vmem>>, vector<128x512xf32>
    %cst_114 = arith.constant dense<0.000000e+00> : vector<8x512xf32>
    %412 = tpu.matmul %409, %411, %cst_114 {dimension_numbers = #tpu.dot_dimension_numbers<[1], [0], [0], [1], [0, 0, 1, 1], [], []>} : vector<8x128xf32>, vector<128x512xf32>, vector<8x512xf32> -> vector<8x512xf32>
    %413 = arith.addf %410, %412 : vector<8x512xf32>
    %414 = vector.extract_strided_slice %413 {offsets = [0, 0], sizes = [8, 384], strides = [1, 1]} : vector<8x512xf32> to vector<8x384xf32>
    %415 = arith.negf %414 : vector<8x384xf32>
    %416 = math.exp %415 : vector<8x384xf32>
    %cst_115 = arith.constant 1.000000e+00 : f32
    %417 = vector.broadcast %cst_115 : f32 to vector<8x384xf32>
    %418 = arith.addf %417, %416 : vector<8x384xf32>
    %419 = arith.divf %417, %418 : vector<8x384xf32>
    %420 = vector.extract_strided_slice %419 {offsets = [0, 0], sizes = [8, 128], strides = [1, 1]} : vector<8x384xf32> to vector<8x128xf32>
    %421 = vector.extract_strided_slice %419 {offsets = [0, 128], sizes = [8, 128], strides = [1, 1]} : vector<8x384xf32> to vector<8x128xf32>
    %422 = vector.extract_strided_slice %419 {offsets = [0, 256], sizes = [8, 128], strides = [1, 1]} : vector<8x384xf32> to vector<8x128xf32>
    %423 = vector.extract_strided_slice %413 {offsets = [0, 384], sizes = [8, 128], strides = [1, 1]} : vector<8x512xf32> to vector<8x128xf32>
    %424 = math.tanh %423 : vector<8x128xf32>
    %425 = arith.mulf %421, %407 : vector<8x128xf32>
    %426 = arith.mulf %420, %424 : vector<8x128xf32>
    %427 = arith.addf %425, %426 : vector<8x128xf32>
    %428 = math.tanh %427 : vector<8x128xf32>
    %429 = arith.mulf %422, %428 : vector<8x128xf32>
    %c168 = arith.constant 168 : index
    %c0_116 = arith.constant 0 : index
    %430 = vector.load %arg8[%c168, %c0_116] : memref<224x512xf32, #tpu.memory_space<vmem>>, vector<8x512xf32>
    %c0_117 = arith.constant 0 : index
    %c0_118 = arith.constant 0 : index
    %431 = vector.load %arg3[%c0_117, %c0_118] : memref<128x512xf32, #tpu.memory_space<vmem>>, vector<128x512xf32>
    %cst_119 = arith.constant dense<0.000000e+00> : vector<8x512xf32>
    %432 = tpu.matmul %429, %431, %cst_119 {dimension_numbers = #tpu.dot_dimension_numbers<[1], [0], [0], [1], [0, 0, 1, 1], [], []>} : vector<8x128xf32>, vector<128x512xf32>, vector<8x512xf32> -> vector<8x512xf32>
    %433 = arith.addf %430, %432 : vector<8x512xf32>
    %434 = vector.extract_strided_slice %433 {offsets = [0, 0], sizes = [8, 384], strides = [1, 1]} : vector<8x512xf32> to vector<8x384xf32>
    %435 = arith.negf %434 : vector<8x384xf32>
    %436 = math.exp %435 : vector<8x384xf32>
    %cst_120 = arith.constant 1.000000e+00 : f32
    %437 = vector.broadcast %cst_120 : f32 to vector<8x384xf32>
    %438 = arith.addf %437, %436 : vector<8x384xf32>
    %439 = arith.divf %437, %438 : vector<8x384xf32>
    %440 = vector.extract_strided_slice %439 {offsets = [0, 0], sizes = [8, 128], strides = [1, 1]} : vector<8x384xf32> to vector<8x128xf32>
    %441 = vector.extract_strided_slice %439 {offsets = [0, 128], sizes = [8, 128], strides = [1, 1]} : vector<8x384xf32> to vector<8x128xf32>
    %442 = vector.extract_strided_slice %439 {offsets = [0, 256], sizes = [8, 128], strides = [1, 1]} : vector<8x384xf32> to vector<8x128xf32>
    %443 = vector.extract_strided_slice %433 {offsets = [0, 384], sizes = [8, 128], strides = [1, 1]} : vector<8x512xf32> to vector<8x128xf32>
    %444 = math.tanh %443 : vector<8x128xf32>
    %445 = arith.mulf %441, %427 : vector<8x128xf32>
    %446 = arith.mulf %440, %444 : vector<8x128xf32>
    %447 = arith.addf %445, %446 : vector<8x128xf32>
    %448 = math.tanh %447 : vector<8x128xf32>
    %449 = arith.mulf %442, %448 : vector<8x128xf32>
    %c176 = arith.constant 176 : index
    %c0_121 = arith.constant 0 : index
    %450 = vector.load %arg8[%c176, %c0_121] : memref<224x512xf32, #tpu.memory_space<vmem>>, vector<8x512xf32>
    %c0_122 = arith.constant 0 : index
    %c0_123 = arith.constant 0 : index
    %451 = vector.load %arg3[%c0_122, %c0_123] : memref<128x512xf32, #tpu.memory_space<vmem>>, vector<128x512xf32>
    %cst_124 = arith.constant dense<0.000000e+00> : vector<8x512xf32>
    %452 = tpu.matmul %449, %451, %cst_124 {dimension_numbers = #tpu.dot_dimension_numbers<[1], [0], [0], [1], [0, 0, 1, 1], [], []>} : vector<8x128xf32>, vector<128x512xf32>, vector<8x512xf32> -> vector<8x512xf32>
    %453 = arith.addf %450, %452 : vector<8x512xf32>
    %454 = vector.extract_strided_slice %453 {offsets = [0, 0], sizes = [8, 384], strides = [1, 1]} : vector<8x512xf32> to vector<8x384xf32>
    %455 = arith.negf %454 : vector<8x384xf32>
    %456 = math.exp %455 : vector<8x384xf32>
    %cst_125 = arith.constant 1.000000e+00 : f32
    %457 = vector.broadcast %cst_125 : f32 to vector<8x384xf32>
    %458 = arith.addf %457, %456 : vector<8x384xf32>
    %459 = arith.divf %457, %458 : vector<8x384xf32>
    %460 = vector.extract_strided_slice %459 {offsets = [0, 0], sizes = [8, 128], strides = [1, 1]} : vector<8x384xf32> to vector<8x128xf32>
    %461 = vector.extract_strided_slice %459 {offsets = [0, 128], sizes = [8, 128], strides = [1, 1]} : vector<8x384xf32> to vector<8x128xf32>
    %462 = vector.extract_strided_slice %459 {offsets = [0, 256], sizes = [8, 128], strides = [1, 1]} : vector<8x384xf32> to vector<8x128xf32>
    %463 = vector.extract_strided_slice %453 {offsets = [0, 384], sizes = [8, 128], strides = [1, 1]} : vector<8x512xf32> to vector<8x128xf32>
    %464 = math.tanh %463 : vector<8x128xf32>
    %465 = arith.mulf %461, %447 : vector<8x128xf32>
    %466 = arith.mulf %460, %464 : vector<8x128xf32>
    %467 = arith.addf %465, %466 : vector<8x128xf32>
    %468 = math.tanh %467 : vector<8x128xf32>
    %469 = arith.mulf %462, %468 : vector<8x128xf32>
    %c184 = arith.constant 184 : index
    %c0_126 = arith.constant 0 : index
    %470 = vector.load %arg8[%c184, %c0_126] : memref<224x512xf32, #tpu.memory_space<vmem>>, vector<8x512xf32>
    %c0_127 = arith.constant 0 : index
    %c0_128 = arith.constant 0 : index
    %471 = vector.load %arg3[%c0_127, %c0_128] : memref<128x512xf32, #tpu.memory_space<vmem>>, vector<128x512xf32>
    %cst_129 = arith.constant dense<0.000000e+00> : vector<8x512xf32>
    %472 = tpu.matmul %469, %471, %cst_129 {dimension_numbers = #tpu.dot_dimension_numbers<[1], [0], [0], [1], [0, 0, 1, 1], [], []>} : vector<8x128xf32>, vector<128x512xf32>, vector<8x512xf32> -> vector<8x512xf32>
    %473 = arith.addf %470, %472 : vector<8x512xf32>
    %474 = vector.extract_strided_slice %473 {offsets = [0, 0], sizes = [8, 384], strides = [1, 1]} : vector<8x512xf32> to vector<8x384xf32>
    %475 = arith.negf %474 : vector<8x384xf32>
    %476 = math.exp %475 : vector<8x384xf32>
    %cst_130 = arith.constant 1.000000e+00 : f32
    %477 = vector.broadcast %cst_130 : f32 to vector<8x384xf32>
    %478 = arith.addf %477, %476 : vector<8x384xf32>
    %479 = arith.divf %477, %478 : vector<8x384xf32>
    %480 = vector.extract_strided_slice %479 {offsets = [0, 0], sizes = [8, 128], strides = [1, 1]} : vector<8x384xf32> to vector<8x128xf32>
    %481 = vector.extract_strided_slice %479 {offsets = [0, 128], sizes = [8, 128], strides = [1, 1]} : vector<8x384xf32> to vector<8x128xf32>
    %482 = vector.extract_strided_slice %479 {offsets = [0, 256], sizes = [8, 128], strides = [1, 1]} : vector<8x384xf32> to vector<8x128xf32>
    %483 = vector.extract_strided_slice %473 {offsets = [0, 384], sizes = [8, 128], strides = [1, 1]} : vector<8x512xf32> to vector<8x128xf32>
    %484 = math.tanh %483 : vector<8x128xf32>
    %485 = arith.mulf %481, %467 : vector<8x128xf32>
    %486 = arith.mulf %480, %484 : vector<8x128xf32>
    %487 = arith.addf %485, %486 : vector<8x128xf32>
    %488 = math.tanh %487 : vector<8x128xf32>
    %489 = arith.mulf %482, %488 : vector<8x128xf32>
    %c192 = arith.constant 192 : index
    %c0_131 = arith.constant 0 : index
    %490 = vector.load %arg8[%c192, %c0_131] : memref<224x512xf32, #tpu.memory_space<vmem>>, vector<8x512xf32>
    %c0_132 = arith.constant 0 : index
    %c0_133 = arith.constant 0 : index
    %491 = vector.load %arg3[%c0_132, %c0_133] : memref<128x512xf32, #tpu.memory_space<vmem>>, vector<128x512xf32>
    %cst_134 = arith.constant dense<0.000000e+00> : vector<8x512xf32>
    %492 = tpu.matmul %489, %491, %cst_134 {dimension_numbers = #tpu.dot_dimension_numbers<[1], [0], [0], [1], [0, 0, 1, 1], [], []>} : vector<8x128xf32>, vector<128x512xf32>, vector<8x512xf32> -> vector<8x512xf32>
    %493 = arith.addf %490, %492 : vector<8x512xf32>
    %494 = vector.extract_strided_slice %493 {offsets = [0, 0], sizes = [8, 384], strides = [1, 1]} : vector<8x512xf32> to vector<8x384xf32>
    %495 = arith.negf %494 : vector<8x384xf32>
    %496 = math.exp %495 : vector<8x384xf32>
    %cst_135 = arith.constant 1.000000e+00 : f32
    %497 = vector.broadcast %cst_135 : f32 to vector<8x384xf32>
    %498 = arith.addf %497, %496 : vector<8x384xf32>
    %499 = arith.divf %497, %498 : vector<8x384xf32>
    %500 = vector.extract_strided_slice %499 {offsets = [0, 0], sizes = [8, 128], strides = [1, 1]} : vector<8x384xf32> to vector<8x128xf32>
    %501 = vector.extract_strided_slice %499 {offsets = [0, 128], sizes = [8, 128], strides = [1, 1]} : vector<8x384xf32> to vector<8x128xf32>
    %502 = vector.extract_strided_slice %499 {offsets = [0, 256], sizes = [8, 128], strides = [1, 1]} : vector<8x384xf32> to vector<8x128xf32>
    %503 = vector.extract_strided_slice %493 {offsets = [0, 384], sizes = [8, 128], strides = [1, 1]} : vector<8x512xf32> to vector<8x128xf32>
    %504 = math.tanh %503 : vector<8x128xf32>
    %505 = arith.mulf %501, %487 : vector<8x128xf32>
    %506 = arith.mulf %500, %504 : vector<8x128xf32>
    %507 = arith.addf %505, %506 : vector<8x128xf32>
    %508 = math.tanh %507 : vector<8x128xf32>
    %509 = arith.mulf %502, %508 : vector<8x128xf32>
    %c200 = arith.constant 200 : index
    %c0_136 = arith.constant 0 : index
    %510 = vector.load %arg8[%c200, %c0_136] : memref<224x512xf32, #tpu.memory_space<vmem>>, vector<8x512xf32>
    %c0_137 = arith.constant 0 : index
    %c0_138 = arith.constant 0 : index
    %511 = vector.load %arg3[%c0_137, %c0_138] : memref<128x512xf32, #tpu.memory_space<vmem>>, vector<128x512xf32>
    %cst_139 = arith.constant dense<0.000000e+00> : vector<8x512xf32>
    %512 = tpu.matmul %509, %511, %cst_139 {dimension_numbers = #tpu.dot_dimension_numbers<[1], [0], [0], [1], [0, 0, 1, 1], [], []>} : vector<8x128xf32>, vector<128x512xf32>, vector<8x512xf32> -> vector<8x512xf32>
    %513 = arith.addf %510, %512 : vector<8x512xf32>
    %514 = vector.extract_strided_slice %513 {offsets = [0, 0], sizes = [8, 384], strides = [1, 1]} : vector<8x512xf32> to vector<8x384xf32>
    %515 = arith.negf %514 : vector<8x384xf32>
    %516 = math.exp %515 : vector<8x384xf32>
    %cst_140 = arith.constant 1.000000e+00 : f32
    %517 = vector.broadcast %cst_140 : f32 to vector<8x384xf32>
    %518 = arith.addf %517, %516 : vector<8x384xf32>
    %519 = arith.divf %517, %518 : vector<8x384xf32>
    %520 = vector.extract_strided_slice %519 {offsets = [0, 0], sizes = [8, 128], strides = [1, 1]} : vector<8x384xf32> to vector<8x128xf32>
    %521 = vector.extract_strided_slice %519 {offsets = [0, 128], sizes = [8, 128], strides = [1, 1]} : vector<8x384xf32> to vector<8x128xf32>
    %522 = vector.extract_strided_slice %519 {offsets = [0, 256], sizes = [8, 128], strides = [1, 1]} : vector<8x384xf32> to vector<8x128xf32>
    %523 = vector.extract_strided_slice %513 {offsets = [0, 384], sizes = [8, 128], strides = [1, 1]} : vector<8x512xf32> to vector<8x128xf32>
    %524 = math.tanh %523 : vector<8x128xf32>
    %525 = arith.mulf %521, %507 : vector<8x128xf32>
    %526 = arith.mulf %520, %524 : vector<8x128xf32>
    %527 = arith.addf %525, %526 : vector<8x128xf32>
    %528 = math.tanh %527 : vector<8x128xf32>
    %529 = arith.mulf %522, %528 : vector<8x128xf32>
    %c208 = arith.constant 208 : index
    %c0_141 = arith.constant 0 : index
    %530 = vector.load %arg8[%c208, %c0_141] : memref<224x512xf32, #tpu.memory_space<vmem>>, vector<8x512xf32>
    %c0_142 = arith.constant 0 : index
    %c0_143 = arith.constant 0 : index
    %531 = vector.load %arg3[%c0_142, %c0_143] : memref<128x512xf32, #tpu.memory_space<vmem>>, vector<128x512xf32>
    %cst_144 = arith.constant dense<0.000000e+00> : vector<8x512xf32>
    %532 = tpu.matmul %529, %531, %cst_144 {dimension_numbers = #tpu.dot_dimension_numbers<[1], [0], [0], [1], [0, 0, 1, 1], [], []>} : vector<8x128xf32>, vector<128x512xf32>, vector<8x512xf32> -> vector<8x512xf32>
    %533 = arith.addf %530, %532 : vector<8x512xf32>
    %534 = vector.extract_strided_slice %533 {offsets = [0, 0], sizes = [8, 384], strides = [1, 1]} : vector<8x512xf32> to vector<8x384xf32>
    %535 = arith.negf %534 : vector<8x384xf32>
    %536 = math.exp %535 : vector<8x384xf32>
    %cst_145 = arith.constant 1.000000e+00 : f32
    %537 = vector.broadcast %cst_145 : f32 to vector<8x384xf32>
    %538 = arith.addf %537, %536 : vector<8x384xf32>
    %539 = arith.divf %537, %538 : vector<8x384xf32>
    %540 = vector.extract_strided_slice %539 {offsets = [0, 0], sizes = [8, 128], strides = [1, 1]} : vector<8x384xf32> to vector<8x128xf32>
    %541 = vector.extract_strided_slice %539 {offsets = [0, 128], sizes = [8, 128], strides = [1, 1]} : vector<8x384xf32> to vector<8x128xf32>
    %542 = vector.extract_strided_slice %539 {offsets = [0, 256], sizes = [8, 128], strides = [1, 1]} : vector<8x384xf32> to vector<8x128xf32>
    %543 = vector.extract_strided_slice %533 {offsets = [0, 384], sizes = [8, 128], strides = [1, 1]} : vector<8x512xf32> to vector<8x128xf32>
    %544 = math.tanh %543 : vector<8x128xf32>
    %545 = arith.mulf %541, %527 : vector<8x128xf32>
    %546 = arith.mulf %540, %544 : vector<8x128xf32>
    %547 = arith.addf %545, %546 : vector<8x128xf32>
    %548 = math.tanh %547 : vector<8x128xf32>
    %549 = arith.mulf %542, %548 : vector<8x128xf32>
    %c216 = arith.constant 216 : index
    %c0_146 = arith.constant 0 : index
    %550 = vector.load %arg8[%c216, %c0_146] : memref<224x512xf32, #tpu.memory_space<vmem>>, vector<8x512xf32>
    %c0_147 = arith.constant 0 : index
    %c0_148 = arith.constant 0 : index
    %551 = vector.load %arg3[%c0_147, %c0_148] : memref<128x512xf32, #tpu.memory_space<vmem>>, vector<128x512xf32>
    %cst_149 = arith.constant dense<0.000000e+00> : vector<8x512xf32>
    %552 = tpu.matmul %549, %551, %cst_149 {dimension_numbers = #tpu.dot_dimension_numbers<[1], [0], [0], [1], [0, 0, 1, 1], [], []>} : vector<8x128xf32>, vector<128x512xf32>, vector<8x512xf32> -> vector<8x512xf32>
    %553 = arith.addf %550, %552 : vector<8x512xf32>
    %554 = vector.extract_strided_slice %553 {offsets = [0, 0], sizes = [8, 384], strides = [1, 1]} : vector<8x512xf32> to vector<8x384xf32>
    %555 = arith.negf %554 : vector<8x384xf32>
    %556 = math.exp %555 : vector<8x384xf32>
    %cst_150 = arith.constant 1.000000e+00 : f32
    %557 = vector.broadcast %cst_150 : f32 to vector<8x384xf32>
    %558 = arith.addf %557, %556 : vector<8x384xf32>
    %559 = arith.divf %557, %558 : vector<8x384xf32>
    %560 = vector.extract_strided_slice %559 {offsets = [0, 0], sizes = [8, 128], strides = [1, 1]} : vector<8x384xf32> to vector<8x128xf32>
    %561 = vector.extract_strided_slice %559 {offsets = [0, 128], sizes = [8, 128], strides = [1, 1]} : vector<8x384xf32> to vector<8x128xf32>
    %562 = vector.extract_strided_slice %559 {offsets = [0, 256], sizes = [8, 128], strides = [1, 1]} : vector<8x384xf32> to vector<8x128xf32>
    %563 = vector.extract_strided_slice %553 {offsets = [0, 384], sizes = [8, 128], strides = [1, 1]} : vector<8x512xf32> to vector<8x128xf32>
    %564 = math.tanh %563 : vector<8x128xf32>
    %565 = arith.mulf %561, %547 : vector<8x128xf32>
    %566 = arith.mulf %560, %564 : vector<8x128xf32>
    %567 = arith.addf %565, %566 : vector<8x128xf32>
    %568 = math.tanh %567 : vector<8x128xf32>
    %569 = arith.mulf %562, %568 : vector<8x128xf32>
    %c0_151 = arith.constant 0 : index
    %c0_152 = arith.constant 0 : index
    %570 = vector.load %arg5[%c0_151, %c0_152] : memref<128x128xf32, #tpu.memory_space<vmem>>, vector<128x128xf32>
    %cst_153 = arith.constant dense<0.000000e+00> : vector<8x128xf32>
    %571 = tpu.matmul %569, %570, %cst_153 {dimension_numbers = #tpu.dot_dimension_numbers<[1], [0], [0], [1], [0, 0, 1, 1], [], []>} : vector<8x128xf32>, vector<128x128xf32>, vector<8x128xf32> -> vector<8x128xf32>
    %c0_154 = arith.constant 0 : index
    %c0_155 = arith.constant 0 : index
    %572 = vector.load %arg6[%c0_154, %c0_155] : memref<1x128xf32, #tpu.memory_space<vmem>>, vector<1x128xf32>
    %573 = vector.broadcast %572 : vector<1x128xf32> to vector<8x128xf32>
    %574 = arith.addf %571, %573 : vector<8x128xf32>
    %c0_156 = arith.constant 0 : index
    %c0_157 = arith.constant 0 : index
    %c0_158 = arith.constant 0 : index
    %575 = vector.load %arg7[%c0_156, %c0_157, %c0_158] : memref<1x8x128xf32, #tpu.memory_space<vmem>>, vector<1x8x128xf32>
    %576 = vector.shape_cast %575 : vector<1x8x128xf32> to vector<8x128xf32>
    %577 = vector.shape_cast %574 : vector<8x128xf32> to vector<1x8x128xf32>
    tpu.vector_store %arg7[%c0_156, %c0_157, %c0_158], %577 {strides = array<i32>} : memref<1x8x128xf32, #tpu.memory_space<vmem>>, vector<1x8x128xf32>,
    return
  }
  func.func @transform_0(%arg0: i32) -> (i32, i32, i32) {
    %c0_i32 = arith.constant 0 : i32
    %c0_i32_0 = arith.constant 0 : i32
    %c0_i32_1 = arith.constant 0 : i32
    return %arg0, %c0_i32, %c0_i32_0 : i32, i32, i32
  }
  func.func @transform_1(%arg0: i32) -> (i32, i32) {
    %c0_i32 = arith.constant 0 : i32
    %c0_i32_0 = arith.constant 0 : i32
    %c0_i32_1 = arith.constant 0 : i32
    return %c0_i32, %c0_i32_0 : i32, i32
  }
  func.func @transform_2(%arg0: i32) -> (i32, i32) {
    %c0_i32 = arith.constant 0 : i32
    %c0_i32_0 = arith.constant 0 : i32
    %c0_i32_1 = arith.constant 0 : i32
    return %c0_i32, %c0_i32_0 : i32, i32
  }
  func.func @transform_3(%arg0: i32) -> (i32, i32) {
    %c0_i32 = arith.constant 0 : i32
    %c0_i32_0 = arith.constant 0 : i32
    %c0_i32_1 = arith.constant 0 : i32
    return %c0_i32, %c0_i32_0 : i32, i32
  }
  func.func @transform_4(%arg0: i32) -> (i32, i32) {
    %c0_i32 = arith.constant 0 : i32
    %c0_i32_0 = arith.constant 0 : i32
    %c0_i32_1 = arith.constant 0 : i32
    return %c0_i32, %c0_i32_0 : i32, i32
  }
  func.func @transform_5(%arg0: i32) -> (i32, i32) {
    %c0_i32 = arith.constant 0 : i32
    %c0_i32_0 = arith.constant 0 : i32
    %c0_i32_1 = arith.constant 0 : i32
    return %c0_i32, %c0_i32_0 : i32, i32
  }
  func.func @transform_6(%arg0: i32) -> (i32, i32, i32) {
    %c0_i32 = arith.constant 0 : i32
    %c0_i32_0 = arith.constant 0 : i32
    %c0_i32_1 = arith.constant 0 : i32
    return %arg0, %c0_i32, %c0_i32_0 : i32, i32, i32
  }
}

</mosaic_0001>

<llo_original>
// kernel: tpu_custom_call.1
$region0: #{tpu_custom_call.1}
  #allocation0 [shape = 'u32[]', space=smem, size = 0x4, offset = 0x4, fixed_abs, tag = 'smem constant byte address 0x4 - core index']
  #allocation1 [shape = 'u32[144,128]{1,0:T(1,128)}', space=vmem, size = 0x12000, scoped, tag = 'internal scratch']
  #allocation2 [shape = 'f32[224,512]{1,0:T(8,128)}', space=vmem, size = 0x70000, scoped, tag = 'scratch operand']
  %s0 = inlined_call_operand.vmem [shape: f32[1,224,28], index: 0, kind: input, shape index: {}]
  %s1 = inlined_call_operand.vmem [shape: f32[28,512], index: 1, kind: input, shape index: {}]
  %s2 = inlined_call_operand.hbm [shape: f32[128,512], index: 2, kind: input, shape index: {}]
  %s3 = inlined_call_operand.vmem [shape: f32[1,512], index: 3, kind: input, shape index: {}]
  %s4 = inlined_call_operand.vmem [shape: f32[128,128], index: 4, kind: input, shape index: {}]
  %s5 = inlined_call_operand.vmem [shape: f32[1,128], index: 5, kind: input, shape index: {}]
  %s6 = inlined_call_operand.hbm [shape: f32[1,8,128], index: 6, kind: output, shape index: {}]
  %s7 = sld [smem:[#allocation0]]
  $region38: #{tpu_custom_call.1} parent=0
    _
  %s9 = ssub.s32 1, %s7
  %s10 = scalar_select 0, %s9, %s7
  $region1: #{tpu_custom_call.1} parent=0
    #allocation3 [shape = 'u8[262144]{0}', space=vmem, size = 0x40000, scoped, tag = 'input window, operand 2, single buffered']
    #allocation4 [shape = 's32[1]{0}', space=sflag, size = 0x4, scoped, tag = 'scoped memory for tpu_custom_call.1']
    #allocation5 [shape = 's32[1]{0}', space=sflag, size = 0x4, scoped, tag = 'scoped memory for tpu_custom_call.1']
    #allocation6 [shape = 'u8[4096]{0}', space=vmem, size = 0x1000, scoped, tag = 'output window, operand 0, single buffered']
    %11 = vsyncpa [#allocation4], 0
    %12 = vsyncpa [#allocation5], 0
    // Predicated region
    $region2: #{tpu_custom_call.1} parent=1 // pred_check
      _
    $region3: #{tpu_custom_call.1} parent=1 // pred_check_branch
      %14 = sbr.rel (0) target = $region5
    $region4: #{tpu_custom_call.1} parent=1 // pred_region
      _
    $region5: #{tpu_custom_call.1} parent=1 // pred_fallthru
      _
    // Predicated region
    $region6: #{tpu_custom_call.1} parent=1 // pred_check
      _
    $region7: #{tpu_custom_call.1} parent=1 // pred_check_branch
      %16 = sbr.rel (0) target = $region9
    $region8: #{tpu_custom_call.1} parent=1 // pred_region
      _
    $region9: #{tpu_custom_call.1} parent=1 // pred_fallthru
      _
    // Predicated region
    $region10: #{tpu_custom_call.1} parent=1 // pred_check
      _
    $region11: #{tpu_custom_call.1} parent=1 // pred_check_branch
      %18 = sbr.rel (0) target = $region13
    $region12: #{tpu_custom_call.1} parent=1 // pred_region
      %s20 = ssub.s32 8192, 8192
      %21 = vsyncadd [#allocation4], %s20
      %s22 = sshll.u32 [#allocation3], 4
      %s23 = int_to_ptr.vmem [resolvable:$true] %s22
      %28 = dma.hbm_to_vmem [thread:$0]  %s2, 8192, %s23, [#allocation4], 512, 512, 32
    $region13: #{tpu_custom_call.1} parent=1 // pred_fallthru
      _
    // Predicated region
    $region14: #{tpu_custom_call.1} parent=1 // pred_check
      _
    $region15: #{tpu_custom_call.1} parent=1 // pred_check_branch
      %30 = sbr.rel (0) target = $region17
    $region16: #{tpu_custom_call.1} parent=1 // pred_region
      _
    $region17: #{tpu_custom_call.1} parent=1 // pred_fallthru
      _
    // Predicated region
    $region18: #{tpu_custom_call.1} parent=1 // pred_check
      _
    $region19: #{tpu_custom_call.1} parent=1 // pred_check_branch
      %32 = sbr.rel (0) target = $region21
    $region20: #{tpu_custom_call.1} parent=1 // pred_region
      _
    $region21: #{tpu_custom_call.1} parent=1 // pred_fallthru
      _
    // Predicated region
    $region22: #{tpu_custom_call.1} parent=1 // pred_check
      _
    $region23: #{tpu_custom_call.1} parent=1 // pred_check_branch
      %34 = sbr.rel (0) target = $region25
    $region24: #{tpu_custom_call.1} parent=1 // pred_region
      _
    $region25: #{tpu_custom_call.1} parent=1 // pred_fallthru
      _
    // Predicated region
    $region26: #{tpu_custom_call.1} parent=1 // pred_check
      _
    $region27: #{tpu_custom_call.1} parent=1 // pred_check_branch
      %36 = sbr.rel (0) target = $region29
    $region28: #{tpu_custom_call.1} parent=1 // pred_region
      %37 = dma.done [#allocation4], 8192
    $region29: #{tpu_custom_call.1} parent=1 // pred_fallthru
      _
    %v38 = vld [vmem:[%s0] sm:$0xff]
    %v39 = vld [vmem:[%s0 + $0x8] sm:$0xff]
    %v40 = vld [vmem:[%s0 + $0x10] sm:$0xff]
    %v41 = vld [vmem:[%s0 + $0x18] sm:$0xff]
    %v42 = vld [vmem:[%s0 + $0x20] sm:$0xff]
    %v43 = vld [vmem:[%s0 + $0x28] sm:$0xff]
    %v44 = vld [vmem:[%s0 + $0x30] sm:$0xff]
    %v45 = vld [vmem:[%s0 + $0x38] sm:$0xff]
    %v46 = vld [vmem:[%s0 + $0x40] sm:$0xff]
    %v47 = vld [vmem:[%s0 + $0x48] sm:$0xff]
    %v48 = vld [vmem:[%s0 + $0x50] sm:$0xff]
    %v49 = vld [vmem:[%s0 + $0x58] sm:$0xff]
    %v50 = vld [vmem:[%s0 + $0x60] sm:$0xff]
    %v51 = vld [vmem:[%s0 + $0x68] sm:$0xff]
    %v52 = vld [vmem:[%s0 + $0x70] sm:$0xff]
    %v53 = vld [vmem:[%s0 + $0x78] sm:$0xff]
    %v54 = vld [vmem:[%s0 + $0x80] sm:$0xff]
    %v55 = vld [vmem:[%s0 + $0x88] sm:$0xff]
    %v56 = vld [vmem:[%s0 + $0x90] sm:$0xff]
    %v57 = vld [vmem:[%s0 + $0x98] sm:$0xff]
    %v58 = vld [vmem:[%s0 + $0xa0] sm:$0xff]
    %v59 = vld [vmem:[%s0 + $0xa8] sm:$0xff]
    %v60 = vld [vmem:[%s0 + $0xb0] sm:$0xff]
    %v61 = vld [vmem:[%s0 + $0xb8] sm:$0xff]
    %v62 = vld [vmem:[%s0 + $0xc0] sm:$0xff]
    %v63 = vld [vmem:[%s0 + $0xc8] sm:$0xff]
    %v64 = vld [vmem:[%s0 + $0xd0] sm:$0xff]
    %v65 = vld [vmem:[%s0 + $0xd8] sm:$0xff]
    %v66 = vld [vmem:[%s1] sm:$0xff]
    %v67 = vld [vmem:[%s1 + $0x8] sm:$0xff]
    %v68 = vld [vmem:[%s1 + $0x10] sm:$0xff]
    %v69 = vld [vmem:[%s1 + $0x18] sm:$0xff]
    %v70 = vld [vmem:[%s1 + $0x20] sm:$0xff]
    %v71 = vld [vmem:[%s1 + $0x28] sm:$0xff]
    %v72 = vld [vmem:[%s1 + $0x30] sm:$0xff]
    %v73 = vld [vmem:[%s1 + $0x38] sm:$0xff]
    %v74 = vld [vmem:[%s1 + $0x40] sm:$0xff]
    %v75 = vld [vmem:[%s1 + $0x48] sm:$0xff]
    %v76 = vld [vmem:[%s1 + $0x50] sm:$0xff]
    %v77 = vld [vmem:[%s1 + $0x58] sm:$0xff]
    %v78 = vld [vmem:[%s1 + $0x60] sm:$0xf]
    %v79 = vld [vmem:[%s1 + $0x68] sm:$0xf]
    %v80 = vld [vmem:[%s1 + $0x70] sm:$0xf]
    %v81 = vld [vmem:[%s1 + $0x78] sm:$0xf]
    %v82 = vld [vmem:[%s3] sm:$0xf]
    %v84 = vlaneseq
    %v85 = vshrl.u32 %v84, 7
    %v86 = vsub.s32 0, %v85
    %v87 = vrot.slane %v82, %v86
    %v88 = vlaneseq
    %v89 = vshrl.u32 %v88, 7
    %v90 = vsub.s32 1, %v89
    %v91 = vrot.slane %v82, %v90
    %v92 = vlaneseq
    %v93 = vshrl.u32 %v92, 7
    %v94 = vsub.s32 2, %v93
    %v95 = vrot.slane %v82, %v94
    %v96 = vlaneseq
    %v97 = vshrl.u32 %v96, 7
    %v98 = vsub.s32 3, %v97
    %v99 = vrot.slane %v82, %v98
    %vm104 = vcmask 228352
    %v106 = vsel %vm104, %v38, 0
    %v109 = vsel %vm104, %v39, 0
    %v112 = vsel %vm104, %v40, 0
    %v115 = vsel %vm104, %v41, 0
    %v118 = vsel %vm104, %v42, 0
    %v121 = vsel %vm104, %v43, 0
    %v124 = vsel %vm104, %v44, 0
    %v127 = vsel %vm104, %v45, 0
    %v130 = vsel %vm104, %v46, 0
    %v133 = vsel %vm104, %v47, 0
    %v136 = vsel %vm104, %v48, 0
    %v139 = vsel %vm104, %v49, 0
    %v142 = vsel %vm104, %v50, 0
    %v145 = vsel %vm104, %v51, 0
    %v148 = vsel %vm104, %v52, 0
    %v151 = vsel %vm104, %v53, 0
    %v154 = vsel %vm104, %v54, 0
    %v157 = vsel %vm104, %v55, 0
    %v160 = vsel %vm104, %v56, 0
    %v163 = vsel %vm104, %v57, 0
    %v166 = vsel %vm104, %v58, 0
    %v169 = vsel %vm104, %v59, 0
    %v172 = vsel %vm104, %v60, 0
    %v175 = vsel %vm104, %v61, 0
    %v178 = vsel %vm104, %v62, 0
    %v181 = vsel %vm104, %v63, 0
    %v184 = vsel %vm104, %v64, 0
    %v187 = vsel %vm104, %v65, 0
    %vm189 = vcmask 1043456
    %v191 = vsel %vm189, %v78, 0
    %v194 = vsel %vm189, %v79, 0
    %v197 = vsel %vm189, %v80, 0
    %v200 = vsel %vm189, %v81, 0
    %202 = vmatprep.subr.mxu0 0.0
    %203 = vmatpush1.msra.mxu0 0.0
    %204 = vmatprep.subr.mxu0 0.0
    %205 = vmatpush1.msra.mxu0 0.0
    %206 = vmatprep.subr.mxu0 0.0
    %207 = vmatpush1.msra.mxu0 0.0
    %208 = vmatprep.subr.mxu0 0.0
    %209 = vmatpush1.msra.mxu0 0.0
    %210 = vmatprep.subr.mxu0 0.0
    %211 = vmatpush1.msra.mxu0 0.0
    %212 = vmatprep.subr.mxu0 0.0
    %213 = vmatpush1.msra.mxu0 0.0
    %214 = vmatprep.subr.mxu0 0.0
    %215 = vmatpush1.msra.mxu0 0.0
    %216 = vmatprep.subr.mxu0 0.0
    %217 = vmatpush1.msra.mxu0 0.0
    %218 = vmatprep.subr.mxu0 0.0
    %219 = vmatpush1.msra.mxu0 0.0
    %220 = vmatprep.subr.mxu0 0.0
    %221 = vmatpush1.msra.mxu0 0.0
    %222 = vmatprep.subr.mxu0 0.0
    %223 = vmatpush1.msra.mxu0 0.0
    %224 = vmatprep.subr.mxu0 0.0
    %225 = vmatpush1.msra.mxu0 0.0
    %226 = vmatprep.subr.mxu0 %v194
    %227 = vmatpush1.msra.mxu0 %v191
    %228 = vmatprep.subr.mxu0 %v75
    %229 = vmatpush1.msra.mxu0 %v74
    %230 = vmatprep.subr.mxu0 %v71
    %231 = vmatpush1.msra.mxu0 %v70
    %232 = vmatprep.subr.mxu0 %v67
    %233 = vmatpush1.msra.mxu0 %v66
    %234 = vmatprep.subr.mxu0 0.0
    %235 = vmatpush2.msra.mxu0 0.0
    %236 = vmatprep.subr.mxu0 0.0
    %237 = vmatpush2.msra.mxu0 0.0
    %238 = vmatprep.subr.mxu0 0.0
    %239 = vmatpush2.msra.mxu0 0.0
    %240 = vmatprep.subr.mxu0 0.0
    %241 = vmatpush2.msra.mxu0 0.0
    %242 = vmatprep.subr.mxu0 0.0
    %243 = vmatpush2.msra.mxu0 0.0
    %244 = vmatprep.subr.mxu0 0.0
    %245 = vmatpush2.msra.mxu0 0.0
    %246 = vmatprep.subr.mxu0 0.0
    %247 = vmatpush2.msra.mxu0 0.0
    %248 = vmatprep.subr.mxu0 0.0
    %249 = vmatpush2.msra.mxu0 0.0
    %250 = vmatprep.subr.mxu0 0.0
    %251 = vmatpush2.msra.mxu0 0.0
    %252 = vmatprep.subr.mxu0 0.0
    %253 = vmatpush2.msra.mxu0 0.0
    %254 = vmatprep.subr.mxu0 0.0
    %255 = vmatpush2.msra.mxu0 0.0
    %256 = vmatprep.subr.mxu0 0.0
    %257 = vmatpush2.msra.mxu0 0.0
    %258 = vmatprep.subr.mxu0 0.0
    %259 = vmatpush2.msra.mxu0 0.0
    %260 = vmatprep.subr.mxu0 0.0
    %261 = vmatpush2.msra.mxu0 0.0
    %262 = vmatprep.subr.mxu0 0.0
    %263 = vmatpush2.msra.mxu0 0.0
    %264 = vmatprep.subr.mxu0 0.0
    %265 = vmatpush2.msra.mxu0 0.0
    %266 = vmatprep.mubr.f32.mxu0 0.0
    %267 = vmatmul.mubr.f32.gmra.mxu0 %v106
    %v268 = vpop.f32.mrf.mxu0
    %v269 = vadd.f32 %v87, %v268
    %v270 = vpop.f32.mrf.mxu0
    %v271 = vadd.f32 %v91, %v270
    %272 = vmatprep.mubr.f32.mxu0 0.0
    %273 = vmatmul.mubr.f32.gmra.mxu0 %v109
    %v274 = vpop.f32.mrf.mxu0
    %v275 = vadd.f32 %v87, %v274
    %v276 = vpop.f32.mrf.mxu0
    %v277 = vadd.f32 %v91, %v276
    %278 = vmatprep.mubr.f32.mxu0 0.0
    %279 = vmatmul.mubr.f32.gmra.mxu0 %v112
    %v280 = vpop.f32.mrf.mxu0
    %v281 = vadd.f32 %v87, %v280
    %v282 = vpop.f32.mrf.mxu0
    %v283 = vadd.f32 %v91, %v282
    %284 = vmatprep.mubr.f32.mxu0 0.0
    %285 = vmatmul.mubr.f32.gmra.mxu0 %v115
    %v286 = vpop.f32.mrf.mxu0
    %v287 = vadd.f32 %v87, %v286
    %v288 = vpop.f32.mrf.mxu0
    %v289 = vadd.f32 %v91, %v288
    %290 = vmatprep.mubr.f32.mxu0 0.0
    %291 = vmatmul.mubr.f32.gmra.mxu0 %v118
    %v292 = vpop.f32.mrf.mxu0
    %v293 = vadd.f32 %v87, %v292
    %v294 = vpop.f32.mrf.mxu0
    %v295 = vadd.f32 %v91, %v294
    %296 = vmatprep.mubr.f32.mxu0 0.0
    %297 = vmatmul.mubr.f32.gmra.mxu0 %v121
    %v298 = vpop.f32.mrf.mxu0
    %v299 = vadd.f32 %v87, %v298
    %v300 = vpop.f32.mrf.mxu0
    %v301 = vadd.f32 %v91, %v300
    %302 = vmatprep.mubr.f32.mxu0 0.0
    %303 = vmatmul.mubr.f32.gmra.mxu0 %v124
    %v304 = vpop.f32.mrf.mxu0
    %v305 = vadd.f32 %v87, %v304
    %v306 = vpop.f32.mrf.mxu0
    %v307 = vadd.f32 %v91, %v306
    %308 = vmatprep.mubr.f32.mxu0 0.0
    %309 = vmatmul.mubr.f32.gmra.mxu0 %v127
    %v310 = vpop.f32.mrf.mxu0
    %v311 = vadd.f32 %v87, %v310
    %v312 = vpop.f32.mrf.mxu0
    %v313 = vadd.f32 %v91, %v312
    %314 = vmatprep.mubr.f32.mxu0 0.0
    %315 = vmatmul.mubr.f32.gmra.mxu0 %v130
    %v316 = vpop.f32.mrf.mxu0
    %v317 = vadd.f32 %v87, %v316
    %v318 = vpop.f32.mrf.mxu0
    %v319 = vadd.f32 %v91, %v318
    %320 = vmatprep.mubr.f32.mxu0 0.0
    %321 = vmatmul.mubr.f32.gmra.mxu0 %v133
    %v322 = vpop.f32.mrf.mxu0
    %v323 = vadd.f32 %v87, %v322
    %v324 = vpop.f32.mrf.mxu0
    %v325 = vadd.f32 %v91, %v324
    %326 = vmatprep.mubr.f32.mxu0 0.0
    %327 = vmatmul.mubr.f32.gmra.mxu0 %v136
    %v328 = vpop.f32.mrf.mxu0
    %v329 = vadd.f32 %v87, %v328
    %v330 = vpop.f32.mrf.mxu0
    %v331 = vadd.f32 %v91, %v330
    %332 = vmatprep.mubr.f32.mxu0 0.0
    %333 = vmatmul.mubr.f32.gmra.mxu0 %v139
    %v334 = vpop.f32.mrf.mxu0
    %v335 = vadd.f32 %v87, %v334
    %v336 = vpop.f32.mrf.mxu0
    %v337 = vadd.f32 %v91, %v336
    %338 = vmatprep.mubr.f32.mxu0 0.0
    %339 = vmatmul.mubr.f32.gmra.mxu0 %v142
    %v340 = vpop.f32.mrf.mxu0
    %v341 = vadd.f32 %v87, %v340
    %v342 = vpop.f32.mrf.mxu0
    %v343 = vadd.f32 %v91, %v342
    %344 = vmatprep.mubr.f32.mxu0 0.0
    %345 = vmatmul.mubr.f32.gmra.mxu0 %v145
    %v346 = vpop.f32.mrf.mxu0
    %v347 = vadd.f32 %v87, %v346
    %v348 = vpop.f32.mrf.mxu0
    %v349 = vadd.f32 %v91, %v348
    %350 = vmatprep.mubr.f32.mxu0 0.0
    %351 = vmatmul.mubr.f32.gmra.mxu0 %v148
    %v352 = vpop.f32.mrf.mxu0
    %v353 = vadd.f32 %v87, %v352
    %v354 = vpop.f32.mrf.mxu0
    %v355 = vadd.f32 %v91, %v354
    %356 = vmatprep.mubr.f32.mxu0 0.0
    %357 = vmatmul.mubr.f32.gmra.mxu0 %v151
    %v358 = vpop.f32.mrf.mxu0
    %v359 = vadd.f32 %v87, %v358
    %v360 = vpop.f32.mrf.mxu0
    %v361 = vadd.f32 %v91, %v360
    %362 = vmatprep.mubr.f32.mxu0 0.0
    %363 = vmatmul.mubr.f32.gmra.mxu0 %v154
    %v364 = vpop.f32.mrf.mxu0
    %v365 = vadd.f32 %v87, %v364
    %v366 = vpop.f32.mrf.mxu0
    %v367 = vadd.f32 %v91, %v366
    %368 = vmatprep.mubr.f32.mxu0 0.0
    %369 = vmatmul.mubr.f32.gmra.mxu0 %v157
    %v370 = vpop.f32.mrf.mxu0
    %v371 = vadd.f32 %v87, %v370
    %v372 = vpop.f32.mrf.mxu0
    %v373 = vadd.f32 %v91, %v372
    %374 = vmatprep.mubr.f32.mxu0 0.0
    %375 = vmatmul.mubr.f32.gmra.mxu0 %v160
    %v376 = vpop.f32.mrf.mxu0
    %v377 = vadd.f32 %v87, %v376
    %v378 = vpop.f32.mrf.mxu0
    %v379 = vadd.f32 %v91, %v378
    %380 = vmatprep.mubr.f32.mxu0 0.0
    %381 = vmatmul.mubr.f32.gmra.mxu0 %v163
    %v382 = vpop.f32.mrf.mxu0
    %v383 = vadd.f32 %v87, %v382
    %v384 = vpop.f32.mrf.mxu0
    %v385 = vadd.f32 %v91, %v384
    %386 = vmatprep.mubr.f32.mxu0 0.0
    %387 = vmatmul.mubr.f32.gmra.mxu0 %v166
    %v388 = vpop.f32.mrf.mxu0
    %v389 = vadd.f32 %v87, %v388
    %v390 = vpop.f32.mrf.mxu0
    %v391 = vadd.f32 %v91, %v390
    %392 = vmatprep.mubr.f32.mxu0 0.0
    %393 = vmatmul.mubr.f32.gmra.mxu0 %v169
    %v394 = vpop.f32.mrf.mxu0
    %v395 = vadd.f32 %v87, %v394
    %v396 = vpop.f32.mrf.mxu0
    %v397 = vadd.f32 %v91, %v396
    %398 = vmatprep.mubr.f32.mxu0 0.0
    %399 = vmatmul.mubr.f32.gmra.mxu0 %v172
    %v400 = vpop.f32.mrf.mxu0
    %v401 = vadd.f32 %v87, %v400
    %v402 = vpop.f32.mrf.mxu0
    %v403 = vadd.f32 %v91, %v402
    %404 = vmatprep.mubr.f32.mxu0 0.0
    %405 = vmatmul.mubr.f32.gmra.mxu0 %v175
    %v406 = vpop.f32.mrf.mxu0
    %v407 = vadd.f32 %v87, %v406
    %v408 = vpop.f32.mrf.mxu0
    %v409 = vadd.f32 %v91, %v408
    %410 = vmatprep.mubr.f32.mxu0 0.0
    %411 = vmatmul.mubr.f32.gmra.mxu0 %v178
    %v412 = vpop.f32.mrf.mxu0
    %v413 = vadd.f32 %v87, %v412
    %v414 = vpop.f32.mrf.mxu0
    %v415 = vadd.f32 %v91, %v414
    %416 = vmatprep.mubr.f32.mxu0 0.0
    %417 = vmatmul.mubr.f32.gmra.mxu0 %v181
    %v418 = vpop.f32.mrf.mxu0
    %v419 = vadd.f32 %v87, %v418
    %v420 = vpop.f32.mrf.mxu0
    %v421 = vadd.f32 %v91, %v420
    %422 = vmatprep.mubr.f32.mxu0 0.0
    %423 = vmatmul.mubr.f32.gmra.mxu0 %v184
    %v424 = vpop.f32.mrf.mxu0
    %v425 = vadd.f32 %v87, %v424
    %v426 = vpop.f32.mrf.mxu0
    %v427 = vadd.f32 %v91, %v426
    %428 = vmatprep.mubr.f32.mxu0 0.0
    %429 = vmatmul.mubr.f32.gmra.mxu0 %v187
    %v430 = vpop.f32.mrf.mxu0
    %v431 = vadd.f32 %v87, %v430
    %v432 = vpop.f32.mrf.mxu0
    %v433 = vadd.f32 %v91, %v432
    %434 = vdwg.mxu0
    %435 = vmatprep.subr.mxu0 0.0
    %436 = vmatpush1.msra.mxu0 0.0
    %437 = vmatprep.subr.mxu0 0.0
    %438 = vmatpush1.msra.mxu0 0.0
    %439 = vmatprep.subr.mxu0 0.0
    %440 = vmatpush1.msra.mxu0 0.0
    %441 = vmatprep.subr.mxu0 0.0
    %442 = vmatpush1.msra.mxu0 0.0
    %443 = vmatprep.subr.mxu0 0.0
    %444 = vmatpush1.msra.mxu0 0.0
    %445 = vmatprep.subr.mxu0 0.0
    %446 = vmatpush1.msra.mxu0 0.0
    %447 = vmatprep.subr.mxu0 0.0
    %448 = vmatpush1.msra.mxu0 0.0
    %449 = vmatprep.subr.mxu0 0.0
    %450 = vmatpush1.msra.mxu0 0.0
    %451 = vmatprep.subr.mxu0 0.0
    %452 = vmatpush1.msra.mxu0 0.0
    %453 = vmatprep.subr.mxu0 0.0
    %454 = vmatpush1.msra.mxu0 0.0
    %455 = vmatprep.subr.mxu0 0.0
    %456 = vmatpush1.msra.mxu0 0.0
    %457 = vmatprep.subr.mxu0 0.0
    %458 = vmatpush1.msra.mxu0 0.0
    %459 = vmatprep.subr.mxu0 %v200
    %460 = vmatpush1.msra.mxu0 %v197
    %461 = vmatprep.subr.mxu0 %v77
    %462 = vmatpush1.msra.mxu0 %v76
    %463 = vmatprep.subr.mxu0 %v73
    %464 = vmatpush1.msra.mxu0 %v72
    %465 = vmatprep.subr.mxu0 %v69
    %466 = vmatpush1.msra.mxu0 %v68
    %467 = vmatprep.subr.mxu0 0.0
    %468 = vmatpush2.msra.mxu0 0.0
    %469 = vmatprep.subr.mxu0 0.0
    %470 = vmatpush2.msra.mxu0 0.0
    %471 = vmatprep.subr.mxu0 0.0
    %472 = vmatpush2.msra.mxu0 0.0
    %473 = vmatprep.subr.mxu0 0.0
    %474 = vmatpush2.msra.mxu0 0.0
    %475 = vmatprep.subr.mxu0 0.0
    %476 = vmatpush2.msra.mxu0 0.0
    %477 = vmatprep.subr.mxu0 0.0
    %478 = vmatpush2.msra.mxu0 0.0
    %479 = vmatprep.subr.mxu0 0.0
    %480 = vmatpush2.msra.mxu0 0.0
    %481 = vmatprep.subr.mxu0 0.0
    %482 = vmatpush2.msra.mxu0 0.0
    %483 = vmatprep.subr.mxu0 0.0
    %484 = vmatpush2.msra.mxu0 0.0
    %485 = vmatprep.subr.mxu0 0.0
    %486 = vmatpush2.msra.mxu0 0.0
    %487 = vmatprep.subr.mxu0 0.0
    %488 = vmatpush2.msra.mxu0 0.0
    %489 = vmatprep.subr.mxu0 0.0
    %490 = vmatpush2.msra.mxu0 0.0
    %491 = vmatprep.subr.mxu0 0.0
    %492 = vmatpush2.msra.mxu0 0.0
    %493 = vmatprep.subr.mxu0 0.0
    %494 = vmatpush2.msra.mxu0 0.0
    %495 = vmatprep.subr.mxu0 0.0
    %496 = vmatpush2.msra.mxu0 0.0
    %497 = vmatprep.subr.mxu0 0.0
    %498 = vmatpush2.msra.mxu0 0.0
    %499 = vmatprep.mubr.f32.mxu0 0.0
    %500 = vmatmul.mubr.f32.gmra.mxu0 %v106
    %v501 = vpop.f32.mrf.mxu0
    %v502 = vadd.f32 %v95, %v501
    %v503 = vpop.f32.mrf.mxu0
    %v504 = vadd.f32 %v99, %v503
    %505 = vmatprep.mubr.f32.mxu0 0.0
    %506 = vmatmul.mubr.f32.gmra.mxu0 %v109
    %v507 = vpop.f32.mrf.mxu0
    %v508 = vadd.f32 %v95, %v507
    %v509 = vpop.f32.mrf.mxu0
    %v510 = vadd.f32 %v99, %v509
    %511 = vmatprep.mubr.f32.mxu0 0.0
    %512 = vmatmul.mubr.f32.gmra.mxu0 %v112
    %v513 = vpop.f32.mrf.mxu0
    %v514 = vadd.f32 %v95, %v513
    %v515 = vpop.f32.mrf.mxu0
    %v516 = vadd.f32 %v99, %v515
    %517 = vmatprep.mubr.f32.mxu0 0.0
    %518 = vmatmul.mubr.f32.gmra.mxu0 %v115
    %v519 = vpop.f32.mrf.mxu0
    %v520 = vadd.f32 %v95, %v519
    %v521 = vpop.f32.mrf.mxu0
    %v522 = vadd.f32 %v99, %v521
    %523 = vmatprep.mubr.f32.mxu0 0.0
    %524 = vmatmul.mubr.f32.gmra.mxu0 %v118
    %v525 = vpop.f32.mrf.mxu0
    %v526 = vadd.f32 %v95, %v525
    %v527 = vpop.f32.mrf.mxu0
    %v528 = vadd.f32 %v99, %v527
    %529 = vmatprep.mubr.f32.mxu0 0.0
    %530 = vmatmul.mubr.f32.gmra.mxu0 %v121
    %v531 = vpop.f32.mrf.mxu0
    %v532 = vadd.f32 %v95, %v531
    %v533 = vpop.f32.mrf.mxu0
    %v534 = vadd.f32 %v99, %v533
    %535 = vmatprep.mubr.f32.mxu0 0.0
    %536 = vmatmul.mubr.f32.gmra.mxu0 %v124
    %v537 = vpop.f32.mrf.mxu0
    %v538 = vadd.f32 %v95, %v537
    %v539 = vpop.f32.mrf.mxu0
    %v540 = vadd.f32 %v99, %v539
    %541 = vmatprep.mubr.f32.mxu0 0.0
    %542 = vmatmul.mubr.f32.gmra.mxu0 %v127
    %v543 = vpop.f32.mrf.mxu0
    %v544 = vadd.f32 %v95, %v543
    %v545 = vpop.f32.mrf.mxu0
    %v546 = vadd.f32 %v99, %v545
    %547 = vmatprep.mubr.f32.mxu0 0.0
    %548 = vmatmul.mubr.f32.gmra.mxu0 %v130
    %v549 = vpop.f32.mrf.mxu0
    %v550 = vadd.f32 %v95, %v549
    %v551 = vpop.f32.mrf.mxu0
    %v552 = vadd.f32 %v99, %v551
    %553 = vmatprep.mubr.f32.mxu0 0.0
    %554 = vmatmul.mubr.f32.gmra.mxu0 %v133
    %v555 = vpop.f32.mrf.mxu0
    %v556 = vadd.f32 %v95, %v555
    %v557 = vpop.f32.mrf.mxu0
    %v558 = vadd.f32 %v99, %v557
    %559 = vmatprep.mubr.f32.mxu0 0.0
    %560 = vmatmul.mubr.f32.gmra.mxu0 %v136
    %v561 = vpop.f32.mrf.mxu0
    %v562 = vadd.f32 %v95, %v561
    %v563 = vpop.f32.mrf.mxu0
    %v564 = vadd.f32 %v99, %v563
    %565 = vmatprep.mubr.f32.mxu0 0.0
    %566 = vmatmul.mubr.f32.gmra.mxu0 %v139
    %v567 = vpop.f32.mrf.mxu0
    %v568 = vadd.f32 %v95, %v567
    %v569 = vpop.f32.mrf.mxu0
    %v570 = vadd.f32 %v99, %v569
    %571 = vmatprep.mubr.f32.mxu0 0.0
    %572 = vmatmul.mubr.f32.gmra.mxu0 %v142
    %v573 = vpop.f32.mrf.mxu0
    %v574 = vadd.f32 %v95, %v573
    %v575 = vpop.f32.mrf.mxu0
    %v576 = vadd.f32 %v99, %v575
    %577 = vmatprep.mubr.f32.mxu0 0.0
    %578 = vmatmul.mubr.f32.gmra.mxu0 %v145
    %v579 = vpop.f32.mrf.mxu0
    %v580 = vadd.f32 %v95, %v579
    %v581 = vpop.f32.mrf.mxu0
    %v582 = vadd.f32 %v99, %v581
    %583 = vmatprep.mubr.f32.mxu0 0.0
    %584 = vmatmul.mubr.f32.gmra.mxu0 %v148
    %v585 = vpop.f32.mrf.mxu0
    %v586 = vadd.f32 %v95, %v585
    %v587 = vpop.f32.mrf.mxu0
    %v588 = vadd.f32 %v99, %v587
    %589 = vmatprep.mubr.f32.mxu0 0.0
    %590 = vmatmul.mubr.f32.gmra.mxu0 %v151
    %v591 = vpop.f32.mrf.mxu0
    %v592 = vadd.f32 %v95, %v591
    %v593 = vpop.f32.mrf.mxu0
    %v594 = vadd.f32 %v99, %v593
    %595 = vmatprep.mubr.f32.mxu0 0.0
    %596 = vmatmul.mubr.f32.gmra.mxu0 %v154
    %v597 = vpop.f32.mrf.mxu0
    %v598 = vadd.f32 %v95, %v597
    %v599 = vpop.f32.mrf.mxu0
    %v600 = vadd.f32 %v99, %v599
    %601 = vmatprep.mubr.f32.mxu0 0.0
    %602 = vmatmul.mubr.f32.gmra.mxu0 %v157
    %v603 = vpop.f32.mrf.mxu0
    %v604 = vadd.f32 %v95, %v603
    %v605 = vpop.f32.mrf.mxu0
    %v606 = vadd.f32 %v99, %v605
    %607 = vmatprep.mubr.f32.mxu0 0.0
    %608 = vmatmul.mubr.f32.gmra.mxu0 %v160
    %v609 = vpop.f32.mrf.mxu0
    %v610 = vadd.f32 %v95, %v609
    %v611 = vpop.f32.mrf.mxu0
    %v612 = vadd.f32 %v99, %v611
    %613 = vmatprep.mubr.f32.mxu0 0.0
    %614 = vmatmul.mubr.f32.gmra.mxu0 %v163
    %v615 = vpop.f32.mrf.mxu0
    %v616 = vadd.f32 %v95, %v615
    %v617 = vpop.f32.mrf.mxu0
    %v618 = vadd.f32 %v99, %v617
    %619 = vmatprep.mubr.f32.mxu0 0.0
    %620 = vmatmul.mubr.f32.gmra.mxu0 %v166
    %v621 = vpop.f32.mrf.mxu0
    %v622 = vadd.f32 %v95, %v621
    %v623 = vpop.f32.mrf.mxu0
    %v624 = vadd.f32 %v99, %v623
    %625 = vmatprep.mubr.f32.mxu0 0.0
    %626 = vmatmul.mubr.f32.gmra.mxu0 %v169
    %v627 = vpop.f32.mrf.mxu0
    %v628 = vadd.f32 %v95, %v627
    %v629 = vpop.f32.mrf.mxu0
    %v630 = vadd.f32 %v99, %v629
    %631 = vmatprep.mubr.f32.mxu0 0.0
    %632 = vmatmul.mubr.f32.gmra.mxu0 %v172
    %v633 = vpop.f32.mrf.mxu0
    %v634 = vadd.f32 %v95, %v633
    %v635 = vpop.f32.mrf.mxu0
    %v636 = vadd.f32 %v99, %v635
    %637 = vmatprep.mubr.f32.mxu0 0.0
    %638 = vmatmul.mubr.f32.gmra.mxu0 %v175
    %v639 = vpop.f32.mrf.mxu0
    %v640 = vadd.f32 %v95, %v639
    %v641 = vpop.f32.mrf.mxu0
    %v642 = vadd.f32 %v99, %v641
    %643 = vmatprep.mubr.f32.mxu0 0.0
    %644 = vmatmul.mubr.f32.gmra.mxu0 %v178
    %v645 = vpop.f32.mrf.mxu0
    %v646 = vadd.f32 %v95, %v645
    %v647 = vpop.f32.mrf.mxu0
    %v648 = vadd.f32 %v99, %v647
    %649 = vmatprep.mubr.f32.mxu0 0.0
    %650 = vmatmul.mubr.f32.gmra.mxu0 %v181
    %v651 = vpop.f32.mrf.mxu0
    %v652 = vadd.f32 %v95, %v651
    %v653 = vpop.f32.mrf.mxu0
    %v654 = vadd.f32 %v99, %v653
    %655 = vmatprep.mubr.f32.mxu0 0.0
    %656 = vmatmul.mubr.f32.gmra.mxu0 %v184
    %v657 = vpop.f32.mrf.mxu0
    %v658 = vadd.f32 %v95, %v657
    %v659 = vpop.f32.mrf.mxu0
    %v660 = vadd.f32 %v99, %v659
    %661 = vmatprep.mubr.f32.mxu0 0.0
    %662 = vmatmul.mubr.f32.gmra.mxu0 %v187
    %v663 = vpop.f32.mrf.mxu0
    %v664 = vadd.f32 %v95, %v663
    %v665 = vpop.f32.mrf.mxu0
    %v666 = vadd.f32 %v99, %v665
    %667 = vdwg.mxu0
    %668 = vst [vmem:[#allocation2] sm:$0xff] %v269
    %669 = vst [vmem:[#allocation2 + $0x8] sm:$0xff] %v271
    %670 = vst [vmem:[#allocation2 + $0x10] sm:$0xff] %v502
    %671 = vst [vmem:[#allocation2 + $0x18] sm:$0xff] %v504
    %672 = vst [vmem:[#allocation2 + $0x20] sm:$0xff] %v275
    %673 = vst [vmem:[#allocation2 + $0x28] sm:$0xff] %v277
    %674 = vst [vmem:[#allocation2 + $0x30] sm:$0xff] %v508
    %675 = vst [vmem:[#allocation2 + $0x38] sm:$0xff] %v510
    %676 = vst [vmem:[#allocation2 + $0x40] sm:$0xff] %v281
    %677 = vst [vmem:[#allocation2 + $0x48] sm:$0xff] %v283
    %678 = vst [vmem:[#allocation2 + $0x50] sm:$0xff] %v514
    %679 = vst [vmem:[#allocation2 + $0x58] sm:$0xff] %v516
    %680 = vst [vmem:[#allocation2 + $0x60] sm:$0xff] %v287
    %681 = vst [vmem:[#allocation2 + $0x68] sm:$0xff] %v289
    %682 = vst [vmem:[#allocation2 + $0x70] sm:$0xff] %v520
    %683 = vst [vmem:[#allocation2 + $0x78] sm:$0xff] %v522
    %684 = vst [vmem:[#allocation2 + $0x80] sm:$0xff] %v293
    %685 = vst [vmem:[#allocation2 + $0x88] sm:$0xff] %v295
    %686 = vst [vmem:[#allocation2 + $0x90] sm:$0xff] %v526
    %687 = vst [vmem:[#allocation2 + $0x98] sm:$0xff] %v528
    %688 = vst [vmem:[#allocation2 + $0xa0] sm:$0xff] %v299
    %689 = vst [vmem:[#allocation2 + $0xa8] sm:$0xff] %v301
    %690 = vst [vmem:[#allocation2 + $0xb0] sm:$0xff] %v532
    %691 = vst [vmem:[#allocation2 + $0xb8] sm:$0xff] %v534
    %692 = vst [vmem:[#allocation2 + $0xc0] sm:$0xff] %v305
    %693 = vst [vmem:[#allocation2 + $0xc8] sm:$0xff] %v307
    %694 = vst [vmem:[#allocation2 + $0xd0] sm:$0xff] %v538
    %695 = vst [vmem:[#allocation2 + $0xd8] sm:$0xff] %v540
    %696 = vst [vmem:[#allocation2 + $0xe0] sm:$0xff] %v311
    %697 = vst [vmem:[#allocation2 + $0xe8] sm:$0xff] %v313
    %698 = vst [vmem:[#allocation2 + $0xf0] sm:$0xff] %v544
    %699 = vst [vmem:[#allocation2 + $0xf8] sm:$0xff] %v546
    %700 = vst [vmem:[#allocation2 + $0x100] sm:$0xff] %v317
    %701 = vst [vmem:[#allocation2 + $0x108] sm:$0xff] %v319
    %702 = vst [vmem:[#allocation2 + $0x110] sm:$0xff] %v550
    %703 = vst [vmem:[#allocation2 + $0x118] sm:$0xff] %v552
    %704 = vst [vmem:[#allocation2 + $0x120] sm:$0xff] %v323
    %705 = vst [vmem:[#allocation2 + $0x128] sm:$0xff] %v325
    %706 = vst [vmem:[#allocation2 + $0x130] sm:$0xff] %v556
    %707 = vst [vmem:[#allocation2 + $0x138] sm:$0xff] %v558
    %708 = vst [vmem:[#allocation2 + $0x140] sm:$0xff] %v329
    %709 = vst [vmem:[#allocation2 + $0x148] sm:$0xff] %v331
    %710 = vst [vmem:[#allocation2 + $0x150] sm:$0xff] %v562
    %711 = vst [vmem:[#allocation2 + $0x158] sm:$0xff] %v564
    %712 = vst [vmem:[#allocation2 + $0x160] sm:$0xff] %v335
    %713 = vst [vmem:[#allocation2 + $0x168] sm:$0xff] %v337
    %714 = vst [vmem:[#allocation2 + $0x170] sm:$0xff] %v568
    %715 = vst [vmem:[#allocation2 + $0x178] sm:$0xff] %v570
    %716 = vst [vmem:[#allocation2 + $0x180] sm:$0xff] %v341
    %717 = vst [vmem:[#allocation2 + $0x188] sm:$0xff] %v343
    %718 = vst [vmem:[#allocation2 + $0x190] sm:$0xff] %v574
    %719 = vst [vmem:[#allocation2 + $0x198] sm:$0xff] %v576
    %720 = vst [vmem:[#allocation2 + $0x1a0] sm:$0xff] %v347
    %721 = vst [vmem:[#allocation2 + $0x1a8] sm:$0xff] %v349
    %722 = vst [vmem:[#allocation2 + $0x1b0] sm:$0xff] %v580
    %723 = vst [vmem:[#allocation2 + $0x1b8] sm:$0xff] %v582
    %724 = vst [vmem:[#allocation2 + $0x1c0] sm:$0xff] %v353
    %725 = vst [vmem:[#allocation2 + $0x1c8] sm:$0xff] %v355
    %726 = vst [vmem:[#allocation2 + $0x1d0] sm:$0xff] %v586
    %727 = vst [vmem:[#allocation2 + $0x1d8] sm:$0xff] %v588
    %728 = vst [vmem:[#allocation2 + $0x1e0] sm:$0xff] %v359
    %729 = vst [vmem:[#allocation2 + $0x1e8] sm:$0xff] %v361
    %730 = vst [vmem:[#allocation2 + $0x1f0] sm:$0xff] %v592
    %731 = vst [vmem:[#allocation2 + $0x1f8] sm:$0xff] %v594
    %732 = vst [vmem:[#allocation2 + $0x200] sm:$0xff] %v365
    %733 = vst [vmem:[#allocation2 + $0x208] sm:$0xff] %v367
    %734 = vst [vmem:[#allocation2 + $0x210] sm:$0xff] %v598
    %735 = vst [vmem:[#allocation2 + $0x218] sm:$0xff] %v600
    %736 = vst [vmem:[#allocation2 + $0x220] sm:$0xff] %v371
    %737 = vst [vmem:[#allocation2 + $0x228] sm:$0xff] %v373
    %738 = vst [vmem:[#allocation2 + $0x230] sm:$0xff] %v604
    %739 = vst [vmem:[#allocation2 + $0x238] sm:$0xff] %v606
    %740 = vst [vmem:[#allocation2 + $0x240] sm:$0xff] %v377
    %741 = vst [vmem:[#allocation2 + $0x248] sm:$0xff] %v379
    %742 = vst [vmem:[#allocation2 + $0x250] sm:$0xff] %v610
    %743 = vst [vmem:[#allocation2 + $0x258] sm:$0xff] %v612
    %744 = vst [vmem:[#allocation2 + $0x260] sm:$0xff] %v383
    %745 = vst [vmem:[#allocation2 + $0x268] sm:$0xff] %v385
    %746 = vst [vmem:[#allocation2 + $0x270] sm:$0xff] %v616
    %747 = vst [vmem:[#allocation2 + $0x278] sm:$0xff] %v618
    %748 = vst [vmem:[#allocation2 + $0x280] sm:$0xff] %v389
    %749 = vst [vmem:[#allocation2 + $0x288] sm:$0xff] %v391
    %750 = vst [vmem:[#allocation2 + $0x290] sm:$0xff] %v622
    %751 = vst [vmem:[#allocation2 + $0x298] sm:$0xff] %v624
    %752 = vst [vmem:[#allocation2 + $0x2a0] sm:$0xff] %v395
    %753 = vst [vmem:[#allocation2 + $0x2a8] sm:$0xff] %v397
    %754 = vst [vmem:[#allocation2 + $0x2b0] sm:$0xff] %v628
    %755 = vst [vmem:[#allocation2 + $0x2b8] sm:$0xff] %v630
    %756 = vst [vmem:[#allocation2 + $0x2c0] sm:$0xff] %v401
    %757 = vst [vmem:[#allocation2 + $0x2c8] sm:$0xff] %v403
    %758 = vst [vmem:[#allocation2 + $0x2d0] sm:$0xff] %v634
    %759 = vst [vmem:[#allocation2 + $0x2d8] sm:$0xff] %v636
    %760 = vst [vmem:[#allocation2 + $0x2e0] sm:$0xff] %v407
    %761 = vst [vmem:[#allocation2 + $0x2e8] sm:$0xff] %v409
    %762 = vst [vmem:[#allocation2 + $0x2f0] sm:$0xff] %v640
    %763 = vst [vmem:[#allocation2 + $0x2f8] sm:$0xff] %v642
    %764 = vst [vmem:[#allocation2 + $0x300] sm:$0xff] %v413
    %765 = vst [vmem:[#allocation2 + $0x308] sm:$0xff] %v415
    %766 = vst [vmem:[#allocation2 + $0x310] sm:$0xff] %v646
    %767 = vst [vmem:[#allocation2 + $0x318] sm:$0xff] %v648
    %768 = vst [vmem:[#allocation2 + $0x320] sm:$0xff] %v419
    %769 = vst [vmem:[#allocation2 + $0x328] sm:$0xff] %v421
    %770 = vst [vmem:[#allocation2 + $0x330] sm:$0xff] %v652
    %771 = vst [vmem:[#allocation2 + $0x338] sm:$0xff] %v654
    %772 = vst [vmem:[#allocation2 + $0x340] sm:$0xff] %v425
    %773 = vst [vmem:[#allocation2 + $0x348] sm:$0xff] %v427
    %774 = vst [vmem:[#allocation2 + $0x350] sm:$0xff] %v658
    %775 = vst [vmem:[#allocation2 + $0x358] sm:$0xff] %v660
    %776 = vst [vmem:[#allocation2 + $0x360] sm:$0xff] %v431
    %777 = vst [vmem:[#allocation2 + $0x368] sm:$0xff] %v433
    %778 = vst [vmem:[#allocation2 + $0x370] sm:$0xff] %v664
    %779 = vst [vmem:[#allocation2 + $0x378] sm:$0xff] %v666
    %v780 = vld [vmem:[#allocation2] sm:$0xff]
    %v781 = vld [vmem:[#allocation2 + $0x8] sm:$0xff]
    %v782 = vld [vmem:[#allocation2 + $0x10] sm:$0xff]
    %v783 = vld [vmem:[#allocation2 + $0x18] sm:$0xff]
    %v784 = vld [vmem:[#allocation3] sm:$0xff]
    %v785 = vld [vmem:[#allocation3 + $0x8] sm:$0xff]
    %v786 = vld [vmem:[#allocation3 + $0x10] sm:$0xff]
    %v787 = vld [vmem:[#allocation3 + $0x18] sm:$0xff]
    %v788 = vld [vmem:[#allocation3 + $0x20] sm:$0xff]
    %v789 = vld [vmem:[#allocation3 + $0x28] sm:$0xff]
    %v790 = vld [vmem:[#allocation3 + $0x30] sm:$0xff]
    %v791 = vld [vmem:[#allocation3 + $0x38] sm:$0xff]
    %v792 = vld [vmem:[#allocation3 + $0x40] sm:$0xff]
    %v793 = vld [vmem:[#allocation3 + $0x48] sm:$0xff]
    %v794 = vld [vmem:[#allocation3 + $0x50] sm:$0xff]
    %v795 = vld [vmem:[#allocation3 + $0x58] sm:$0xff]
    %v796 = vld [vmem:[#allocation3 + $0x60] sm:$0xff]
    %v797 = vld [vmem:[#allocation3 + $0x68] sm:$0xff]
    %v798 = vld [vmem:[#allocation3 + $0x70] sm:$0xff]
    %v799 = vld [vmem:[#allocation3 + $0x78] sm:$0xff]
    %v800 = vld [vmem:[#allocation3 + $0x80] sm:$0xff]
    %v801 = vld [vmem:[#allocation3 + $0x88] sm:$0xff]
    %v802 = vld [vmem:[#allocation3 + $0x90] sm:$0xff]
    %v803 = vld [vmem:[#allocation3 + $0x98] sm:$0xff]
    %v804 = vld [vmem:[#allocation3 + $0xa0] sm:$0xff]
    %v805 = vld [vmem:[#allocation3 + $0xa8] sm:$0xff]
    %v806 = vld [vmem:[#allocation3 + $0xb0] sm:$0xff]
    %v807 = vld [vmem:[#allocation3 + $0xb8] sm:$0xff]
    %v808 = vld [vmem:[#allocation3 + $0xc0] sm:$0xff]
    %v809 = vld [vmem:[#allocation3 + $0xc8] sm:$0xff]
    %v810 = vld [vmem:[#allocation3 + $0xd0] sm:$0xff]
    %v811 = vld [vmem:[#allocation3 + $0xd8] sm:$0xff]
    %v812 = vld [vmem:[#allocation3 + $0xe0] sm:$0xff]
    %v813 = vld [vmem:[#allocation3 + $0xe8] sm:$0xff]
    %v814 = vld [vmem:[#allocation3 + $0xf0] sm:$0xff]
    %v815 = vld [vmem:[#allocation3 + $0xf8] sm:$0xff]
    %v816 = vld [vmem:[#allocation3 + $0x100] sm:$0xff]
    %v817 = vld [vmem:[#allocation3 + $0x108] sm:$0xff]
    %v818 = vld [vmem:[#allocation3 + $0x110] sm:$0xff]
    %v819 = vld [vmem:[#allocation3 + $0x118] sm:$0xff]
    %v820 = vld [vmem:[#allocation3 + $0x120] sm:$0xff]
    %v821 = vld [vmem:[#allocation3 + $0x128] sm:$0xff]
    %v822 = vld [vmem:[#allocation3 + $0x130] sm:$0xff]
    %v823 = vld [vmem:[#allocation3 + $0x138] sm:$0xff]
    %v824 = vld [vmem:[#allocation3 + $0x140] sm:$0xff]
    %v825 = vld [vmem:[#allocation3 + $0x148] sm:$0xff]
    %v826 = vld [vmem:[#allocation3 + $0x150] sm:$0xff]
    %v827 = vld [vmem:[#allocation3 + $0x158] sm:$0xff]
    %v828 = vld [vmem:[#allocation3 + $0x160] sm:$0xff]
    %v829 = vld [vmem:[#allocation3 + $0x168] sm:$0xff]
    %v830 = vld [vmem:[#allocation3 + $0x170] sm:$0xff]
    %v831 = vld [vmem:[#allocation3 + $0x178] sm:$0xff]
    %v832 = vld [vmem:[#allocation3 + $0x180] sm:$0xff]
    %v833 = vld [vmem:[#allocation3 + $0x188] sm:$0xff]
    %v834 = vld [vmem:[#allocation3 + $0x190] sm:$0xff]
    %v835 = vld [vmem:[#allocation3 + $0x198] sm:$0xff]
    %v836 = vld [vmem:[#allocation3 + $0x1a0] sm:$0xff]
    %v837 = vld [vmem:[#allocation3 + $0x1a8] sm:$0xff]
    %v838 = vld [vmem:[#allocation3 + $0x1b0] sm:$0xff]
    %v839 = vld [vmem:[#allocation3 + $0x1b8] sm:$0xff]
    %v840 = vld [vmem:[#allocation3 + $0x1c0] sm:$0xff]
    %v841 = vld [vmem:[#allocation3 + $0x1c8] sm:$0xff]
    %v842 = vld [vmem:[#allocation3 + $0x1d0] sm:$0xff]
    %v843 = vld [vmem:[#allocation3 + $0x1d8] sm:$0xff]
    %v844 = vld [vmem:[#allocation3 + $0x1e0] sm:$0xff]
    %v845 = vld [vmem:[#allocation3 + $0x1e8] sm:$0xff]
    %v846 = vld [vmem:[#allocation3 + $0x1f0] sm:$0xff]
    %v847 = vld [vmem:[#allocation3 + $0x1f8] sm:$0xff]
    %848 = vmatprep.subr.mxu0 %v845
    %849 = vmatpush1.msra.mxu0 %v844
    %850 = vmatprep.subr.mxu0 %v841
    %851 = vmatpush1.msra.mxu0 %v840
    %852 = vmatprep.subr.mxu0 %v837
    %853 = vmatpush1.msra.mxu0 %v836
    %854 = vmatprep.subr.mxu0 %v833
    %855 = vmatpush1.msra.mxu0 %v832
    %856 = vmatprep.subr.mxu0 %v829
    %857 = vmatpush1.msra.mxu0 %v828
    %858 = vmatprep.subr.mxu0 %v825
    %859 = vmatpush1.msra.mxu0 %v824
    %860 = vmatprep.subr.mxu0 %v821
    %861 = vmatpush1.msra.mxu0 %v820
    %862 = vmatprep.subr.mxu0 %v817
    %863 = vmatpush1.msra.mxu0 %v816
    %864 = vmatprep.subr.mxu0 %v813
    %865 = vmatpush1.msra.mxu0 %v812
    %866 = vmatprep.subr.mxu0 %v809
    %867 = vmatpush1.msra.mxu0 %v808
    %868 = vmatprep.subr.mxu0 %v805
    %869 = vmatpush1.msra.mxu0 %v804
    %870 = vmatprep.subr.mxu0 %v801
    %871 = vmatpush1.msra.mxu0 %v800
    %872 = vmatprep.subr.mxu0 %v797
    %873 = vmatpush1.msra.mxu0 %v796
    %874 = vmatprep.subr.mxu0 %v793
    %875 = vmatpush1.msra.mxu0 %v792
    %876 = vmatprep.subr.mxu0 %v789
    %877 = vmatpush1.msra.mxu0 %v788
    %878 = vmatprep.subr.mxu0 %v785
    %879 = vmatpush1.msra.mxu0 %v784
    %880 = vmatprep.subr.mxu0 0.0
    %881 = vmatpush2.msra.mxu0 0.0
    %882 = vmatprep.subr.mxu0 0.0
    %883 = vmatpush2.msra.mxu0 0.0
    %884 = vmatprep.subr.mxu0 0.0
    %885 = vmatpush2.msra.mxu0 0.0
    %886 = vmatprep.subr.mxu0 0.0
    %887 = vmatpush2.msra.mxu0 0.0
    %888 = vmatprep.subr.mxu0 0.0
    %889 = vmatpush2.msra.mxu0 0.0
    %890 = vmatprep.subr.mxu0 0.0
    %891 = vmatpush2.msra.mxu0 0.0
    %892 = vmatprep.subr.mxu0 0.0
    %893 = vmatpush2.msra.mxu0 0.0
    %894 = vmatprep.subr.mxu0 0.0
    %895 = vmatpush2.msra.mxu0 0.0
    %896 = vmatprep.subr.mxu0 0.0
    %897 = vmatpush2.msra.mxu0 0.0
    %898 = vmatprep.subr.mxu0 0.0
    %899 = vmatpush2.msra.mxu0 0.0
    %900 = vmatprep.subr.mxu0 0.0
    %901 = vmatpush2.msra.mxu0 0.0
    %902 = vmatprep.subr.mxu0 0.0
    %903 = vmatpush2.msra.mxu0 0.0
    %904 = vmatprep.subr.mxu0 0.0
    %905 = vmatpush2.msra.mxu0 0.0
    %906 = vmatprep.subr.mxu0 0.0
    %907 = vmatpush2.msra.mxu0 0.0
    %908 = vmatprep.subr.mxu0 0.0
    %909 = vmatpush2.msra.mxu0 0.0
    %910 = vmatprep.subr.mxu0 0.0
    %911 = vmatpush2.msra.mxu0 0.0
    %912 = vmatprep.mubr.f32.mxu0 0.0
    %913 = vmatmul.mubr.f32.gmra.mxu0 0.0
    %v914 = vpop.f32.mrf.mxu0
    %v915 = vadd.f32 0.0, %v914
    %v916 = vpop.f32.mrf.mxu0
    %v917 = vadd.f32 0.0, %v916
    %918 = vdwg.mxu0
    %919 = vmatprep.subr.mxu0 %v847
    %920 = vmatpush1.msra.mxu0 %v846
    %921 = vmatprep.subr.mxu0 %v843
    %922 = vmatpush1.msra.mxu0 %v842
    %923 = vmatprep.subr.mxu0 %v839
    %924 = vmatpush1.msra.mxu0 %v838
    %925 = vmatprep.subr.mxu0 %v835
    %926 = vmatpush1.msra.mxu0 %v834
    %927 = vmatprep.subr.mxu0 %v831
    %928 = vmatpush1.msra.mxu0 %v830
    %929 = vmatprep.subr.mxu0 %v827
    %930 = vmatpush1.msra.mxu0 %v826
    %931 = vmatprep.subr.mxu0 %v823
    %932 = vmatpush1.msra.mxu0 %v822
    %933 = vmatprep.subr.mxu0 %v819
    %934 = vmatpush1.msra.mxu0 %v818
    %935 = vmatprep.subr.mxu0 %v815
    %936 = vmatpush1.msra.mxu0 %v814
    %937 = vmatprep.subr.mxu0 %v811
    %938 = vmatpush1.msra.mxu0 %v810
    %939 = vmatprep.subr.mxu0 %v807
    %940 = vmatpush1.msra.mxu0 %v806
    %941 = vmatprep.subr.mxu0 %v803
    %942 = vmatpush1.msra.mxu0 %v802
    %943 = vmatprep.subr.mxu0 %v799
    %944 = vmatpush1.msra.mxu0 %v798
    %945 = vmatprep.subr.mxu0 %v795
    %946 = vmatpush1.msra.mxu0 %v794
    %947 = vmatprep.subr.mxu0 %v791
    %948 = vmatpush1.msra.mxu0 %v790
    %949 = vmatprep.subr.mxu0 %v787
    %950 = vmatpush1.msra.mxu0 %v786
    %951 = vmatprep.subr.mxu0 0.0
    %952 = vmatpush2.msra.mxu0 0.0
    %953 = vmatprep.subr.mxu0 0.0
    %954 = vmatpush2.msra.mxu0 0.0
    %955 = vmatprep.subr.mxu0 0.0
    %956 = vmatpush2.msra.mxu0 0.0
    %957 = vmatprep.subr.mxu0 0.0
    %958 = vmatpush2.msra.mxu0 0.0
    %959 = vmatprep.subr.mxu0 0.0
    %960 = vmatpush2.msra.mxu0 0.0
    %961 = vmatprep.subr.mxu0 0.0
    %962 = vmatpush2.msra.mxu0 0.0
    %963 = vmatprep.subr.mxu0 0.0
    %964 = vmatpush2.msra.mxu0 0.0
    %965 = vmatprep.subr.mxu0 0.0
    %966 = vmatpush2.msra.mxu0 0.0
    %967 = vmatprep.subr.mxu0 0.0
    %968 = vmatpush2.msra.mxu0 0.0
    %969 = vmatprep.subr.mxu0 0.0
    %970 = vmatpush2.msra.mxu0 0.0
    %971 = vmatprep.subr.mxu0 0.0
    %972 = vmatpush2.msra.mxu0 0.0
    %973 = vmatprep.subr.mxu0 0.0
    %974 = vmatpush2.msra.mxu0 0.0
    %975 = vmatprep.subr.mxu0 0.0
    %976 = vmatpush2.msra.mxu0 0.0
    %977 = vmatprep.subr.mxu0 0.0
    %978 = vmatpush2.msra.mxu0 0.0
    %979 = vmatprep.subr.mxu0 0.0
    %980 = vmatpush2.msra.mxu0 0.0
    %981 = vmatprep.subr.mxu0 0.0
    %982 = vmatpush2.msra.mxu0 0.0
    %983 = vmatprep.mubr.f32.mxu0 0.0
    %984 = vmatmul.mubr.f32.gmra.mxu0 0.0
    %v985 = vpop.f32.mrf.mxu0
    %v986 = vadd.f32 0.0, %v985
    %v987 = vpop.f32.mrf.mxu0
    %v988 = vadd.f32 0.0, %v987
    %989 = vdwg.mxu0
    %v990 = vadd.f32 %v780, %v915
    %v991 = vadd.f32 %v781, %v917
    %v992 = vadd.f32 %v782, %v986
    %v993 = vadd.f32 %v783, %v988
    %v994 = vxor.u32 %v990, 2147483648
    %v995 = vxor.u32 %v991, 2147483648
    %v996 = vxor.u32 %v992, 2147483648
    %v997 = vmul.f32 %v994, 1.442695
    %v998 = vpow.pop %v997
    %v999 = vmul.f32 %v995, 1.442695
    %v1000 = vpow.pop %v999
    %v1001 = vmul.f32 %v996, 1.442695
    %v1002 = vpow.pop %v1001
    %v1003 = vadd.f32 %v998, 1.0
    %v1004 = vadd.f32 %v1000, 1.0
    %v1005 = vadd.f32 %v1002, 1.0
    %v1006 = vrcp.pop %v1003
    %v1007 = vmul.f32 1.0, %v1006
    %v1008 = vrcp.pop %v1004
    %v1009 = vmul.f32 1.0, %v1008
    %v1010 = vrcp.pop %v1005
    %v1011 = vmul.f32 1.0, %v1010
    %v1012 = vtanh.pop %v993
    %v1013 = vmul.f32 %v1009, 0.0
    %v1014 = vmul.f32 %v1007, %v1012
    %v1015 = vadd.f32 %v1013, %v1014
    %v1016 = vtanh.pop %v1015
    %v1017 = vmul.f32 %v1011, %v1016
    %v1018 = vld [vmem:[#allocation2 + $0x20] sm:$0xff]
    %v1019 = vld [vmem:[#allocation2 + $0x28] sm:$0xff]
    %v1020 = vld [vmem:[#allocation2 + $0x30] sm:$0xff]
    %v1021 = vld [vmem:[#allocation2 + $0x38] sm:$0xff]
    %1022 = vmatprep.subr.mxu0 %v845
    %1023 = vmatpush1.msra.mxu0 %v844
    %1024 = vmatprep.subr.mxu0 %v841
    %1025 = vmatpush1.msra.mxu0 %v840
    %1026 = vmatprep.subr.mxu0 %v837
    %1027 = vmatpush1.msra.mxu0 %v836
    %1028 = vmatprep.subr.mxu0 %v833
    %1029 = vmatpush1.msra.mxu0 %v832
    %1030 = vmatprep.subr.mxu0 %v829
    %1031 = vmatpush1.msra.mxu0 %v828
    %1032 = vmatprep.subr.mxu0 %v825
    %1033 = vmatpush1.msra.mxu0 %v824
    %1034 = vmatprep.subr.mxu0 %v821
    %1035 = vmatpush1.msra.mxu0 %v820
    %1036 = vmatprep.subr.mxu0 %v817
    %1037 = vmatpush1.msra.mxu0 %v816
    %1038 = vmatprep.subr.mxu0 %v813
    %1039 = vmatpush1.msra.mxu0 %v812
    %1040 = vmatprep.subr.mxu0 %v809
    %1041 = vmatpush1.msra.mxu0 %v808
    %1042 = vmatprep.subr.mxu0 %v805
    %1043 = vmatpush1.msra.mxu0 %v804
    %1044 = vmatprep.subr.mxu0 %v801
    %1045 = vmatpush1.msra.mxu0 %v800
    %1046 = vmatprep.subr.mxu0 %v797
    %1047 = vmatpush1.msra.mxu0 %v796
    %1048 = vmatprep.subr.mxu0 %v793
    %1049 = vmatpush1.msra.mxu0 %v792
    %1050 = vmatprep.subr.mxu0 %v789
    %1051 = vmatpush1.msra.mxu0 %v788
    %1052 = vmatprep.subr.mxu0 %v785
    %1053 = vmatpush1.msra.mxu0 %v784
    %1054 = vmatprep.subr.mxu0 0.0
    %1055 = vmatpush2.msra.mxu0 0.0
    %1056 = vmatprep.subr.mxu0 0.0
    %1057 = vmatpush2.msra.mxu0 0.0
    %1058 = vmatprep.subr.mxu0 0.0
    %1059 = vmatpush2.msra.mxu0 0.0
    %1060 = vmatprep.subr.mxu0 0.0
    %1061 = vmatpush2.msra.mxu0 0.0
    %1062 = vmatprep.subr.mxu0 0.0
    %1063 = vmatpush2.msra.mxu0 0.0
    %1064 = vmatprep.subr.mxu0 0.0
    %1065 = vmatpush2.msra.mxu0 0.0
    %1066 = vmatprep.subr.mxu0 0.0
    %1067 = vmatpush2.msra.mxu0 0.0
    %1068 = vmatprep.subr.mxu0 0.0
    %1069 = vmatpush2.msra.mxu0 0.0
    %1070 = vmatprep.subr.mxu0 0.0
    %1071 = vmatpush2.msra.mxu0 0.0
    %1072 = vmatprep.subr.mxu0 0.0
    %1073 = vmatpush2.msra.mxu0 0.0
    %1074 = vmatprep.subr.mxu0 0.0
    %1075 = vmatpush2.msra.mxu0 0.0
    %1076 = vmatprep.subr.mxu0 0.0
    %1077 = vmatpush2.msra.mxu0 0.0
    %1078 = vmatprep.subr.mxu0 0.0
    %1079 = vmatpush2.msra.mxu0 0.0
    %1080 = vmatprep.subr.mxu0 0.0
    %1081 = vmatpush2.msra.mxu0 0.0
    %1082 = vmatprep.subr.mxu0 0.0
    %1083 = vmatpush2.msra.mxu0 0.0
    %1084 = vmatprep.subr.mxu0 0.0
    %1085 = vmatpush2.msra.mxu0 0.0
    %1086 = vmatprep.mubr.f32.mxu0 0.0
    %1087 = vmatmul.mubr.f32.gmra.mxu0 %v1017
    %v1088 = vpop.f32.mrf.mxu0
    %v1089 = vadd.f32 0.0, %v1088
    %v1090 = vpop.f32.mrf.mxu0
    %v1091 = vadd.f32 0.0, %v1090
    %1092 = vdwg.mxu0
    %1093 = vmatprep.subr.mxu0 %v847
    %1094 = vmatpush1.msra.mxu0 %v846
    %1095 = vmatprep.subr.mxu0 %v843
    %1096 = vmatpush1.msra.mxu0 %v842
    %1097 = vmatprep.subr.mxu0 %v839
    %1098 = vmatpush1.msra.mxu0 %v838
    %1099 = vmatprep.subr.mxu0 %v835
    %1100 = vmatpush1.msra.mxu0 %v834
    %1101 = vmatprep.subr.mxu0 %v831
    %1102 = vmatpush1.msra.mxu0 %v830
    %1103 = vmatprep.subr.mxu0 %v827
    %1104 = vmatpush1.msra.mxu0 %v826
    %1105 = vmatprep.subr.mxu0 %v823
    %1106 = vmatpush1.msra.mxu0 %v822
    %1107 = vmatprep.subr.mxu0 %v819
    %1108 = vmatpush1.msra.mxu0 %v818
    %1109 = vmatprep.subr.mxu0 %v815
    %1110 = vmatpush1.msra.mxu0 %v814
    %1111 = vmatprep.subr.mxu0 %v811
    %1112 = vmatpush1.msra.mxu0 %v810
    %1113 = vmatprep.subr.mxu0 %v807
    %1114 = vmatpush1.msra.mxu0 %v806
    %1115 = vmatprep.subr.mxu0 %v803
    %1116 = vmatpush1.msra.mxu0 %v802
    %1117 = vmatprep.subr.mxu0 %v799
    %1118 = vmatpush1.msra.mxu0 %v798
    %1119 = vmatprep.subr.mxu0 %v795
    %1120 = vmatpush1.msra.mxu0 %v794
    %1121 = vmatprep.subr.mxu0 %v791
    %1122 = vmatpush1.msra.mxu0 %v790
    %1123 = vmatprep.subr.mxu0 %v787
    %1124 = vmatpush1.msra.mxu0 %v786
    %1125 = vmatprep.subr.mxu0 0.0
    %1126 = vmatpush2.msra.mxu0 0.0
    %1127 = vmatprep.subr.mxu0 0.0
    %1128 = vmatpush2.msra.mxu0 0.0
    %1129 = vmatprep.subr.mxu0 0.0
    %1130 = vmatpush2.msra.mxu0 0.0
    %1131 = vmatprep.subr.mxu0 0.0
    %1132 = vmatpush2.msra.mxu0 0.0
    %1133 = vmatprep.subr.mxu0 0.0
    %1134 = vmatpush2.msra.mxu0 0.0
    %1135 = vmatprep.subr.mxu0 0.0
    %1136 = vmatpush2.msra.mxu0 0.0
    %1137 = vmatprep.subr.mxu0 0.0
    %1138 = vmatpush2.msra.mxu0 0.0
    %1139 = vmatprep.subr.mxu0 0.0
    %1140 = vmatpush2.msra.mxu0 0.0
    %1141 = vmatprep.subr.mxu0 0.0
    %1142 = vmatpush2.msra.mxu0 0.0
    %1143 = vmatprep.subr.mxu0 0.0
    %1144 = vmatpush2.msra.mxu0 0.0
    %1145 = vmatprep.subr.mxu0 0.0
    %1146 = vmatpush2.msra.mxu0 0.0
    %1147 = vmatprep.subr.mxu0 0.0
    %1148 = vmatpush2.msra.mxu0 0.0
    %1149 = vmatprep.subr.mxu0 0.0
    %1150 = vmatpush2.msra.mxu0 0.0
    %1151 = vmatprep.subr.mxu0 0.0
    %1152 = vmatpush2.msra.mxu0 0.0
    %1153 = vmatprep.subr.mxu0 0.0
    %1154 = vmatpush2.msra.mxu0 0.0
    %1155 = vmatprep.subr.mxu0 0.0
    %1156 = vmatpush2.msra.mxu0 0.0
    %1157 = vmatprep.mubr.f32.mxu0 0.0
    %1158 = vmatmul.mubr.f32.gmra.mxu0 %v1017
    %v1159 = vpop.f32.mrf.mxu0
    %v1160 = vadd.f32 0.0, %v1159
    %v1161 = vpop.f32.mrf.mxu0
    %v1162 = vadd.f32 0.0, %v1161
    %1163 = vdwg.mxu0
    %v1164 = vadd.f32 %v1018, %v1089
    %v1165 = vadd.f32 %v1019, %v1091
    %v1166 = vadd.f32 %v1020, %v1160
    %v1167 = vadd.f32 %v1021, %v1162
    %v1168 = vxor.u32 %v1164, 2147483648
    %v1169 = vxor.u32 %v1165, 2147483648
    %v1170 = vxor.u32 %v1166, 2147483648
    %v1171 = vmul.f32 %v1168, 1.442695
    %v1172 = vpow.pop %v1171
    %v1173 = vmul.f32 %v1169, 1.442695
    %v1174 = vpow.pop %v1173
    %v1175 = vmul.f32 %v1170, 1.442695
    %v1176 = vpow.pop %v1175
    %v1177 = vadd.f32 %v1172, 1.0
    %v1178 = vadd.f32 %v1174, 1.0
    %v1179 = vadd.f32 %v1176, 1.0
    %v1180 = vrcp.pop %v1177
    %v1181 = vmul.f32 1.0, %v1180
    %v1182 = vrcp.pop %v1178
    %v1183 = vmul.f32 1.0, %v1182
    %v1184 = vrcp.pop %v1179
    %v1185 = vmul.f32 1.0, %v1184
    %v1186 = vtanh.pop %v1167
    %v1187 = vmul.f32 %v1183, %v1015
    %v1188 = vmul.f32 %v1181, %v1186
    %v1189 = vadd.f32 %v1187, %v1188
    %v1190 = vtanh.pop %v1189
    %v1191 = vmul.f32 %v1185, %v1190
    %v1192 = vld [vmem:[#allocation2 + $0x40] sm:$0xff]
    %v1193 = vld [vmem:[#allocation2 + $0x48] sm:$0xff]
    %v1194 = vld [vmem:[#allocation2 + $0x50] sm:$0xff]
    %v1195 = vld [vmem:[#allocation2 + $0x58] sm:$0xff]
    %1196 = vmatprep.subr.mxu0 %v845
    %1197 = vmatpush1.msra.mxu0 %v844
    %1198 = vmatprep.subr.mxu0 %v841
    %1199 = vmatpush1.msra.mxu0 %v840
    %1200 = vmatprep.subr.mxu0 %v837
    %1201 = vmatpush1.msra.mxu0 %v836
    %1202 = vmatprep.subr.mxu0 %v833
    %1203 = vmatpush1.msra.mxu0 %v832
    %1204 = vmatprep.subr.mxu0 %v829
    %1205 = vmatpush1.msra.mxu0 %v828
    %1206 = vmatprep.subr.mxu0 %v825
    %1207 = vmatpush1.msra.mxu0 %v824
    %1208 = vmatprep.subr.mxu0 %v821
    %1209 = vmatpush1.msra.mxu0 %v820
    %1210 = vmatprep.subr.mxu0 %v817
    %1211 = vmatpush1.msra.mxu0 %v816
    %1212 = vmatprep.subr.mxu0 %v813
    %1213 = vmatpush1.msra.mxu0 %v812
    %1214 = vmatprep.subr.mxu0 %v809
    %1215 = vmatpush1.msra.mxu0 %v808
    %1216 = vmatprep.subr.mxu0 %v805
    %1217 = vmatpush1.msra.mxu0 %v804
    %1218 = vmatprep.subr.mxu0 %v801
    %1219 = vmatpush1.msra.mxu0 %v800
    %1220 = vmatprep.subr.mxu0 %v797
    %1221 = vmatpush1.msra.mxu0 %v796
    %1222 = vmatprep.subr.mxu0 %v793
    %1223 = vmatpush1.msra.mxu0 %v792
    %1224 = vmatprep.subr.mxu0 %v789
    %1225 = vmatpush1.msra.mxu0 %v788
    %1226 = vmatprep.subr.mxu0 %v785
    %1227 = vmatpush1.msra.mxu0 %v784
    %1228 = vmatprep.subr.mxu0 0.0
    %1229 = vmatpush2.msra.mxu0 0.0
    %1230 = vmatprep.subr.mxu0 0.0
    %1231 = vmatpush2.msra.mxu0 0.0
    %1232 = vmatprep.subr.mxu0 0.0
    %1233 = vmatpush2.msra.mxu0 0.0
    %1234 = vmatprep.subr.mxu0 0.0
    %1235 = vmatpush2.msra.mxu0 0.0
    %1236 = vmatprep.subr.mxu0 0.0
    %1237 = vmatpush2.msra.mxu0 0.0
    %1238 = vmatprep.subr.mxu0 0.0
    %1239 = vmatpush2.msra.mxu0 0.0
    %1240 = vmatprep.subr.mxu0 0.0
    %1241 = vmatpush2.msra.mxu0 0.0
    %1242 = vmatprep.subr.mxu0 0.0
    %1243 = vmatpush2.msra.mxu0 0.0
    %1244 = vmatprep.subr.mxu0 0.0
    %1245 = vmatpush2.msra.mxu0 0.0
    %1246 = vmatprep.subr.mxu0 0.0
    %1247 = vmatpush2.msra.mxu0 0.0
    %1248 = vmatprep.subr.mxu0 0.0
    %1249 = vmatpush2.msra.mxu0 0.0
    %1250 = vmatprep.subr.mxu0 0.0
    %1251 = vmatpush2.msra.mxu0 0.0
    %1252 = vmatprep.subr.mxu0 0.0
    %1253 = vmatpush2.msra.mxu0 0.0
    %1254 = vmatprep.subr.mxu0 0.0
    %1255 = vmatpush2.msra.mxu0 0.0
    %1256 = vmatprep.subr.mxu0 0.0
    %1257 = vmatpush2.msra.mxu0 0.0
    %1258 = vmatprep.subr.mxu0 0.0
    %1259 = vmatpush2.msra.mxu0 0.0
    %1260 = vmatprep.mubr.f32.mxu0 0.0
    %1261 = vmatmul.mubr.f32.gmra.mxu0 %v1191
    %v1262 = vpop.f32.mrf.mxu0
    %v1263 = vadd.f32 0.0, %v1262
    %v1264 = vpop.f32.mrf.mxu0
    %v1265 = vadd.f32 0.0, %v1264
    %1266 = vdwg.mxu0
    %1267 = vmatprep.subr.mxu0 %v847
    %1268 = vmatpush1.msra.mxu0 %v846
    %1269 = vmatprep.subr.mxu0 %v843
    %1270 = vmatpush1.msra.mxu0 %v842
    %1271 = vmatprep.subr.mxu0 %v839
    %1272 = vmatpush1.msra.mxu0 %v838
    %1273 = vmatprep.subr.mxu0 %v835
    %1274 = vmatpush1.msra.mxu0 %v834
    %1275 = vmatprep.subr.mxu0 %v831
    %1276 = vmatpush1.msra.mxu0 %v830
    %1277 = vmatprep.subr.mxu0 %v827
    %1278 = vmatpush1.msra.mxu0 %v826
    %1279 = vmatprep.subr.mxu0 %v823
    %1280 = vmatpush1.msra.mxu0 %v822
    %1281 = vmatprep.subr.mxu0 %v819
    %1282 = vmatpush1.msra.mxu0 %v818
    %1283 = vmatprep.subr.mxu0 %v815
    %1284 = vmatpush1.msra.mxu0 %v814
    %1285 = vmatprep.subr.mxu0 %v811
    %1286 = vmatpush1.msra.mxu0 %v810
    %1287 = vmatprep.subr.mxu0 %v807
    %1288 = vmatpush1.msra.mxu0 %v806
    %1289 = vmatprep.subr.mxu0 %v803
    %1290 = vmatpush1.msra.mxu0 %v802
    %1291 = vmatprep.subr.mxu0 %v799
    %1292 = vmatpush1.msra.mxu0 %v798
    %1293 = vmatprep.subr.mxu0 %v795
    %1294 = vmatpush1.msra.mxu0 %v794
    %1295 = vmatprep.subr.mxu0 %v791
    %1296 = vmatpush1.msra.mxu0 %v790
    %1297 = vmatprep.subr.mxu0 %v787
    %1298 = vmatpush1.msra.mxu0 %v786
    %1299 = vmatprep.subr.mxu0 0.0
    %1300 = vmatpush2.msra.mxu0 0.0
    %1301 = vmatprep.subr.mxu0 0.0
    %1302 = vmatpush2.msra.mxu0 0.0
    %1303 = vmatprep.subr.mxu0 0.0
    %1304 = vmatpush2.msra.mxu0 0.0
    %1305 = vmatprep.subr.mxu0 0.0
    %1306 = vmatpush2.msra.mxu0 0.0
    %1307 = vmatprep.subr.mxu0 0.0
    %1308 = vmatpush2.msra.mxu0 0.0
    %1309 = vmatprep.subr.mxu0 0.0
    %1310 = vmatpush2.msra.mxu0 0.0
    %1311 = vmatprep.subr.mxu0 0.0
    %1312 = vmatpush2.msra.mxu0 0.0
    %1313 = vmatprep.subr.mxu0 0.0
    %1314 = vmatpush2.msra.mxu0 0.0
    %1315 = vmatprep.subr.mxu0 0.0
    %1316 = vmatpush2.msra.mxu0 0.0
    %1317 = vmatprep.subr.mxu0 0.0
    %1318 = vmatpush2.msra.mxu0 0.0
    %1319 = vmatprep.subr.mxu0 0.0
    %1320 = vmatpush2.msra.mxu0 0.0
    %1321 = vmatprep.subr.mxu0 0.0
    %1322 = vmatpush2.msra.mxu0 0.0
    %1323 = vmatprep.subr.mxu0 0.0
    %1324 = vmatpush2.msra.mxu0 0.0
    %1325 = vmatprep.subr.mxu0 0.0
    %1326 = vmatpush2.msra.mxu0 0.0
    %1327 = vmatprep.subr.mxu0 0.0
    %1328 = vmatpush2.msra.mxu0 0.0
    %1329 = vmatprep.subr.mxu0 0.0
    %1330 = vmatpush2.msra.mxu0 0.0
    %1331 = vmatprep.mubr.f32.mxu0 0.0
    %1332 = vmatmul.mubr.f32.gmra.mxu0 %v1191
    %v1333 = vpop.f32.mrf.mxu0
    %v1334 = vadd.f32 0.0, %v1333
    %v1335 = vpop.f32.mrf.mxu0
    %v1336 = vadd.f32 0.0, %v1335
    %1337 = vdwg.mxu0
    %v1338 = vadd.f32 %v1192, %v1263
    %v1339 = vadd.f32 %v1193, %v1265
    %v1340 = vadd.f32 %v1194, %v1334
    %v1341 = vadd.f32 %v1195, %v1336
    %v1342 = vxor.u32 %v1338, 2147483648
    %v1343 = vxor.u32 %v1339, 2147483648
    %v1344 = vxor.u32 %v1340, 2147483648
    %v1345 = vmul.f32 %v1342, 1.442695
    %v1346 = vpow.pop %v1345
    %v1347 = vmul.f32 %v1343, 1.442695
    %v1348 = vpow.pop %v1347
    %v1349 = vmul.f32 %v1344, 1.442695
    %v1350 = vpow.pop %v1349
    %v1351 = vadd.f32 %v1346, 1.0
    %v1352 = vadd.f32 %v1348, 1.0
    %v1353 = vadd.f32 %v1350, 1.0
    %v1354 = vrcp.pop %v1351
    %v1355 = vmul.f32 1.0, %v1354
    %v1356 = vrcp.pop %v1352
    %v1357 = vmul.f32 1.0, %v1356
    %v1358 = vrcp.pop %v1353
    %v1359 = vmul.f32 1.0, %v1358
    %v1360 = vtanh.pop %v1341
    %v1361 = vmul.f32 %v1357, %v1189
    %v1362 = vmul.f32 %v1355, %v1360
    %v1363 = vadd.f32 %v1361, %v1362
    %v1364 = vtanh.pop %v1363
    %v1365 = vmul.f32 %v1359, %v1364
    %v1366 = vld [vmem:[#allocation2 + $0x60] sm:$0xff]
    %v1367 = vld [vmem:[#allocation2 + $0x68] sm:$0xff]
    %v1368 = vld [vmem:[#allocation2 + $0x70] sm:$0xff]
    %v1369 = vld [vmem:[#allocation2 + $0x78] sm:$0xff]
    %1370 = vmatprep.subr.mxu0 %v845
    %1371 = vmatpush1.msra.mxu0 %v844
    %1372 = vmatprep.subr.mxu0 %v841
    %1373 = vmatpush1.msra.mxu0 %v840
    %1374 = vmatprep.subr.mxu0 %v837
    %1375 = vmatpush1.msra.mxu0 %v836
    %1376 = vmatprep.subr.mxu0 %v833
    %1377 = vmatpush1.msra.mxu0 %v832
    %1378 = vmatprep.subr.mxu0 %v829
    %1379 = vmatpush1.msra.mxu0 %v828
    %1380 = vmatprep.subr.mxu0 %v825
    %1381 = vmatpush1.msra.mxu0 %v824
    %1382 = vmatprep.subr.mxu0 %v821
    %1383 = vmatpush1.msra.mxu0 %v820
    %1384 = vmatprep.subr.mxu0 %v817
    %1385 = vmatpush1.msra.mxu0 %v816
    %1386 = vmatprep.subr.mxu0 %v813
    %1387 = vmatpush1.msra.mxu0 %v812
    %1388 = vmatprep.subr.mxu0 %v809
    %1389 = vmatpush1.msra.mxu0 %v808
    %1390 = vmatprep.subr.mxu0 %v805
    %1391 = vmatpush1.msra.mxu0 %v804
    %1392 = vmatprep.subr.mxu0 %v801
    %1393 = vmatpush1.msra.mxu0 %v800
    %1394 = vmatprep.subr.mxu0 %v797
    %1395 = vmatpush1.msra.mxu0 %v796
    %1396 = vmatprep.subr.mxu0 %v793
    %1397 = vmatpush1.msra.mxu0 %v792
    %1398 = vmatprep.subr.mxu0 %v789
    %1399 = vmatpush1.msra.mxu0 %v788
    %1400 = vmatprep.subr.mxu0 %v785
    %1401 = vmatpush1.msra.mxu0 %v784
    %1402 = vmatprep.subr.mxu0 0.0
    %1403 = vmatpush2.msra.mxu0 0.0
    %1404 = vmatprep.subr.mxu0 0.0
    %1405 = vmatpush2.msra.mxu0 0.0
    %1406 = vmatprep.subr.mxu0 0.0
    %1407 = vmatpush2.msra.mxu0 0.0
    %1408 = vmatprep.subr.mxu0 0.0
    %1409 = vmatpush2.msra.mxu0 0.0
    %1410 = vmatprep.subr.mxu0 0.0
    %1411 = vmatpush2.msra.mxu0 0.0
    %1412 = vmatprep.subr.mxu0 0.0
    %1413 = vmatpush2.msra.mxu0 0.0
    %1414 = vmatprep.subr.mxu0 0.0
    %1415 = vmatpush2.msra.mxu0 0.0
    %1416 = vmatprep.subr.mxu0 0.0
    %1417 = vmatpush2.msra.mxu0 0.0
    %1418 = vmatprep.subr.mxu0 0.0
    %1419 = vmatpush2.msra.mxu0 0.0
    %1420 = vmatprep.subr.mxu0 0.0
    %1421 = vmatpush2.msra.mxu0 0.0
    %1422 = vmatprep.subr.mxu0 0.0
    %1423 = vmatpush2.msra.mxu0 0.0
    %1424 = vmatprep.subr.mxu0 0.0
    %1425 = vmatpush2.msra.mxu0 0.0
    %1426 = vmatprep.subr.mxu0 0.0
    %1427 = vmatpush2.msra.mxu0 0.0
    %1428 = vmatprep.subr.mxu0 0.0
    %1429 = vmatpush2.msra.mxu0 0.0
    %1430 = vmatprep.subr.mxu0 0.0
    %1431 = vmatpush2.msra.mxu0 0.0
    %1432 = vmatprep.subr.mxu0 0.0
    %1433 = vmatpush2.msra.mxu0 0.0
    %1434 = vmatprep.mubr.f32.mxu0 0.0
    %1435 = vmatmul.mubr.f32.gmra.mxu0 %v1365
    %v1436 = vpop.f32.mrf.mxu0
    %v1437 = vadd.f32 0.0, %v1436
    %v1438 = vpop.f32.mrf.mxu0
    %v1439 = vadd.f32 0.0, %v1438
    %1440 = vdwg.mxu0
    %1441 = vmatprep.subr.mxu0 %v847
    %1442 = vmatpush1.msra.mxu0 %v846
    %1443 = vmatprep.subr.mxu0 %v843
    %1444 = vmatpush1.msra.mxu0 %v842
    %1445 = vmatprep.subr.mxu0 %v839
    %1446 = vmatpush1.msra.mxu0 %v838
    %1447 = vmatprep.subr.mxu0 %v835
    %1448 = vmatpush1.msra.mxu0 %v834
    %1449 = vmatprep.subr.mxu0 %v831
    %1450 = vmatpush1.msra.mxu0 %v830
    %1451 = vmatprep.subr.mxu0 %v827
    %1452 = vmatpush1.msra.mxu0 %v826
    %1453 = vmatprep.subr.mxu0 %v823
    %1454 = vmatpush1.msra.mxu0 %v822
    %1455 = vmatprep.subr.mxu0 %v819
    %1456 = vmatpush1.msra.mxu0 %v818
    %1457 = vmatprep.subr.mxu0 %v815
    %1458 = vmatpush1.msra.mxu0 %v814
    %1459 = vmatprep.subr.mxu0 %v811
    %1460 = vmatpush1.msra.mxu0 %v810
    %1461 = vmatprep.subr.mxu0 %v807
    %1462 = vmatpush1.msra.mxu0 %v806
    %1463 = vmatprep.subr.mxu0 %v803
    %1464 = vmatpush1.msra.mxu0 %v802
    %1465 = vmatprep.subr.mxu0 %v799
    %1466 = vmatpush1.msra.mxu0 %v798
    %1467 = vmatprep.subr.mxu0 %v795
    %1468 = vmatpush1.msra.mxu0 %v794
    %1469 = vmatprep.subr.mxu0 %v791
    %1470 = vmatpush1.msra.mxu0 %v790
    %1471 = vmatprep.subr.mxu0 %v787
    %1472 = vmatpush1.msra.mxu0 %v786
    %1473 = vmatprep.subr.mxu0 0.0
    %1474 = vmatpush2.msra.mxu0 0.0
    %1475 = vmatprep.subr.mxu0 0.0
    %1476 = vmatpush2.msra.mxu0 0.0
    %1477 = vmatprep.subr.mxu0 0.0
    %1478 = vmatpush2.msra.mxu0 0.0
    %1479 = vmatprep.subr.mxu0 0.0
    %1480 = vmatpush2.msra.mxu0 0.0
    %1481 = vmatprep.subr.mxu0 0.0
    %1482 = vmatpush2.msra.mxu0 0.0
    %1483 = vmatprep.subr.mxu0 0.0
    %1484 = vmatpush2.msra.mxu0 0.0
    %1485 = vmatprep.subr.mxu0 0.0
    %1486 = vmatpush2.msra.mxu0 0.0
    %1487 = vmatprep.subr.mxu0 0.0
    %1488 = vmatpush2.msra.mxu0 0.0
    %1489 = vmatprep.subr.mxu0 0.0
    %1490 = vmatpush2.msra.mxu0 0.0
    %1491 = vmatprep.subr.mxu0 0.0
    %1492 = vmatpush2.msra.mxu0 0.0
    %1493 = vmatprep.subr.mxu0 0.0
    %1494 = vmatpush2.msra.mxu0 0.0
    %1495 = vmatprep.subr.mxu0 0.0
    %1496 = vmatpush2.msra.mxu0 0.0
    %1497 = vmatprep.subr.mxu0 0.0
    %1498 = vmatpush2.msra.mxu0 0.0
    %1499 = vmatprep.subr.mxu0 0.0
    %1500 = vmatpush2.msra.mxu0 0.0
    %1501 = vmatprep.subr.mxu0 0.0
    %1502 = vmatpush2.msra.mxu0 0.0
    %1503 = vmatprep.subr.mxu0 0.0
    %1504 = vmatpush2.msra.mxu0 0.0
    %1505 = vmatprep.mubr.f32.mxu0 0.0
    %1506 = vmatmul.mubr.f32.gmra.mxu0 %v1365
    %v1507 = vpop.f32.mrf.mxu0
    %v1508 = vadd.f32 0.0, %v1507
    %v1509 = vpop.f32.mrf.mxu0
    %v1510 = vadd.f32 0.0, %v1509
    %1511 = vdwg.mxu0
    %v1512 = vadd.f32 %v1366, %v1437
    %v1513 = vadd.f32 %v1367, %v1439
    %v1514 = vadd.f32 %v1368, %v1508
    %v1515 = vadd.f32 %v1369, %v1510
    %v1516 = vxor.u32 %v1512, 2147483648
    %v1517 = vxor.u32 %v1513, 2147483648
    %v1518 = vxor.u32 %v1514, 2147483648
    %v1519 = vmul.f32 %v1516, 1.442695
    %v1520 = vpow.pop %v1519
    %v1521 = vmul.f32 %v1517, 1.442695
    %v1522 = vpow.pop %v1521
    %v1523 = vmul.f32 %v1518, 1.442695
    %v1524 = vpow.pop %v1523
    %v1525 = vadd.f32 %v1520, 1.0
    %v1526 = vadd.f32 %v1522, 1.0
    %v1527 = vadd.f32 %v1524, 1.0
    %v1528 = vrcp.pop %v1525
    %v1529 = vmul.f32 1.0, %v1528
    %v1530 = vrcp.pop %v1526
    %v1531 = vmul.f32 1.0, %v1530
    %v1532 = vrcp.pop %v1527
    %v1533 = vmul.f32 1.0, %v1532
    %v1534 = vtanh.pop %v1515
    %v1535 = vmul.f32 %v1531, %v1363
    %v1536 = vmul.f32 %v1529, %v1534
    %v1537 = vadd.f32 %v1535, %v1536
    %v1538 = vtanh.pop %v1537
    %v1539 = vmul.f32 %v1533, %v1538
    %v1540 = vld [vmem:[#allocation2 + $0x80] sm:$0xff]
    %v1541 = vld [vmem:[#allocation2 + $0x88] sm:$0xff]
    %v1542 = vld [vmem:[#allocation2 + $0x90] sm:$0xff]
    %v1543 = vld [vmem:[#allocation2 + $0x98] sm:$0xff]
    %1544 = vmatprep.subr.mxu0 %v845
    %1545 = vmatpush1.msra.mxu0 %v844
    %1546 = vmatprep.subr.mxu0 %v841
    %1547 = vmatpush1.msra.mxu0 %v840
    %1548 = vmatprep.subr.mxu0 %v837
    %1549 = vmatpush1.msra.mxu0 %v836
    %1550 = vmatprep.subr.mxu0 %v833
    %1551 = vmatpush1.msra.mxu0 %v832
    %1552 = vmatprep.subr.mxu0 %v829
    %1553 = vmatpush1.msra.mxu0 %v828
    %1554 = vmatprep.subr.mxu0 %v825
    %1555 = vmatpush1.msra.mxu0 %v824
    %1556 = vmatprep.subr.mxu0 %v821
    %1557 = vmatpush1.msra.mxu0 %v820
    %1558 = vmatprep.subr.mxu0 %v817
    %1559 = vmatpush1.msra.mxu0 %v816
    %1560 = vmatprep.subr.mxu0 %v813
    %1561 = vmatpush1.msra.mxu0 %v812
    %1562 = vmatprep.subr.mxu0 %v809
    %1563 = vmatpush1.msra.mxu0 %v808
    %1564 = vmatprep.subr.mxu0 %v805
    %1565 = vmatpush1.msra.mxu0 %v804
    %1566 = vmatprep.subr.mxu0 %v801
    %1567 = vmatpush1.msra.mxu0 %v800
    %1568 = vmatprep.subr.mxu0 %v797
    %1569 = vmatpush1.msra.mxu0 %v796
    %1570 = vmatprep.subr.mxu0 %v793
    %1571 = vmatpush1.msra.mxu0 %v792
    %1572 = vmatprep.subr.mxu0 %v789
    %1573 = vmatpush1.msra.mxu0 %v788
    %1574 = vmatprep.subr.mxu0 %v785
    %1575 = vmatpush1.msra.mxu0 %v784
    %1576 = vmatprep.subr.mxu0 0.0
    %1577 = vmatpush2.msra.mxu0 0.0
    %1578 = vmatprep.subr.mxu0 0.0
    %1579 = vmatpush2.msra.mxu0 0.0
    %1580 = vmatprep.subr.mxu0 0.0
    %1581 = vmatpush2.msra.mxu0 0.0
    %1582 = vmatprep.subr.mxu0 0.0
    %1583 = vmatpush2.msra.mxu0 0.0
    %1584 = vmatprep.subr.mxu0 0.0
    %1585 = vmatpush2.msra.mxu0 0.0
    %1586 = vmatprep.subr.mxu0 0.0
    %1587 = vmatpush2.msra.mxu0 0.0
    %1588 = vmatprep.subr.mxu0 0.0
    %1589 = vmatpush2.msra.mxu0 0.0
    %1590 = vmatprep.subr.mxu0 0.0
    %1591 = vmatpush2.msra.mxu0 0.0
    %1592 = vmatprep.subr.mxu0 0.0
    %1593 = vmatpush2.msra.mxu0 0.0
    %1594 = vmatprep.subr.mxu0 0.0
    %1595 = vmatpush2.msra.mxu0 0.0
    %1596 = vmatprep.subr.mxu0 0.0
    %1597 = vmatpush2.msra.mxu0 0.0
    %1598 = vmatprep.subr.mxu0 0.0
    %1599 = vmatpush2.msra.mxu0 0.0
    %1600 = vmatprep.subr.mxu0 0.0
    %1601 = vmatpush2.msra.mxu0 0.0
    %1602 = vmatprep.subr.mxu0 0.0
    %1603 = vmatpush2.msra.mxu0 0.0
    %1604 = vmatprep.subr.mxu0 0.0
    %1605 = vmatpush2.msra.mxu0 0.0
    %1606 = vmatprep.subr.mxu0 0.0
    %1607 = vmatpush2.msra.mxu0 0.0
    %1608 = vmatprep.mubr.f32.mxu0 0.0
    %1609 = vmatmul.mubr.f32.gmra.mxu0 %v1539
    %v1610 = vpop.f32.mrf.mxu0
    %v1611 = vadd.f32 0.0, %v1610
    %v1612 = vpop.f32.mrf.mxu0
    %v1613 = vadd.f32 0.0, %v1612
    %1614 = vdwg.mxu0
    %1615 = vmatprep.subr.mxu0 %v847
    %1616 = vmatpush1.msra.mxu0 %v846
    %1617 = vmatprep.subr.mxu0 %v843
    %1618 = vmatpush1.msra.mxu0 %v842
    %1619 = vmatprep.subr.mxu0 %v839
    %1620 = vmatpush1.msra.mxu0 %v838
    %1621 = vmatprep.subr.mxu0 %v835
    %1622 = vmatpush1.msra.mxu0 %v834
    %1623 = vmatprep.subr.mxu0 %v831
    %1624 = vmatpush1.msra.mxu0 %v830
    %1625 = vmatprep.subr.mxu0 %v827
    %1626 = vmatpush1.msra.mxu0 %v826
    %1627 = vmatprep.subr.mxu0 %v823
    %1628 = vmatpush1.msra.mxu0 %v822
    %1629 = vmatprep.subr.mxu0 %v819
    %1630 = vmatpush1.msra.mxu0 %v818
    %1631 = vmatprep.subr.mxu0 %v815
    %1632 = vmatpush1.msra.mxu0 %v814
    %1633 = vmatprep.subr.mxu0 %v811
    %1634 = vmatpush1.msra.mxu0 %v810
    %1635 = vmatprep.subr.mxu0 %v807
    %1636 = vmatpush1.msra.mxu0 %v806
    %1637 = vmatprep.subr.mxu0 %v803
    %1638 = vmatpush1.msra.mxu0 %v802
    %1639 = vmatprep.subr.mxu0 %v799
    %1640 = vmatpush1.msra.mxu0 %v798
    %1641 = vmatprep.subr.mxu0 %v795
    %1642 = vmatpush1.msra.mxu0 %v794
    %1643 = vmatprep.subr.mxu0 %v791
    %1644 = vmatpush1.msra.mxu0 %v790
    %1645 = vmatprep.subr.mxu0 %v787
    %1646 = vmatpush1.msra.mxu0 %v786
    %1647 = vmatprep.subr.mxu0 0.0
    %1648 = vmatpush2.msra.mxu0 0.0
    %1649 = vmatprep.subr.mxu0 0.0
    %1650 = vmatpush2.msra.mxu0 0.0
    %1651 = vmatprep.subr.mxu0 0.0
    %1652 = vmatpush2.msra.mxu0 0.0
    %1653 = vmatprep.subr.mxu0 0.0
    %1654 = vmatpush2.msra.mxu0 0.0
    %1655 = vmatprep.subr.mxu0 0.0
    %1656 = vmatpush2.msra.mxu0 0.0
    %1657 = vmatprep.subr.mxu0 0.0
    %1658 = vmatpush2.msra.mxu0 0.0
    %1659 = vmatprep.subr.mxu0 0.0
    %1660 = vmatpush2.msra.mxu0 0.0
    %1661 = vmatprep.subr.mxu0 0.0
    %1662 = vmatpush2.msra.mxu0 0.0
    %1663 = vmatprep.subr.mxu0 0.0
    %1664 = vmatpush2.msra.mxu0 0.0
    %1665 = vmatprep.subr.mxu0 0.0
    %1666 = vmatpush2.msra.mxu0 0.0
    %1667 = vmatprep.subr.mxu0 0.0
    %1668 = vmatpush2.msra.mxu0 0.0
    %1669 = vmatprep.subr.mxu0 0.0
    %1670 = vmatpush2.msra.mxu0 0.0
    %1671 = vmatprep.subr.mxu0 0.0
    %1672 = vmatpush2.msra.mxu0 0.0
    %1673 = vmatprep.subr.mxu0 0.0
    %1674 = vmatpush2.msra.mxu0 0.0
    %1675 = vmatprep.subr.mxu0 0.0
    %1676 = vmatpush2.msra.mxu0 0.0
    %1677 = vmatprep.subr.mxu0 0.0
    %1678 = vmatpush2.msra.mxu0 0.0
    %1679 = vmatprep.mubr.f32.mxu0 0.0
    %1680 = vmatmul.mubr.f32.gmra.mxu0 %v1539
    %v1681 = vpop.f32.mrf.mxu0
    %v1682 = vadd.f32 0.0, %v1681
    %v1683 = vpop.f32.mrf.mxu0
    %v1684 = vadd.f32 0.0, %v1683
    %1685 = vdwg.mxu0
    %v1686 = vadd.f32 %v1540, %v1611
    %v1687 = vadd.f32 %v1541, %v1613
    %v1688 = vadd.f32 %v1542, %v1682
    %v1689 = vadd.f32 %v1543, %v1684
    %v1690 = vxor.u32 %v1686, 2147483648
    %v1691 = vxor.u32 %v1687, 2147483648
    %v1692 = vxor.u32 %v1688, 2147483648
    %v1693 = vmul.f32 %v1690, 1.442695
    %v1694 = vpow.pop %v1693
    %v1695 = vmul.f32 %v1691, 1.442695
    %v1696 = vpow.pop %v1695
    %v1697 = vmul.f32 %v1692, 1.442695
    %v1698 = vpow.pop %v1697
    %v1699 = vadd.f32 %v1694, 1.0
    %v1700 = vadd.f32 %v1696, 1.0
    %v1701 = vadd.f32 %v1698, 1.0
    %v1702 = vrcp.pop %v1699
    %v1703 = vmul.f32 1.0, %v1702
    %v1704 = vrcp.pop %v1700
    %v1705 = vmul.f32 1.0, %v1704
    %v1706 = vrcp.pop %v1701
    %v1707 = vmul.f32 1.0, %v1706
    %v1708 = vtanh.pop %v1689
    %v1709 = vmul.f32 %v1705, %v1537
    %v1710 = vmul.f32 %v1703, %v1708
    %v1711 = vadd.f32 %v1709, %v1710
    %v1712 = vtanh.pop %v1711
    %v1713 = vmul.f32 %v1707, %v1712
    %v1714 = vld [vmem:[#allocation2 + $0xa0] sm:$0xff]
    %v1715 = vld [vmem:[#allocation2 + $0xa8] sm:$0xff]
    %v1716 = vld [vmem:[#allocation2 + $0xb0] sm:$0xff]
    %v1717 = vld [vmem:[#allocation2 + $0xb8] sm:$0xff]
    %1718 = vmatprep.subr.mxu0 %v845
    %1719 = vmatpush1.msra.mxu0 %v844
    %1720 = vmatprep.subr.mxu0 %v841
    %1721 = vmatpush1.msra.mxu0 %v840
    %1722 = vmatprep.subr.mxu0 %v837
    %1723 = vmatpush1.msra.mxu0 %v836
    %1724 = vmatprep.subr.mxu0 %v833
    %1725 = vmatpush1.msra.mxu0 %v832
    %1726 = vmatprep.subr.mxu0 %v829
    %1727 = vmatpush1.msra.mxu0 %v828
    %1728 = vmatprep.subr.mxu0 %v825
    %1729 = vmatpush1.msra.mxu0 %v824
    %1730 = vmatprep.subr.mxu0 %v821
    %1731 = vmatpush1.msra.mxu0 %v820
    %1732 = vmatprep.subr.mxu0 %v817
    %1733 = vmatpush1.msra.mxu0 %v816
    %1734 = vmatprep.subr.mxu0 %v813
    %1735 = vmatpush1.msra.mxu0 %v812
    %1736 = vmatprep.subr.mxu0 %v809
    %1737 = vmatpush1.msra.mxu0 %v808
    %1738 = vmatprep.subr.mxu0 %v805
    %1739 = vmatpush1.msra.mxu0 %v804
    %1740 = vmatprep.subr.mxu0 %v801
    %1741 = vmatpush1.msra.mxu0 %v800
    %1742 = vmatprep.subr.mxu0 %v797
    %1743 = vmatpush1.msra.mxu0 %v796
    %1744 = vmatprep.subr.mxu0 %v793
    %1745 = vmatpush1.msra.mxu0 %v792
    %1746 = vmatprep.subr.mxu0 %v789
    %1747 = vmatpush1.msra.mxu0 %v788
    %1748 = vmatprep.subr.mxu0 %v785
    %1749 = vmatpush1.msra.mxu0 %v784
    %1750 = vmatprep.subr.mxu0 0.0
    %1751 = vmatpush2.msra.mxu0 0.0
    %1752 = vmatprep.subr.mxu0 0.0
    %1753 = vmatpush2.msra.mxu0 0.0
    %1754 = vmatprep.subr.mxu0 0.0
    %1755 = vmatpush2.msra.mxu0 0.0
    %1756 = vmatprep.subr.mxu0 0.0
    %1757 = vmatpush2.msra.mxu0 0.0
    %1758 = vmatprep.subr.mxu0 0.0
    %1759 = vmatpush2.msra.mxu0 0.0
    %1760 = vmatprep.subr.mxu0 0.0
    %1761 = vmatpush2.msra.mxu0 0.0
    %1762 = vmatprep.subr.mxu0 0.0
    %1763 = vmatpush2.msra.mxu0 0.0
    %1764 = vmatprep.subr.mxu0 0.0
    %1765 = vmatpush2.msra.mxu0 0.0
    %1766 = vmatprep.subr.mxu0 0.0
    %1767 = vmatpush2.msra.mxu0 0.0
    %1768 = vmatprep.subr.mxu0 0.0
    %1769 = vmatpush2.msra.mxu0 0.0
    %1770 = vmatprep.subr.mxu0 0.0
    %1771 = vmatpush2.msra.mxu0 0.0
    %1772 = vmatprep.subr.mxu0 0.0
    %1773 = vmatpush2.msra.mxu0 0.0
    %1774 = vmatprep.subr.mxu0 0.0
    %1775 = vmatpush2.msra.mxu0 0.0
    %1776 = vmatprep.subr.mxu0 0.0
    %1777 = vmatpush2.msra.mxu0 0.0
    %1778 = vmatprep.subr.mxu0 0.0
    %1779 = vmatpush2.msra.mxu0 0.0
    %1780 = vmatprep.subr.mxu0 0.0
    %1781 = vmatpush2.msra.mxu0 0.0
    %1782 = vmatprep.mubr.f32.mxu0 0.0
    %1783 = vmatmul.mubr.f32.gmra.mxu0 %v1713
    %v1784 = vpop.f32.mrf.mxu0
    %v1785 = vadd.f32 0.0, %v1784
    %v1786 = vpop.f32.mrf.mxu0
    %v1787 = vadd.f32 0.0, %v1786
    %1788 = vdwg.mxu0
    %1789 = vmatprep.subr.mxu0 %v847
    %1790 = vmatpush1.msra.mxu0 %v846
    %1791 = vmatprep.subr.mxu0 %v843
    %1792 = vmatpush1.msra.mxu0 %v842
    %1793 = vmatprep.subr.mxu0 %v839
    %1794 = vmatpush1.msra.mxu0 %v838
    %1795 = vmatprep.subr.mxu0 %v835
    %1796 = vmatpush1.msra.mxu0 %v834
    %1797 = vmatprep.subr.mxu0 %v831
    %1798 = vmatpush1.msra.mxu0 %v830
    %1799 = vmatprep.subr.mxu0 %v827
    %1800 = vmatpush1.msra.mxu0 %v826
    %1801 = vmatprep.subr.mxu0 %v823
    %1802 = vmatpush1.msra.mxu0 %v822
    %1803 = vmatprep.subr.mxu0 %v819
    %1804 = vmatpush1.msra.mxu0 %v818
    %1805 = vmatprep.subr.mxu0 %v815
    %1806 = vmatpush1.msra.mxu0 %v814
    %1807 = vmatprep.subr.mxu0 %v811
    %1808 = vmatpush1.msra.mxu0 %v810
    %1809 = vmatprep.subr.mxu0 %v807
    %1810 = vmatpush1.msra.mxu0 %v806
    %1811 = vmatprep.subr.mxu0 %v803
    %1812 = vmatpush1.msra.mxu0 %v802
    %1813 = vmatprep.subr.mxu0 %v799
    %1814 = vmatpush1.msra.mxu0 %v798
    %1815 = vmatprep.subr.mxu0 %v795
    %1816 = vmatpush1.msra.mxu0 %v794
    %1817 = vmatprep.subr.mxu0 %v791
    %1818 = vmatpush1.msra.mxu0 %v790
    %1819 = vmatprep.subr.mxu0 %v787
    %1820 = vmatpush1.msra.mxu0 %v786
    %1821 = vmatprep.subr.mxu0 0.0
    %1822 = vmatpush2.msra.mxu0 0.0
    %1823 = vmatprep.subr.mxu0 0.0
    %1824 = vmatpush2.msra.mxu0 0.0
    %1825 = vmatprep.subr.mxu0 0.0
    %1826 = vmatpush2.msra.mxu0 0.0
    %1827 = vmatprep.subr.mxu0 0.0
    %1828 = vmatpush2.msra.mxu0 0.0
    %1829 = vmatprep.subr.mxu0 0.0
    %1830 = vmatpush2.msra.mxu0 0.0
    %1831 = vmatprep.subr.mxu0 0.0
    %1832 = vmatpush2.msra.mxu0 0.0
    %1833 = vmatprep.subr.mxu0 0.0
    %1834 = vmatpush2.msra.mxu0 0.0
    %1835 = vmatprep.subr.mxu0 0.0
    %1836 = vmatpush2.msra.mxu0 0.0
    %1837 = vmatprep.subr.mxu0 0.0
    %1838 = vmatpush2.msra.mxu0 0.0
    %1839 = vmatprep.subr.mxu0 0.0
    %1840 = vmatpush2.msra.mxu0 0.0
    %1841 = vmatprep.subr.mxu0 0.0
    %1842 = vmatpush2.msra.mxu0 0.0
    %1843 = vmatprep.subr.mxu0 0.0
    %1844 = vmatpush2.msra.mxu0 0.0
    %1845 = vmatprep.subr.mxu0 0.0
    %1846 = vmatpush2.msra.mxu0 0.0
    %1847 = vmatprep.subr.mxu0 0.0
    %1848 = vmatpush2.msra.mxu0 0.0
    %1849 = vmatprep.subr.mxu0 0.0
    %1850 = vmatpush2.msra.mxu0 0.0
    %1851 = vmatprep.subr.mxu0 0.0
    %1852 = vmatpush2.msra.mxu0 0.0
    %1853 = vmatprep.mubr.f32.mxu0 0.0
    %1854 = vmatmul.mubr.f32.gmra.mxu0 %v1713
    %v1855 = vpop.f32.mrf.mxu0
    %v1856 = vadd.f32 0.0, %v1855
    %v1857 = vpop.f32.mrf.mxu0
    %v1858 = vadd.f32 0.0, %v1857
    %1859 = vdwg.mxu0
    %v1860 = vadd.f32 %v1714, %v1785
    %v1861 = vadd.f32 %v1715, %v1787
    %v1862 = vadd.f32 %v1716, %v1856
    %v1863 = vadd.f32 %v1717, %v1858
    %v1864 = vxor.u32 %v1860, 2147483648
    %v1865 = vxor.u32 %v1861, 2147483648
    %v1866 = vxor.u32 %v1862, 2147483648
    %v1867 = vmul.f32 %v1864, 1.442695
    %v1868 = vpow.pop %v1867
    %v1869 = vmul.f32 %v1865, 1.442695
    %v1870 = vpow.pop %v1869
    %v1871 = vmul.f32 %v1866, 1.442695
    %v1872 = vpow.pop %v1871
    %v1873 = vadd.f32 %v1868, 1.0
    %v1874 = vadd.f32 %v1870, 1.0
    %v1875 = vadd.f32 %v1872, 1.0
    %v1876 = vrcp.pop %v1873
    %v1877 = vmul.f32 1.0, %v1876
    %v1878 = vrcp.pop %v1874
    %v1879 = vmul.f32 1.0, %v1878
    %v1880 = vrcp.pop %v1875
    %v1881 = vmul.f32 1.0, %v1880
    %v1882 = vtanh.pop %v1863
    %v1883 = vmul.f32 %v1879, %v1711
    %v1884 = vmul.f32 %v1877, %v1882
    %v1885 = vadd.f32 %v1883, %v1884
    %v1886 = vtanh.pop %v1885
    %v1887 = vmul.f32 %v1881, %v1886
    %v1888 = vld [vmem:[#allocation2 + $0xc0] sm:$0xff]
    %v1889 = vld [vmem:[#allocation2 + $0xc8] sm:$0xff]
    %v1890 = vld [vmem:[#allocation2 + $0xd0] sm:$0xff]
    %v1891 = vld [vmem:[#allocation2 + $0xd8] sm:$0xff]
    %1892 = vmatprep.subr.mxu0 %v845
    %1893 = vmatpush1.msra.mxu0 %v844
    %1894 = vmatprep.subr.mxu0 %v841
    %1895 = vmatpush1.msra.mxu0 %v840
    %1896 = vmatprep.subr.mxu0 %v837
    %1897 = vmatpush1.msra.mxu0 %v836
    %1898 = vmatprep.subr.mxu0 %v833
    %1899 = vmatpush1.msra.mxu0 %v832
    %1900 = vmatprep.subr.mxu0 %v829
    %1901 = vmatpush1.msra.mxu0 %v828
    %1902 = vmatprep.subr.mxu0 %v825
    %1903 = vmatpush1.msra.mxu0 %v824
    %1904 = vmatprep.subr.mxu0 %v821
    %1905 = vmatpush1.msra.mxu0 %v820
    %1906 = vmatprep.subr.mxu0 %v817
    %1907 = vmatpush1.msra.mxu0 %v816
    %1908 = vmatprep.subr.mxu0 %v813
    %1909 = vmatpush1.msra.mxu0 %v812
    %1910 = vmatprep.subr.mxu0 %v809
    %1911 = vmatpush1.msra.mxu0 %v808
    %1912 = vmatprep.subr.mxu0 %v805
    %1913 = vmatpush1.msra.mxu0 %v804
    %1914 = vmatprep.subr.mxu0 %v801
    %1915 = vmatpush1.msra.mxu0 %v800
    %1916 = vmatprep.subr.mxu0 %v797
    %1917 = vmatpush1.msra.mxu0 %v796
    %1918 = vmatprep.subr.mxu0 %v793
    %1919 = vmatpush1.msra.mxu0 %v792
    %1920 = vmatprep.subr.mxu0 %v789
    %1921 = vmatpush1.msra.mxu0 %v788
    %1922 = vmatprep.subr.mxu0 %v785
    %1923 = vmatpush1.msra.mxu0 %v784
    %1924 = vmatprep.subr.mxu0 0.0
    %1925 = vmatpush2.msra.mxu0 0.0
    %1926 = vmatprep.subr.mxu0 0.0
    %1927 = vmatpush2.msra.mxu0 0.0
    %1928 = vmatprep.subr.mxu0 0.0
    %1929 = vmatpush2.msra.mxu0 0.0
    %1930 = vmatprep.subr.mxu0 0.0
    %1931 = vmatpush2.msra.mxu0 0.0
    %1932 = vmatprep.subr.mxu0 0.0
    %1933 = vmatpush2.msra.mxu0 0.0
    %1934 = vmatprep.subr.mxu0 0.0
    %1935 = vmatpush2.msra.mxu0 0.0
    %1936 = vmatprep.subr.mxu0 0.0
    %1937 = vmatpush2.msra.mxu0 0.0
    %1938 = vmatprep.subr.mxu0 0.0
    %1939 = vmatpush2.msra.mxu0 0.0
    %1940 = vmatprep.subr.mxu0 0.0
    %1941 = vmatpush2.msra.mxu0 0.0
    %1942 = vmatprep.subr.mxu0 0.0
    %1943 = vmatpush2.msra.mxu0 0.0
    %1944 = vmatprep.subr.mxu0 0.0
    %1945 = vmatpush2.msra.mxu0 0.0
    %1946 = vmatprep.subr.mxu0 0.0
    %1947 = vmatpush2.msra.mxu0 0.0
    %1948 = vmatprep.subr.mxu0 0.0
    %1949 = vmatpush2.msra.mxu0 0.0
    %1950 = vmatprep.subr.mxu0 0.0
    %1951 = vmatpush2.msra.mxu0 0.0
    %1952 = vmatprep.subr.mxu0 0.0
    %1953 = vmatpush2.msra.mxu0 0.0
    %1954 = vmatprep.subr.mxu0 0.0
    %1955 = vmatpush2.msra.mxu0 0.0
    %1956 = vmatprep.mubr.f32.mxu0 0.0
    %1957 = vmatmul.mubr.f32.gmra.mxu0 %v1887
    %v1958 = vpop.f32.mrf.mxu0
    %v1959 = vadd.f32 0.0, %v1958
    %v1960 = vpop.f32.mrf.mxu0
    %v1961 = vadd.f32 0.0, %v1960
    %1962 = vdwg.mxu0
    %1963 = vmatprep.subr.mxu0 %v847
    %1964 = vmatpush1.msra.mxu0 %v846
    %1965 = vmatprep.subr.mxu0 %v843
    %1966 = vmatpush1.msra.mxu0 %v842
    %1967 = vmatprep.subr.mxu0 %v839
    %1968 = vmatpush1.msra.mxu0 %v838
    %1969 = vmatprep.subr.mxu0 %v835
    %1970 = vmatpush1.msra.mxu0 %v834
    %1971 = vmatprep.subr.mxu0 %v831
    %1972 = vmatpush1.msra.mxu0 %v830
    %1973 = vmatprep.subr.mxu0 %v827
    %1974 = vmatpush1.msra.mxu0 %v826
    %1975 = vmatprep.subr.mxu0 %v823
    %1976 = vmatpush1.msra.mxu0 %v822
    %1977 = vmatprep.subr.mxu0 %v819
    %1978 = vmatpush1.msra.mxu0 %v818
    %1979 = vmatprep.subr.mxu0 %v815
    %1980 = vmatpush1.msra.mxu0 %v814
    %1981 = vmatprep.subr.mxu0 %v811
    %1982 = vmatpush1.msra.mxu0 %v810
    %1983 = vmatprep.subr.mxu0 %v807
    %1984 = vmatpush1.msra.mxu0 %v806
    %1985 = vmatprep.subr.mxu0 %v803
    %1986 = vmatpush1.msra.mxu0 %v802
    %1987 = vmatprep.subr.mxu0 %v799
    %1988 = vmatpush1.msra.mxu0 %v798
    %1989 = vmatprep.subr.mxu0 %v795
    %1990 = vmatpush1.msra.mxu0 %v794
    %1991 = vmatprep.subr.mxu0 %v791
    %1992 = vmatpush1.msra.mxu0 %v790
    %1993 = vmatprep.subr.mxu0 %v787
    %1994 = vmatpush1.msra.mxu0 %v786
    %1995 = vmatprep.subr.mxu0 0.0
    %1996 = vmatpush2.msra.mxu0 0.0
    %1997 = vmatprep.subr.mxu0 0.0
    %1998 = vmatpush2.msra.mxu0 0.0
    %1999 = vmatprep.subr.mxu0 0.0
    %2000 = vmatpush2.msra.mxu0 0.0
    %2001 = vmatprep.subr.mxu0 0.0
    %2002 = vmatpush2.msra.mxu0 0.0
    %2003 = vmatprep.subr.mxu0 0.0
    %2004 = vmatpush2.msra.mxu0 0.0
    %2005 = vmatprep.subr.mxu0 0.0
    %2006 = vmatpush2.msra.mxu0 0.0
    %2007 = vmatprep.subr.mxu0 0.0
    %2008 = vmatpush2.msra.mxu0 0.0
    %2009 = vmatprep.subr.mxu0 0.0
    %2010 = vmatpush2.msra.mxu0 0.0
    %2011 = vmatprep.subr.mxu0 0.0
    %2012 = vmatpush2.msra.mxu0 0.0
    %2013 = vmatprep.subr.mxu0 0.0
    %2014 = vmatpush2.msra.mxu0 0.0
    %2015 = vmatprep.subr.mxu0 0.0
    %2016 = vmatpush2.msra.mxu0 0.0
    %2017 = vmatprep.subr.mxu0 0.0
    %2018 = vmatpush2.msra.mxu0 0.0
    %2019 = vmatprep.subr.mxu0 0.0
    %2020 = vmatpush2.msra.mxu0 0.0
    %2021 = vmatprep.subr.mxu0 0.0
    %2022 = vmatpush2.msra.mxu0 0.0
    %2023 = vmatprep.subr.mxu0 0.0
    %2024 = vmatpush2.msra.mxu0 0.0
    %2025 = vmatprep.subr.mxu0 0.0
    %2026 = vmatpush2.msra.mxu0 0.0
    %2027 = vmatprep.mubr.f32.mxu0 0.0
    %2028 = vmatmul.mubr.f32.gmra.mxu0 %v1887
    %v2029 = vpop.f32.mrf.mxu0
    %v2030 = vadd.f32 0.0, %v2029
    %v2031 = vpop.f32.mrf.mxu0
    %v2032 = vadd.f32 0.0, %v2031
    %2033 = vdwg.mxu0
    %v2034 = vadd.f32 %v1888, %v1959
    %v2035 = vadd.f32 %v1889, %v1961
    %v2036 = vadd.f32 %v1890, %v2030
    %v2037 = vadd.f32 %v1891, %v2032
    %v2038 = vxor.u32 %v2034, 2147483648
    %v2039 = vxor.u32 %v2035, 2147483648
    %v2040 = vxor.u32 %v2036, 2147483648
    %v2041 = vmul.f32 %v2038, 1.442695
    %v2042 = vpow.pop %v2041
    %v2043 = vmul.f32 %v2039, 1.442695
    %v2044 = vpow.pop %v2043
    %v2045 = vmul.f32 %v2040, 1.442695
    %v2046 = vpow.pop %v2045
    %v2047 = vadd.f32 %v2042, 1.0
    %v2048 = vadd.f32 %v2044, 1.0
    %v2049 = vadd.f32 %v2046, 1.0
    %v2050 = vrcp.pop %v2047
    %v2051 = vmul.f32 1.0, %v2050
    %v2052 = vrcp.pop %v2048
    %v2053 = vmul.f32 1.0, %v2052
    %v2054 = vrcp.pop %v2049
    %v2055 = vmul.f32 1.0, %v2054
    %v2056 = vtanh.pop %v2037
    %v2057 = vmul.f32 %v2053, %v1885
    %v2058 = vmul.f32 %v2051, %v2056
    %v2059 = vadd.f32 %v2057, %v2058
    %v2060 = vtanh.pop %v2059
    %v2061 = vmul.f32 %v2055, %v2060
    %v2062 = vld [vmem:[#allocation2 + $0xe0] sm:$0xff]
    %v2063 = vld [vmem:[#allocation2 + $0xe8] sm:$0xff]
    %v2064 = vld [vmem:[#allocation2 + $0xf0] sm:$0xff]
    %v2065 = vld [vmem:[#allocation2 + $0xf8] sm:$0xff]
    %2066 = vmatprep.subr.mxu0 %v845
    %2067 = vmatpush1.msra.mxu0 %v844
    %2068 = vmatprep.subr.mxu0 %v841
    %2069 = vmatpush1.msra.mxu0 %v840
    %2070 = vmatprep.subr.mxu0 %v837
    %2071 = vmatpush1.msra.mxu0 %v836
    %2072 = vmatprep.subr.mxu0 %v833
    %2073 = vmatpush1.msra.mxu0 %v832
    %2074 = vmatprep.subr.mxu0 %v829
    %2075 = vmatpush1.msra.mxu0 %v828
    %2076 = vmatprep.subr.mxu0 %v825
    %2077 = vmatpush1.msra.mxu0 %v824
    %2078 = vmatprep.subr.mxu0 %v821
    %2079 = vmatpush1.msra.mxu0 %v820
    %2080 = vmatprep.subr.mxu0 %v817
    %2081 = vmatpush1.msra.mxu0 %v816
    %2082 = vmatprep.subr.mxu0 %v813
    %2083 = vmatpush1.msra.mxu0 %v812
    %2084 = vmatprep.subr.mxu0 %v809
    %2085 = vmatpush1.msra.mxu0 %v808
    %2086 = vmatprep.subr.mxu0 %v805
    %2087 = vmatpush1.msra.mxu0 %v804
    %2088 = vmatprep.subr.mxu0 %v801
    %2089 = vmatpush1.msra.mxu0 %v800
    %2090 = vmatprep.subr.mxu0 %v797
    %2091 = vmatpush1.msra.mxu0 %v796
    %2092 = vmatprep.subr.mxu0 %v793
    %2093 = vmatpush1.msra.mxu0 %v792
    %2094 = vmatprep.subr.mxu0 %v789
    %2095 = vmatpush1.msra.mxu0 %v788
    %2096 = vmatprep.subr.mxu0 %v785
    %2097 = vmatpush1.msra.mxu0 %v784
    %2098 = vmatprep.subr.mxu0 0.0
    %2099 = vmatpush2.msra.mxu0 0.0
    %2100 = vmatprep.subr.mxu0 0.0
    %2101 = vmatpush2.msra.mxu0 0.0
    %2102 = vmatprep.subr.mxu0 0.0
    %2103 = vmatpush2.msra.mxu0 0.0
    %2104 = vmatprep.subr.mxu0 0.0
    %2105 = vmatpush2.msra.mxu0 0.0
    %2106 = vmatprep.subr.mxu0 0.0
    %2107 = vmatpush2.msra.mxu0 0.0
    %2108 = vmatprep.subr.mxu0 0.0
    %2109 = vmatpush2.msra.mxu0 0.0
    %2110 = vmatprep.subr.mxu0 0.0
    %2111 = vmatpush2.msra.mxu0 0.0
    %2112 = vmatprep.subr.mxu0 0.0
    %2113 = vmatpush2.msra.mxu0 0.0
    %2114 = vmatprep.subr.mxu0 0.0
    %2115 = vmatpush2.msra.mxu0 0.0
    %2116 = vmatprep.subr.mxu0 0.0
    %2117 = vmatpush2.msra.mxu0 0.0
    %2118 = vmatprep.subr.mxu0 0.0
    %2119 = vmatpush2.msra.mxu0 0.0
    %2120 = vmatprep.subr.mxu0 0.0
    %2121 = vmatpush2.msra.mxu0 0.0
    %2122 = vmatprep.subr.mxu0 0.0
    %2123 = vmatpush2.msra.mxu0 0.0
    %2124 = vmatprep.subr.mxu0 0.0
    %2125 = vmatpush2.msra.mxu0 0.0
    %2126 = vmatprep.subr.mxu0 0.0
    %2127 = vmatpush2.msra.mxu0 0.0
    %2128 = vmatprep.subr.mxu0 0.0
    %2129 = vmatpush2.msra.mxu0 0.0
    %2130 = vmatprep.mubr.f32.mxu0 0.0
    %2131 = vmatmul.mubr.f32.gmra.mxu0 %v2061
    %v2132 = vpop.f32.mrf.mxu0
    %v2133 = vadd.f32 0.0, %v2132
    %v2134 = vpop.f32.mrf.mxu0
    %v2135 = vadd.f32 0.0, %v2134
    %2136 = vdwg.mxu0
    %2137 = vmatprep.subr.mxu0 %v847
    %2138 = vmatpush1.msra.mxu0 %v846
    %2139 = vmatprep.subr.mxu0 %v843
    %2140 = vmatpush1.msra.mxu0 %v842
    %2141 = vmatprep.subr.mxu0 %v839
    %2142 = vmatpush1.msra.mxu0 %v838
    %2143 = vmatprep.subr.mxu0 %v835
    %2144 = vmatpush1.msra.mxu0 %v834
    %2145 = vmatprep.subr.mxu0 %v831
    %2146 = vmatpush1.msra.mxu0 %v830
    %2147 = vmatprep.subr.mxu0 %v827
    %2148 = vmatpush1.msra.mxu0 %v826
    %2149 = vmatprep.subr.mxu0 %v823
    %2150 = vmatpush1.msra.mxu0 %v822
    %2151 = vmatprep.subr.mxu0 %v819
    %2152 = vmatpush1.msra.mxu0 %v818
    %2153 = vmatprep.subr.mxu0 %v815
    %2154 = vmatpush1.msra.mxu0 %v814
    %2155 = vmatprep.subr.mxu0 %v811
    %2156 = vmatpush1.msra.mxu0 %v810
    %2157 = vmatprep.subr.mxu0 %v807
    %2158 = vmatpush1.msra.mxu0 %v806
    %2159 = vmatprep.subr.mxu0 %v803
    %2160 = vmatpush1.msra.mxu0 %v802
    %2161 = vmatprep.subr.mxu0 %v799
    %2162 = vmatpush1.msra.mxu0 %v798
    %2163 = vmatprep.subr.mxu0 %v795
    %2164 = vmatpush1.msra.mxu0 %v794
    %2165 = vmatprep.subr.mxu0 %v791
    %2166 = vmatpush1.msra.mxu0 %v790
    %2167 = vmatprep.subr.mxu0 %v787
    %2168 = vmatpush1.msra.mxu0 %v786
    %2169 = vmatprep.subr.mxu0 0.0
    %2170 = vmatpush2.msra.mxu0 0.0
    %2171 = vmatprep.subr.mxu0 0.0
    %2172 = vmatpush2.msra.mxu0 0.0
    %2173 = vmatprep.subr.mxu0 0.0
    %2174 = vmatpush2.msra.mxu0 0.0
    %2175 = vmatprep.subr.mxu0 0.0
    %2176 = vmatpush2.msra.mxu0 0.0
    %2177 = vmatprep.subr.mxu0 0.0
    %2178 = vmatpush2.msra.mxu0 0.0
    %2179 = vmatprep.subr.mxu0 0.0
    %2180 = vmatpush2.msra.mxu0 0.0
    %2181 = vmatprep.subr.mxu0 0.0
    %2182 = vmatpush2.msra.mxu0 0.0
    %2183 = vmatprep.subr.mxu0 0.0
    %2184 = vmatpush2.msra.mxu0 0.0
    %2185 = vmatprep.subr.mxu0 0.0
    %2186 = vmatpush2.msra.mxu0 0.0
    %2187 = vmatprep.subr.mxu0 0.0
    %2188 = vmatpush2.msra.mxu0 0.0
    %2189 = vmatprep.subr.mxu0 0.0
    %2190 = vmatpush2.msra.mxu0 0.0
    %2191 = vmatprep.subr.mxu0 0.0
    %2192 = vmatpush2.msra.mxu0 0.0
    %2193 = vmatprep.subr.mxu0 0.0
    %2194 = vmatpush2.msra.mxu0 0.0
    %2195 = vmatprep.subr.mxu0 0.0
    %2196 = vmatpush2.msra.mxu0 0.0
    %2197 = vmatprep.subr.mxu0 0.0
    %2198 = vmatpush2.msra.mxu0 0.0
    %2199 = vmatprep.subr.mxu0 0.0
    %2200 = vmatpush2.msra.mxu0 0.0
    %2201 = vmatprep.mubr.f32.mxu0 0.0
    %2202 = vmatmul.mubr.f32.gmra.mxu0 %v2061
    %v2203 = vpop.f32.mrf.mxu0
    %v2204 = vadd.f32 0.0, %v2203
    %v2205 = vpop.f32.mrf.mxu0
    %v2206 = vadd.f32 0.0, %v2205
    %2207 = vdwg.mxu0
    %v2208 = vadd.f32 %v2062, %v2133
    %v2209 = vadd.f32 %v2063, %v2135
    %v2210 = vadd.f32 %v2064, %v2204
    %v2211 = vadd.f32 %v2065, %v2206
    %v2212 = vxor.u32 %v2208, 2147483648
    %v2213 = vxor.u32 %v2209, 2147483648
    %v2214 = vxor.u32 %v2210, 2147483648
    %v2215 = vmul.f32 %v2212, 1.442695
    %v2216 = vpow.pop %v2215
    %v2217 = vmul.f32 %v2213, 1.442695
    %v2218 = vpow.pop %v2217
    %v2219 = vmul.f32 %v2214, 1.442695
    %v2220 = vpow.pop %v2219
    %v2221 = vadd.f32 %v2216, 1.0
    %v2222 = vadd.f32 %v2218, 1.0
    %v2223 = vadd.f32 %v2220, 1.0
    %v2224 = vrcp.pop %v2221
    %v2225 = vmul.f32 1.0, %v2224
    %v2226 = vrcp.pop %v2222
    %v2227 = vmul.f32 1.0, %v2226
    %v2228 = vrcp.pop %v2223
    %v2229 = vmul.f32 1.0, %v2228
    %v2230 = vtanh.pop %v2211
    %v2231 = vmul.f32 %v2227, %v2059
    %v2232 = vmul.f32 %v2225, %v2230
    %v2233 = vadd.f32 %v2231, %v2232
    %v2234 = vtanh.pop %v2233
    %v2235 = vmul.f32 %v2229, %v2234
    %v2236 = vld [vmem:[#allocation2 + $0x100] sm:$0xff]
    %v2237 = vld [vmem:[#allocation2 + $0x108] sm:$0xff]
    %v2238 = vld [vmem:[#allocation2 + $0x110] sm:$0xff]
    %v2239 = vld [vmem:[#allocation2 + $0x118] sm:$0xff]
    %2240 = vmatprep.subr.mxu0 %v845
    %2241 = vmatpush1.msra.mxu0 %v844
    %2242 = vmatprep.subr.mxu0 %v841
    %2243 = vmatpush1.msra.mxu0 %v840
    %2244 = vmatprep.subr.mxu0 %v837
    %2245 = vmatpush1.msra.mxu0 %v836
    %2246 = vmatprep.subr.mxu0 %v833
    %2247 = vmatpush1.msra.mxu0 %v832
    %2248 = vmatprep.subr.mxu0 %v829
    %2249 = vmatpush1.msra.mxu0 %v828
    %2250 = vmatprep.subr.mxu0 %v825
    %2251 = vmatpush1.msra.mxu0 %v824
    %2252 = vmatprep.subr.mxu0 %v821
    %2253 = vmatpush1.msra.mxu0 %v820
    %2254 = vmatprep.subr.mxu0 %v817
    %2255 = vmatpush1.msra.mxu0 %v816
    %2256 = vmatprep.subr.mxu0 %v813
    %2257 = vmatpush1.msra.mxu0 %v812
    %2258 = vmatprep.subr.mxu0 %v809
    %2259 = vmatpush1.msra.mxu0 %v808
    %2260 = vmatprep.subr.mxu0 %v805
    %2261 = vmatpush1.msra.mxu0 %v804
    %2262 = vmatprep.subr.mxu0 %v801
    %2263 = vmatpush1.msra.mxu0 %v800
    %2264 = vmatprep.subr.mxu0 %v797
    %2265 = vmatpush1.msra.mxu0 %v796
    %2266 = vmatprep.subr.mxu0 %v793
    %2267 = vmatpush1.msra.mxu0 %v792
    %2268 = vmatprep.subr.mxu0 %v789
    %2269 = vmatpush1.msra.mxu0 %v788
    %2270 = vmatprep.subr.mxu0 %v785
    %2271 = vmatpush1.msra.mxu0 %v784
    %2272 = vmatprep.subr.mxu0 0.0
    %2273 = vmatpush2.msra.mxu0 0.0
    %2274 = vmatprep.subr.mxu0 0.0
    %2275 = vmatpush2.msra.mxu0 0.0
    %2276 = vmatprep.subr.mxu0 0.0
    %2277 = vmatpush2.msra.mxu0 0.0
    %2278 = vmatprep.subr.mxu0 0.0
    %2279 = vmatpush2.msra.mxu0 0.0
    %2280 = vmatprep.subr.mxu0 0.0
    %2281 = vmatpush2.msra.mxu0 0.0
    %2282 = vmatprep.subr.mxu0 0.0
    %2283 = vmatpush2.msra.mxu0 0.0
    %2284 = vmatprep.subr.mxu0 0.0
    %2285 = vmatpush2.msra.mxu0 0.0
    %2286 = vmatprep.subr.mxu0 0.0
    %2287 = vmatpush2.msra.mxu0 0.0
    %2288 = vmatprep.subr.mxu0 0.0
    %2289 = vmatpush2.msra.mxu0 0.0
    %2290 = vmatprep.subr.mxu0 0.0
    %2291 = vmatpush2.msra.mxu0 0.0
    %2292 = vmatprep.subr.mxu0 0.0
    %2293 = vmatpush2.msra.mxu0 0.0
    %2294 = vmatprep.subr.mxu0 0.0
    %2295 = vmatpush2.msra.mxu0 0.0
    %2296 = vmatprep.subr.mxu0 0.0
    %2297 = vmatpush2.msra.mxu0 0.0
    %2298 = vmatprep.subr.mxu0 0.0
    %2299 = vmatpush2.msra.mxu0 0.0
    %2300 = vmatprep.subr.mxu0 0.0
    %2301 = vmatpush2.msra.mxu0 0.0
    %2302 = vmatprep.subr.mxu0 0.0
    %2303 = vmatpush2.msra.mxu0 0.0
    %2304 = vmatprep.mubr.f32.mxu0 0.0
    %2305 = vmatmul.mubr.f32.gmra.mxu0 %v2235
    %v2306 = vpop.f32.mrf.mxu0
    %v2307 = vadd.f32 0.0, %v2306
    %v2308 = vpop.f32.mrf.mxu0
    %v2309 = vadd.f32 0.0, %v2308
    %2310 = vdwg.mxu0
    %2311 = vmatprep.subr.mxu0 %v847
    %2312 = vmatpush1.msra.mxu0 %v846
    %2313 = vmatprep.subr.mxu0 %v843
    %2314 = vmatpush1.msra.mxu0 %v842
    %2315 = vmatprep.subr.mxu0 %v839
    %2316 = vmatpush1.msra.mxu0 %v838
    %2317 = vmatprep.subr.mxu0 %v835
    %2318 = vmatpush1.msra.mxu0 %v834
    %2319 = vmatprep.subr.mxu0 %v831
    %2320 = vmatpush1.msra.mxu0 %v830
    %2321 = vmatprep.subr.mxu0 %v827
    %2322 = vmatpush1.msra.mxu0 %v826
    %2323 = vmatprep.subr.mxu0 %v823
    %2324 = vmatpush1.msra.mxu0 %v822
    %2325 = vmatprep.subr.mxu0 %v819
    %2326 = vmatpush1.msra.mxu0 %v818
    %2327 = vmatprep.subr.mxu0 %v815
    %2328 = vmatpush1.msra.mxu0 %v814
    %2329 = vmatprep.subr.mxu0 %v811
    %2330 = vmatpush1.msra.mxu0 %v810
    %2331 = vmatprep.subr.mxu0 %v807
    %2332 = vmatpush1.msra.mxu0 %v806
    %2333 = vmatprep.subr.mxu0 %v803
    %2334 = vmatpush1.msra.mxu0 %v802
    %2335 = vmatprep.subr.mxu0 %v799
    %2336 = vmatpush1.msra.mxu0 %v798
    %2337 = vmatprep.subr.mxu0 %v795
    %2338 = vmatpush1.msra.mxu0 %v794
    %2339 = vmatprep.subr.mxu0 %v791
    %2340 = vmatpush1.msra.mxu0 %v790
    %2341 = vmatprep.subr.mxu0 %v787
    %2342 = vmatpush1.msra.mxu0 %v786
    %2343 = vmatprep.subr.mxu0 0.0
    %2344 = vmatpush2.msra.mxu0 0.0
    %2345 = vmatprep.subr.mxu0 0.0
    %2346 = vmatpush2.msra.mxu0 0.0
    %2347 = vmatprep.subr.mxu0 0.0
    %2348 = vmatpush2.msra.mxu0 0.0
    %2349 = vmatprep.subr.mxu0 0.0
    %2350 = vmatpush2.msra.mxu0 0.0
    %2351 = vmatprep.subr.mxu0 0.0
    %2352 = vmatpush2.msra.mxu0 0.0
    %2353 = vmatprep.subr.mxu0 0.0
    %2354 = vmatpush2.msra.mxu0 0.0
    %2355 = vmatprep.subr.mxu0 0.0
    %2356 = vmatpush2.msra.mxu0 0.0
    %2357 = vmatprep.subr.mxu0 0.0
    %2358 = vmatpush2.msra.mxu0 0.0
    %2359 = vmatprep.subr.mxu0 0.0
    %2360 = vmatpush2.msra.mxu0 0.0
    %2361 = vmatprep.subr.mxu0 0.0
    %2362 = vmatpush2.msra.mxu0 0.0
    %2363 = vmatprep.subr.mxu0 0.0
    %2364 = vmatpush2.msra.mxu0 0.0
    %2365 = vmatprep.subr.mxu0 0.0
    %2366 = vmatpush2.msra.mxu0 0.0
    %2367 = vmatprep.subr.mxu0 0.0
    %2368 = vmatpush2.msra.mxu0 0.0
    %2369 = vmatprep.subr.mxu0 0.0
    %2370 = vmatpush2.msra.mxu0 0.0
    %2371 = vmatprep.subr.mxu0 0.0
    %2372 = vmatpush2.msra.mxu0 0.0
    %2373 = vmatprep.subr.mxu0 0.0
    %2374 = vmatpush2.msra.mxu0 0.0
    %2375 = vmatprep.mubr.f32.mxu0 0.0
    %2376 = vmatmul.mubr.f32.gmra.mxu0 %v2235
    %v2377 = vpop.f32.mrf.mxu0
    %v2378 = vadd.f32 0.0, %v2377
    %v2379 = vpop.f32.mrf.mxu0
    %v2380 = vadd.f32 0.0, %v2379
    %2381 = vdwg.mxu0
    %v2382 = vadd.f32 %v2236, %v2307
    %v2383 = vadd.f32 %v2237, %v2309
    %v2384 = vadd.f32 %v2238, %v2378
    %v2385 = vadd.f32 %v2239, %v2380
    %v2386 = vxor.u32 %v2382, 2147483648
    %v2387 = vxor.u32 %v2383, 2147483648
    %v2388 = vxor.u32 %v2384, 2147483648
    %v2389 = vmul.f32 %v2386, 1.442695
    %v2390 = vpow.pop %v2389
    %v2391 = vmul.f32 %v2387, 1.442695
    %v2392 = vpow.pop %v2391
    %v2393 = vmul.f32 %v2388, 1.442695
    %v2394 = vpow.pop %v2393
    %v2395 = vadd.f32 %v2390, 1.0
    %v2396 = vadd.f32 %v2392, 1.0
    %v2397 = vadd.f32 %v2394, 1.0
    %v2398 = vrcp.pop %v2395
    %v2399 = vmul.f32 1.0, %v2398
    %v2400 = vrcp.pop %v2396
    %v2401 = vmul.f32 1.0, %v2400
    %v2402 = vrcp.pop %v2397
    %v2403 = vmul.f32 1.0, %v2402
    %v2404 = vtanh.pop %v2385
    %v2405 = vmul.f32 %v2401, %v2233
    %v2406 = vmul.f32 %v2399, %v2404
    %v2407 = vadd.f32 %v2405, %v2406
    %v2408 = vtanh.pop %v2407
    %v2409 = vmul.f32 %v2403, %v2408
    %v2410 = vld [vmem:[#allocation2 + $0x120] sm:$0xff]
    %v2411 = vld [vmem:[#allocation2 + $0x128] sm:$0xff]
    %v2412 = vld [vmem:[#allocation2 + $0x130] sm:$0xff]
    %v2413 = vld [vmem:[#allocation2 + $0x138] sm:$0xff]
    %2414 = vmatprep.subr.mxu0 %v845
    %2415 = vmatpush1.msra.mxu0 %v844
    %2416 = vmatprep.subr.mxu0 %v841
    %2417 = vmatpush1.msra.mxu0 %v840
    %2418 = vmatprep.subr.mxu0 %v837
    %2419 = vmatpush1.msra.mxu0 %v836
    %2420 = vmatprep.subr.mxu0 %v833
    %2421 = vmatpush1.msra.mxu0 %v832
    %2422 = vmatprep.subr.mxu0 %v829
    %2423 = vmatpush1.msra.mxu0 %v828
    %2424 = vmatprep.subr.mxu0 %v825
    %2425 = vmatpush1.msra.mxu0 %v824
    %2426 = vmatprep.subr.mxu0 %v821
    %2427 = vmatpush1.msra.mxu0 %v820
    %2428 = vmatprep.subr.mxu0 %v817
    %2429 = vmatpush1.msra.mxu0 %v816
    %2430 = vmatprep.subr.mxu0 %v813
    %2431 = vmatpush1.msra.mxu0 %v812
    %2432 = vmatprep.subr.mxu0 %v809
    %2433 = vmatpush1.msra.mxu0 %v808
    %2434 = vmatprep.subr.mxu0 %v805
    %2435 = vmatpush1.msra.mxu0 %v804
    %2436 = vmatprep.subr.mxu0 %v801
    %2437 = vmatpush1.msra.mxu0 %v800
    %2438 = vmatprep.subr.mxu0 %v797
    %2439 = vmatpush1.msra.mxu0 %v796
    %2440 = vmatprep.subr.mxu0 %v793
    %2441 = vmatpush1.msra.mxu0 %v792
    %2442 = vmatprep.subr.mxu0 %v789
    %2443 = vmatpush1.msra.mxu0 %v788
    %2444 = vmatprep.subr.mxu0 %v785
    %2445 = vmatpush1.msra.mxu0 %v784
    %2446 = vmatprep.subr.mxu0 0.0
    %2447 = vmatpush2.msra.mxu0 0.0
    %2448 = vmatprep.subr.mxu0 0.0
    %2449 = vmatpush2.msra.mxu0 0.0
    %2450 = vmatprep.subr.mxu0 0.0
    %2451 = vmatpush2.msra.mxu0 0.0
    %2452 = vmatprep.subr.mxu0 0.0
    %2453 = vmatpush2.msra.mxu0 0.0
    %2454 = vmatprep.subr.mxu0 0.0
    %2455 = vmatpush2.msra.mxu0 0.0
    %2456 = vmatprep.subr.mxu0 0.0
    %2457 = vmatpush2.msra.mxu0 0.0
    %2458 = vmatprep.subr.mxu0 0.0
    %2459 = vmatpush2.msra.mxu0 0.0
    %2460 = vmatprep.subr.mxu0 0.0
    %2461 = vmatpush2.msra.mxu0 0.0
    %2462 = vmatprep.subr.mxu0 0.0
    %2463 = vmatpush2.msra.mxu0 0.0
    %2464 = vmatprep.subr.mxu0 0.0
    %2465 = vmatpush2.msra.mxu0 0.0
    %2466 = vmatprep.subr.mxu0 0.0
    %2467 = vmatpush2.msra.mxu0 0.0
    %2468 = vmatprep.subr.mxu0 0.0
    %2469 = vmatpush2.msra.mxu0 0.0
    %2470 = vmatprep.subr.mxu0 0.0
    %2471 = vmatpush2.msra.mxu0 0.0
    %2472 = vmatprep.subr.mxu0 0.0
    %2473 = vmatpush2.msra.mxu0 0.0
    %2474 = vmatprep.subr.mxu0 0.0
    %2475 = vmatpush2.msra.mxu0 0.0
    %2476 = vmatprep.subr.mxu0 0.0
    %2477 = vmatpush2.msra.mxu0 0.0
    %2478 = vmatprep.mubr.f32.mxu0 0.0
    %2479 = vmatmul.mubr.f32.gmra.mxu0 %v2409
    %v2480 = vpop.f32.mrf.mxu0
    %v2481 = vadd.f32 0.0, %v2480
    %v2482 = vpop.f32.mrf.mxu0
    %v2483 = vadd.f32 0.0, %v2482
    %2484 = vdwg.mxu0
    %2485 = vmatprep.subr.mxu0 %v847
    %2486 = vmatpush1.msra.mxu0 %v846
    %2487 = vmatprep.subr.mxu0 %v843
    %2488 = vmatpush1.msra.mxu0 %v842
    %2489 = vmatprep.subr.mxu0 %v839
    %2490 = vmatpush1.msra.mxu0 %v838
    %2491 = vmatprep.subr.mxu0 %v835
    %2492 = vmatpush1.msra.mxu0 %v834
    %2493 = vmatprep.subr.mxu0 %v831
    %2494 = vmatpush1.msra.mxu0 %v830
    %2495 = vmatprep.subr.mxu0 %v827
    %2496 = vmatpush1.msra.mxu0 %v826
    %2497 = vmatprep.subr.mxu0 %v823
    %2498 = vmatpush1.msra.mxu0 %v822
    %2499 = vmatprep.subr.mxu0 %v819
    %2500 = vmatpush1.msra.mxu0 %v818
    %2501 = vmatprep.subr.mxu0 %v815
    %2502 = vmatpush1.msra.mxu0 %v814
    %2503 = vmatprep.subr.mxu0 %v811
    %2504 = vmatpush1.msra.mxu0 %v810
    %2505 = vmatprep.subr.mxu0 %v807
    %2506 = vmatpush1.msra.mxu0 %v806
    %2507 = vmatprep.subr.mxu0 %v803
    %2508 = vmatpush1.msra.mxu0 %v802
    %2509 = vmatprep.subr.mxu0 %v799
    %2510 = vmatpush1.msra.mxu0 %v798
    %2511 = vmatprep.subr.mxu0 %v795
    %2512 = vmatpush1.msra.mxu0 %v794
    %2513 = vmatprep.subr.mxu0 %v791
    %2514 = vmatpush1.msra.mxu0 %v790
    %2515 = vmatprep.subr.mxu0 %v787
    %2516 = vmatpush1.msra.mxu0 %v786
    %2517 = vmatprep.subr.mxu0 0.0
    %2518 = vmatpush2.msra.mxu0 0.0
    %2519 = vmatprep.subr.mxu0 0.0
    %2520 = vmatpush2.msra.mxu0 0.0
    %2521 = vmatprep.subr.mxu0 0.0
    %2522 = vmatpush2.msra.mxu0 0.0
    %2523 = vmatprep.subr.mxu0 0.0
    %2524 = vmatpush2.msra.mxu0 0.0
    %2525 = vmatprep.subr.mxu0 0.0
    %2526 = vmatpush2.msra.mxu0 0.0
    %2527 = vmatprep.subr.mxu0 0.0
    %2528 = vmatpush2.msra.mxu0 0.0
    %2529 = vmatprep.subr.mxu0 0.0
    %2530 = vmatpush2.msra.mxu0 0.0
    %2531 = vmatprep.subr.mxu0 0.0
    %2532 = vmatpush2.msra.mxu0 0.0
    %2533 = vmatprep.subr.mxu0 0.0
    %2534 = vmatpush2.msra.mxu0 0.0
    %2535 = vmatprep.subr.mxu0 0.0
    %2536 = vmatpush2.msra.mxu0 0.0
    %2537 = vmatprep.subr.mxu0 0.0
    %2538 = vmatpush2.msra.mxu0 0.0
    %2539 = vmatprep.subr.mxu0 0.0
    %2540 = vmatpush2.msra.mxu0 0.0
    %2541 = vmatprep.subr.mxu0 0.0
    %2542 = vmatpush2.msra.mxu0 0.0
    %2543 = vmatprep.subr.mxu0 0.0
    %2544 = vmatpush2.msra.mxu0 0.0
    %2545 = vmatprep.subr.mxu0 0.0
    %2546 = vmatpush2.msra.mxu0 0.0
    %2547 = vmatprep.subr.mxu0 0.0
    %2548 = vmatpush2.msra.mxu0 0.0
    %2549 = vmatprep.mubr.f32.mxu0 0.0
    %2550 = vmatmul.mubr.f32.gmra.mxu0 %v2409
    %v2551 = vpop.f32.mrf.mxu0
    %v2552 = vadd.f32 0.0, %v2551
    %v2553 = vpop.f32.mrf.mxu0
    %v2554 = vadd.f32 0.0, %v2553
    %2555 = vdwg.mxu0
    %v2556 = vadd.f32 %v2410, %v2481
    %v2557 = vadd.f32 %v2411, %v2483
    %v2558 = vadd.f32 %v2412, %v2552
    %v2559 = vadd.f32 %v2413, %v2554
    %v2560 = vxor.u32 %v2556, 2147483648
    %v2561 = vxor.u32 %v2557, 2147483648
    %v2562 = vxor.u32 %v2558, 2147483648
    %v2563 = vmul.f32 %v2560, 1.442695
    %v2564 = vpow.pop %v2563
    %v2565 = vmul.f32 %v2561, 1.442695
    %v2566 = vpow.pop %v2565
    %v2567 = vmul.f32 %v2562, 1.442695
    %v2568 = vpow.pop %v2567
    %v2569 = vadd.f32 %v2564, 1.0
    %v2570 = vadd.f32 %v2566, 1.0
    %v2571 = vadd.f32 %v2568, 1.0
    %v2572 = vrcp.pop %v2569
    %v2573 = vmul.f32 1.0, %v2572
    %v2574 = vrcp.pop %v2570
    %v2575 = vmul.f32 1.0, %v2574
    %v2576 = vrcp.pop %v2571
    %v2577 = vmul.f32 1.0, %v2576
    %v2578 = vtanh.pop %v2559
    %v2579 = vmul.f32 %v2575, %v2407
    %v2580 = vmul.f32 %v2573, %v2578
    %v2581 = vadd.f32 %v2579, %v2580
    %v2582 = vtanh.pop %v2581
    %v2583 = vmul.f32 %v2577, %v2582
    %v2584 = vld [vmem:[#allocation2 + $0x140] sm:$0xff]
    %v2585 = vld [vmem:[#allocation2 + $0x148] sm:$0xff]
    %v2586 = vld [vmem:[#allocation2 + $0x150] sm:$0xff]
    %v2587 = vld [vmem:[#allocation2 + $0x158] sm:$0xff]
    %2588 = vmatprep.subr.mxu0 %v845
    %2589 = vmatpush1.msra.mxu0 %v844
    %2590 = vmatprep.subr.mxu0 %v841
    %2591 = vmatpush1.msra.mxu0 %v840
    %2592 = vmatprep.subr.mxu0 %v837
    %2593 = vmatpush1.msra.mxu0 %v836
    %2594 = vmatprep.subr.mxu0 %v833
    %2595 = vmatpush1.msra.mxu0 %v832
    %2596 = vmatprep.subr.mxu0 %v829
    %2597 = vmatpush1.msra.mxu0 %v828
    %2598 = vmatprep.subr.mxu0 %v825
    %2599 = vmatpush1.msra.mxu0 %v824
    %2600 = vmatprep.subr.mxu0 %v821
    %2601 = vmatpush1.msra.mxu0 %v820
    %2602 = vmatprep.subr.mxu0 %v817
    %2603 = vmatpush1.msra.mxu0 %v816
    %2604 = vmatprep.subr.mxu0 %v813
    %2605 = vmatpush1.msra.mxu0 %v812
    %2606 = vmatprep.subr.mxu0 %v809
    %2607 = vmatpush1.msra.mxu0 %v808
    %2608 = vmatprep.subr.mxu0 %v805
    %2609 = vmatpush1.msra.mxu0 %v804
    %2610 = vmatprep.subr.mxu0 %v801
    %2611 = vmatpush1.msra.mxu0 %v800
    %2612 = vmatprep.subr.mxu0 %v797
    %2613 = vmatpush1.msra.mxu0 %v796
    %2614 = vmatprep.subr.mxu0 %v793
    %2615 = vmatpush1.msra.mxu0 %v792
    %2616 = vmatprep.subr.mxu0 %v789
    %2617 = vmatpush1.msra.mxu0 %v788
    %2618 = vmatprep.subr.mxu0 %v785
    %2619 = vmatpush1.msra.mxu0 %v784
    %2620 = vmatprep.subr.mxu0 0.0
    %2621 = vmatpush2.msra.mxu0 0.0
    %2622 = vmatprep.subr.mxu0 0.0
    %2623 = vmatpush2.msra.mxu0 0.0
    %2624 = vmatprep.subr.mxu0 0.0
    %2625 = vmatpush2.msra.mxu0 0.0
    %2626 = vmatprep.subr.mxu0 0.0
    %2627 = vmatpush2.msra.mxu0 0.0
    %2628 = vmatprep.subr.mxu0 0.0
    %2629 = vmatpush2.msra.mxu0 0.0
    %2630 = vmatprep.subr.mxu0 0.0
    %2631 = vmatpush2.msra.mxu0 0.0
    %2632 = vmatprep.subr.mxu0 0.0
    %2633 = vmatpush2.msra.mxu0 0.0
    %2634 = vmatprep.subr.mxu0 0.0
    %2635 = vmatpush2.msra.mxu0 0.0
    %2636 = vmatprep.subr.mxu0 0.0
    %2637 = vmatpush2.msra.mxu0 0.0
    %2638 = vmatprep.subr.mxu0 0.0
    %2639 = vmatpush2.msra.mxu0 0.0
    %2640 = vmatprep.subr.mxu0 0.0
    %2641 = vmatpush2.msra.mxu0 0.0
    %2642 = vmatprep.subr.mxu0 0.0
    %2643 = vmatpush2.msra.mxu0 0.0
    %2644 = vmatprep.subr.mxu0 0.0
    %2645 = vmatpush2.msra.mxu0 0.0
    %2646 = vmatprep.subr.mxu0 0.0
    %2647 = vmatpush2.msra.mxu0 0.0
    %2648 = vmatprep.subr.mxu0 0.0
    %2649 = vmatpush2.msra.mxu0 0.0
    %2650 = vmatprep.subr.mxu0 0.0
    %2651 = vmatpush2.msra.mxu0 0.0
    %2652 = vmatprep.mubr.f32.mxu0 0.0
    %2653 = vmatmul.mubr.f32.gmra.mxu0 %v2583
    %v2654 = vpop.f32.mrf.mxu0
    %v2655 = vadd.f32 0.0, %v2654
    %v2656 = vpop.f32.mrf.mxu0
    %v2657 = vadd.f32 0.0, %v2656
    %2658 = vdwg.mxu0
    %2659 = vmatprep.subr.mxu0 %v847
    %2660 = vmatpush1.msra.mxu0 %v846
    %2661 = vmatprep.subr.mxu0 %v843
    %2662 = vmatpush1.msra.mxu0 %v842
    %2663 = vmatprep.subr.mxu0 %v839
    %2664 = vmatpush1.msra.mxu0 %v838
    %2665 = vmatprep.subr.mxu0 %v835
    %2666 = vmatpush1.msra.mxu0 %v834
    %2667 = vmatprep.subr.mxu0 %v831
    %2668 = vmatpush1.msra.mxu0 %v830
    %2669 = vmatprep.subr.mxu0 %v827
    %2670 = vmatpush1.msra.mxu0 %v826
    %2671 = vmatprep.subr.mxu0 %v823
    %2672 = vmatpush1.msra.mxu0 %v822
    %2673 = vmatprep.subr.mxu0 %v819
    %2674 = vmatpush1.msra.mxu0 %v818
    %2675 = vmatprep.subr.mxu0 %v815
    %2676 = vmatpush1.msra.mxu0 %v814
    %2677 = vmatprep.subr.mxu0 %v811
    %2678 = vmatpush1.msra.mxu0 %v810
    %2679 = vmatprep.subr.mxu0 %v807
    %2680 = vmatpush1.msra.mxu0 %v806
    %2681 = vmatprep.subr.mxu0 %v803
    %2682 = vmatpush1.msra.mxu0 %v802
    %2683 = vmatprep.subr.mxu0 %v799
    %2684 = vmatpush1.msra.mxu0 %v798
    %2685 = vmatprep.subr.mxu0 %v795
    %2686 = vmatpush1.msra.mxu0 %v794
    %2687 = vmatprep.subr.mxu0 %v791
    %2688 = vmatpush1.msra.mxu0 %v790
    %2689 = vmatprep.subr.mxu0 %v787
    %2690 = vmatpush1.msra.mxu0 %v786
    %2691 = vmatprep.subr.mxu0 0.0
    %2692 = vmatpush2.msra.mxu0 0.0
    %2693 = vmatprep.subr.mxu0 0.0
    %2694 = vmatpush2.msra.mxu0 0.0
    %2695 = vmatprep.subr.mxu0 0.0
    %2696 = vmatpush2.msra.mxu0 0.0
    %2697 = vmatprep.subr.mxu0 0.0
    %2698 = vmatpush2.msra.mxu0 0.0
    %2699 = vmatprep.subr.mxu0 0.0
    %2700 = vmatpush2.msra.mxu0 0.0
    %2701 = vmatprep.subr.mxu0 0.0
    %2702 = vmatpush2.msra.mxu0 0.0
    %2703 = vmatprep.subr.mxu0 0.0
    %2704 = vmatpush2.msra.mxu0 0.0
    %2705 = vmatprep.subr.mxu0 0.0
    %2706 = vmatpush2.msra.mxu0 0.0
    %2707 = vmatprep.subr.mxu0 0.0
    %2708 = vmatpush2.msra.mxu0 0.0
    %2709 = vmatprep.subr.mxu0 0.0
    %2710 = vmatpush2.msra.mxu0 0.0
    %2711 = vmatprep.subr.mxu0 0.0
    %2712 = vmatpush2.msra.mxu0 0.0
    %2713 = vmatprep.subr.mxu0 0.0
    %2714 = vmatpush2.msra.mxu0 0.0
    %2715 = vmatprep.subr.mxu0 0.0
    %2716 = vmatpush2.msra.mxu0 0.0
    %2717 = vmatprep.subr.mxu0 0.0
    %2718 = vmatpush2.msra.mxu0 0.0
    %2719 = vmatprep.subr.mxu0 0.0
    %2720 = vmatpush2.msra.mxu0 0.0
    %2721 = vmatprep.subr.mxu0 0.0
    %2722 = vmatpush2.msra.mxu0 0.0
    %2723 = vmatprep.mubr.f32.mxu0 0.0
    %2724 = vmatmul.mubr.f32.gmra.mxu0 %v2583
    %v2725 = vpop.f32.mrf.mxu0
    %v2726 = vadd.f32 0.0, %v2725
    %v2727 = vpop.f32.mrf.mxu0
    %v2728 = vadd.f32 0.0, %v2727
    %2729 = vdwg.mxu0
    %v2730 = vadd.f32 %v2584, %v2655
    %v2731 = vadd.f32 %v2585, %v2657
    %v2732 = vadd.f32 %v2586, %v2726
    %v2733 = vadd.f32 %v2587, %v2728
    %v2734 = vxor.u32 %v2730, 2147483648
    %v2735 = vxor.u32 %v2731, 2147483648
    %v2736 = vxor.u32 %v2732, 2147483648
    %v2737 = vmul.f32 %v2734, 1.442695
    %v2738 = vpow.pop %v2737
    %v2739 = vmul.f32 %v2735, 1.442695
    %v2740 = vpow.pop %v2739
    %v2741 = vmul.f32 %v2736, 1.442695
    %v2742 = vpow.pop %v2741
    %v2743 = vadd.f32 %v2738, 1.0
    %v2744 = vadd.f32 %v2740, 1.0
    %v2745 = vadd.f32 %v2742, 1.0
    %v2746 = vrcp.pop %v2743
    %v2747 = vmul.f32 1.0, %v2746
    %v2748 = vrcp.pop %v2744
    %v2749 = vmul.f32 1.0, %v2748
    %v2750 = vrcp.pop %v2745
    %v2751 = vmul.f32 1.0, %v2750
    %v2752 = vtanh.pop %v2733
    %v2753 = vmul.f32 %v2749, %v2581
    %v2754 = vmul.f32 %v2747, %v2752
    %v2755 = vadd.f32 %v2753, %v2754
    %v2756 = vtanh.pop %v2755
    %v2757 = vmul.f32 %v2751, %v2756
    %v2758 = vld [vmem:[#allocation2 + $0x160] sm:$0xff]
    %v2759 = vld [vmem:[#allocation2 + $0x168] sm:$0xff]
    %v2760 = vld [vmem:[#allocation2 + $0x170] sm:$0xff]
    %v2761 = vld [vmem:[#allocation2 + $0x178] sm:$0xff]
    %2762 = vmatprep.subr.mxu0 %v845
    %2763 = vmatpush1.msra.mxu0 %v844
    %2764 = vmatprep.subr.mxu0 %v841
    %2765 = vmatpush1.msra.mxu0 %v840
    %2766 = vmatprep.subr.mxu0 %v837
    %2767 = vmatpush1.msra.mxu0 %v836
    %2768 = vmatprep.subr.mxu0 %v833
    %2769 = vmatpush1.msra.mxu0 %v832
    %2770 = vmatprep.subr.mxu0 %v829
    %2771 = vmatpush1.msra.mxu0 %v828
    %2772 = vmatprep.subr.mxu0 %v825
    %2773 = vmatpush1.msra.mxu0 %v824
    %2774 = vmatprep.subr.mxu0 %v821
    %2775 = vmatpush1.msra.mxu0 %v820
    %2776 = vmatprep.subr.mxu0 %v817
    %2777 = vmatpush1.msra.mxu0 %v816
    %2778 = vmatprep.subr.mxu0 %v813
    %2779 = vmatpush1.msra.mxu0 %v812
    %2780 = vmatprep.subr.mxu0 %v809
    %2781 = vmatpush1.msra.mxu0 %v808
    %2782 = vmatprep.subr.mxu0 %v805
    %2783 = vmatpush1.msra.mxu0 %v804
    %2784 = vmatprep.subr.mxu0 %v801
    %2785 = vmatpush1.msra.mxu0 %v800
    %2786 = vmatprep.subr.mxu0 %v797
    %2787 = vmatpush1.msra.mxu0 %v796
    %2788 = vmatprep.subr.mxu0 %v793
    %2789 = vmatpush1.msra.mxu0 %v792
    %2790 = vmatprep.subr.mxu0 %v789
    %2791 = vmatpush1.msra.mxu0 %v788
    %2792 = vmatprep.subr.mxu0 %v785
    %2793 = vmatpush1.msra.mxu0 %v784
    %2794 = vmatprep.subr.mxu0 0.0
    %2795 = vmatpush2.msra.mxu0 0.0
    %2796 = vmatprep.subr.mxu0 0.0
    %2797 = vmatpush2.msra.mxu0 0.0
    %2798 = vmatprep.subr.mxu0 0.0
    %2799 = vmatpush2.msra.mxu0 0.0
    %2800 = vmatprep.subr.mxu0 0.0
    %2801 = vmatpush2.msra.mxu0 0.0
    %2802 = vmatprep.subr.mxu0 0.0
    %2803 = vmatpush2.msra.mxu0 0.0
    %2804 = vmatprep.subr.mxu0 0.0
    %2805 = vmatpush2.msra.mxu0 0.0
    %2806 = vmatprep.subr.mxu0 0.0
    %2807 = vmatpush2.msra.mxu0 0.0
    %2808 = vmatprep.subr.mxu0 0.0
    %2809 = vmatpush2.msra.mxu0 0.0
    %2810 = vmatprep.subr.mxu0 0.0
    %2811 = vmatpush2.msra.mxu0 0.0
    %2812 = vmatprep.subr.mxu0 0.0
    %2813 = vmatpush2.msra.mxu0 0.0
    %2814 = vmatprep.subr.mxu0 0.0
    %2815 = vmatpush2.msra.mxu0 0.0
    %2816 = vmatprep.subr.mxu0 0.0
    %2817 = vmatpush2.msra.mxu0 0.0
    %2818 = vmatprep.subr.mxu0 0.0
    %2819 = vmatpush2.msra.mxu0 0.0
    %2820 = vmatprep.subr.mxu0 0.0
    %2821 = vmatpush2.msra.mxu0 0.0
    %2822 = vmatprep.subr.mxu0 0.0
    %2823 = vmatpush2.msra.mxu0 0.0
    %2824 = vmatprep.subr.mxu0 0.0
    %2825 = vmatpush2.msra.mxu0 0.0
    %2826 = vmatprep.mubr.f32.mxu0 0.0
    %2827 = vmatmul.mubr.f32.gmra.mxu0 %v2757
    %v2828 = vpop.f32.mrf.mxu0
    %v2829 = vadd.f32 0.0, %v2828
    %v2830 = vpop.f32.mrf.mxu0
    %v2831 = vadd.f32 0.0, %v2830
    %2832 = vdwg.mxu0
    %2833 = vmatprep.subr.mxu0 %v847
    %2834 = vmatpush1.msra.mxu0 %v846
    %2835 = vmatprep.subr.mxu0 %v843
    %2836 = vmatpush1.msra.mxu0 %v842
    %2837 = vmatprep.subr.mxu0 %v839
    %2838 = vmatpush1.msra.mxu0 %v838
    %2839 = vmatprep.subr.mxu0 %v835
    %2840 = vmatpush1.msra.mxu0 %v834
    %2841 = vmatprep.subr.mxu0 %v831
    %2842 = vmatpush1.msra.mxu0 %v830
    %2843 = vmatprep.subr.mxu0 %v827
    %2844 = vmatpush1.msra.mxu0 %v826
    %2845 = vmatprep.subr.mxu0 %v823
    %2846 = vmatpush1.msra.mxu0 %v822
    %2847 = vmatprep.subr.mxu0 %v819
    %2848 = vmatpush1.msra.mxu0 %v818
    %2849 = vmatprep.subr.mxu0 %v815
    %2850 = vmatpush1.msra.mxu0 %v814
    %2851 = vmatprep.subr.mxu0 %v811
    %2852 = vmatpush1.msra.mxu0 %v810
    %2853 = vmatprep.subr.mxu0 %v807
    %2854 = vmatpush1.msra.mxu0 %v806
    %2855 = vmatprep.subr.mxu0 %v803
    %2856 = vmatpush1.msra.mxu0 %v802
    %2857 = vmatprep.subr.mxu0 %v799
    %2858 = vmatpush1.msra.mxu0 %v798
    %2859 = vmatprep.subr.mxu0 %v795
    %2860 = vmatpush1.msra.mxu0 %v794
    %2861 = vmatprep.subr.mxu0 %v791
    %2862 = vmatpush1.msra.mxu0 %v790
    %2863 = vmatprep.subr.mxu0 %v787
    %2864 = vmatpush1.msra.mxu0 %v786
    %2865 = vmatprep.subr.mxu0 0.0
    %2866 = vmatpush2.msra.mxu0 0.0
    %2867 = vmatprep.subr.mxu0 0.0
    %2868 = vmatpush2.msra.mxu0 0.0
    %2869 = vmatprep.subr.mxu0 0.0
    %2870 = vmatpush2.msra.mxu0 0.0
    %2871 = vmatprep.subr.mxu0 0.0
    %2872 = vmatpush2.msra.mxu0 0.0
    %2873 = vmatprep.subr.mxu0 0.0
    %2874 = vmatpush2.msra.mxu0 0.0
    %2875 = vmatprep.subr.mxu0 0.0
    %2876 = vmatpush2.msra.mxu0 0.0
    %2877 = vmatprep.subr.mxu0 0.0
    %2878 = vmatpush2.msra.mxu0 0.0
    %2879 = vmatprep.subr.mxu0 0.0
    %2880 = vmatpush2.msra.mxu0 0.0
    %2881 = vmatprep.subr.mxu0 0.0
    %2882 = vmatpush2.msra.mxu0 0.0
    %2883 = vmatprep.subr.mxu0 0.0
    %2884 = vmatpush2.msra.mxu0 0.0
    %2885 = vmatprep.subr.mxu0 0.0
    %2886 = vmatpush2.msra.mxu0 0.0
    %2887 = vmatprep.subr.mxu0 0.0
    %2888 = vmatpush2.msra.mxu0 0.0
    %2889 = vmatprep.subr.mxu0 0.0
    %2890 = vmatpush2.msra.mxu0 0.0
    %2891 = vmatprep.subr.mxu0 0.0
    %2892 = vmatpush2.msra.mxu0 0.0
    %2893 = vmatprep.subr.mxu0 0.0
    %2894 = vmatpush2.msra.mxu0 0.0
    %2895 = vmatprep.subr.mxu0 0.0
    %2896 = vmatpush2.msra.mxu0 0.0
    %2897 = vmatprep.mubr.f32.mxu0 0.0
    %2898 = vmatmul.mubr.f32.gmra.mxu0 %v2757
    %v2899 = vpop.f32.mrf.mxu0
    %v2900 = vadd.f32 0.0, %v2899
    %v2901 = vpop.f32.mrf.mxu0
    %v2902 = vadd.f32 0.0, %v2901
    %2903 = vdwg.mxu0
    %v2904 = vadd.f32 %v2758, %v2829
    %v2905 = vadd.f32 %v2759, %v2831
    %v2906 = vadd.f32 %v2760, %v2900
    %v2907 = vadd.f32 %v2761, %v2902
    %v2908 = vxor.u32 %v2904, 2147483648
    %v2909 = vxor.u32 %v2905, 2147483648
    %v2910 = vxor.u32 %v2906, 2147483648
    %v2911 = vmul.f32 %v2908, 1.442695
    %v2912 = vpow.pop %v2911
    %v2913 = vmul.f32 %v2909, 1.442695
    %v2914 = vpow.pop %v2913
    %v2915 = vmul.f32 %v2910, 1.442695
    %v2916 = vpow.pop %v2915
    %v2917 = vadd.f32 %v2912, 1.0
    %v2918 = vadd.f32 %v2914, 1.0
    %v2919 = vadd.f32 %v2916, 1.0
    %v2920 = vrcp.pop %v2917
    %v2921 = vmul.f32 1.0, %v2920
    %v2922 = vrcp.pop %v2918
    %v2923 = vmul.f32 1.0, %v2922
    %v2924 = vrcp.pop %v2919
    %v2925 = vmul.f32 1.0, %v2924
    %v2926 = vtanh.pop %v2907
    %v2927 = vmul.f32 %v2923, %v2755
    %v2928 = vmul.f32 %v2921, %v2926
    %v2929 = vadd.f32 %v2927, %v2928
    %v2930 = vtanh.pop %v2929
    %v2931 = vmul.f32 %v2925, %v2930
    %v2932 = vld [vmem:[#allocation2 + $0x180] sm:$0xff]
    %v2933 = vld [vmem:[#allocation2 + $0x188] sm:$0xff]
    %v2934 = vld [vmem:[#allocation2 + $0x190] sm:$0xff]
    %v2935 = vld [vmem:[#allocation2 + $0x198] sm:$0xff]
    %2936 = vmatprep.subr.mxu0 %v845
    %2937 = vmatpush1.msra.mxu0 %v844
    %2938 = vmatprep.subr.mxu0 %v841
    %2939 = vmatpush1.msra.mxu0 %v840
    %2940 = vmatprep.subr.mxu0 %v837
    %2941 = vmatpush1.msra.mxu0 %v836
    %2942 = vmatprep.subr.mxu0 %v833
    %2943 = vmatpush1.msra.mxu0 %v832
    %2944 = vmatprep.subr.mxu0 %v829
    %2945 = vmatpush1.msra.mxu0 %v828
    %2946 = vmatprep.subr.mxu0 %v825
    %2947 = vmatpush1.msra.mxu0 %v824
    %2948 = vmatprep.subr.mxu0 %v821
    %2949 = vmatpush1.msra.mxu0 %v820
    %2950 = vmatprep.subr.mxu0 %v817
    %2951 = vmatpush1.msra.mxu0 %v816
    %2952 = vmatprep.subr.mxu0 %v813
    %2953 = vmatpush1.msra.mxu0 %v812
    %2954 = vmatprep.subr.mxu0 %v809
    %2955 = vmatpush1.msra.mxu0 %v808
    %2956 = vmatprep.subr.mxu0 %v805
    %2957 = vmatpush1.msra.mxu0 %v804
    %2958 = vmatprep.subr.mxu0 %v801
    %2959 = vmatpush1.msra.mxu0 %v800
    %2960 = vmatprep.subr.mxu0 %v797
    %2961 = vmatpush1.msra.mxu0 %v796
    %2962 = vmatprep.subr.mxu0 %v793
    %2963 = vmatpush1.msra.mxu0 %v792
    %2964 = vmatprep.subr.mxu0 %v789
    %2965 = vmatpush1.msra.mxu0 %v788
    %2966 = vmatprep.subr.mxu0 %v785
    %2967 = vmatpush1.msra.mxu0 %v784
    %2968 = vmatprep.subr.mxu0 0.0
    %2969 = vmatpush2.msra.mxu0 0.0
    %2970 = vmatprep.subr.mxu0 0.0
    %2971 = vmatpush2.msra.mxu0 0.0
    %2972 = vmatprep.subr.mxu0 0.0
    %2973 = vmatpush2.msra.mxu0 0.0
    %2974 = vmatprep.subr.mxu0 0.0
    %2975 = vmatpush2.msra.mxu0 0.0
    %2976 = vmatprep.subr.mxu0 0.0
    %2977 = vmatpush2.msra.mxu0 0.0
    %2978 = vmatprep.subr.mxu0 0.0
    %2979 = vmatpush2.msra.mxu0 0.0
    %2980 = vmatprep.subr.mxu0 0.0
    %2981 = vmatpush2.msra.mxu0 0.0
    %2982 = vmatprep.subr.mxu0 0.0
    %2983 = vmatpush2.msra.mxu0 0.0
    %2984 = vmatprep.subr.mxu0 0.0
    %2985 = vmatpush2.msra.mxu0 0.0
    %2986 = vmatprep.subr.mxu0 0.0
    %2987 = vmatpush2.msra.mxu0 0.0
    %2988 = vmatprep.subr.mxu0 0.0
    %2989 = vmatpush2.msra.mxu0 0.0
    %2990 = vmatprep.subr.mxu0 0.0
    %2991 = vmatpush2.msra.mxu0 0.0
    %2992 = vmatprep.subr.mxu0 0.0
    %2993 = vmatpush2.msra.mxu0 0.0
    %2994 = vmatprep.subr.mxu0 0.0
    %2995 = vmatpush2.msra.mxu0 0.0
    %2996 = vmatprep.subr.mxu0 0.0
    %2997 = vmatpush2.msra.mxu0 0.0
    %2998 = vmatprep.subr.mxu0 0.0
    %2999 = vmatpush2.msra.mxu0 0.0
    %3000 = vmatprep.mubr.f32.mxu0 0.0
    %3001 = vmatmul.mubr.f32.gmra.mxu0 %v2931
    %v3002 = vpop.f32.mrf.mxu0
    %v3003 = vadd.f32 0.0, %v3002
    %v3004 = vpop.f32.mrf.mxu0
    %v3005 = vadd.f32 0.0, %v3004
    %3006 = vdwg.mxu0
    %3007 = vmatprep.subr.mxu0 %v847
    %3008 = vmatpush1.msra.mxu0 %v846
    %3009 = vmatprep.subr.mxu0 %v843
    %3010 = vmatpush1.msra.mxu0 %v842
    %3011 = vmatprep.subr.mxu0 %v839
    %3012 = vmatpush1.msra.mxu0 %v838
    %3013 = vmatprep.subr.mxu0 %v835
    %3014 = vmatpush1.msra.mxu0 %v834
    %3015 = vmatprep.subr.mxu0 %v831
    %3016 = vmatpush1.msra.mxu0 %v830
    %3017 = vmatprep.subr.mxu0 %v827
    %3018 = vmatpush1.msra.mxu0 %v826
    %3019 = vmatprep.subr.mxu0 %v823
    %3020 = vmatpush1.msra.mxu0 %v822
    %3021 = vmatprep.subr.mxu0 %v819
    %3022 = vmatpush1.msra.mxu0 %v818
    %3023 = vmatprep.subr.mxu0 %v815
    %3024 = vmatpush1.msra.mxu0 %v814
    %3025 = vmatprep.subr.mxu0 %v811
    %3026 = vmatpush1.msra.mxu0 %v810
    %3027 = vmatprep.subr.mxu0 %v807
    %3028 = vmatpush1.msra.mxu0 %v806
    %3029 = vmatprep.subr.mxu0 %v803
    %3030 = vmatpush1.msra.mxu0 %v802
    %3031 = vmatprep.subr.mxu0 %v799
    %3032 = vmatpush1.msra.mxu0 %v798
    %3033 = vmatprep.subr.mxu0 %v795
    %3034 = vmatpush1.msra.mxu0 %v794
    %3035 = vmatprep.subr.mxu0 %v791
    %3036 = vmatpush1.msra.mxu0 %v790
    %3037 = vmatprep.subr.mxu0 %v787
    %3038 = vmatpush1.msra.mxu0 %v786
    %3039 = vmatprep.subr.mxu0 0.0
    %3040 = vmatpush2.msra.mxu0 0.0
    %3041 = vmatprep.subr.mxu0 0.0
    %3042 = vmatpush2.msra.mxu0 0.0
    %3043 = vmatprep.subr.mxu0 0.0
    %3044 = vmatpush2.msra.mxu0 0.0
    %3045 = vmatprep.subr.mxu0 0.0
    %3046 = vmatpush2.msra.mxu0 0.0
    %3047 = vmatprep.subr.mxu0 0.0
    %3048 = vmatpush2.msra.mxu0 0.0
    %3049 = vmatprep.subr.mxu0 0.0
    %3050 = vmatpush2.msra.mxu0 0.0
    %3051 = vmatprep.subr.mxu0 0.0
    %3052 = vmatpush2.msra.mxu0 0.0
    %3053 = vmatprep.subr.mxu0 0.0
    %3054 = vmatpush2.msra.mxu0 0.0
    %3055 = vmatprep.subr.mxu0 0.0
    %3056 = vmatpush2.msra.mxu0 0.0
    %3057 = vmatprep.subr.mxu0 0.0
    %3058 = vmatpush2.msra.mxu0 0.0
    %3059 = vmatprep.subr.mxu0 0.0
    %3060 = vmatpush2.msra.mxu0 0.0
    %3061 = vmatprep.subr.mxu0 0.0
    %3062 = vmatpush2.msra.mxu0 0.0
    %3063 = vmatprep.subr.mxu0 0.0
    %3064 = vmatpush2.msra.mxu0 0.0
    %3065 = vmatprep.subr.mxu0 0.0
    %3066 = vmatpush2.msra.mxu0 0.0
    %3067 = vmatprep.subr.mxu0 0.0
    %3068 = vmatpush2.msra.mxu0 0.0
    %3069 = vmatprep.subr.mxu0 0.0
    %3070 = vmatpush2.msra.mxu0 0.0
    %3071 = vmatprep.mubr.f32.mxu0 0.0
    %3072 = vmatmul.mubr.f32.gmra.mxu0 %v2931
    %v3073 = vpop.f32.mrf.mxu0
    %v3074 = vadd.f32 0.0, %v3073
    %v3075 = vpop.f32.mrf.mxu0
    %v3076 = vadd.f32 0.0, %v3075
    %3077 = vdwg.mxu0
    %v3078 = vadd.f32 %v2932, %v3003
    %v3079 = vadd.f32 %v2933, %v3005
    %v3080 = vadd.f32 %v2934, %v3074
    %v3081 = vadd.f32 %v2935, %v3076
    %v3082 = vxor.u32 %v3078, 2147483648
    %v3083 = vxor.u32 %v3079, 2147483648
    %v3084 = vxor.u32 %v3080, 2147483648
    %v3085 = vmul.f32 %v3082, 1.442695
    %v3086 = vpow.pop %v3085
    %v3087 = vmul.f32 %v3083, 1.442695
    %v3088 = vpow.pop %v3087
    %v3089 = vmul.f32 %v3084, 1.442695
    %v3090 = vpow.pop %v3089
    %v3091 = vadd.f32 %v3086, 1.0
    %v3092 = vadd.f32 %v3088, 1.0
    %v3093 = vadd.f32 %v3090, 1.0
    %v3094 = vrcp.pop %v3091
    %v3095 = vmul.f32 1.0, %v3094
    %v3096 = vrcp.pop %v3092
    %v3097 = vmul.f32 1.0, %v3096
    %v3098 = vrcp.pop %v3093
    %v3099 = vmul.f32 1.0, %v3098
    %v3100 = vtanh.pop %v3081
    %v3101 = vmul.f32 %v3097, %v2929
    %v3102 = vmul.f32 %v3095, %v3100
    %v3103 = vadd.f32 %v3101, %v3102
    %v3104 = vtanh.pop %v3103
    %v3105 = vmul.f32 %v3099, %v3104
    %v3106 = vld [vmem:[#allocation2 + $0x1a0] sm:$0xff]
    %v3107 = vld [vmem:[#allocation2 + $0x1a8] sm:$0xff]
    %v3108 = vld [vmem:[#allocation2 + $0x1b0] sm:$0xff]
    %v3109 = vld [vmem:[#allocation2 + $0x1b8] sm:$0xff]
    %3110 = vmatprep.subr.mxu0 %v845
    %3111 = vmatpush1.msra.mxu0 %v844
    %3112 = vmatprep.subr.mxu0 %v841
    %3113 = vmatpush1.msra.mxu0 %v840
    %3114 = vmatprep.subr.mxu0 %v837
    %3115 = vmatpush1.msra.mxu0 %v836
    %3116 = vmatprep.subr.mxu0 %v833
    %3117 = vmatpush1.msra.mxu0 %v832
    %3118 = vmatprep.subr.mxu0 %v829
    %3119 = vmatpush1.msra.mxu0 %v828
    %3120 = vmatprep.subr.mxu0 %v825
    %3121 = vmatpush1.msra.mxu0 %v824
    %3122 = vmatprep.subr.mxu0 %v821
    %3123 = vmatpush1.msra.mxu0 %v820
    %3124 = vmatprep.subr.mxu0 %v817
    %3125 = vmatpush1.msra.mxu0 %v816
    %3126 = vmatprep.subr.mxu0 %v813
    %3127 = vmatpush1.msra.mxu0 %v812
    %3128 = vmatprep.subr.mxu0 %v809
    %3129 = vmatpush1.msra.mxu0 %v808
    %3130 = vmatprep.subr.mxu0 %v805
    %3131 = vmatpush1.msra.mxu0 %v804
    %3132 = vmatprep.subr.mxu0 %v801
    %3133 = vmatpush1.msra.mxu0 %v800
    %3134 = vmatprep.subr.mxu0 %v797
    %3135 = vmatpush1.msra.mxu0 %v796
    %3136 = vmatprep.subr.mxu0 %v793
    %3137 = vmatpush1.msra.mxu0 %v792
    %3138 = vmatprep.subr.mxu0 %v789
    %3139 = vmatpush1.msra.mxu0 %v788
    %3140 = vmatprep.subr.mxu0 %v785
    %3141 = vmatpush1.msra.mxu0 %v784
    %3142 = vmatprep.subr.mxu0 0.0
    %3143 = vmatpush2.msra.mxu0 0.0
    %3144 = vmatprep.subr.mxu0 0.0
    %3145 = vmatpush2.msra.mxu0 0.0
    %3146 = vmatprep.subr.mxu0 0.0
    %3147 = vmatpush2.msra.mxu0 0.0
    %3148 = vmatprep.subr.mxu0 0.0
    %3149 = vmatpush2.msra.mxu0 0.0
    %3150 = vmatprep.subr.mxu0 0.0
    %3151 = vmatpush2.msra.mxu0 0.0
    %3152 = vmatprep.subr.mxu0 0.0
    %3153 = vmatpush2.msra.mxu0 0.0
    %3154 = vmatprep.subr.mxu0 0.0
    %3155 = vmatpush2.msra.mxu0 0.0
    %3156 = vmatprep.subr.mxu0 0.0
    %3157 = vmatpush2.msra.mxu0 0.0
    %3158 = vmatprep.subr.mxu0 0.0
    %3159 = vmatpush2.msra.mxu0 0.0
    %3160 = vmatprep.subr.mxu0 0.0
    %3161 = vmatpush2.msra.mxu0 0.0
    %3162 = vmatprep.subr.mxu0 0.0
    %3163 = vmatpush2.msra.mxu0 0.0
    %3164 = vmatprep.subr.mxu0 0.0
    %3165 = vmatpush2.msra.mxu0 0.0
    %3166 = vmatprep.subr.mxu0 0.0
    %3167 = vmatpush2.msra.mxu0 0.0
    %3168 = vmatprep.subr.mxu0 0.0
    %3169 = vmatpush2.msra.mxu0 0.0
    %3170 = vmatprep.subr.mxu0 0.0
    %3171 = vmatpush2.msra.mxu0 0.0
    %3172 = vmatprep.subr.mxu0 0.0
    %3173 = vmatpush2.msra.mxu0 0.0
    %3174 = vmatprep.mubr.f32.mxu0 0.0
    %3175 = vmatmul.mubr.f32.gmra.mxu0 %v3105
    %v3176 = vpop.f32.mrf.mxu0
    %v3177 = vadd.f32 0.0, %v3176
    %v3178 = vpop.f32.mrf.mxu0
    %v3179 = vadd.f32 0.0, %v3178
    %3180 = vdwg.mxu0
    %3181 = vmatprep.subr.mxu0 %v847
    %3182 = vmatpush1.msra.mxu0 %v846
    %3183 = vmatprep.subr.mxu0 %v843
    %3184 = vmatpush1.msra.mxu0 %v842
    %3185 = vmatprep.subr.mxu0 %v839
    %3186 = vmatpush1.msra.mxu0 %v838
    %3187 = vmatprep.subr.mxu0 %v835
    %3188 = vmatpush1.msra.mxu0 %v834
    %3189 = vmatprep.subr.mxu0 %v831
    %3190 = vmatpush1.msra.mxu0 %v830
    %3191 = vmatprep.subr.mxu0 %v827
    %3192 = vmatpush1.msra.mxu0 %v826
    %3193 = vmatprep.subr.mxu0 %v823
    %3194 = vmatpush1.msra.mxu0 %v822
    %3195 = vmatprep.subr.mxu0 %v819
    %3196 = vmatpush1.msra.mxu0 %v818
    %3197 = vmatprep.subr.mxu0 %v815
    %3198 = vmatpush1.msra.mxu0 %v814
    %3199 = vmatprep.subr.mxu0 %v811
    %3200 = vmatpush1.msra.mxu0 %v810
    %3201 = vmatprep.subr.mxu0 %v807
    %3202 = vmatpush1.msra.mxu0 %v806
    %3203 = vmatprep.subr.mxu0 %v803
    %3204 = vmatpush1.msra.mxu0 %v802
    %3205 = vmatprep.subr.mxu0 %v799
    %3206 = vmatpush1.msra.mxu0 %v798
    %3207 = vmatprep.subr.mxu0 %v795
    %3208 = vmatpush1.msra.mxu0 %v794
    %3209 = vmatprep.subr.mxu0 %v791
    %3210 = vmatpush1.msra.mxu0 %v790
    %3211 = vmatprep.subr.mxu0 %v787
    %3212 = vmatpush1.msra.mxu0 %v786
    %3213 = vmatprep.subr.mxu0 0.0
    %3214 = vmatpush2.msra.mxu0 0.0
    %3215 = vmatprep.subr.mxu0 0.0
    %3216 = vmatpush2.msra.mxu0 0.0
    %3217 = vmatprep.subr.mxu0 0.0
    %3218 = vmatpush2.msra.mxu0 0.0
    %3219 = vmatprep.subr.mxu0 0.0
    %3220 = vmatpush2.msra.mxu0 0.0
    %3221 = vmatprep.subr.mxu0 0.0
    %3222 = vmatpush2.msra.mxu0 0.0
    %3223 = vmatprep.subr.mxu0 0.0
    %3224 = vmatpush2.msra.mxu0 0.0
    %3225 = vmatprep.subr.mxu0 0.0
    %3226 = vmatpush2.msra.mxu0 0.0
    %3227 = vmatprep.subr.mxu0 0.0
    %3228 = vmatpush2.msra.mxu0 0.0
    %3229 = vmatprep.subr.mxu0 0.0
    %3230 = vmatpush2.msra.mxu0 0.0
    %3231 = vmatprep.subr.mxu0 0.0
    %3232 = vmatpush2.msra.mxu0 0.0
    %3233 = vmatprep.subr.mxu0 0.0
    %3234 = vmatpush2.msra.mxu0 0.0
    %3235 = vmatprep.subr.mxu0 0.0
    %3236 = vmatpush2.msra.mxu0 0.0
    %3237 = vmatprep.subr.mxu0 0.0
    %3238 = vmatpush2.msra.mxu0 0.0
    %3239 = vmatprep.subr.mxu0 0.0
    %3240 = vmatpush2.msra.mxu0 0.0
    %3241 = vmatprep.subr.mxu0 0.0
    %3242 = vmatpush2.msra.mxu0 0.0
    %3243 = vmatprep.subr.mxu0 0.0
    %3244 = vmatpush2.msra.mxu0 0.0
    %3245 = vmatprep.mubr.f32.mxu0 0.0
    %3246 = vmatmul.mubr.f32.gmra.mxu0 %v3105
    %v3247 = vpop.f32.mrf.mxu0
    %v3248 = vadd.f32 0.0, %v3247
    %v3249 = vpop.f32.mrf.mxu0
    %v3250 = vadd.f32 0.0, %v3249
    %3251 = vdwg.mxu0
    %v3252 = vadd.f32 %v3106, %v3177
    %v3253 = vadd.f32 %v3107, %v3179
    %v3254 = vadd.f32 %v3108, %v3248
    %v3255 = vadd.f32 %v3109, %v3250
    %v3256 = vxor.u32 %v3252, 2147483648
    %v3257 = vxor.u32 %v3253, 2147483648
    %v3258 = vxor.u32 %v3254, 2147483648
    %v3259 = vmul.f32 %v3256, 1.442695
    %v3260 = vpow.pop %v3259
    %v3261 = vmul.f32 %v3257, 1.442695
    %v3262 = vpow.pop %v3261
    %v3263 = vmul.f32 %v3258, 1.442695
    %v3264 = vpow.pop %v3263
    %v3265 = vadd.f32 %v3260, 1.0
    %v3266 = vadd.f32 %v3262, 1.0
    %v3267 = vadd.f32 %v3264, 1.0
    %v3268 = vrcp.pop %v3265
    %v3269 = vmul.f32 1.0, %v3268
    %v3270 = vrcp.pop %v3266
    %v3271 = vmul.f32 1.0, %v3270
    %v3272 = vrcp.pop %v3267
    %v3273 = vmul.f32 1.0, %v3272
    %v3274 = vtanh.pop %v3255
    %v3275 = vmul.f32 %v3271, %v3103
    %v3276 = vmul.f32 %v3269, %v3274
    %v3277 = vadd.f32 %v3275, %v3276
    %v3278 = vtanh.pop %v3277
    %v3279 = vmul.f32 %v3273, %v3278
    %v3280 = vld [vmem:[#allocation2 + $0x1c0] sm:$0xff]
    %v3281 = vld [vmem:[#allocation2 + $0x1c8] sm:$0xff]
    %v3282 = vld [vmem:[#allocation2 + $0x1d0] sm:$0xff]
    %v3283 = vld [vmem:[#allocation2 + $0x1d8] sm:$0xff]
    %3284 = vmatprep.subr.mxu0 %v845
    %3285 = vmatpush1.msra.mxu0 %v844
    %3286 = vmatprep.subr.mxu0 %v841
    %3287 = vmatpush1.msra.mxu0 %v840
    %3288 = vmatprep.subr.mxu0 %v837
    %3289 = vmatpush1.msra.mxu0 %v836
    %3290 = vmatprep.subr.mxu0 %v833
    %3291 = vmatpush1.msra.mxu0 %v832
    %3292 = vmatprep.subr.mxu0 %v829
    %3293 = vmatpush1.msra.mxu0 %v828
    %3294 = vmatprep.subr.mxu0 %v825
    %3295 = vmatpush1.msra.mxu0 %v824
    %3296 = vmatprep.subr.mxu0 %v821
    %3297 = vmatpush1.msra.mxu0 %v820
    %3298 = vmatprep.subr.mxu0 %v817
    %3299 = vmatpush1.msra.mxu0 %v816
    %3300 = vmatprep.subr.mxu0 %v813
    %3301 = vmatpush1.msra.mxu0 %v812
    %3302 = vmatprep.subr.mxu0 %v809
    %3303 = vmatpush1.msra.mxu0 %v808
    %3304 = vmatprep.subr.mxu0 %v805
    %3305 = vmatpush1.msra.mxu0 %v804
    %3306 = vmatprep.subr.mxu0 %v801
    %3307 = vmatpush1.msra.mxu0 %v800
    %3308 = vmatprep.subr.mxu0 %v797
    %3309 = vmatpush1.msra.mxu0 %v796
    %3310 = vmatprep.subr.mxu0 %v793
    %3311 = vmatpush1.msra.mxu0 %v792
    %3312 = vmatprep.subr.mxu0 %v789
    %3313 = vmatpush1.msra.mxu0 %v788
    %3314 = vmatprep.subr.mxu0 %v785
    %3315 = vmatpush1.msra.mxu0 %v784
    %3316 = vmatprep.subr.mxu0 0.0
    %3317 = vmatpush2.msra.mxu0 0.0
    %3318 = vmatprep.subr.mxu0 0.0
    %3319 = vmatpush2.msra.mxu0 0.0
    %3320 = vmatprep.subr.mxu0 0.0
    %3321 = vmatpush2.msra.mxu0 0.0
    %3322 = vmatprep.subr.mxu0 0.0
    %3323 = vmatpush2.msra.mxu0 0.0
    %3324 = vmatprep.subr.mxu0 0.0
    %3325 = vmatpush2.msra.mxu0 0.0
    %3326 = vmatprep.subr.mxu0 0.0
    %3327 = vmatpush2.msra.mxu0 0.0
    %3328 = vmatprep.subr.mxu0 0.0
    %3329 = vmatpush2.msra.mxu0 0.0
    %3330 = vmatprep.subr.mxu0 0.0
    %3331 = vmatpush2.msra.mxu0 0.0
    %3332 = vmatprep.subr.mxu0 0.0
    %3333 = vmatpush2.msra.mxu0 0.0
    %3334 = vmatprep.subr.mxu0 0.0
    %3335 = vmatpush2.msra.mxu0 0.0
    %3336 = vmatprep.subr.mxu0 0.0
    %3337 = vmatpush2.msra.mxu0 0.0
    %3338 = vmatprep.subr.mxu0 0.0
    %3339 = vmatpush2.msra.mxu0 0.0
    %3340 = vmatprep.subr.mxu0 0.0
    %3341 = vmatpush2.msra.mxu0 0.0
    %3342 = vmatprep.subr.mxu0 0.0
    %3343 = vmatpush2.msra.mxu0 0.0
    %3344 = vmatprep.subr.mxu0 0.0
    %3345 = vmatpush2.msra.mxu0 0.0
    %3346 = vmatprep.subr.mxu0 0.0
    %3347 = vmatpush2.msra.mxu0 0.0
    %3348 = vmatprep.mubr.f32.mxu0 0.0
    %3349 = vmatmul.mubr.f32.gmra.mxu0 %v3279
    %v3350 = vpop.f32.mrf.mxu0
    %v3351 = vadd.f32 0.0, %v3350
    %v3352 = vpop.f32.mrf.mxu0
    %v3353 = vadd.f32 0.0, %v3352
    %3354 = vdwg.mxu0
    %3355 = vmatprep.subr.mxu0 %v847
    %3356 = vmatpush1.msra.mxu0 %v846
    %3357 = vmatprep.subr.mxu0 %v843
    %3358 = vmatpush1.msra.mxu0 %v842
    %3359 = vmatprep.subr.mxu0 %v839
    %3360 = vmatpush1.msra.mxu0 %v838
    %3361 = vmatprep.subr.mxu0 %v835
    %3362 = vmatpush1.msra.mxu0 %v834
    %3363 = vmatprep.subr.mxu0 %v831
    %3364 = vmatpush1.msra.mxu0 %v830
    %3365 = vmatprep.subr.mxu0 %v827
    %3366 = vmatpush1.msra.mxu0 %v826
    %3367 = vmatprep.subr.mxu0 %v823
    %3368 = vmatpush1.msra.mxu0 %v822
    %3369 = vmatprep.subr.mxu0 %v819
    %3370 = vmatpush1.msra.mxu0 %v818
    %3371 = vmatprep.subr.mxu0 %v815
    %3372 = vmatpush1.msra.mxu0 %v814
    %3373 = vmatprep.subr.mxu0 %v811
    %3374 = vmatpush1.msra.mxu0 %v810
    %3375 = vmatprep.subr.mxu0 %v807
    %3376 = vmatpush1.msra.mxu0 %v806
    %3377 = vmatprep.subr.mxu0 %v803
    %3378 = vmatpush1.msra.mxu0 %v802
    %3379 = vmatprep.subr.mxu0 %v799
    %3380 = vmatpush1.msra.mxu0 %v798
    %3381 = vmatprep.subr.mxu0 %v795
    %3382 = vmatpush1.msra.mxu0 %v794
    %3383 = vmatprep.subr.mxu0 %v791
    %3384 = vmatpush1.msra.mxu0 %v790
    %3385 = vmatprep.subr.mxu0 %v787
    %3386 = vmatpush1.msra.mxu0 %v786
    %3387 = vmatprep.subr.mxu0 0.0
    %3388 = vmatpush2.msra.mxu0 0.0
    %3389 = vmatprep.subr.mxu0 0.0
    %3390 = vmatpush2.msra.mxu0 0.0
    %3391 = vmatprep.subr.mxu0 0.0
    %3392 = vmatpush2.msra.mxu0 0.0
    %3393 = vmatprep.subr.mxu0 0.0
    %3394 = vmatpush2.msra.mxu0 0.0
    %3395 = vmatprep.subr.mxu0 0.0
    %3396 = vmatpush2.msra.mxu0 0.0
    %3397 = vmatprep.subr.mxu0 0.0
    %3398 = vmatpush2.msra.mxu0 0.0
    %3399 = vmatprep.subr.mxu0 0.0
    %3400 = vmatpush2.msra.mxu0 0.0
    %3401 = vmatprep.subr.mxu0 0.0
    %3402 = vmatpush2.msra.mxu0 0.0
    %3403 = vmatprep.subr.mxu0 0.0
    %3404 = vmatpush2.msra.mxu0 0.0
    %3405 = vmatprep.subr.mxu0 0.0
    %3406 = vmatpush2.msra.mxu0 0.0
    %3407 = vmatprep.subr.mxu0 0.0
    %3408 = vmatpush2.msra.mxu0 0.0
    %3409 = vmatprep.subr.mxu0 0.0
    %3410 = vmatpush2.msra.mxu0 0.0
    %3411 = vmatprep.subr.mxu0 0.0
    %3412 = vmatpush2.msra.mxu0 0.0
    %3413 = vmatprep.subr.mxu0 0.0
    %3414 = vmatpush2.msra.mxu0 0.0
    %3415 = vmatprep.subr.mxu0 0.0
    %3416 = vmatpush2.msra.mxu0 0.0
    %3417 = vmatprep.subr.mxu0 0.0
    %3418 = vmatpush2.msra.mxu0 0.0
    %3419 = vmatprep.mubr.f32.mxu0 0.0
    %3420 = vmatmul.mubr.f32.gmra.mxu0 %v3279
    %v3421 = vpop.f32.mrf.mxu0
    %v3422 = vadd.f32 0.0, %v3421
    %v3423 = vpop.f32.mrf.mxu0
    %v3424 = vadd.f32 0.0, %v3423
    %3425 = vdwg.mxu0
    %v3426 = vadd.f32 %v3280, %v3351
    %v3427 = vadd.f32 %v3281, %v3353
    %v3428 = vadd.f32 %v3282, %v3422
    %v3429 = vadd.f32 %v3283, %v3424
    %v3430 = vxor.u32 %v3426, 2147483648
    %v3431 = vxor.u32 %v3427, 2147483648
    %v3432 = vxor.u32 %v3428, 2147483648
    %v3433 = vmul.f32 %v3430, 1.442695
    %v3434 = vpow.pop %v3433
    %v3435 = vmul.f32 %v3431, 1.442695
    %v3436 = vpow.pop %v3435
    %v3437 = vmul.f32 %v3432, 1.442695
    %v3438 = vpow.pop %v3437
    %v3439 = vadd.f32 %v3434, 1.0
    %v3440 = vadd.f32 %v3436, 1.0
    %v3441 = vadd.f32 %v3438, 1.0
    %v3442 = vrcp.pop %v3439
    %v3443 = vmul.f32 1.0, %v3442
    %v3444 = vrcp.pop %v3440
    %v3445 = vmul.f32 1.0, %v3444
    %v3446 = vrcp.pop %v3441
    %v3447 = vmul.f32 1.0, %v3446
    %v3448 = vtanh.pop %v3429
    %v3449 = vmul.f32 %v3445, %v3277
    %v3450 = vmul.f32 %v3443, %v3448
    %v3451 = vadd.f32 %v3449, %v3450
    %v3452 = vtanh.pop %v3451
    %v3453 = vmul.f32 %v3447, %v3452
    %v3454 = vld [vmem:[#allocation2 + $0x1e0] sm:$0xff]
    %v3455 = vld [vmem:[#allocation2 + $0x1e8] sm:$0xff]
    %v3456 = vld [vmem:[#allocation2 + $0x1f0] sm:$0xff]
    %v3457 = vld [vmem:[#allocation2 + $0x1f8] sm:$0xff]
    %3458 = vmatprep.subr.mxu0 %v845
    %3459 = vmatpush1.msra.mxu0 %v844
    %3460 = vmatprep.subr.mxu0 %v841
    %3461 = vmatpush1.msra.mxu0 %v840
    %3462 = vmatprep.subr.mxu0 %v837
    %3463 = vmatpush1.msra.mxu0 %v836
    %3464 = vmatprep.subr.mxu0 %v833
    %3465 = vmatpush1.msra.mxu0 %v832
    %3466 = vmatprep.subr.mxu0 %v829
    %3467 = vmatpush1.msra.mxu0 %v828
    %3468 = vmatprep.subr.mxu0 %v825
    %3469 = vmatpush1.msra.mxu0 %v824
    %3470 = vmatprep.subr.mxu0 %v821
    %3471 = vmatpush1.msra.mxu0 %v820
    %3472 = vmatprep.subr.mxu0 %v817
    %3473 = vmatpush1.msra.mxu0 %v816
    %3474 = vmatprep.subr.mxu0 %v813
    %3475 = vmatpush1.msra.mxu0 %v812
    %3476 = vmatprep.subr.mxu0 %v809
    %3477 = vmatpush1.msra.mxu0 %v808
    %3478 = vmatprep.subr.mxu0 %v805
    %3479 = vmatpush1.msra.mxu0 %v804
    %3480 = vmatprep.subr.mxu0 %v801
    %3481 = vmatpush1.msra.mxu0 %v800
    %3482 = vmatprep.subr.mxu0 %v797
    %3483 = vmatpush1.msra.mxu0 %v796
    %3484 = vmatprep.subr.mxu0 %v793
    %3485 = vmatpush1.msra.mxu0 %v792
    %3486 = vmatprep.subr.mxu0 %v789
    %3487 = vmatpush1.msra.mxu0 %v788
    %3488 = vmatprep.subr.mxu0 %v785
    %3489 = vmatpush1.msra.mxu0 %v784
    %3490 = vmatprep.subr.mxu0 0.0
    %3491 = vmatpush2.msra.mxu0 0.0
    %3492 = vmatprep.subr.mxu0 0.0
    %3493 = vmatpush2.msra.mxu0 0.0
    %3494 = vmatprep.subr.mxu0 0.0
    %3495 = vmatpush2.msra.mxu0 0.0
    %3496 = vmatprep.subr.mxu0 0.0
    %3497 = vmatpush2.msra.mxu0 0.0
    %3498 = vmatprep.subr.mxu0 0.0
    %3499 = vmatpush2.msra.mxu0 0.0
    %3500 = vmatprep.subr.mxu0 0.0
    %3501 = vmatpush2.msra.mxu0 0.0
    %3502 = vmatprep.subr.mxu0 0.0
    %3503 = vmatpush2.msra.mxu0 0.0
    %3504 = vmatprep.subr.mxu0 0.0
    %3505 = vmatpush2.msra.mxu0 0.0
    %3506 = vmatprep.subr.mxu0 0.0
    %3507 = vmatpush2.msra.mxu0 0.0
    %3508 = vmatprep.subr.mxu0 0.0
    %3509 = vmatpush2.msra.mxu0 0.0
    %3510 = vmatprep.subr.mxu0 0.0
    %3511 = vmatpush2.msra.mxu0 0.0
    %3512 = vmatprep.subr.mxu0 0.0
    %3513 = vmatpush2.msra.mxu0 0.0
    %3514 = vmatprep.subr.mxu0 0.0
    %3515 = vmatpush2.msra.mxu0 0.0
    %3516 = vmatprep.subr.mxu0 0.0
    %3517 = vmatpush2.msra.mxu0 0.0
    %3518 = vmatprep.subr.mxu0 0.0
    %3519 = vmatpush2.msra.mxu0 0.0
    %3520 = vmatprep.subr.mxu0 0.0
    %3521 = vmatpush2.msra.mxu0 0.0
    %3522 = vmatprep.mubr.f32.mxu0 0.0
    %3523 = vmatmul.mubr.f32.gmra.mxu0 %v3453
    %v3524 = vpop.f32.mrf.mxu0
    %v3525 = vadd.f32 0.0, %v3524
    %v3526 = vpop.f32.mrf.mxu0
    %v3527 = vadd.f32 0.0, %v3526
    %3528 = vdwg.mxu0
    %3529 = vmatprep.subr.mxu0 %v847
    %3530 = vmatpush1.msra.mxu0 %v846
    %3531 = vmatprep.subr.mxu0 %v843
    %3532 = vmatpush1.msra.mxu0 %v842
    %3533 = vmatprep.subr.mxu0 %v839
    %3534 = vmatpush1.msra.mxu0 %v838
    %3535 = vmatprep.subr.mxu0 %v835
    %3536 = vmatpush1.msra.mxu0 %v834
    %3537 = vmatprep.subr.mxu0 %v831
    %3538 = vmatpush1.msra.mxu0 %v830
    %3539 = vmatprep.subr.mxu0 %v827
    %3540 = vmatpush1.msra.mxu0 %v826
    %3541 = vmatprep.subr.mxu0 %v823
    %3542 = vmatpush1.msra.mxu0 %v822
    %3543 = vmatprep.subr.mxu0 %v819
    %3544 = vmatpush1.msra.mxu0 %v818
    %3545 = vmatprep.subr.mxu0 %v815
    %3546 = vmatpush1.msra.mxu0 %v814
    %3547 = vmatprep.subr.mxu0 %v811
    %3548 = vmatpush1.msra.mxu0 %v810
    %3549 = vmatprep.subr.mxu0 %v807
    %3550 = vmatpush1.msra.mxu0 %v806
    %3551 = vmatprep.subr.mxu0 %v803
    %3552 = vmatpush1.msra.mxu0 %v802
    %3553 = vmatprep.subr.mxu0 %v799
    %3554 = vmatpush1.msra.mxu0 %v798
    %3555 = vmatprep.subr.mxu0 %v795
    %3556 = vmatpush1.msra.mxu0 %v794
    %3557 = vmatprep.subr.mxu0 %v791
    %3558 = vmatpush1.msra.mxu0 %v790
    %3559 = vmatprep.subr.mxu0 %v787
    %3560 = vmatpush1.msra.mxu0 %v786
    %3561 = vmatprep.subr.mxu0 0.0
    %3562 = vmatpush2.msra.mxu0 0.0
    %3563 = vmatprep.subr.mxu0 0.0
    %3564 = vmatpush2.msra.mxu0 0.0
    %3565 = vmatprep.subr.mxu0 0.0
    %3566 = vmatpush2.msra.mxu0 0.0
    %3567 = vmatprep.subr.mxu0 0.0
    %3568 = vmatpush2.msra.mxu0 0.0
    %3569 = vmatprep.subr.mxu0 0.0
    %3570 = vmatpush2.msra.mxu0 0.0
    %3571 = vmatprep.subr.mxu0 0.0
    %3572 = vmatpush2.msra.mxu0 0.0
    %3573 = vmatprep.subr.mxu0 0.0
    %3574 = vmatpush2.msra.mxu0 0.0
    %3575 = vmatprep.subr.mxu0 0.0
    %3576 = vmatpush2.msra.mxu0 0.0
    %3577 = vmatprep.subr.mxu0 0.0
    %3578 = vmatpush2.msra.mxu0 0.0
    %3579 = vmatprep.subr.mxu0 0.0
    %3580 = vmatpush2.msra.mxu0 0.0
    %3581 = vmatprep.subr.mxu0 0.0
    %3582 = vmatpush2.msra.mxu0 0.0
    %3583 = vmatprep.subr.mxu0 0.0
    %3584 = vmatpush2.msra.mxu0 0.0
    %3585 = vmatprep.subr.mxu0 0.0
    %3586 = vmatpush2.msra.mxu0 0.0
    %3587 = vmatprep.subr.mxu0 0.0
    %3588 = vmatpush2.msra.mxu0 0.0
    %3589 = vmatprep.subr.mxu0 0.0
    %3590 = vmatpush2.msra.mxu0 0.0
    %3591 = vmatprep.subr.mxu0 0.0
    %3592 = vmatpush2.msra.mxu0 0.0
    %3593 = vmatprep.mubr.f32.mxu0 0.0
    %3594 = vmatmul.mubr.f32.gmra.mxu0 %v3453
    %v3595 = vpop.f32.mrf.mxu0
    %v3596 = vadd.f32 0.0, %v3595
    %v3597 = vpop.f32.mrf.mxu0
    %v3598 = vadd.f32 0.0, %v3597
    %3599 = vdwg.mxu0
    %v3600 = vadd.f32 %v3454, %v3525
    %v3601 = vadd.f32 %v3455, %v3527
    %v3602 = vadd.f32 %v3456, %v3596
    %v3603 = vadd.f32 %v3457, %v3598
    %v3604 = vxor.u32 %v3600, 2147483648
    %v3605 = vxor.u32 %v3601, 2147483648
    %v3606 = vxor.u32 %v3602, 2147483648
    %v3607 = vmul.f32 %v3604, 1.442695
    %v3608 = vpow.pop %v3607
    %v3609 = vmul.f32 %v3605, 1.442695
    %v3610 = vpow.pop %v3609
    %v3611 = vmul.f32 %v3606, 1.442695
    %v3612 = vpow.pop %v3611
    %v3613 = vadd.f32 %v3608, 1.0
    %v3614 = vadd.f32 %v3610, 1.0
    %v3615 = vadd.f32 %v3612, 1.0
    %v3616 = vrcp.pop %v3613
    %v3617 = vmul.f32 1.0, %v3616
    %v3618 = vrcp.pop %v3614
    %v3619 = vmul.f32 1.0, %v3618
    %v3620 = vrcp.pop %v3615
    %v3621 = vmul.f32 1.0, %v3620
    %v3622 = vtanh.pop %v3603
    %v3623 = vmul.f32 %v3619, %v3451
    %v3624 = vmul.f32 %v3617, %v3622
    %v3625 = vadd.f32 %v3623, %v3624
    %v3626 = vtanh.pop %v3625
    %v3627 = vmul.f32 %v3621, %v3626
    %v3628 = vld [vmem:[#allocation2 + $0x200] sm:$0xff]
    %v3629 = vld [vmem:[#allocation2 + $0x208] sm:$0xff]
    %v3630 = vld [vmem:[#allocation2 + $0x210] sm:$0xff]
    %v3631 = vld [vmem:[#allocation2 + $0x218] sm:$0xff]
    %3632 = vmatprep.subr.mxu0 %v845
    %3633 = vmatpush1.msra.mxu0 %v844
    %3634 = vmatprep.subr.mxu0 %v841
    %3635 = vmatpush1.msra.mxu0 %v840
    %3636 = vmatprep.subr.mxu0 %v837
    %3637 = vmatpush1.msra.mxu0 %v836
    %3638 = vmatprep.subr.mxu0 %v833
    %3639 = vmatpush1.msra.mxu0 %v832
    %3640 = vmatprep.subr.mxu0 %v829
    %3641 = vmatpush1.msra.mxu0 %v828
    %3642 = vmatprep.subr.mxu0 %v825
    %3643 = vmatpush1.msra.mxu0 %v824
    %3644 = vmatprep.subr.mxu0 %v821
    %3645 = vmatpush1.msra.mxu0 %v820
    %3646 = vmatprep.subr.mxu0 %v817
    %3647 = vmatpush1.msra.mxu0 %v816
    %3648 = vmatprep.subr.mxu0 %v813
    %3649 = vmatpush1.msra.mxu0 %v812
    %3650 = vmatprep.subr.mxu0 %v809
    %3651 = vmatpush1.msra.mxu0 %v808
    %3652 = vmatprep.subr.mxu0 %v805
    %3653 = vmatpush1.msra.mxu0 %v804
    %3654 = vmatprep.subr.mxu0 %v801
    %3655 = vmatpush1.msra.mxu0 %v800
    %3656 = vmatprep.subr.mxu0 %v797
    %3657 = vmatpush1.msra.mxu0 %v796
    %3658 = vmatprep.subr.mxu0 %v793
    %3659 = vmatpush1.msra.mxu0 %v792
    %3660 = vmatprep.subr.mxu0 %v789
    %3661 = vmatpush1.msra.mxu0 %v788
    %3662 = vmatprep.subr.mxu0 %v785
    %3663 = vmatpush1.msra.mxu0 %v784
    %3664 = vmatprep.subr.mxu0 0.0
    %3665 = vmatpush2.msra.mxu0 0.0
    %3666 = vmatprep.subr.mxu0 0.0
    %3667 = vmatpush2.msra.mxu0 0.0
    %3668 = vmatprep.subr.mxu0 0.0
    %3669 = vmatpush2.msra.mxu0 0.0
    %3670 = vmatprep.subr.mxu0 0.0
    %3671 = vmatpush2.msra.mxu0 0.0
    %3672 = vmatprep.subr.mxu0 0.0
    %3673 = vmatpush2.msra.mxu0 0.0
    %3674 = vmatprep.subr.mxu0 0.0
    %3675 = vmatpush2.msra.mxu0 0.0
    %3676 = vmatprep.subr.mxu0 0.0
    %3677 = vmatpush2.msra.mxu0 0.0
    %3678 = vmatprep.subr.mxu0 0.0
    %3679 = vmatpush2.msra.mxu0 0.0
    %3680 = vmatprep.subr.mxu0 0.0
    %3681 = vmatpush2.msra.mxu0 0.0
    %3682 = vmatprep.subr.mxu0 0.0
    %3683 = vmatpush2.msra.mxu0 0.0
    %3684 = vmatprep.subr.mxu0 0.0
    %3685 = vmatpush2.msra.mxu0 0.0
    %3686 = vmatprep.subr.mxu0 0.0
    %3687 = vmatpush2.msra.mxu0 0.0
    %3688 = vmatprep.subr.mxu0 0.0
    %3689 = vmatpush2.msra.mxu0 0.0
    %3690 = vmatprep.subr.mxu0 0.0
    %3691 = vmatpush2.msra.mxu0 0.0
    %3692 = vmatprep.subr.mxu0 0.0
    %3693 = vmatpush2.msra.mxu0 0.0
    %3694 = vmatprep.subr.mxu0 0.0
    %3695 = vmatpush2.msra.mxu0 0.0
    %3696 = vmatprep.mubr.f32.mxu0 0.0
    %3697 = vmatmul.mubr.f32.gmra.mxu0 %v3627
    %v3698 = vpop.f32.mrf.mxu0
    %v3699 = vadd.f32 0.0, %v3698
    %v3700 = vpop.f32.mrf.mxu0
    %v3701 = vadd.f32 0.0, %v3700
    %3702 = vdwg.mxu0
    %3703 = vmatprep.subr.mxu0 %v847
    %3704 = vmatpush1.msra.mxu0 %v846
    %3705 = vmatprep.subr.mxu0 %v843
    %3706 = vmatpush1.msra.mxu0 %v842
    %3707 = vmatprep.subr.mxu0 %v839
    %3708 = vmatpush1.msra.mxu0 %v838
    %3709 = vmatprep.subr.mxu0 %v835
    %3710 = vmatpush1.msra.mxu0 %v834
    %3711 = vmatprep.subr.mxu0 %v831
    %3712 = vmatpush1.msra.mxu0 %v830
    %3713 = vmatprep.subr.mxu0 %v827
    %3714 = vmatpush1.msra.mxu0 %v826
    %3715 = vmatprep.subr.mxu0 %v823
    %3716 = vmatpush1.msra.mxu0 %v822
    %3717 = vmatprep.subr.mxu0 %v819
    %3718 = vmatpush1.msra.mxu0 %v818
    %3719 = vmatprep.subr.mxu0 %v815
    %3720 = vmatpush1.msra.mxu0 %v814
    %3721 = vmatprep.subr.mxu0 %v811
    %3722 = vmatpush1.msra.mxu0 %v810
    %3723 = vmatprep.subr.mxu0 %v807
    %3724 = vmatpush1.msra.mxu0 %v806
    %3725 = vmatprep.subr.mxu0 %v803
    %3726 = vmatpush1.msra.mxu0 %v802
    %3727 = vmatprep.subr.mxu0 %v799
    %3728 = vmatpush1.msra.mxu0 %v798
    %3729 = vmatprep.subr.mxu0 %v795
    %3730 = vmatpush1.msra.mxu0 %v794
    %3731 = vmatprep.subr.mxu0 %v791
    %3732 = vmatpush1.msra.mxu0 %v790
    %3733 = vmatprep.subr.mxu0 %v787
    %3734 = vmatpush1.msra.mxu0 %v786
    %3735 = vmatprep.subr.mxu0 0.0
    %3736 = vmatpush2.msra.mxu0 0.0
    %3737 = vmatprep.subr.mxu0 0.0
    %3738 = vmatpush2.msra.mxu0 0.0
    %3739 = vmatprep.subr.mxu0 0.0
    %3740 = vmatpush2.msra.mxu0 0.0
    %3741 = vmatprep.subr.mxu0 0.0
    %3742 = vmatpush2.msra.mxu0 0.0
    %3743 = vmatprep.subr.mxu0 0.0
    %3744 = vmatpush2.msra.mxu0 0.0
    %3745 = vmatprep.subr.mxu0 0.0
    %3746 = vmatpush2.msra.mxu0 0.0
    %3747 = vmatprep.subr.mxu0 0.0
    %3748 = vmatpush2.msra.mxu0 0.0
    %3749 = vmatprep.subr.mxu0 0.0
    %3750 = vmatpush2.msra.mxu0 0.0
    %3751 = vmatprep.subr.mxu0 0.0
    %3752 = vmatpush2.msra.mxu0 0.0
    %3753 = vmatprep.subr.mxu0 0.0
    %3754 = vmatpush2.msra.mxu0 0.0
    %3755 = vmatprep.subr.mxu0 0.0
    %3756 = vmatpush2.msra.mxu0 0.0
    %3757 = vmatprep.subr.mxu0 0.0
    %3758 = vmatpush2.msra.mxu0 0.0
    %3759 = vmatprep.subr.mxu0 0.0
    %3760 = vmatpush2.msra.mxu0 0.0
    %3761 = vmatprep.subr.mxu0 0.0
    %3762 = vmatpush2.msra.mxu0 0.0
    %3763 = vmatprep.subr.mxu0 0.0
    %3764 = vmatpush2.msra.mxu0 0.0
    %3765 = vmatprep.subr.mxu0 0.0
    %3766 = vmatpush2.msra.mxu0 0.0
    %3767 = vmatprep.mubr.f32.mxu0 0.0
    %3768 = vmatmul.mubr.f32.gmra.mxu0 %v3627
    %v3769 = vpop.f32.mrf.mxu0
    %v3770 = vadd.f32 0.0, %v3769
    %v3771 = vpop.f32.mrf.mxu0
    %v3772 = vadd.f32 0.0, %v3771
    %3773 = vdwg.mxu0
    %v3774 = vadd.f32 %v3628, %v3699
    %v3775 = vadd.f32 %v3629, %v3701
    %v3776 = vadd.f32 %v3630, %v3770
    %v3777 = vadd.f32 %v3631, %v3772
    %v3778 = vxor.u32 %v3774, 2147483648
    %v3779 = vxor.u32 %v3775, 2147483648
    %v3780 = vxor.u32 %v3776, 2147483648
    %v3781 = vmul.f32 %v3778, 1.442695
    %v3782 = vpow.pop %v3781
    %v3783 = vmul.f32 %v3779, 1.442695
    %v3784 = vpow.pop %v3783
    %v3785 = vmul.f32 %v3780, 1.442695
    %v3786 = vpow.pop %v3785
    %v3787 = vadd.f32 %v3782, 1.0
    %v3788 = vadd.f32 %v3784, 1.0
    %v3789 = vadd.f32 %v3786, 1.0
    %v3790 = vrcp.pop %v3787
    %v3791 = vmul.f32 1.0, %v3790
    %v3792 = vrcp.pop %v3788
    %v3793 = vmul.f32 1.0, %v3792
    %v3794 = vrcp.pop %v3789
    %v3795 = vmul.f32 1.0, %v3794
    %v3796 = vtanh.pop %v3777
    %v3797 = vmul.f32 %v3793, %v3625
    %v3798 = vmul.f32 %v3791, %v3796
    %v3799 = vadd.f32 %v3797, %v3798
    %v3800 = vtanh.pop %v3799
    %v3801 = vmul.f32 %v3795, %v3800
    %v3802 = vld [vmem:[#allocation2 + $0x220] sm:$0xff]
    %v3803 = vld [vmem:[#allocation2 + $0x228] sm:$0xff]
    %v3804 = vld [vmem:[#allocation2 + $0x230] sm:$0xff]
    %v3805 = vld [vmem:[#allocation2 + $0x238] sm:$0xff]
    %3806 = vmatprep.subr.mxu0 %v845
    %3807 = vmatpush1.msra.mxu0 %v844
    %3808 = vmatprep.subr.mxu0 %v841
    %3809 = vmatpush1.msra.mxu0 %v840
    %3810 = vmatprep.subr.mxu0 %v837
    %3811 = vmatpush1.msra.mxu0 %v836
    %3812 = vmatprep.subr.mxu0 %v833
    %3813 = vmatpush1.msra.mxu0 %v832
    %3814 = vmatprep.subr.mxu0 %v829
    %3815 = vmatpush1.msra.mxu0 %v828
    %3816 = vmatprep.subr.mxu0 %v825
    %3817 = vmatpush1.msra.mxu0 %v824
    %3818 = vmatprep.subr.mxu0 %v821
    %3819 = vmatpush1.msra.mxu0 %v820
    %3820 = vmatprep.subr.mxu0 %v817
    %3821 = vmatpush1.msra.mxu0 %v816
    %3822 = vmatprep.subr.mxu0 %v813
    %3823 = vmatpush1.msra.mxu0 %v812
    %3824 = vmatprep.subr.mxu0 %v809
    %3825 = vmatpush1.msra.mxu0 %v808
    %3826 = vmatprep.subr.mxu0 %v805
    %3827 = vmatpush1.msra.mxu0 %v804
    %3828 = vmatprep.subr.mxu0 %v801
    %3829 = vmatpush1.msra.mxu0 %v800
    %3830 = vmatprep.subr.mxu0 %v797
    %3831 = vmatpush1.msra.mxu0 %v796
    %3832 = vmatprep.subr.mxu0 %v793
    %3833 = vmatpush1.msra.mxu0 %v792
    %3834 = vmatprep.subr.mxu0 %v789
    %3835 = vmatpush1.msra.mxu0 %v788
    %3836 = vmatprep.subr.mxu0 %v785
    %3837 = vmatpush1.msra.mxu0 %v784
    %3838 = vmatprep.subr.mxu0 0.0
    %3839 = vmatpush2.msra.mxu0 0.0
    %3840 = vmatprep.subr.mxu0 0.0
    %3841 = vmatpush2.msra.mxu0 0.0
    %3842 = vmatprep.subr.mxu0 0.0
    %3843 = vmatpush2.msra.mxu0 0.0
    %3844 = vmatprep.subr.mxu0 0.0
    %3845 = vmatpush2.msra.mxu0 0.0
    %3846 = vmatprep.subr.mxu0 0.0
    %3847 = vmatpush2.msra.mxu0 0.0
    %3848 = vmatprep.subr.mxu0 0.0
    %3849 = vmatpush2.msra.mxu0 0.0
    %3850 = vmatprep.subr.mxu0 0.0
    %3851 = vmatpush2.msra.mxu0 0.0
    %3852 = vmatprep.subr.mxu0 0.0
    %3853 = vmatpush2.msra.mxu0 0.0
    %3854 = vmatprep.subr.mxu0 0.0
    %3855 = vmatpush2.msra.mxu0 0.0
    %3856 = vmatprep.subr.mxu0 0.0
    %3857 = vmatpush2.msra.mxu0 0.0
    %3858 = vmatprep.subr.mxu0 0.0
    %3859 = vmatpush2.msra.mxu0 0.0
    %3860 = vmatprep.subr.mxu0 0.0
    %3861 = vmatpush2.msra.mxu0 0.0
    %3862 = vmatprep.subr.mxu0 0.0
    %3863 = vmatpush2.msra.mxu0 0.0
    %3864 = vmatprep.subr.mxu0 0.0
    %3865 = vmatpush2.msra.mxu0 0.0
    %3866 = vmatprep.subr.mxu0 0.0
    %3867 = vmatpush2.msra.mxu0 0.0
    %3868 = vmatprep.subr.mxu0 0.0
    %3869 = vmatpush2.msra.mxu0 0.0
    %3870 = vmatprep.mubr.f32.mxu0 0.0
    %3871 = vmatmul.mubr.f32.gmra.mxu0 %v3801
    %v3872 = vpop.f32.mrf.mxu0
    %v3873 = vadd.f32 0.0, %v3872
    %v3874 = vpop.f32.mrf.mxu0
    %v3875 = vadd.f32 0.0, %v3874
    %3876 = vdwg.mxu0
    %3877 = vmatprep.subr.mxu0 %v847
    %3878 = vmatpush1.msra.mxu0 %v846
    %3879 = vmatprep.subr.mxu0 %v843
    %3880 = vmatpush1.msra.mxu0 %v842
    %3881 = vmatprep.subr.mxu0 %v839
    %3882 = vmatpush1.msra.mxu0 %v838
    %3883 = vmatprep.subr.mxu0 %v835
    %3884 = vmatpush1.msra.mxu0 %v834
    %3885 = vmatprep.subr.mxu0 %v831
    %3886 = vmatpush1.msra.mxu0 %v830
    %3887 = vmatprep.subr.mxu0 %v827
    %3888 = vmatpush1.msra.mxu0 %v826
    %3889 = vmatprep.subr.mxu0 %v823
    %3890 = vmatpush1.msra.mxu0 %v822
    %3891 = vmatprep.subr.mxu0 %v819
    %3892 = vmatpush1.msra.mxu0 %v818
    %3893 = vmatprep.subr.mxu0 %v815
    %3894 = vmatpush1.msra.mxu0 %v814
    %3895 = vmatprep.subr.mxu0 %v811
    %3896 = vmatpush1.msra.mxu0 %v810
    %3897 = vmatprep.subr.mxu0 %v807
    %3898 = vmatpush1.msra.mxu0 %v806
    %3899 = vmatprep.subr.mxu0 %v803
    %3900 = vmatpush1.msra.mxu0 %v802
    %3901 = vmatprep.subr.mxu0 %v799
    %3902 = vmatpush1.msra.mxu0 %v798
    %3903 = vmatprep.subr.mxu0 %v795
    %3904 = vmatpush1.msra.mxu0 %v794
    %3905 = vmatprep.subr.mxu0 %v791
    %3906 = vmatpush1.msra.mxu0 %v790
    %3907 = vmatprep.subr.mxu0 %v787
    %3908 = vmatpush1.msra.mxu0 %v786
    %3909 = vmatprep.subr.mxu0 0.0
    %3910 = vmatpush2.msra.mxu0 0.0
    %3911 = vmatprep.subr.mxu0 0.0
    %3912 = vmatpush2.msra.mxu0 0.0
    %3913 = vmatprep.subr.mxu0 0.0
    %3914 = vmatpush2.msra.mxu0 0.0
    %3915 = vmatprep.subr.mxu0 0.0
    %3916 = vmatpush2.msra.mxu0 0.0
    %3917 = vmatprep.subr.mxu0 0.0
    %3918 = vmatpush2.msra.mxu0 0.0
    %3919 = vmatprep.subr.mxu0 0.0
    %3920 = vmatpush2.msra.mxu0 0.0
    %3921 = vmatprep.subr.mxu0 0.0
    %3922 = vmatpush2.msra.mxu0 0.0
    %3923 = vmatprep.subr.mxu0 0.0
    %3924 = vmatpush2.msra.mxu0 0.0
    %3925 = vmatprep.subr.mxu0 0.0
    %3926 = vmatpush2.msra.mxu0 0.0
    %3927 = vmatprep.subr.mxu0 0.0
    %3928 = vmatpush2.msra.mxu0 0.0
    %3929 = vmatprep.subr.mxu0 0.0
    %3930 = vmatpush2.msra.mxu0 0.0
    %3931 = vmatprep.subr.mxu0 0.0
    %3932 = vmatpush2.msra.mxu0 0.0
    %3933 = vmatprep.subr.mxu0 0.0
    %3934 = vmatpush2.msra.mxu0 0.0
    %3935 = vmatprep.subr.mxu0 0.0
    %3936 = vmatpush2.msra.mxu0 0.0
    %3937 = vmatprep.subr.mxu0 0.0
    %3938 = vmatpush2.msra.mxu0 0.0
    %3939 = vmatprep.subr.mxu0 0.0
    %3940 = vmatpush2.msra.mxu0 0.0
    %3941 = vmatprep.mubr.f32.mxu0 0.0
    %3942 = vmatmul.mubr.f32.gmra.mxu0 %v3801
    %v3943 = vpop.f32.mrf.mxu0
    %v3944 = vadd.f32 0.0, %v3943
    %v3945 = vpop.f32.mrf.mxu0
    %v3946 = vadd.f32 0.0, %v3945
    %3947 = vdwg.mxu0
    %v3948 = vadd.f32 %v3802, %v3873
    %v3949 = vadd.f32 %v3803, %v3875
    %v3950 = vadd.f32 %v3804, %v3944
    %v3951 = vadd.f32 %v3805, %v3946
    %v3952 = vxor.u32 %v3948, 2147483648
    %v3953 = vxor.u32 %v3949, 2147483648
    %v3954 = vxor.u32 %v3950, 2147483648
    %v3955 = vmul.f32 %v3952, 1.442695
    %v3956 = vpow.pop %v3955
    %v3957 = vmul.f32 %v3953, 1.442695
    %v3958 = vpow.pop %v3957
    %v3959 = vmul.f32 %v3954, 1.442695
    %v3960 = vpow.pop %v3959
    %v3961 = vadd.f32 %v3956, 1.0
    %v3962 = vadd.f32 %v3958, 1.0
    %v3963 = vadd.f32 %v3960, 1.0
    %v3964 = vrcp.pop %v3961
    %v3965 = vmul.f32 1.0, %v3964
    %v3966 = vrcp.pop %v3962
    %v3967 = vmul.f32 1.0, %v3966
    %v3968 = vrcp.pop %v3963
    %v3969 = vmul.f32 1.0, %v3968
    %v3970 = vtanh.pop %v3951
    %v3971 = vmul.f32 %v3967, %v3799
    %v3972 = vmul.f32 %v3965, %v3970
    %v3973 = vadd.f32 %v3971, %v3972
    %v3974 = vtanh.pop %v3973
    %v3975 = vmul.f32 %v3969, %v3974
    %v3976 = vld [vmem:[#allocation2 + $0x240] sm:$0xff]
    %v3977 = vld [vmem:[#allocation2 + $0x248] sm:$0xff]
    %v3978 = vld [vmem:[#allocation2 + $0x250] sm:$0xff]
    %v3979 = vld [vmem:[#allocation2 + $0x258] sm:$0xff]
    %3980 = vmatprep.subr.mxu0 %v845
    %3981 = vmatpush1.msra.mxu0 %v844
    %3982 = vmatprep.subr.mxu0 %v841
    %3983 = vmatpush1.msra.mxu0 %v840
    %3984 = vmatprep.subr.mxu0 %v837
    %3985 = vmatpush1.msra.mxu0 %v836
    %3986 = vmatprep.subr.mxu0 %v833
    %3987 = vmatpush1.msra.mxu0 %v832
    %3988 = vmatprep.subr.mxu0 %v829
    %3989 = vmatpush1.msra.mxu0 %v828
    %3990 = vmatprep.subr.mxu0 %v825
    %3991 = vmatpush1.msra.mxu0 %v824
    %3992 = vmatprep.subr.mxu0 %v821
    %3993 = vmatpush1.msra.mxu0 %v820
    %3994 = vmatprep.subr.mxu0 %v817
    %3995 = vmatpush1.msra.mxu0 %v816
    %3996 = vmatprep.subr.mxu0 %v813
    %3997 = vmatpush1.msra.mxu0 %v812
    %3998 = vmatprep.subr.mxu0 %v809
    %3999 = vmatpush1.msra.mxu0 %v808
    %4000 = vmatprep.subr.mxu0 %v805
    %4001 = vmatpush1.msra.mxu0 %v804
    %4002 = vmatprep.subr.mxu0 %v801
    %4003 = vmatpush1.msra.mxu0 %v800
    %4004 = vmatprep.subr.mxu0 %v797
    %4005 = vmatpush1.msra.mxu0 %v796
    %4006 = vmatprep.subr.mxu0 %v793
    %4007 = vmatpush1.msra.mxu0 %v792
    %4008 = vmatprep.subr.mxu0 %v789
    %4009 = vmatpush1.msra.mxu0 %v788
    %4010 = vmatprep.subr.mxu0 %v785
    %4011 = vmatpush1.msra.mxu0 %v784
    %4012 = vmatprep.subr.mxu0 0.0
    %4013 = vmatpush2.msra.mxu0 0.0
    %4014 = vmatprep.subr.mxu0 0.0
    %4015 = vmatpush2.msra.mxu0 0.0
    %4016 = vmatprep.subr.mxu0 0.0
    %4017 = vmatpush2.msra.mxu0 0.0
    %4018 = vmatprep.subr.mxu0 0.0
    %4019 = vmatpush2.msra.mxu0 0.0
    %4020 = vmatprep.subr.mxu0 0.0
    %4021 = vmatpush2.msra.mxu0 0.0
    %4022 = vmatprep.subr.mxu0 0.0
    %4023 = vmatpush2.msra.mxu0 0.0
    %4024 = vmatprep.subr.mxu0 0.0
    %4025 = vmatpush2.msra.mxu0 0.0
    %4026 = vmatprep.subr.mxu0 0.0
    %4027 = vmatpush2.msra.mxu0 0.0
    %4028 = vmatprep.subr.mxu0 0.0
    %4029 = vmatpush2.msra.mxu0 0.0
    %4030 = vmatprep.subr.mxu0 0.0
    %4031 = vmatpush2.msra.mxu0 0.0
    %4032 = vmatprep.subr.mxu0 0.0
    %4033 = vmatpush2.msra.mxu0 0.0
    %4034 = vmatprep.subr.mxu0 0.0
    %4035 = vmatpush2.msra.mxu0 0.0
    %4036 = vmatprep.subr.mxu0 0.0
    %4037 = vmatpush2.msra.mxu0 0.0
    %4038 = vmatprep.subr.mxu0 0.0
    %4039 = vmatpush2.msra.mxu0 0.0
    %4040 = vmatprep.subr.mxu0 0.0
    %4041 = vmatpush2.msra.mxu0 0.0
    %4042 = vmatprep.subr.mxu0 0.0
    %4043 = vmatpush2.msra.mxu0 0.0
    %4044 = vmatprep.mubr.f32.mxu0 0.0
    %4045 = vmatmul.mubr.f32.gmra.mxu0 %v3975
    %v4046 = vpop.f32.mrf.mxu0
    %v4047 = vadd.f32 0.0, %v4046
    %v4048 = vpop.f32.mrf.mxu0
    %v4049 = vadd.f32 0.0, %v4048
    %4050 = vdwg.mxu0
    %4051 = vmatprep.subr.mxu0 %v847
    %4052 = vmatpush1.msra.mxu0 %v846
    %4053 = vmatprep.subr.mxu0 %v843
    %4054 = vmatpush1.msra.mxu0 %v842
    %4055 = vmatprep.subr.mxu0 %v839
    %4056 = vmatpush1.msra.mxu0 %v838
    %4057 = vmatprep.subr.mxu0 %v835
    %4058 = vmatpush1.msra.mxu0 %v834
    %4059 = vmatprep.subr.mxu0 %v831
    %4060 = vmatpush1.msra.mxu0 %v830
    %4061 = vmatprep.subr.mxu0 %v827
    %4062 = vmatpush1.msra.mxu0 %v826
    %4063 = vmatprep.subr.mxu0 %v823
    %4064 = vmatpush1.msra.mxu0 %v822
    %4065 = vmatprep.subr.mxu0 %v819
    %4066 = vmatpush1.msra.mxu0 %v818
    %4067 = vmatprep.subr.mxu0 %v815
    %4068 = vmatpush1.msra.mxu0 %v814
    %4069 = vmatprep.subr.mxu0 %v811
    %4070 = vmatpush1.msra.mxu0 %v810
    %4071 = vmatprep.subr.mxu0 %v807
    %4072 = vmatpush1.msra.mxu0 %v806
    %4073 = vmatprep.subr.mxu0 %v803
    %4074 = vmatpush1.msra.mxu0 %v802
    %4075 = vmatprep.subr.mxu0 %v799
    %4076 = vmatpush1.msra.mxu0 %v798
    %4077 = vmatprep.subr.mxu0 %v795
    %4078 = vmatpush1.msra.mxu0 %v794
    %4079 = vmatprep.subr.mxu0 %v791
    %4080 = vmatpush1.msra.mxu0 %v790
    %4081 = vmatprep.subr.mxu0 %v787
    %4082 = vmatpush1.msra.mxu0 %v786
    %4083 = vmatprep.subr.mxu0 0.0
    %4084 = vmatpush2.msra.mxu0 0.0
    %4085 = vmatprep.subr.mxu0 0.0
    %4086 = vmatpush2.msra.mxu0 0.0
    %4087 = vmatprep.subr.mxu0 0.0
    %4088 = vmatpush2.msra.mxu0 0.0
    %4089 = vmatprep.subr.mxu0 0.0
    %4090 = vmatpush2.msra.mxu0 0.0
    %4091 = vmatprep.subr.mxu0 0.0
    %4092 = vmatpush2.msra.mxu0 0.0
    %4093 = vmatprep.subr.mxu0 0.0
    %4094 = vmatpush2.msra.mxu0 0.0
    %4095 = vmatprep.subr.mxu0 0.0
    %4096 = vmatpush2.msra.mxu0 0.0
    %4097 = vmatprep.subr.mxu0 0.0
    %4098 = vmatpush2.msra.mxu0 0.0
    %4099 = vmatprep.subr.mxu0 0.0
    %4100 = vmatpush2.msra.mxu0 0.0
    %4101 = vmatprep.subr.mxu0 0.0
    %4102 = vmatpush2.msra.mxu0 0.0
    %4103 = vmatprep.subr.mxu0 0.0
    %4104 = vmatpush2.msra.mxu0 0.0
    %4105 = vmatprep.subr.mxu0 0.0
    %4106 = vmatpush2.msra.mxu0 0.0
    %4107 = vmatprep.subr.mxu0 0.0
    %4108 = vmatpush2.msra.mxu0 0.0
    %4109 = vmatprep.subr.mxu0 0.0
    %4110 = vmatpush2.msra.mxu0 0.0
    %4111 = vmatprep.subr.mxu0 0.0
    %4112 = vmatpush2.msra.mxu0 0.0
    %4113 = vmatprep.subr.mxu0 0.0
    %4114 = vmatpush2.msra.mxu0 0.0
    %4115 = vmatprep.mubr.f32.mxu0 0.0
    %4116 = vmatmul.mubr.f32.gmra.mxu0 %v3975
    %v4117 = vpop.f32.mrf.mxu0
    %v4118 = vadd.f32 0.0, %v4117
    %v4119 = vpop.f32.mrf.mxu0
    %v4120 = vadd.f32 0.0, %v4119
    %4121 = vdwg.mxu0
    %v4122 = vadd.f32 %v3976, %v4047
    %v4123 = vadd.f32 %v3977, %v4049
    %v4124 = vadd.f32 %v3978, %v4118
    %v4125 = vadd.f32 %v3979, %v4120
    %v4126 = vxor.u32 %v4122, 2147483648
    %v4127 = vxor.u32 %v4123, 2147483648
    %v4128 = vxor.u32 %v4124, 2147483648
    %v4129 = vmul.f32 %v4126, 1.442695
    %v4130 = vpow.pop %v4129
    %v4131 = vmul.f32 %v4127, 1.442695
    %v4132 = vpow.pop %v4131
    %v4133 = vmul.f32 %v4128, 1.442695
    %v4134 = vpow.pop %v4133
    %v4135 = vadd.f32 %v4130, 1.0
    %v4136 = vadd.f32 %v4132, 1.0
    %v4137 = vadd.f32 %v4134, 1.0
    %v4138 = vrcp.pop %v4135
    %v4139 = vmul.f32 1.0, %v4138
    %v4140 = vrcp.pop %v4136
    %v4141 = vmul.f32 1.0, %v4140
    %v4142 = vrcp.pop %v4137
    %v4143 = vmul.f32 1.0, %v4142
    %v4144 = vtanh.pop %v4125
    %v4145 = vmul.f32 %v4141, %v3973
    %v4146 = vmul.f32 %v4139, %v4144
    %v4147 = vadd.f32 %v4145, %v4146
    %v4148 = vtanh.pop %v4147
    %v4149 = vmul.f32 %v4143, %v4148
    %v4150 = vld [vmem:[#allocation2 + $0x260] sm:$0xff]
    %v4151 = vld [vmem:[#allocation2 + $0x268] sm:$0xff]
    %v4152 = vld [vmem:[#allocation2 + $0x270] sm:$0xff]
    %v4153 = vld [vmem:[#allocation2 + $0x278] sm:$0xff]
    %4154 = vmatprep.subr.mxu0 %v845
    %4155 = vmatpush1.msra.mxu0 %v844
    %4156 = vmatprep.subr.mxu0 %v841
    %4157 = vmatpush1.msra.mxu0 %v840
    %4158 = vmatprep.subr.mxu0 %v837
    %4159 = vmatpush1.msra.mxu0 %v836
    %4160 = vmatprep.subr.mxu0 %v833
    %4161 = vmatpush1.msra.mxu0 %v832
    %4162 = vmatprep.subr.mxu0 %v829
    %4163 = vmatpush1.msra.mxu0 %v828
    %4164 = vmatprep.subr.mxu0 %v825
    %4165 = vmatpush1.msra.mxu0 %v824
    %4166 = vmatprep.subr.mxu0 %v821
    %4167 = vmatpush1.msra.mxu0 %v820
    %4168 = vmatprep.subr.mxu0 %v817
    %4169 = vmatpush1.msra.mxu0 %v816
    %4170 = vmatprep.subr.mxu0 %v813
    %4171 = vmatpush1.msra.mxu0 %v812
    %4172 = vmatprep.subr.mxu0 %v809
    %4173 = vmatpush1.msra.mxu0 %v808
    %4174 = vmatprep.subr.mxu0 %v805
    %4175 = vmatpush1.msra.mxu0 %v804
    %4176 = vmatprep.subr.mxu0 %v801
    %4177 = vmatpush1.msra.mxu0 %v800
    %4178 = vmatprep.subr.mxu0 %v797
    %4179 = vmatpush1.msra.mxu0 %v796
    %4180 = vmatprep.subr.mxu0 %v793
    %4181 = vmatpush1.msra.mxu0 %v792
    %4182 = vmatprep.subr.mxu0 %v789
    %4183 = vmatpush1.msra.mxu0 %v788
    %4184 = vmatprep.subr.mxu0 %v785
    %4185 = vmatpush1.msra.mxu0 %v784
    %4186 = vmatprep.subr.mxu0 0.0
    %4187 = vmatpush2.msra.mxu0 0.0
    %4188 = vmatprep.subr.mxu0 0.0
    %4189 = vmatpush2.msra.mxu0 0.0
    %4190 = vmatprep.subr.mxu0 0.0
    %4191 = vmatpush2.msra.mxu0 0.0
    %4192 = vmatprep.subr.mxu0 0.0
    %4193 = vmatpush2.msra.mxu0 0.0
    %4194 = vmatprep.subr.mxu0 0.0
    %4195 = vmatpush2.msra.mxu0 0.0
    %4196 = vmatprep.subr.mxu0 0.0
    %4197 = vmatpush2.msra.mxu0 0.0
    %4198 = vmatprep.subr.mxu0 0.0
    %4199 = vmatpush2.msra.mxu0 0.0
    %4200 = vmatprep.subr.mxu0 0.0
    %4201 = vmatpush2.msra.mxu0 0.0
    %4202 = vmatprep.subr.mxu0 0.0
    %4203 = vmatpush2.msra.mxu0 0.0
    %4204 = vmatprep.subr.mxu0 0.0
    %4205 = vmatpush2.msra.mxu0 0.0
    %4206 = vmatprep.subr.mxu0 0.0
    %4207 = vmatpush2.msra.mxu0 0.0
    %4208 = vmatprep.subr.mxu0 0.0
    %4209 = vmatpush2.msra.mxu0 0.0
    %4210 = vmatprep.subr.mxu0 0.0
    %4211 = vmatpush2.msra.mxu0 0.0
    %4212 = vmatprep.subr.mxu0 0.0
    %4213 = vmatpush2.msra.mxu0 0.0
    %4214 = vmatprep.subr.mxu0 0.0
    %4215 = vmatpush2.msra.mxu0 0.0
    %4216 = vmatprep.subr.mxu0 0.0
    %4217 = vmatpush2.msra.mxu0 0.0
    %4218 = vmatprep.mubr.f32.mxu0 0.0
    %4219 = vmatmul.mubr.f32.gmra.mxu0 %v4149
    %v4220 = vpop.f32.mrf.mxu0
    %v4221 = vadd.f32 0.0, %v4220
    %v4222 = vpop.f32.mrf.mxu0
    %v4223 = vadd.f32 0.0, %v4222
    %4224 = vdwg.mxu0
    %4225 = vmatprep.subr.mxu0 %v847
    %4226 = vmatpush1.msra.mxu0 %v846
    %4227 = vmatprep.subr.mxu0 %v843
    %4228 = vmatpush1.msra.mxu0 %v842
    %4229 = vmatprep.subr.mxu0 %v839
    %4230 = vmatpush1.msra.mxu0 %v838
    %4231 = vmatprep.subr.mxu0 %v835
    %4232 = vmatpush1.msra.mxu0 %v834
    %4233 = vmatprep.subr.mxu0 %v831
    %4234 = vmatpush1.msra.mxu0 %v830
    %4235 = vmatprep.subr.mxu0 %v827
    %4236 = vmatpush1.msra.mxu0 %v826
    %4237 = vmatprep.subr.mxu0 %v823
    %4238 = vmatpush1.msra.mxu0 %v822
    %4239 = vmatprep.subr.mxu0 %v819
    %4240 = vmatpush1.msra.mxu0 %v818
    %4241 = vmatprep.subr.mxu0 %v815
    %4242 = vmatpush1.msra.mxu0 %v814
    %4243 = vmatprep.subr.mxu0 %v811
    %4244 = vmatpush1.msra.mxu0 %v810
    %4245 = vmatprep.subr.mxu0 %v807
    %4246 = vmatpush1.msra.mxu0 %v806
    %4247 = vmatprep.subr.mxu0 %v803
    %4248 = vmatpush1.msra.mxu0 %v802
    %4249 = vmatprep.subr.mxu0 %v799
    %4250 = vmatpush1.msra.mxu0 %v798
    %4251 = vmatprep.subr.mxu0 %v795
    %4252 = vmatpush1.msra.mxu0 %v794
    %4253 = vmatprep.subr.mxu0 %v791
    %4254 = vmatpush1.msra.mxu0 %v790
    %4255 = vmatprep.subr.mxu0 %v787
    %4256 = vmatpush1.msra.mxu0 %v786
    %4257 = vmatprep.subr.mxu0 0.0
    %4258 = vmatpush2.msra.mxu0 0.0
    %4259 = vmatprep.subr.mxu0 0.0
    %4260 = vmatpush2.msra.mxu0 0.0
    %4261 = vmatprep.subr.mxu0 0.0
    %4262 = vmatpush2.msra.mxu0 0.0
    %4263 = vmatprep.subr.mxu0 0.0
    %4264 = vmatpush2.msra.mxu0 0.0
    %4265 = vmatprep.subr.mxu0 0.0
    %4266 = vmatpush2.msra.mxu0 0.0
    %4267 = vmatprep.subr.mxu0 0.0
    %4268 = vmatpush2.msra.mxu0 0.0
    %4269 = vmatprep.subr.mxu0 0.0
    %4270 = vmatpush2.msra.mxu0 0.0
    %4271 = vmatprep.subr.mxu0 0.0
    %4272 = vmatpush2.msra.mxu0 0.0
    %4273 = vmatprep.subr.mxu0 0.0
    %4274 = vmatpush2.msra.mxu0 0.0
    %4275 = vmatprep.subr.mxu0 0.0
    %4276 = vmatpush2.msra.mxu0 0.0
    %4277 = vmatprep.subr.mxu0 0.0
    %4278 = vmatpush2.msra.mxu0 0.0
    %4279 = vmatprep.subr.mxu0 0.0
    %4280 = vmatpush2.msra.mxu0 0.0
    %4281 = vmatprep.subr.mxu0 0.0
    %4282 = vmatpush2.msra.mxu0 0.0
    %4283 = vmatprep.subr.mxu0 0.0
    %4284 = vmatpush2.msra.mxu0 0.0
    %4285 = vmatprep.subr.mxu0 0.0
    %4286 = vmatpush2.msra.mxu0 0.0
    %4287 = vmatprep.subr.mxu0 0.0
    %4288 = vmatpush2.msra.mxu0 0.0
    %4289 = vmatprep.mubr.f32.mxu0 0.0
    %4290 = vmatmul.mubr.f32.gmra.mxu0 %v4149
    %v4291 = vpop.f32.mrf.mxu0
    %v4292 = vadd.f32 0.0, %v4291
    %v4293 = vpop.f32.mrf.mxu0
    %v4294 = vadd.f32 0.0, %v4293
    %4295 = vdwg.mxu0
    %v4296 = vadd.f32 %v4150, %v4221
    %v4297 = vadd.f32 %v4151, %v4223
    %v4298 = vadd.f32 %v4152, %v4292
    %v4299 = vadd.f32 %v4153, %v4294
    %v4300 = vxor.u32 %v4296, 2147483648
    %v4301 = vxor.u32 %v4297, 2147483648
    %v4302 = vxor.u32 %v4298, 2147483648
    %v4303 = vmul.f32 %v4300, 1.442695
    %v4304 = vpow.pop %v4303
    %v4305 = vmul.f32 %v4301, 1.442695
    %v4306 = vpow.pop %v4305
    %v4307 = vmul.f32 %v4302, 1.442695
    %v4308 = vpow.pop %v4307
    %v4309 = vadd.f32 %v4304, 1.0
    %v4310 = vadd.f32 %v4306, 1.0
    %v4311 = vadd.f32 %v4308, 1.0
    %v4312 = vrcp.pop %v4309
    %v4313 = vmul.f32 1.0, %v4312
    %v4314 = vrcp.pop %v4310
    %v4315 = vmul.f32 1.0, %v4314
    %v4316 = vrcp.pop %v4311
    %v4317 = vmul.f32 1.0, %v4316
    %v4318 = vtanh.pop %v4299
    %v4319 = vmul.f32 %v4315, %v4147
    %v4320 = vmul.f32 %v4313, %v4318
    %v4321 = vadd.f32 %v4319, %v4320
    %v4322 = vtanh.pop %v4321
    %v4323 = vmul.f32 %v4317, %v4322
    %v4324 = vld [vmem:[#allocation2 + $0x280] sm:$0xff]
    %v4325 = vld [vmem:[#allocation2 + $0x288] sm:$0xff]
    %v4326 = vld [vmem:[#allocation2 + $0x290] sm:$0xff]
    %v4327 = vld [vmem:[#allocation2 + $0x298] sm:$0xff]
    %4328 = vmatprep.subr.mxu0 %v845
    %4329 = vmatpush1.msra.mxu0 %v844
    %4330 = vmatprep.subr.mxu0 %v841
    %4331 = vmatpush1.msra.mxu0 %v840
    %4332 = vmatprep.subr.mxu0 %v837
    %4333 = vmatpush1.msra.mxu0 %v836
    %4334 = vmatprep.subr.mxu0 %v833
    %4335 = vmatpush1.msra.mxu0 %v832
    %4336 = vmatprep.subr.mxu0 %v829
    %4337 = vmatpush1.msra.mxu0 %v828
    %4338 = vmatprep.subr.mxu0 %v825
    %4339 = vmatpush1.msra.mxu0 %v824
    %4340 = vmatprep.subr.mxu0 %v821
    %4341 = vmatpush1.msra.mxu0 %v820
    %4342 = vmatprep.subr.mxu0 %v817
    %4343 = vmatpush1.msra.mxu0 %v816
    %4344 = vmatprep.subr.mxu0 %v813
    %4345 = vmatpush1.msra.mxu0 %v812
    %4346 = vmatprep.subr.mxu0 %v809
    %4347 = vmatpush1.msra.mxu0 %v808
    %4348 = vmatprep.subr.mxu0 %v805
    %4349 = vmatpush1.msra.mxu0 %v804
    %4350 = vmatprep.subr.mxu0 %v801
    %4351 = vmatpush1.msra.mxu0 %v800
    %4352 = vmatprep.subr.mxu0 %v797
    %4353 = vmatpush1.msra.mxu0 %v796
    %4354 = vmatprep.subr.mxu0 %v793
    %4355 = vmatpush1.msra.mxu0 %v792
    %4356 = vmatprep.subr.mxu0 %v789
    %4357 = vmatpush1.msra.mxu0 %v788
    %4358 = vmatprep.subr.mxu0 %v785
    %4359 = vmatpush1.msra.mxu0 %v784
    %4360 = vmatprep.subr.mxu0 0.0
    %4361 = vmatpush2.msra.mxu0 0.0
    %4362 = vmatprep.subr.mxu0 0.0
    %4363 = vmatpush2.msra.mxu0 0.0
    %4364 = vmatprep.subr.mxu0 0.0
    %4365 = vmatpush2.msra.mxu0 0.0
    %4366 = vmatprep.subr.mxu0 0.0
    %4367 = vmatpush2.msra.mxu0 0.0
    %4368 = vmatprep.subr.mxu0 0.0
    %4369 = vmatpush2.msra.mxu0 0.0
    %4370 = vmatprep.subr.mxu0 0.0
    %4371 = vmatpush2.msra.mxu0 0.0
    %4372 = vmatprep.subr.mxu0 0.0
    %4373 = vmatpush2.msra.mxu0 0.0
    %4374 = vmatprep.subr.mxu0 0.0
    %4375 = vmatpush2.msra.mxu0 0.0
    %4376 = vmatprep.subr.mxu0 0.0
    %4377 = vmatpush2.msra.mxu0 0.0
    %4378 = vmatprep.subr.mxu0 0.0
    %4379 = vmatpush2.msra.mxu0 0.0
    %4380 = vmatprep.subr.mxu0 0.0
    %4381 = vmatpush2.msra.mxu0 0.0
    %4382 = vmatprep.subr.mxu0 0.0
    %4383 = vmatpush2.msra.mxu0 0.0
    %4384 = vmatprep.subr.mxu0 0.0
    %4385 = vmatpush2.msra.mxu0 0.0
    %4386 = vmatprep.subr.mxu0 0.0
    %4387 = vmatpush2.msra.mxu0 0.0
    %4388 = vmatprep.subr.mxu0 0.0
    %4389 = vmatpush2.msra.mxu0 0.0
    %4390 = vmatprep.subr.mxu0 0.0
    %4391 = vmatpush2.msra.mxu0 0.0
    %4392 = vmatprep.mubr.f32.mxu0 0.0
    %4393 = vmatmul.mubr.f32.gmra.mxu0 %v4323
    %v4394 = vpop.f32.mrf.mxu0
    %v4395 = vadd.f32 0.0, %v4394
    %v4396 = vpop.f32.mrf.mxu0
    %v4397 = vadd.f32 0.0, %v4396
    %4398 = vdwg.mxu0
    %4399 = vmatprep.subr.mxu0 %v847
    %4400 = vmatpush1.msra.mxu0 %v846
    %4401 = vmatprep.subr.mxu0 %v843
    %4402 = vmatpush1.msra.mxu0 %v842
    %4403 = vmatprep.subr.mxu0 %v839
    %4404 = vmatpush1.msra.mxu0 %v838
    %4405 = vmatprep.subr.mxu0 %v835
    %4406 = vmatpush1.msra.mxu0 %v834
    %4407 = vmatprep.subr.mxu0 %v831
    %4408 = vmatpush1.msra.mxu0 %v830
    %4409 = vmatprep.subr.mxu0 %v827
    %4410 = vmatpush1.msra.mxu0 %v826
    %4411 = vmatprep.subr.mxu0 %v823
    %4412 = vmatpush1.msra.mxu0 %v822
    %4413 = vmatprep.subr.mxu0 %v819
    %4414 = vmatpush1.msra.mxu0 %v818
    %4415 = vmatprep.subr.mxu0 %v815
    %4416 = vmatpush1.msra.mxu0 %v814
    %4417 = vmatprep.subr.mxu0 %v811
    %4418 = vmatpush1.msra.mxu0 %v810
    %4419 = vmatprep.subr.mxu0 %v807
    %4420 = vmatpush1.msra.mxu0 %v806
    %4421 = vmatprep.subr.mxu0 %v803
    %4422 = vmatpush1.msra.mxu0 %v802
    %4423 = vmatprep.subr.mxu0 %v799
    %4424 = vmatpush1.msra.mxu0 %v798
    %4425 = vmatprep.subr.mxu0 %v795
    %4426 = vmatpush1.msra.mxu0 %v794
    %4427 = vmatprep.subr.mxu0 %v791
    %4428 = vmatpush1.msra.mxu0 %v790
    %4429 = vmatprep.subr.mxu0 %v787
    %4430 = vmatpush1.msra.mxu0 %v786
    %4431 = vmatprep.subr.mxu0 0.0
    %4432 = vmatpush2.msra.mxu0 0.0
    %4433 = vmatprep.subr.mxu0 0.0
    %4434 = vmatpush2.msra.mxu0 0.0
    %4435 = vmatprep.subr.mxu0 0.0
    %4436 = vmatpush2.msra.mxu0 0.0
    %4437 = vmatprep.subr.mxu0 0.0
    %4438 = vmatpush2.msra.mxu0 0.0
    %4439 = vmatprep.subr.mxu0 0.0
    %4440 = vmatpush2.msra.mxu0 0.0
    %4441 = vmatprep.subr.mxu0 0.0
    %4442 = vmatpush2.msra.mxu0 0.0
    %4443 = vmatprep.subr.mxu0 0.0
    %4444 = vmatpush2.msra.mxu0 0.0
    %4445 = vmatprep.subr.mxu0 0.0
    %4446 = vmatpush2.msra.mxu0 0.0
    %4447 = vmatprep.subr.mxu0 0.0
    %4448 = vmatpush2.msra.mxu0 0.0
    %4449 = vmatprep.subr.mxu0 0.0
    %4450 = vmatpush2.msra.mxu0 0.0
    %4451 = vmatprep.subr.mxu0 0.0
    %4452 = vmatpush2.msra.mxu0 0.0
    %4453 = vmatprep.subr.mxu0 0.0
    %4454 = vmatpush2.msra.mxu0 0.0
    %4455 = vmatprep.subr.mxu0 0.0
    %4456 = vmatpush2.msra.mxu0 0.0
    %4457 = vmatprep.subr.mxu0 0.0
    %4458 = vmatpush2.msra.mxu0 0.0
    %4459 = vmatprep.subr.mxu0 0.0
    %4460 = vmatpush2.msra.mxu0 0.0
    %4461 = vmatprep.subr.mxu0 0.0
    %4462 = vmatpush2.msra.mxu0 0.0
    %4463 = vmatprep.mubr.f32.mxu0 0.0
    %4464 = vmatmul.mubr.f32.gmra.mxu0 %v4323
    %v4465 = vpop.f32.mrf.mxu0
    %v4466 = vadd.f32 0.0, %v4465
    %v4467 = vpop.f32.mrf.mxu0
    %v4468 = vadd.f32 0.0, %v4467
    %4469 = vdwg.mxu0
    %v4470 = vadd.f32 %v4324, %v4395
    %v4471 = vadd.f32 %v4325, %v4397
    %v4472 = vadd.f32 %v4326, %v4466
    %v4473 = vadd.f32 %v4327, %v4468
    %v4474 = vxor.u32 %v4470, 2147483648
    %v4475 = vxor.u32 %v4471, 2147483648
    %v4476 = vxor.u32 %v4472, 2147483648
    %v4477 = vmul.f32 %v4474, 1.442695
    %v4478 = vpow.pop %v4477
    %v4479 = vmul.f32 %v4475, 1.442695
    %v4480 = vpow.pop %v4479
    %v4481 = vmul.f32 %v4476, 1.442695
    %v4482 = vpow.pop %v4481
    %v4483 = vadd.f32 %v4478, 1.0
    %v4484 = vadd.f32 %v4480, 1.0
    %v4485 = vadd.f32 %v4482, 1.0
    %v4486 = vrcp.pop %v4483
    %v4487 = vmul.f32 1.0, %v4486
    %v4488 = vrcp.pop %v4484
    %v4489 = vmul.f32 1.0, %v4488
    %v4490 = vrcp.pop %v4485
    %v4491 = vmul.f32 1.0, %v4490
    %v4492 = vtanh.pop %v4473
    %v4493 = vmul.f32 %v4489, %v4321
    %v4494 = vmul.f32 %v4487, %v4492
    %v4495 = vadd.f32 %v4493, %v4494
    %v4496 = vtanh.pop %v4495
    %v4497 = vmul.f32 %v4491, %v4496
    %v4498 = vld [vmem:[#allocation2 + $0x2a0] sm:$0xff]
    %v4499 = vld [vmem:[#allocation2 + $0x2a8] sm:$0xff]
    %v4500 = vld [vmem:[#allocation2 + $0x2b0] sm:$0xff]
    %v4501 = vld [vmem:[#allocation2 + $0x2b8] sm:$0xff]
    %4502 = vmatprep.subr.mxu0 %v845
    %4503 = vmatpush1.msra.mxu0 %v844
    %4504 = vmatprep.subr.mxu0 %v841
    %4505 = vmatpush1.msra.mxu0 %v840
    %4506 = vmatprep.subr.mxu0 %v837
    %4507 = vmatpush1.msra.mxu0 %v836
    %4508 = vmatprep.subr.mxu0 %v833
    %4509 = vmatpush1.msra.mxu0 %v832
    %4510 = vmatprep.subr.mxu0 %v829
    %4511 = vmatpush1.msra.mxu0 %v828
    %4512 = vmatprep.subr.mxu0 %v825
    %4513 = vmatpush1.msra.mxu0 %v824
    %4514 = vmatprep.subr.mxu0 %v821
    %4515 = vmatpush1.msra.mxu0 %v820
    %4516 = vmatprep.subr.mxu0 %v817
    %4517 = vmatpush1.msra.mxu0 %v816
    %4518 = vmatprep.subr.mxu0 %v813
    %4519 = vmatpush1.msra.mxu0 %v812
    %4520 = vmatprep.subr.mxu0 %v809
    %4521 = vmatpush1.msra.mxu0 %v808
    %4522 = vmatprep.subr.mxu0 %v805
    %4523 = vmatpush1.msra.mxu0 %v804
    %4524 = vmatprep.subr.mxu0 %v801
    %4525 = vmatpush1.msra.mxu0 %v800
    %4526 = vmatprep.subr.mxu0 %v797
    %4527 = vmatpush1.msra.mxu0 %v796
    %4528 = vmatprep.subr.mxu0 %v793
    %4529 = vmatpush1.msra.mxu0 %v792
    %4530 = vmatprep.subr.mxu0 %v789
    %4531 = vmatpush1.msra.mxu0 %v788
    %4532 = vmatprep.subr.mxu0 %v785
    %4533 = vmatpush1.msra.mxu0 %v784
    %4534 = vmatprep.subr.mxu0 0.0
    %4535 = vmatpush2.msra.mxu0 0.0
    %4536 = vmatprep.subr.mxu0 0.0
    %4537 = vmatpush2.msra.mxu0 0.0
    %4538 = vmatprep.subr.mxu0 0.0
    %4539 = vmatpush2.msra.mxu0 0.0
    %4540 = vmatprep.subr.mxu0 0.0
    %4541 = vmatpush2.msra.mxu0 0.0
    %4542 = vmatprep.subr.mxu0 0.0
    %4543 = vmatpush2.msra.mxu0 0.0
    %4544 = vmatprep.subr.mxu0 0.0
    %4545 = vmatpush2.msra.mxu0 0.0
    %4546 = vmatprep.subr.mxu0 0.0
    %4547 = vmatpush2.msra.mxu0 0.0
    %4548 = vmatprep.subr.mxu0 0.0
    %4549 = vmatpush2.msra.mxu0 0.0
    %4550 = vmatprep.subr.mxu0 0.0
    %4551 = vmatpush2.msra.mxu0 0.0
    %4552 = vmatprep.subr.mxu0 0.0
    %4553 = vmatpush2.msra.mxu0 0.0
    %4554 = vmatprep.subr.mxu0 0.0
    %4555 = vmatpush2.msra.mxu0 0.0
    %4556 = vmatprep.subr.mxu0 0.0
    %4557 = vmatpush2.msra.mxu0 0.0
    %4558 = vmatprep.subr.mxu0 0.0
    %4559 = vmatpush2.msra.mxu0 0.0
    %4560 = vmatprep.subr.mxu0 0.0
    %4561 = vmatpush2.msra.mxu0 0.0
    %4562 = vmatprep.subr.mxu0 0.0
    %4563 = vmatpush2.msra.mxu0 0.0
    %4564 = vmatprep.subr.mxu0 0.0
    %4565 = vmatpush2.msra.mxu0 0.0
    %4566 = vmatprep.mubr.f32.mxu0 0.0
    %4567 = vmatmul.mubr.f32.gmra.mxu0 %v4497
    %v4568 = vpop.f32.mrf.mxu0
    %v4569 = vadd.f32 0.0, %v4568
    %v4570 = vpop.f32.mrf.mxu0
    %v4571 = vadd.f32 0.0, %v4570
    %4572 = vdwg.mxu0
    %4573 = vmatprep.subr.mxu0 %v847
    %4574 = vmatpush1.msra.mxu0 %v846
    %4575 = vmatprep.subr.mxu0 %v843
    %4576 = vmatpush1.msra.mxu0 %v842
    %4577 = vmatprep.subr.mxu0 %v839
    %4578 = vmatpush1.msra.mxu0 %v838
    %4579 = vmatprep.subr.mxu0 %v835
    %4580 = vmatpush1.msra.mxu0 %v834
    %4581 = vmatprep.subr.mxu0 %v831
    %4582 = vmatpush1.msra.mxu0 %v830
    %4583 = vmatprep.subr.mxu0 %v827
    %4584 = vmatpush1.msra.mxu0 %v826
    %4585 = vmatprep.subr.mxu0 %v823
    %4586 = vmatpush1.msra.mxu0 %v822
    %4587 = vmatprep.subr.mxu0 %v819
    %4588 = vmatpush1.msra.mxu0 %v818
    %4589 = vmatprep.subr.mxu0 %v815
    %4590 = vmatpush1.msra.mxu0 %v814
    %4591 = vmatprep.subr.mxu0 %v811
    %4592 = vmatpush1.msra.mxu0 %v810
    %4593 = vmatprep.subr.mxu0 %v807
    %4594 = vmatpush1.msra.mxu0 %v806
    %4595 = vmatprep.subr.mxu0 %v803
    %4596 = vmatpush1.msra.mxu0 %v802
    %4597 = vmatprep.subr.mxu0 %v799
    %4598 = vmatpush1.msra.mxu0 %v798
    %4599 = vmatprep.subr.mxu0 %v795
    %4600 = vmatpush1.msra.mxu0 %v794
    %4601 = vmatprep.subr.mxu0 %v791
    %4602 = vmatpush1.msra.mxu0 %v790
    %4603 = vmatprep.subr.mxu0 %v787
    %4604 = vmatpush1.msra.mxu0 %v786
    %4605 = vmatprep.subr.mxu0 0.0
    %4606 = vmatpush2.msra.mxu0 0.0
    %4607 = vmatprep.subr.mxu0 0.0
    %4608 = vmatpush2.msra.mxu0 0.0
    %4609 = vmatprep.subr.mxu0 0.0
    %4610 = vmatpush2.msra.mxu0 0.0
    %4611 = vmatprep.subr.mxu0 0.0
    %4612 = vmatpush2.msra.mxu0 0.0
    %4613 = vmatprep.subr.mxu0 0.0
    %4614 = vmatpush2.msra.mxu0 0.0
    %4615 = vmatprep.subr.mxu0 0.0
    %4616 = vmatpush2.msra.mxu0 0.0
    %4617 = vmatprep.subr.mxu0 0.0
    %4618 = vmatpush2.msra.mxu0 0.0
    %4619 = vmatprep.subr.mxu0 0.0
    %4620 = vmatpush2.msra.mxu0 0.0
    %4621 = vmatprep.subr.mxu0 0.0
    %4622 = vmatpush2.msra.mxu0 0.0
    %4623 = vmatprep.subr.mxu0 0.0
    %4624 = vmatpush2.msra.mxu0 0.0
    %4625 = vmatprep.subr.mxu0 0.0
    %4626 = vmatpush2.msra.mxu0 0.0
    %4627 = vmatprep.subr.mxu0 0.0
    %4628 = vmatpush2.msra.mxu0 0.0
    %4629 = vmatprep.subr.mxu0 0.0
    %4630 = vmatpush2.msra.mxu0 0.0
    %4631 = vmatprep.subr.mxu0 0.0
    %4632 = vmatpush2.msra.mxu0 0.0
    %4633 = vmatprep.subr.mxu0 0.0
    %4634 = vmatpush2.msra.mxu0 0.0
    %4635 = vmatprep.subr.mxu0 0.0
    %4636 = vmatpush2.msra.mxu0 0.0
    %4637 = vmatprep.mubr.f32.mxu0 0.0
    %4638 = vmatmul.mubr.f32.gmra.mxu0 %v4497
    %v4639 = vpop.f32.mrf.mxu0
    %v4640 = vadd.f32 0.0, %v4639
    %v4641 = vpop.f32.mrf.mxu0
    %v4642 = vadd.f32 0.0, %v4641
    %4643 = vdwg.mxu0
    %v4644 = vadd.f32 %v4498, %v4569
    %v4645 = vadd.f32 %v4499, %v4571
    %v4646 = vadd.f32 %v4500, %v4640
    %v4647 = vadd.f32 %v4501, %v4642
    %v4648 = vxor.u32 %v4644, 2147483648
    %v4649 = vxor.u32 %v4645, 2147483648
    %v4650 = vxor.u32 %v4646, 2147483648
    %v4651 = vmul.f32 %v4648, 1.442695
    %v4652 = vpow.pop %v4651
    %v4653 = vmul.f32 %v4649, 1.442695
    %v4654 = vpow.pop %v4653
    %v4655 = vmul.f32 %v4650, 1.442695
    %v4656 = vpow.pop %v4655
    %v4657 = vadd.f32 %v4652, 1.0
    %v4658 = vadd.f32 %v4654, 1.0
    %v4659 = vadd.f32 %v4656, 1.0
    %v4660 = vrcp.pop %v4657
    %v4661 = vmul.f32 1.0, %v4660
    %v4662 = vrcp.pop %v4658
    %v4663 = vmul.f32 1.0, %v4662
    %v4664 = vrcp.pop %v4659
    %v4665 = vmul.f32 1.0, %v4664
    %v4666 = vtanh.pop %v4647
    %v4667 = vmul.f32 %v4663, %v4495
    %v4668 = vmul.f32 %v4661, %v4666
    %v4669 = vadd.f32 %v4667, %v4668
    %v4670 = vtanh.pop %v4669
    %v4671 = vmul.f32 %v4665, %v4670
    %v4672 = vld [vmem:[#allocation2 + $0x2c0] sm:$0xff]
    %v4673 = vld [vmem:[#allocation2 + $0x2c8] sm:$0xff]
    %v4674 = vld [vmem:[#allocation2 + $0x2d0] sm:$0xff]
    %v4675 = vld [vmem:[#allocation2 + $0x2d8] sm:$0xff]
    %4676 = vmatprep.subr.mxu0 %v845
    %4677 = vmatpush1.msra.mxu0 %v844
    %4678 = vmatprep.subr.mxu0 %v841
    %4679 = vmatpush1.msra.mxu0 %v840
    %4680 = vmatprep.subr.mxu0 %v837
    %4681 = vmatpush1.msra.mxu0 %v836
    %4682 = vmatprep.subr.mxu0 %v833
    %4683 = vmatpush1.msra.mxu0 %v832
    %4684 = vmatprep.subr.mxu0 %v829
    %4685 = vmatpush1.msra.mxu0 %v828
    %4686 = vmatprep.subr.mxu0 %v825
    %4687 = vmatpush1.msra.mxu0 %v824
    %4688 = vmatprep.subr.mxu0 %v821
    %4689 = vmatpush1.msra.mxu0 %v820
    %4690 = vmatprep.subr.mxu0 %v817
    %4691 = vmatpush1.msra.mxu0 %v816
    %4692 = vmatprep.subr.mxu0 %v813
    %4693 = vmatpush1.msra.mxu0 %v812
    %4694 = vmatprep.subr.mxu0 %v809
    %4695 = vmatpush1.msra.mxu0 %v808
    %4696 = vmatprep.subr.mxu0 %v805
    %4697 = vmatpush1.msra.mxu0 %v804
    %4698 = vmatprep.subr.mxu0 %v801
    %4699 = vmatpush1.msra.mxu0 %v800
    %4700 = vmatprep.subr.mxu0 %v797
    %4701 = vmatpush1.msra.mxu0 %v796
    %4702 = vmatprep.subr.mxu0 %v793
    %4703 = vmatpush1.msra.mxu0 %v792
    %4704 = vmatprep.subr.mxu0 %v789
    %4705 = vmatpush1.msra.mxu0 %v788
    %4706 = vmatprep.subr.mxu0 %v785
    %4707 = vmatpush1.msra.mxu0 %v784
    %4708 = vmatprep.subr.mxu0 0.0
    %4709 = vmatpush2.msra.mxu0 0.0
    %4710 = vmatprep.subr.mxu0 0.0
    %4711 = vmatpush2.msra.mxu0 0.0
    %4712 = vmatprep.subr.mxu0 0.0
    %4713 = vmatpush2.msra.mxu0 0.0
    %4714 = vmatprep.subr.mxu0 0.0
    %4715 = vmatpush2.msra.mxu0 0.0
    %4716 = vmatprep.subr.mxu0 0.0
    %4717 = vmatpush2.msra.mxu0 0.0
    %4718 = vmatprep.subr.mxu0 0.0
    %4719 = vmatpush2.msra.mxu0 0.0
    %4720 = vmatprep.subr.mxu0 0.0
    %4721 = vmatpush2.msra.mxu0 0.0
    %4722 = vmatprep.subr.mxu0 0.0
    %4723 = vmatpush2.msra.mxu0 0.0
    %4724 = vmatprep.subr.mxu0 0.0
    %4725 = vmatpush2.msra.mxu0 0.0
    %4726 = vmatprep.subr.mxu0 0.0
    %4727 = vmatpush2.msra.mxu0 0.0
    %4728 = vmatprep.subr.mxu0 0.0
    %4729 = vmatpush2.msra.mxu0 0.0
    %4730 = vmatprep.subr.mxu0 0.0
    %4731 = vmatpush2.msra.mxu0 0.0
    %4732 = vmatprep.subr.mxu0 0.0
    %4733 = vmatpush2.msra.mxu0 0.0
    %4734 = vmatprep.subr.mxu0 0.0
    %4735 = vmatpush2.msra.mxu0 0.0
    %4736 = vmatprep.subr.mxu0 0.0
    %4737 = vmatpush2.msra.mxu0 0.0
    %4738 = vmatprep.subr.mxu0 0.0
    %4739 = vmatpush2.msra.mxu0 0.0
    %4740 = vmatprep.mubr.f32.mxu0 0.0
    %4741 = vmatmul.mubr.f32.gmra.mxu0 %v4671
    %v4742 = vpop.f32.mrf.mxu0
    %v4743 = vadd.f32 0.0, %v4742
    %v4744 = vpop.f32.mrf.mxu0
    %v4745 = vadd.f32 0.0, %v4744
    %4746 = vdwg.mxu0
    %4747 = vmatprep.subr.mxu0 %v847
    %4748 = vmatpush1.msra.mxu0 %v846
    %4749 = vmatprep.subr.mxu0 %v843
    %4750 = vmatpush1.msra.mxu0 %v842
    %4751 = vmatprep.subr.mxu0 %v839
    %4752 = vmatpush1.msra.mxu0 %v838
    %4753 = vmatprep.subr.mxu0 %v835
    %4754 = vmatpush1.msra.mxu0 %v834
    %4755 = vmatprep.subr.mxu0 %v831
    %4756 = vmatpush1.msra.mxu0 %v830
    %4757 = vmatprep.subr.mxu0 %v827
    %4758 = vmatpush1.msra.mxu0 %v826
    %4759 = vmatprep.subr.mxu0 %v823
    %4760 = vmatpush1.msra.mxu0 %v822
    %4761 = vmatprep.subr.mxu0 %v819
    %4762 = vmatpush1.msra.mxu0 %v818
    %4763 = vmatprep.subr.mxu0 %v815
    %4764 = vmatpush1.msra.mxu0 %v814
    %4765 = vmatprep.subr.mxu0 %v811
    %4766 = vmatpush1.msra.mxu0 %v810
    %4767 = vmatprep.subr.mxu0 %v807
    %4768 = vmatpush1.msra.mxu0 %v806
    %4769 = vmatprep.subr.mxu0 %v803
    %4770 = vmatpush1.msra.mxu0 %v802
    %4771 = vmatprep.subr.mxu0 %v799
    %4772 = vmatpush1.msra.mxu0 %v798
    %4773 = vmatprep.subr.mxu0 %v795
    %4774 = vmatpush1.msra.mxu0 %v794
    %4775 = vmatprep.subr.mxu0 %v791
    %4776 = vmatpush1.msra.mxu0 %v790
    %4777 = vmatprep.subr.mxu0 %v787
    %4778 = vmatpush1.msra.mxu0 %v786
    %4779 = vmatprep.subr.mxu0 0.0
    %4780 = vmatpush2.msra.mxu0 0.0
    %4781 = vmatprep.subr.mxu0 0.0
    %4782 = vmatpush2.msra.mxu0 0.0
    %4783 = vmatprep.subr.mxu0 0.0
    %4784 = vmatpush2.msra.mxu0 0.0
    %4785 = vmatprep.subr.mxu0 0.0
    %4786 = vmatpush2.msra.mxu0 0.0
    %4787 = vmatprep.subr.mxu0 0.0
    %4788 = vmatpush2.msra.mxu0 0.0
    %4789 = vmatprep.subr.mxu0 0.0
    %4790 = vmatpush2.msra.mxu0 0.0
    %4791 = vmatprep.subr.mxu0 0.0
    %4792 = vmatpush2.msra.mxu0 0.0
    %4793 = vmatprep.subr.mxu0 0.0
    %4794 = vmatpush2.msra.mxu0 0.0
    %4795 = vmatprep.subr.mxu0 0.0
    %4796 = vmatpush2.msra.mxu0 0.0
    %4797 = vmatprep.subr.mxu0 0.0
    %4798 = vmatpush2.msra.mxu0 0.0
    %4799 = vmatprep.subr.mxu0 0.0
    %4800 = vmatpush2.msra.mxu0 0.0
    %4801 = vmatprep.subr.mxu0 0.0
    %4802 = vmatpush2.msra.mxu0 0.0
    %4803 = vmatprep.subr.mxu0 0.0
    %4804 = vmatpush2.msra.mxu0 0.0
    %4805 = vmatprep.subr.mxu0 0.0
    %4806 = vmatpush2.msra.mxu0 0.0
    %4807 = vmatprep.subr.mxu0 0.0
    %4808 = vmatpush2.msra.mxu0 0.0
    %4809 = vmatprep.subr.mxu0 0.0
    %4810 = vmatpush2.msra.mxu0 0.0
    %4811 = vmatprep.mubr.f32.mxu0 0.0
    %4812 = vmatmul.mubr.f32.gmra.mxu0 %v4671
    %v4813 = vpop.f32.mrf.mxu0
    %v4814 = vadd.f32 0.0, %v4813
    %v4815 = vpop.f32.mrf.mxu0
    %v4816 = vadd.f32 0.0, %v4815
    %4817 = vdwg.mxu0
    %v4818 = vadd.f32 %v4672, %v4743
    %v4819 = vadd.f32 %v4673, %v4745
    %v4820 = vadd.f32 %v4674, %v4814
    %v4821 = vadd.f32 %v4675, %v4816
    %v4822 = vxor.u32 %v4818, 2147483648
    %v4823 = vxor.u32 %v4819, 2147483648
    %v4824 = vxor.u32 %v4820, 2147483648
    %v4825 = vmul.f32 %v4822, 1.442695
    %v4826 = vpow.pop %v4825
    %v4827 = vmul.f32 %v4823, 1.442695
    %v4828 = vpow.pop %v4827
    %v4829 = vmul.f32 %v4824, 1.442695
    %v4830 = vpow.pop %v4829
    %v4831 = vadd.f32 %v4826, 1.0
    %v4832 = vadd.f32 %v4828, 1.0
    %v4833 = vadd.f32 %v4830, 1.0
    %v4834 = vrcp.pop %v4831
    %v4835 = vmul.f32 1.0, %v4834
    %v4836 = vrcp.pop %v4832
    %v4837 = vmul.f32 1.0, %v4836
    %v4838 = vrcp.pop %v4833
    %v4839 = vmul.f32 1.0, %v4838
    %v4840 = vtanh.pop %v4821
    %v4841 = vmul.f32 %v4837, %v4669
    %v4842 = vmul.f32 %v4835, %v4840
    %v4843 = vadd.f32 %v4841, %v4842
    %v4844 = vtanh.pop %v4843
    %v4845 = vmul.f32 %v4839, %v4844
    %v4846 = vld [vmem:[#allocation2 + $0x2e0] sm:$0xff]
    %v4847 = vld [vmem:[#allocation2 + $0x2e8] sm:$0xff]
    %v4848 = vld [vmem:[#allocation2 + $0x2f0] sm:$0xff]
    %v4849 = vld [vmem:[#allocation2 + $0x2f8] sm:$0xff]
    %4850 = vmatprep.subr.mxu0 %v845
    %4851 = vmatpush1.msra.mxu0 %v844
    %4852 = vmatprep.subr.mxu0 %v841
    %4853 = vmatpush1.msra.mxu0 %v840
    %4854 = vmatprep.subr.mxu0 %v837
    %4855 = vmatpush1.msra.mxu0 %v836
    %4856 = vmatprep.subr.mxu0 %v833
    %4857 = vmatpush1.msra.mxu0 %v832
    %4858 = vmatprep.subr.mxu0 %v829
    %4859 = vmatpush1.msra.mxu0 %v828
    %4860 = vmatprep.subr.mxu0 %v825
    %4861 = vmatpush1.msra.mxu0 %v824
    %4862 = vmatprep.subr.mxu0 %v821
    %4863 = vmatpush1.msra.mxu0 %v820
    %4864 = vmatprep.subr.mxu0 %v817
    %4865 = vmatpush1.msra.mxu0 %v816
    %4866 = vmatprep.subr.mxu0 %v813
    %4867 = vmatpush1.msra.mxu0 %v812
    %4868 = vmatprep.subr.mxu0 %v809
    %4869 = vmatpush1.msra.mxu0 %v808
    %4870 = vmatprep.subr.mxu0 %v805
    %4871 = vmatpush1.msra.mxu0 %v804
    %4872 = vmatprep.subr.mxu0 %v801
    %4873 = vmatpush1.msra.mxu0 %v800
    %4874 = vmatprep.subr.mxu0 %v797
    %4875 = vmatpush1.msra.mxu0 %v796
    %4876 = vmatprep.subr.mxu0 %v793
    %4877 = vmatpush1.msra.mxu0 %v792
    %4878 = vmatprep.subr.mxu0 %v789
    %4879 = vmatpush1.msra.mxu0 %v788
    %4880 = vmatprep.subr.mxu0 %v785
    %4881 = vmatpush1.msra.mxu0 %v784
    %4882 = vmatprep.subr.mxu0 0.0
    %4883 = vmatpush2.msra.mxu0 0.0
    %4884 = vmatprep.subr.mxu0 0.0
    %4885 = vmatpush2.msra.mxu0 0.0
    %4886 = vmatprep.subr.mxu0 0.0
    %4887 = vmatpush2.msra.mxu0 0.0
    %4888 = vmatprep.subr.mxu0 0.0
    %4889 = vmatpush2.msra.mxu0 0.0
    %4890 = vmatprep.subr.mxu0 0.0
    %4891 = vmatpush2.msra.mxu0 0.0
    %4892 = vmatprep.subr.mxu0 0.0
    %4893 = vmatpush2.msra.mxu0 0.0
    %4894 = vmatprep.subr.mxu0 0.0
    %4895 = vmatpush2.msra.mxu0 0.0
    %4896 = vmatprep.subr.mxu0 0.0
    %4897 = vmatpush2.msra.mxu0 0.0
    %4898 = vmatprep.subr.mxu0 0.0
    %4899 = vmatpush2.msra.mxu0 0.0
    %4900 = vmatprep.subr.mxu0 0.0
    %4901 = vmatpush2.msra.mxu0 0.0
    %4902 = vmatprep.subr.mxu0 0.0
    %4903 = vmatpush2.msra.mxu0 0.0
    %4904 = vmatprep.subr.mxu0 0.0
    %4905 = vmatpush2.msra.mxu0 0.0
    %4906 = vmatprep.subr.mxu0 0.0
    %4907 = vmatpush2.msra.mxu0 0.0
    %4908 = vmatprep.subr.mxu0 0.0
    %4909 = vmatpush2.msra.mxu0 0.0
    %4910 = vmatprep.subr.mxu0 0.0
    %4911 = vmatpush2.msra.mxu0 0.0
    %4912 = vmatprep.subr.mxu0 0.0
    %4913 = vmatpush2.msra.mxu0 0.0
    %4914 = vmatprep.mubr.f32.mxu0 0.0
    %4915 = vmatmul.mubr.f32.gmra.mxu0 %v4845
    %v4916 = vpop.f32.mrf.mxu0
    %v4917 = vadd.f32 0.0, %v4916
    %v4918 = vpop.f32.mrf.mxu0
    %v4919 = vadd.f32 0.0, %v4918
    %4920 = vdwg.mxu0
    %4921 = vmatprep.subr.mxu0 %v847
    %4922 = vmatpush1.msra.mxu0 %v846
    %4923 = vmatprep.subr.mxu0 %v843
    %4924 = vmatpush1.msra.mxu0 %v842
    %4925 = vmatprep.subr.mxu0 %v839
    %4926 = vmatpush1.msra.mxu0 %v838
    %4927 = vmatprep.subr.mxu0 %v835
    %4928 = vmatpush1.msra.mxu0 %v834
    %4929 = vmatprep.subr.mxu0 %v831
    %4930 = vmatpush1.msra.mxu0 %v830
    %4931 = vmatprep.subr.mxu0 %v827
    %4932 = vmatpush1.msra.mxu0 %v826
    %4933 = vmatprep.subr.mxu0 %v823
    %4934 = vmatpush1.msra.mxu0 %v822
    %4935 = vmatprep.subr.mxu0 %v819
    %4936 = vmatpush1.msra.mxu0 %v818
    %4937 = vmatprep.subr.mxu0 %v815
    %4938 = vmatpush1.msra.mxu0 %v814
    %4939 = vmatprep.subr.mxu0 %v811
    %4940 = vmatpush1.msra.mxu0 %v810
    %4941 = vmatprep.subr.mxu0 %v807
    %4942 = vmatpush1.msra.mxu0 %v806
    %4943 = vmatprep.subr.mxu0 %v803
    %4944 = vmatpush1.msra.mxu0 %v802
    %4945 = vmatprep.subr.mxu0 %v799
    %4946 = vmatpush1.msra.mxu0 %v798
    %4947 = vmatprep.subr.mxu0 %v795
    %4948 = vmatpush1.msra.mxu0 %v794
    %4949 = vmatprep.subr.mxu0 %v791
    %4950 = vmatpush1.msra.mxu0 %v790
    %4951 = vmatprep.subr.mxu0 %v787
    %4952 = vmatpush1.msra.mxu0 %v786
    %4953 = vmatprep.subr.mxu0 0.0
    %4954 = vmatpush2.msra.mxu0 0.0
    %4955 = vmatprep.subr.mxu0 0.0
    %4956 = vmatpush2.msra.mxu0 0.0
    %4957 = vmatprep.subr.mxu0 0.0
    %4958 = vmatpush2.msra.mxu0 0.0
    %4959 = vmatprep.subr.mxu0 0.0
    %4960 = vmatpush2.msra.mxu0 0.0
    %4961 = vmatprep.subr.mxu0 0.0
    %4962 = vmatpush2.msra.mxu0 0.0
    %4963 = vmatprep.subr.mxu0 0.0
    %4964 = vmatpush2.msra.mxu0 0.0
    %4965 = vmatprep.subr.mxu0 0.0
    %4966 = vmatpush2.msra.mxu0 0.0
    %4967 = vmatprep.subr.mxu0 0.0
    %4968 = vmatpush2.msra.mxu0 0.0
    %4969 = vmatprep.subr.mxu0 0.0
    %4970 = vmatpush2.msra.mxu0 0.0
    %4971 = vmatprep.subr.mxu0 0.0
    %4972 = vmatpush2.msra.mxu0 0.0
    %4973 = vmatprep.subr.mxu0 0.0
    %4974 = vmatpush2.msra.mxu0 0.0
    %4975 = vmatprep.subr.mxu0 0.0
    %4976 = vmatpush2.msra.mxu0 0.0
    %4977 = vmatprep.subr.mxu0 0.0
    %4978 = vmatpush2.msra.mxu0 0.0
    %4979 = vmatprep.subr.mxu0 0.0
    %4980 = vmatpush2.msra.mxu0 0.0
    %4981 = vmatprep.subr.mxu0 0.0
    %4982 = vmatpush2.msra.mxu0 0.0
    %4983 = vmatprep.subr.mxu0 0.0
    %4984 = vmatpush2.msra.mxu0 0.0
    %4985 = vmatprep.mubr.f32.mxu0 0.0
    %4986 = vmatmul.mubr.f32.gmra.mxu0 %v4845
    %v4987 = vpop.f32.mrf.mxu0
    %v4988 = vadd.f32 0.0, %v4987
    %v4989 = vpop.f32.mrf.mxu0
    %v4990 = vadd.f32 0.0, %v4989
    %4991 = vdwg.mxu0
    %v4992 = vadd.f32 %v4846, %v4917
    %v4993 = vadd.f32 %v4847, %v4919
    %v4994 = vadd.f32 %v4848, %v4988
    %v4995 = vadd.f32 %v4849, %v4990
    %v4996 = vxor.u32 %v4992, 2147483648
    %v4997 = vxor.u32 %v4993, 2147483648
    %v4998 = vxor.u32 %v4994, 2147483648
    %v4999 = vmul.f32 %v4996, 1.442695
    %v5000 = vpow.pop %v4999
    %v5001 = vmul.f32 %v4997, 1.442695
    %v5002 = vpow.pop %v5001
    %v5003 = vmul.f32 %v4998, 1.442695
    %v5004 = vpow.pop %v5003
    %v5005 = vadd.f32 %v5000, 1.0
    %v5006 = vadd.f32 %v5002, 1.0
    %v5007 = vadd.f32 %v5004, 1.0
    %v5008 = vrcp.pop %v5005
    %v5009 = vmul.f32 1.0, %v5008
    %v5010 = vrcp.pop %v5006
    %v5011 = vmul.f32 1.0, %v5010
    %v5012 = vrcp.pop %v5007
    %v5013 = vmul.f32 1.0, %v5012
    %v5014 = vtanh.pop %v4995
    %v5015 = vmul.f32 %v5011, %v4843
    %v5016 = vmul.f32 %v5009, %v5014
    %v5017 = vadd.f32 %v5015, %v5016
    %v5018 = vtanh.pop %v5017
    %v5019 = vmul.f32 %v5013, %v5018
    %v5020 = vld [vmem:[#allocation2 + $0x300] sm:$0xff]
    %v5021 = vld [vmem:[#allocation2 + $0x308] sm:$0xff]
    %v5022 = vld [vmem:[#allocation2 + $0x310] sm:$0xff]
    %v5023 = vld [vmem:[#allocation2 + $0x318] sm:$0xff]
    %5024 = vmatprep.subr.mxu0 %v845
    %5025 = vmatpush1.msra.mxu0 %v844
    %5026 = vmatprep.subr.mxu0 %v841
    %5027 = vmatpush1.msra.mxu0 %v840
    %5028 = vmatprep.subr.mxu0 %v837
    %5029 = vmatpush1.msra.mxu0 %v836
    %5030 = vmatprep.subr.mxu0 %v833
    %5031 = vmatpush1.msra.mxu0 %v832
    %5032 = vmatprep.subr.mxu0 %v829
    %5033 = vmatpush1.msra.mxu0 %v828
    %5034 = vmatprep.subr.mxu0 %v825
    %5035 = vmatpush1.msra.mxu0 %v824
    %5036 = vmatprep.subr.mxu0 %v821
    %5037 = vmatpush1.msra.mxu0 %v820
    %5038 = vmatprep.subr.mxu0 %v817
    %5039 = vmatpush1.msra.mxu0 %v816
    %5040 = vmatprep.subr.mxu0 %v813
    %5041 = vmatpush1.msra.mxu0 %v812
    %5042 = vmatprep.subr.mxu0 %v809
    %5043 = vmatpush1.msra.mxu0 %v808
    %5044 = vmatprep.subr.mxu0 %v805
    %5045 = vmatpush1.msra.mxu0 %v804
    %5046 = vmatprep.subr.mxu0 %v801
    %5047 = vmatpush1.msra.mxu0 %v800
    %5048 = vmatprep.subr.mxu0 %v797
    %5049 = vmatpush1.msra.mxu0 %v796
    %5050 = vmatprep.subr.mxu0 %v793
    %5051 = vmatpush1.msra.mxu0 %v792
    %5052 = vmatprep.subr.mxu0 %v789
    %5053 = vmatpush1.msra.mxu0 %v788
    %5054 = vmatprep.subr.mxu0 %v785
    %5055 = vmatpush1.msra.mxu0 %v784
    %5056 = vmatprep.subr.mxu0 0.0
    %5057 = vmatpush2.msra.mxu0 0.0
    %5058 = vmatprep.subr.mxu0 0.0
    %5059 = vmatpush2.msra.mxu0 0.0
    %5060 = vmatprep.subr.mxu0 0.0
    %5061 = vmatpush2.msra.mxu0 0.0
    %5062 = vmatprep.subr.mxu0 0.0
    %5063 = vmatpush2.msra.mxu0 0.0
    %5064 = vmatprep.subr.mxu0 0.0
    %5065 = vmatpush2.msra.mxu0 0.0
    %5066 = vmatprep.subr.mxu0 0.0
    %5067 = vmatpush2.msra.mxu0 0.0
    %5068 = vmatprep.subr.mxu0 0.0
    %5069 = vmatpush2.msra.mxu0 0.0
    %5070 = vmatprep.subr.mxu0 0.0
    %5071 = vmatpush2.msra.mxu0 0.0
    %5072 = vmatprep.subr.mxu0 0.0
    %5073 = vmatpush2.msra.mxu0 0.0
    %5074 = vmatprep.subr.mxu0 0.0
    %5075 = vmatpush2.msra.mxu0 0.0
    %5076 = vmatprep.subr.mxu0 0.0
    %5077 = vmatpush2.msra.mxu0 0.0
    %5078 = vmatprep.subr.mxu0 0.0
    %5079 = vmatpush2.msra.mxu0 0.0
    %5080 = vmatprep.subr.mxu0 0.0
    %5081 = vmatpush2.msra.mxu0 0.0
    %5082 = vmatprep.subr.mxu0 0.0
    %5083 = vmatpush2.msra.mxu0 0.0
    %5084 = vmatprep.subr.mxu0 0.0
    %5085 = vmatpush2.msra.mxu0 0.0
    %5086 = vmatprep.subr.mxu0 0.0
    %5087 = vmatpush2.msra.mxu0 0.0
    %5088 = vmatprep.mubr.f32.mxu0 0.0
    %5089 = vmatmul.mubr.f32.gmra.mxu0 %v5019
    %v5090 = vpop.f32.mrf.mxu0
    %v5091 = vadd.f32 0.0, %v5090
    %v5092 = vpop.f32.mrf.mxu0
    %v5093 = vadd.f32 0.0, %v5092
    %5094 = vdwg.mxu0
    %5095 = vmatprep.subr.mxu0 %v847
    %5096 = vmatpush1.msra.mxu0 %v846
    %5097 = vmatprep.subr.mxu0 %v843
    %5098 = vmatpush1.msra.mxu0 %v842
    %5099 = vmatprep.subr.mxu0 %v839
    %5100 = vmatpush1.msra.mxu0 %v838
    %5101 = vmatprep.subr.mxu0 %v835
    %5102 = vmatpush1.msra.mxu0 %v834
    %5103 = vmatprep.subr.mxu0 %v831
    %5104 = vmatpush1.msra.mxu0 %v830
    %5105 = vmatprep.subr.mxu0 %v827
    %5106 = vmatpush1.msra.mxu0 %v826
    %5107 = vmatprep.subr.mxu0 %v823
    %5108 = vmatpush1.msra.mxu0 %v822
    %5109 = vmatprep.subr.mxu0 %v819
    %5110 = vmatpush1.msra.mxu0 %v818
    %5111 = vmatprep.subr.mxu0 %v815
    %5112 = vmatpush1.msra.mxu0 %v814
    %5113 = vmatprep.subr.mxu0 %v811
    %5114 = vmatpush1.msra.mxu0 %v810
    %5115 = vmatprep.subr.mxu0 %v807
    %5116 = vmatpush1.msra.mxu0 %v806
    %5117 = vmatprep.subr.mxu0 %v803
    %5118 = vmatpush1.msra.mxu0 %v802
    %5119 = vmatprep.subr.mxu0 %v799
    %5120 = vmatpush1.msra.mxu0 %v798
    %5121 = vmatprep.subr.mxu0 %v795
    %5122 = vmatpush1.msra.mxu0 %v794
    %5123 = vmatprep.subr.mxu0 %v791
    %5124 = vmatpush1.msra.mxu0 %v790
    %5125 = vmatprep.subr.mxu0 %v787
    %5126 = vmatpush1.msra.mxu0 %v786
    %5127 = vmatprep.subr.mxu0 0.0
    %5128 = vmatpush2.msra.mxu0 0.0
    %5129 = vmatprep.subr.mxu0 0.0
    %5130 = vmatpush2.msra.mxu0 0.0
    %5131 = vmatprep.subr.mxu0 0.0
    %5132 = vmatpush2.msra.mxu0 0.0
    %5133 = vmatprep.subr.mxu0 0.0
    %5134 = vmatpush2.msra.mxu0 0.0
    %5135 = vmatprep.subr.mxu0 0.0
    %5136 = vmatpush2.msra.mxu0 0.0
    %5137 = vmatprep.subr.mxu0 0.0
    %5138 = vmatpush2.msra.mxu0 0.0
    %5139 = vmatprep.subr.mxu0 0.0
    %5140 = vmatpush2.msra.mxu0 0.0
    %5141 = vmatprep.subr.mxu0 0.0
    %5142 = vmatpush2.msra.mxu0 0.0
    %5143 = vmatprep.subr.mxu0 0.0
    %5144 = vmatpush2.msra.mxu0 0.0
    %5145 = vmatprep.subr.mxu0 0.0
    %5146 = vmatpush2.msra.mxu0 0.0
    %5147 = vmatprep.subr.mxu0 0.0
    %5148 = vmatpush2.msra.mxu0 0.0
    %5149 = vmatprep.subr.mxu0 0.0
    %5150 = vmatpush2.msra.mxu0 0.0
    %5151 = vmatprep.subr.mxu0 0.0
    %5152 = vmatpush2.msra.mxu0 0.0
    %5153 = vmatprep.subr.mxu0 0.0
    %5154 = vmatpush2.msra.mxu0 0.0
    %5155 = vmatprep.subr.mxu0 0.0
    %5156 = vmatpush2.msra.mxu0 0.0
    %5157 = vmatprep.subr.mxu0 0.0
    %5158 = vmatpush2.msra.mxu0 0.0
    %5159 = vmatprep.mubr.f32.mxu0 0.0
    %5160 = vmatmul.mubr.f32.gmra.mxu0 %v5019
    %v5161 = vpop.f32.mrf.mxu0
    %v5162 = vadd.f32 0.0, %v5161
    %v5163 = vpop.f32.mrf.mxu0
    %v5164 = vadd.f32 0.0, %v5163
    %5165 = vdwg.mxu0
    %v5166 = vadd.f32 %v5020, %v5091
    %v5167 = vadd.f32 %v5021, %v5093
    %v5168 = vadd.f32 %v5022, %v5162
    %v5169 = vadd.f32 %v5023, %v5164
    %v5170 = vxor.u32 %v5166, 2147483648
    %v5171 = vxor.u32 %v5167, 2147483648
    %v5172 = vxor.u32 %v5168, 2147483648
    %v5173 = vmul.f32 %v5170, 1.442695
    %v5174 = vpow.pop %v5173
    %v5175 = vmul.f32 %v5171, 1.442695
    %v5176 = vpow.pop %v5175
    %v5177 = vmul.f32 %v5172, 1.442695
    %v5178 = vpow.pop %v5177
    %v5179 = vadd.f32 %v5174, 1.0
    %v5180 = vadd.f32 %v5176, 1.0
    %v5181 = vadd.f32 %v5178, 1.0
    %v5182 = vrcp.pop %v5179
    %v5183 = vmul.f32 1.0, %v5182
    %v5184 = vrcp.pop %v5180
    %v5185 = vmul.f32 1.0, %v5184
    %v5186 = vrcp.pop %v5181
    %v5187 = vmul.f32 1.0, %v5186
    %v5188 = vtanh.pop %v5169
    %v5189 = vmul.f32 %v5185, %v5017
    %v5190 = vmul.f32 %v5183, %v5188
    %v5191 = vadd.f32 %v5189, %v5190
    %v5192 = vtanh.pop %v5191
    %v5193 = vmul.f32 %v5187, %v5192
    %v5194 = vld [vmem:[#allocation2 + $0x320] sm:$0xff]
    %v5195 = vld [vmem:[#allocation2 + $0x328] sm:$0xff]
    %v5196 = vld [vmem:[#allocation2 + $0x330] sm:$0xff]
    %v5197 = vld [vmem:[#allocation2 + $0x338] sm:$0xff]
    %5198 = vmatprep.subr.mxu0 %v845
    %5199 = vmatpush1.msra.mxu0 %v844
    %5200 = vmatprep.subr.mxu0 %v841
    %5201 = vmatpush1.msra.mxu0 %v840
    %5202 = vmatprep.subr.mxu0 %v837
    %5203 = vmatpush1.msra.mxu0 %v836
    %5204 = vmatprep.subr.mxu0 %v833
    %5205 = vmatpush1.msra.mxu0 %v832
    %5206 = vmatprep.subr.mxu0 %v829
    %5207 = vmatpush1.msra.mxu0 %v828
    %5208 = vmatprep.subr.mxu0 %v825
    %5209 = vmatpush1.msra.mxu0 %v824
    %5210 = vmatprep.subr.mxu0 %v821
    %5211 = vmatpush1.msra.mxu0 %v820
    %5212 = vmatprep.subr.mxu0 %v817
    %5213 = vmatpush1.msra.mxu0 %v816
    %5214 = vmatprep.subr.mxu0 %v813
    %5215 = vmatpush1.msra.mxu0 %v812
    %5216 = vmatprep.subr.mxu0 %v809
    %5217 = vmatpush1.msra.mxu0 %v808
    %5218 = vmatprep.subr.mxu0 %v805
    %5219 = vmatpush1.msra.mxu0 %v804
    %5220 = vmatprep.subr.mxu0 %v801
    %5221 = vmatpush1.msra.mxu0 %v800
    %5222 = vmatprep.subr.mxu0 %v797
    %5223 = vmatpush1.msra.mxu0 %v796
    %5224 = vmatprep.subr.mxu0 %v793
    %5225 = vmatpush1.msra.mxu0 %v792
    %5226 = vmatprep.subr.mxu0 %v789
    %5227 = vmatpush1.msra.mxu0 %v788
    %5228 = vmatprep.subr.mxu0 %v785
    %5229 = vmatpush1.msra.mxu0 %v784
    %5230 = vmatprep.subr.mxu0 0.0
    %5231 = vmatpush2.msra.mxu0 0.0
    %5232 = vmatprep.subr.mxu0 0.0
    %5233 = vmatpush2.msra.mxu0 0.0
    %5234 = vmatprep.subr.mxu0 0.0
    %5235 = vmatpush2.msra.mxu0 0.0
    %5236 = vmatprep.subr.mxu0 0.0
    %5237 = vmatpush2.msra.mxu0 0.0
    %5238 = vmatprep.subr.mxu0 0.0
    %5239 = vmatpush2.msra.mxu0 0.0
    %5240 = vmatprep.subr.mxu0 0.0
    %5241 = vmatpush2.msra.mxu0 0.0
    %5242 = vmatprep.subr.mxu0 0.0
    %5243 = vmatpush2.msra.mxu0 0.0
    %5244 = vmatprep.subr.mxu0 0.0
    %5245 = vmatpush2.msra.mxu0 0.0
    %5246 = vmatprep.subr.mxu0 0.0
    %5247 = vmatpush2.msra.mxu0 0.0
    %5248 = vmatprep.subr.mxu0 0.0
    %5249 = vmatpush2.msra.mxu0 0.0
    %5250 = vmatprep.subr.mxu0 0.0
    %5251 = vmatpush2.msra.mxu0 0.0
    %5252 = vmatprep.subr.mxu0 0.0
    %5253 = vmatpush2.msra.mxu0 0.0
    %5254 = vmatprep.subr.mxu0 0.0
    %5255 = vmatpush2.msra.mxu0 0.0
    %5256 = vmatprep.subr.mxu0 0.0
    %5257 = vmatpush2.msra.mxu0 0.0
    %5258 = vmatprep.subr.mxu0 0.0
    %5259 = vmatpush2.msra.mxu0 0.0
    %5260 = vmatprep.subr.mxu0 0.0
    %5261 = vmatpush2.msra.mxu0 0.0
    %5262 = vmatprep.mubr.f32.mxu0 0.0
    %5263 = vmatmul.mubr.f32.gmra.mxu0 %v5193
    %v5264 = vpop.f32.mrf.mxu0
    %v5265 = vadd.f32 0.0, %v5264
    %v5266 = vpop.f32.mrf.mxu0
    %v5267 = vadd.f32 0.0, %v5266
    %5268 = vdwg.mxu0
    %5269 = vmatprep.subr.mxu0 %v847
    %5270 = vmatpush1.msra.mxu0 %v846
    %5271 = vmatprep.subr.mxu0 %v843
    %5272 = vmatpush1.msra.mxu0 %v842
    %5273 = vmatprep.subr.mxu0 %v839
    %5274 = vmatpush1.msra.mxu0 %v838
    %5275 = vmatprep.subr.mxu0 %v835
    %5276 = vmatpush1.msra.mxu0 %v834
    %5277 = vmatprep.subr.mxu0 %v831
    %5278 = vmatpush1.msra.mxu0 %v830
    %5279 = vmatprep.subr.mxu0 %v827
    %5280 = vmatpush1.msra.mxu0 %v826
    %5281 = vmatprep.subr.mxu0 %v823
    %5282 = vmatpush1.msra.mxu0 %v822
    %5283 = vmatprep.subr.mxu0 %v819
    %5284 = vmatpush1.msra.mxu0 %v818
    %5285 = vmatprep.subr.mxu0 %v815
    %5286 = vmatpush1.msra.mxu0 %v814
    %5287 = vmatprep.subr.mxu0 %v811
    %5288 = vmatpush1.msra.mxu0 %v810
    %5289 = vmatprep.subr.mxu0 %v807
    %5290 = vmatpush1.msra.mxu0 %v806
    %5291 = vmatprep.subr.mxu0 %v803
    %5292 = vmatpush1.msra.mxu0 %v802
    %5293 = vmatprep.subr.mxu0 %v799
    %5294 = vmatpush1.msra.mxu0 %v798
    %5295 = vmatprep.subr.mxu0 %v795
    %5296 = vmatpush1.msra.mxu0 %v794
    %5297 = vmatprep.subr.mxu0 %v791
    %5298 = vmatpush1.msra.mxu0 %v790
    %5299 = vmatprep.subr.mxu0 %v787
    %5300 = vmatpush1.msra.mxu0 %v786
    %5301 = vmatprep.subr.mxu0 0.0
    %5302 = vmatpush2.msra.mxu0 0.0
    %5303 = vmatprep.subr.mxu0 0.0
    %5304 = vmatpush2.msra.mxu0 0.0
    %5305 = vmatprep.subr.mxu0 0.0
    %5306 = vmatpush2.msra.mxu0 0.0
    %5307 = vmatprep.subr.mxu0 0.0
    %5308 = vmatpush2.msra.mxu0 0.0
    %5309 = vmatprep.subr.mxu0 0.0
    %5310 = vmatpush2.msra.mxu0 0.0
    %5311 = vmatprep.subr.mxu0 0.0
    %5312 = vmatpush2.msra.mxu0 0.0
    %5313 = vmatprep.subr.mxu0 0.0
    %5314 = vmatpush2.msra.mxu0 0.0
    %5315 = vmatprep.subr.mxu0 0.0
    %5316 = vmatpush2.msra.mxu0 0.0
    %5317 = vmatprep.subr.mxu0 0.0
    %5318 = vmatpush2.msra.mxu0 0.0
    %5319 = vmatprep.subr.mxu0 0.0
    %5320 = vmatpush2.msra.mxu0 0.0
    %5321 = vmatprep.subr.mxu0 0.0
    %5322 = vmatpush2.msra.mxu0 0.0
    %5323 = vmatprep.subr.mxu0 0.0
    %5324 = vmatpush2.msra.mxu0 0.0
    %5325 = vmatprep.subr.mxu0 0.0
    %5326 = vmatpush2.msra.mxu0 0.0
    %5327 = vmatprep.subr.mxu0 0.0
    %5328 = vmatpush2.msra.mxu0 0.0
    %5329 = vmatprep.subr.mxu0 0.0
    %5330 = vmatpush2.msra.mxu0 0.0
    %5331 = vmatprep.subr.mxu0 0.0
    %5332 = vmatpush2.msra.mxu0 0.0
    %5333 = vmatprep.mubr.f32.mxu0 0.0
    %5334 = vmatmul.mubr.f32.gmra.mxu0 %v5193
    %v5335 = vpop.f32.mrf.mxu0
    %v5336 = vadd.f32 0.0, %v5335
    %v5337 = vpop.f32.mrf.mxu0
    %v5338 = vadd.f32 0.0, %v5337
    %5339 = vdwg.mxu0
    %v5340 = vadd.f32 %v5194, %v5265
    %v5341 = vadd.f32 %v5195, %v5267
    %v5342 = vadd.f32 %v5196, %v5336
    %v5343 = vadd.f32 %v5197, %v5338
    %v5344 = vxor.u32 %v5340, 2147483648
    %v5345 = vxor.u32 %v5341, 2147483648
    %v5346 = vxor.u32 %v5342, 2147483648
    %v5347 = vmul.f32 %v5344, 1.442695
    %v5348 = vpow.pop %v5347
    %v5349 = vmul.f32 %v5345, 1.442695
    %v5350 = vpow.pop %v5349
    %v5351 = vmul.f32 %v5346, 1.442695
    %v5352 = vpow.pop %v5351
    %v5353 = vadd.f32 %v5348, 1.0
    %v5354 = vadd.f32 %v5350, 1.0
    %v5355 = vadd.f32 %v5352, 1.0
    %v5356 = vrcp.pop %v5353
    %v5357 = vmul.f32 1.0, %v5356
    %v5358 = vrcp.pop %v5354
    %v5359 = vmul.f32 1.0, %v5358
    %v5360 = vrcp.pop %v5355
    %v5361 = vmul.f32 1.0, %v5360
    %v5362 = vtanh.pop %v5343
    %v5363 = vmul.f32 %v5359, %v5191
    %v5364 = vmul.f32 %v5357, %v5362
    %v5365 = vadd.f32 %v5363, %v5364
    %v5366 = vtanh.pop %v5365
    %v5367 = vmul.f32 %v5361, %v5366
    %v5368 = vld [vmem:[#allocation2 + $0x340] sm:$0xff]
    %v5369 = vld [vmem:[#allocation2 + $0x348] sm:$0xff]
    %v5370 = vld [vmem:[#allocation2 + $0x350] sm:$0xff]
    %v5371 = vld [vmem:[#allocation2 + $0x358] sm:$0xff]
    %5372 = vmatprep.subr.mxu0 %v845
    %5373 = vmatpush1.msra.mxu0 %v844
    %5374 = vmatprep.subr.mxu0 %v841
    %5375 = vmatpush1.msra.mxu0 %v840
    %5376 = vmatprep.subr.mxu0 %v837
    %5377 = vmatpush1.msra.mxu0 %v836
    %5378 = vmatprep.subr.mxu0 %v833
    %5379 = vmatpush1.msra.mxu0 %v832
    %5380 = vmatprep.subr.mxu0 %v829
    %5381 = vmatpush1.msra.mxu0 %v828
    %5382 = vmatprep.subr.mxu0 %v825
    %5383 = vmatpush1.msra.mxu0 %v824
    %5384 = vmatprep.subr.mxu0 %v821
    %5385 = vmatpush1.msra.mxu0 %v820
    %5386 = vmatprep.subr.mxu0 %v817
    %5387 = vmatpush1.msra.mxu0 %v816
    %5388 = vmatprep.subr.mxu0 %v813
    %5389 = vmatpush1.msra.mxu0 %v812
    %5390 = vmatprep.subr.mxu0 %v809
    %5391 = vmatpush1.msra.mxu0 %v808
    %5392 = vmatprep.subr.mxu0 %v805
    %5393 = vmatpush1.msra.mxu0 %v804
    %5394 = vmatprep.subr.mxu0 %v801
    %5395 = vmatpush1.msra.mxu0 %v800
    %5396 = vmatprep.subr.mxu0 %v797
    %5397 = vmatpush1.msra.mxu0 %v796
    %5398 = vmatprep.subr.mxu0 %v793
    %5399 = vmatpush1.msra.mxu0 %v792
    %5400 = vmatprep.subr.mxu0 %v789
    %5401 = vmatpush1.msra.mxu0 %v788
    %5402 = vmatprep.subr.mxu0 %v785
    %5403 = vmatpush1.msra.mxu0 %v784
    %5404 = vmatprep.subr.mxu0 0.0
    %5405 = vmatpush2.msra.mxu0 0.0
    %5406 = vmatprep.subr.mxu0 0.0
    %5407 = vmatpush2.msra.mxu0 0.0
    %5408 = vmatprep.subr.mxu0 0.0
    %5409 = vmatpush2.msra.mxu0 0.0
    %5410 = vmatprep.subr.mxu0 0.0
    %5411 = vmatpush2.msra.mxu0 0.0
    %5412 = vmatprep.subr.mxu0 0.0
    %5413 = vmatpush2.msra.mxu0 0.0
    %5414 = vmatprep.subr.mxu0 0.0
    %5415 = vmatpush2.msra.mxu0 0.0
    %5416 = vmatprep.subr.mxu0 0.0
    %5417 = vmatpush2.msra.mxu0 0.0
    %5418 = vmatprep.subr.mxu0 0.0
    %5419 = vmatpush2.msra.mxu0 0.0
    %5420 = vmatprep.subr.mxu0 0.0
    %5421 = vmatpush2.msra.mxu0 0.0
    %5422 = vmatprep.subr.mxu0 0.0
    %5423 = vmatpush2.msra.mxu0 0.0
    %5424 = vmatprep.subr.mxu0 0.0
    %5425 = vmatpush2.msra.mxu0 0.0
    %5426 = vmatprep.subr.mxu0 0.0
    %5427 = vmatpush2.msra.mxu0 0.0
    %5428 = vmatprep.subr.mxu0 0.0
    %5429 = vmatpush2.msra.mxu0 0.0
    %5430 = vmatprep.subr.mxu0 0.0
    %5431 = vmatpush2.msra.mxu0 0.0
    %5432 = vmatprep.subr.mxu0 0.0
    %5433 = vmatpush2.msra.mxu0 0.0
    %5434 = vmatprep.subr.mxu0 0.0
    %5435 = vmatpush2.msra.mxu0 0.0
    %5436 = vmatprep.mubr.f32.mxu0 0.0
    %5437 = vmatmul.mubr.f32.gmra.mxu0 %v5367
    %v5438 = vpop.f32.mrf.mxu0
    %v5439 = vadd.f32 0.0, %v5438
    %v5440 = vpop.f32.mrf.mxu0
    %v5441 = vadd.f32 0.0, %v5440
    %5442 = vdwg.mxu0
    %5443 = vmatprep.subr.mxu0 %v847
    %5444 = vmatpush1.msra.mxu0 %v846
    %5445 = vmatprep.subr.mxu0 %v843
    %5446 = vmatpush1.msra.mxu0 %v842
    %5447 = vmatprep.subr.mxu0 %v839
    %5448 = vmatpush1.msra.mxu0 %v838
    %5449 = vmatprep.subr.mxu0 %v835
    %5450 = vmatpush1.msra.mxu0 %v834
    %5451 = vmatprep.subr.mxu0 %v831
    %5452 = vmatpush1.msra.mxu0 %v830
    %5453 = vmatprep.subr.mxu0 %v827
    %5454 = vmatpush1.msra.mxu0 %v826
    %5455 = vmatprep.subr.mxu0 %v823
    %5456 = vmatpush1.msra.mxu0 %v822
    %5457 = vmatprep.subr.mxu0 %v819
    %5458 = vmatpush1.msra.mxu0 %v818
    %5459 = vmatprep.subr.mxu0 %v815
    %5460 = vmatpush1.msra.mxu0 %v814
    %5461 = vmatprep.subr.mxu0 %v811
    %5462 = vmatpush1.msra.mxu0 %v810
    %5463 = vmatprep.subr.mxu0 %v807
    %5464 = vmatpush1.msra.mxu0 %v806
    %5465 = vmatprep.subr.mxu0 %v803
    %5466 = vmatpush1.msra.mxu0 %v802
    %5467 = vmatprep.subr.mxu0 %v799
    %5468 = vmatpush1.msra.mxu0 %v798
    %5469 = vmatprep.subr.mxu0 %v795
    %5470 = vmatpush1.msra.mxu0 %v794
    %5471 = vmatprep.subr.mxu0 %v791
    %5472 = vmatpush1.msra.mxu0 %v790
    %5473 = vmatprep.subr.mxu0 %v787
    %5474 = vmatpush1.msra.mxu0 %v786
    %5475 = vmatprep.subr.mxu0 0.0
    %5476 = vmatpush2.msra.mxu0 0.0
    %5477 = vmatprep.subr.mxu0 0.0
    %5478 = vmatpush2.msra.mxu0 0.0
    %5479 = vmatprep.subr.mxu0 0.0
    %5480 = vmatpush2.msra.mxu0 0.0
    %5481 = vmatprep.subr.mxu0 0.0
    %5482 = vmatpush2.msra.mxu0 0.0
    %5483 = vmatprep.subr.mxu0 0.0
    %5484 = vmatpush2.msra.mxu0 0.0
    %5485 = vmatprep.subr.mxu0 0.0
    %5486 = vmatpush2.msra.mxu0 0.0
    %5487 = vmatprep.subr.mxu0 0.0
    %5488 = vmatpush2.msra.mxu0 0.0
    %5489 = vmatprep.subr.mxu0 0.0
    %5490 = vmatpush2.msra.mxu0 0.0
    %5491 = vmatprep.subr.mxu0 0.0
    %5492 = vmatpush2.msra.mxu0 0.0
    %5493 = vmatprep.subr.mxu0 0.0
    %5494 = vmatpush2.msra.mxu0 0.0
    %5495 = vmatprep.subr.mxu0 0.0
    %5496 = vmatpush2.msra.mxu0 0.0
    %5497 = vmatprep.subr.mxu0 0.0
    %5498 = vmatpush2.msra.mxu0 0.0
    %5499 = vmatprep.subr.mxu0 0.0
    %5500 = vmatpush2.msra.mxu0 0.0
    %5501 = vmatprep.subr.mxu0 0.0
    %5502 = vmatpush2.msra.mxu0 0.0
    %5503 = vmatprep.subr.mxu0 0.0
    %5504 = vmatpush2.msra.mxu0 0.0
    %5505 = vmatprep.subr.mxu0 0.0
    %5506 = vmatpush2.msra.mxu0 0.0
    %5507 = vmatprep.mubr.f32.mxu0 0.0
    %5508 = vmatmul.mubr.f32.gmra.mxu0 %v5367
    %v5509 = vpop.f32.mrf.mxu0
    %v5510 = vadd.f32 0.0, %v5509
    %v5511 = vpop.f32.mrf.mxu0
    %v5512 = vadd.f32 0.0, %v5511
    %5513 = vdwg.mxu0
    %v5514 = vadd.f32 %v5368, %v5439
    %v5515 = vadd.f32 %v5369, %v5441
    %v5516 = vadd.f32 %v5370, %v5510
    %v5517 = vadd.f32 %v5371, %v5512
    %v5518 = vxor.u32 %v5514, 2147483648
    %v5519 = vxor.u32 %v5515, 2147483648
    %v5520 = vxor.u32 %v5516, 2147483648
    %v5521 = vmul.f32 %v5518, 1.442695
    %v5522 = vpow.pop %v5521
    %v5523 = vmul.f32 %v5519, 1.442695
    %v5524 = vpow.pop %v5523
    %v5525 = vmul.f32 %v5520, 1.442695
    %v5526 = vpow.pop %v5525
    %v5527 = vadd.f32 %v5522, 1.0
    %v5528 = vadd.f32 %v5524, 1.0
    %v5529 = vadd.f32 %v5526, 1.0
    %v5530 = vrcp.pop %v5527
    %v5531 = vmul.f32 1.0, %v5530
    %v5532 = vrcp.pop %v5528
    %v5533 = vmul.f32 1.0, %v5532
    %v5534 = vrcp.pop %v5529
    %v5535 = vmul.f32 1.0, %v5534
    %v5536 = vtanh.pop %v5517
    %v5537 = vmul.f32 %v5533, %v5365
    %v5538 = vmul.f32 %v5531, %v5536
    %v5539 = vadd.f32 %v5537, %v5538
    %v5540 = vtanh.pop %v5539
    %v5541 = vmul.f32 %v5535, %v5540
    %v5542 = vld [vmem:[#allocation2 + $0x360] sm:$0xff]
    %v5543 = vld [vmem:[#allocation2 + $0x368] sm:$0xff]
    %v5544 = vld [vmem:[#allocation2 + $0x370] sm:$0xff]
    %v5545 = vld [vmem:[#allocation2 + $0x378] sm:$0xff]
    %5546 = vmatprep.subr.mxu0 %v845
    %5547 = vmatpush1.msra.mxu0 %v844
    %5548 = vmatprep.subr.mxu0 %v841
    %5549 = vmatpush1.msra.mxu0 %v840
    %5550 = vmatprep.subr.mxu0 %v837
    %5551 = vmatpush1.msra.mxu0 %v836
    %5552 = vmatprep.subr.mxu0 %v833
    %5553 = vmatpush1.msra.mxu0 %v832
    %5554 = vmatprep.subr.mxu0 %v829
    %5555 = vmatpush1.msra.mxu0 %v828
    %5556 = vmatprep.subr.mxu0 %v825
    %5557 = vmatpush1.msra.mxu0 %v824
    %5558 = vmatprep.subr.mxu0 %v821
    %5559 = vmatpush1.msra.mxu0 %v820
    %5560 = vmatprep.subr.mxu0 %v817
    %5561 = vmatpush1.msra.mxu0 %v816
    %5562 = vmatprep.subr.mxu0 %v813
    %5563 = vmatpush1.msra.mxu0 %v812
    %5564 = vmatprep.subr.mxu0 %v809
    %5565 = vmatpush1.msra.mxu0 %v808
    %5566 = vmatprep.subr.mxu0 %v805
    %5567 = vmatpush1.msra.mxu0 %v804
    %5568 = vmatprep.subr.mxu0 %v801
    %5569 = vmatpush1.msra.mxu0 %v800
    %5570 = vmatprep.subr.mxu0 %v797
    %5571 = vmatpush1.msra.mxu0 %v796
    %5572 = vmatprep.subr.mxu0 %v793
    %5573 = vmatpush1.msra.mxu0 %v792
    %5574 = vmatprep.subr.mxu0 %v789
    %5575 = vmatpush1.msra.mxu0 %v788
    %5576 = vmatprep.subr.mxu0 %v785
    %5577 = vmatpush1.msra.mxu0 %v784
    %5578 = vmatprep.subr.mxu0 0.0
    %5579 = vmatpush2.msra.mxu0 0.0
    %5580 = vmatprep.subr.mxu0 0.0
    %5581 = vmatpush2.msra.mxu0 0.0
    %5582 = vmatprep.subr.mxu0 0.0
    %5583 = vmatpush2.msra.mxu0 0.0
    %5584 = vmatprep.subr.mxu0 0.0
    %5585 = vmatpush2.msra.mxu0 0.0
    %5586 = vmatprep.subr.mxu0 0.0
    %5587 = vmatpush2.msra.mxu0 0.0
    %5588 = vmatprep.subr.mxu0 0.0
    %5589 = vmatpush2.msra.mxu0 0.0
    %5590 = vmatprep.subr.mxu0 0.0
    %5591 = vmatpush2.msra.mxu0 0.0
    %5592 = vmatprep.subr.mxu0 0.0
    %5593 = vmatpush2.msra.mxu0 0.0
    %5594 = vmatprep.subr.mxu0 0.0
    %5595 = vmatpush2.msra.mxu0 0.0
    %5596 = vmatprep.subr.mxu0 0.0
    %5597 = vmatpush2.msra.mxu0 0.0
    %5598 = vmatprep.subr.mxu0 0.0
    %5599 = vmatpush2.msra.mxu0 0.0
    %5600 = vmatprep.subr.mxu0 0.0
    %5601 = vmatpush2.msra.mxu0 0.0
    %5602 = vmatprep.subr.mxu0 0.0
    %5603 = vmatpush2.msra.mxu0 0.0
    %5604 = vmatprep.subr.mxu0 0.0
    %5605 = vmatpush2.msra.mxu0 0.0
    %5606 = vmatprep.subr.mxu0 0.0
    %5607 = vmatpush2.msra.mxu0 0.0
    %5608 = vmatprep.subr.mxu0 0.0
    %5609 = vmatpush2.msra.mxu0 0.0
    %5610 = vmatprep.mubr.f32.mxu0 0.0
    %5611 = vmatmul.mubr.f32.gmra.mxu0 %v5541
    %v5612 = vpop.f32.mrf.mxu0
    %v5613 = vadd.f32 0.0, %v5612
    %v5614 = vpop.f32.mrf.mxu0
    %v5615 = vadd.f32 0.0, %v5614
    %5616 = vdwg.mxu0
    %5617 = vmatprep.subr.mxu0 %v847
    %5618 = vmatpush1.msra.mxu0 %v846
    %5619 = vmatprep.subr.mxu0 %v843
    %5620 = vmatpush1.msra.mxu0 %v842
    %5621 = vmatprep.subr.mxu0 %v839
    %5622 = vmatpush1.msra.mxu0 %v838
    %5623 = vmatprep.subr.mxu0 %v835
    %5624 = vmatpush1.msra.mxu0 %v834
    %5625 = vmatprep.subr.mxu0 %v831
    %5626 = vmatpush1.msra.mxu0 %v830
    %5627 = vmatprep.subr.mxu0 %v827
    %5628 = vmatpush1.msra.mxu0 %v826
    %5629 = vmatprep.subr.mxu0 %v823
    %5630 = vmatpush1.msra.mxu0 %v822
    %5631 = vmatprep.subr.mxu0 %v819
    %5632 = vmatpush1.msra.mxu0 %v818
    %5633 = vmatprep.subr.mxu0 %v815
    %5634 = vmatpush1.msra.mxu0 %v814
    %5635 = vmatprep.subr.mxu0 %v811
    %5636 = vmatpush1.msra.mxu0 %v810
    %5637 = vmatprep.subr.mxu0 %v807
    %5638 = vmatpush1.msra.mxu0 %v806
    %5639 = vmatprep.subr.mxu0 %v803
    %5640 = vmatpush1.msra.mxu0 %v802
    %5641 = vmatprep.subr.mxu0 %v799
    %5642 = vmatpush1.msra.mxu0 %v798
    %5643 = vmatprep.subr.mxu0 %v795
    %5644 = vmatpush1.msra.mxu0 %v794
    %5645 = vmatprep.subr.mxu0 %v791
    %5646 = vmatpush1.msra.mxu0 %v790
    %5647 = vmatprep.subr.mxu0 %v787
    %5648 = vmatpush1.msra.mxu0 %v786
    %5649 = vmatprep.subr.mxu0 0.0
    %5650 = vmatpush2.msra.mxu0 0.0
    %5651 = vmatprep.subr.mxu0 0.0
    %5652 = vmatpush2.msra.mxu0 0.0
    %5653 = vmatprep.subr.mxu0 0.0
    %5654 = vmatpush2.msra.mxu0 0.0
    %5655 = vmatprep.subr.mxu0 0.0
    %5656 = vmatpush2.msra.mxu0 0.0
    %5657 = vmatprep.subr.mxu0 0.0
    %5658 = vmatpush2.msra.mxu0 0.0
    %5659 = vmatprep.subr.mxu0 0.0
    %5660 = vmatpush2.msra.mxu0 0.0
    %5661 = vmatprep.subr.mxu0 0.0
    %5662 = vmatpush2.msra.mxu0 0.0
    %5663 = vmatprep.subr.mxu0 0.0
    %5664 = vmatpush2.msra.mxu0 0.0
    %5665 = vmatprep.subr.mxu0 0.0
    %5666 = vmatpush2.msra.mxu0 0.0
    %5667 = vmatprep.subr.mxu0 0.0
    %5668 = vmatpush2.msra.mxu0 0.0
    %5669 = vmatprep.subr.mxu0 0.0
    %5670 = vmatpush2.msra.mxu0 0.0
    %5671 = vmatprep.subr.mxu0 0.0
    %5672 = vmatpush2.msra.mxu0 0.0
    %5673 = vmatprep.subr.mxu0 0.0
    %5674 = vmatpush2.msra.mxu0 0.0
    %5675 = vmatprep.subr.mxu0 0.0
    %5676 = vmatpush2.msra.mxu0 0.0
    %5677 = vmatprep.subr.mxu0 0.0
    %5678 = vmatpush2.msra.mxu0 0.0
    %5679 = vmatprep.subr.mxu0 0.0
    %5680 = vmatpush2.msra.mxu0 0.0
    %5681 = vmatprep.mubr.f32.mxu0 0.0
    %5682 = vmatmul.mubr.f32.gmra.mxu0 %v5541
    %v5683 = vpop.f32.mrf.mxu0
    %v5684 = vadd.f32 0.0, %v5683
    %v5685 = vpop.f32.mrf.mxu0
    %v5686 = vadd.f32 0.0, %v5685
    %5687 = vdwg.mxu0
    %v5688 = vadd.f32 %v5542, %v5613
    %v5689 = vadd.f32 %v5543, %v5615
    %v5690 = vadd.f32 %v5544, %v5684
    %v5691 = vadd.f32 %v5545, %v5686
    %v5692 = vxor.u32 %v5688, 2147483648
    %v5693 = vxor.u32 %v5689, 2147483648
    %v5694 = vxor.u32 %v5690, 2147483648
    %v5695 = vmul.f32 %v5692, 1.442695
    %v5696 = vpow.pop %v5695
    %v5697 = vmul.f32 %v5693, 1.442695
    %v5698 = vpow.pop %v5697
    %v5699 = vmul.f32 %v5694, 1.442695
    %v5700 = vpow.pop %v5699
    %v5701 = vadd.f32 %v5696, 1.0
    %v5702 = vadd.f32 %v5698, 1.0
    %v5703 = vadd.f32 %v5700, 1.0
    %v5704 = vrcp.pop %v5701
    %v5705 = vmul.f32 1.0, %v5704
    %v5706 = vrcp.pop %v5702
    %v5707 = vmul.f32 1.0, %v5706
    %v5708 = vrcp.pop %v5703
    %v5709 = vmul.f32 1.0, %v5708
    %v5710 = vtanh.pop %v5691
    %v5711 = vmul.f32 %v5707, %v5539
    %v5712 = vmul.f32 %v5705, %v5710
    %v5713 = vadd.f32 %v5711, %v5712
    %v5714 = vtanh.pop %v5713
    %v5715 = vmul.f32 %v5709, %v5714
    %v5716 = vld [vmem:[%s4] sm:$0xff]
    %v5717 = vld [vmem:[%s4 + $0x8] sm:$0xff]
    %v5718 = vld [vmem:[%s4 + $0x10] sm:$0xff]
    %v5719 = vld [vmem:[%s4 + $0x18] sm:$0xff]
    %v5720 = vld [vmem:[%s4 + $0x20] sm:$0xff]
    %v5721 = vld [vmem:[%s4 + $0x28] sm:$0xff]
    %v5722 = vld [vmem:[%s4 + $0x30] sm:$0xff]
    %v5723 = vld [vmem:[%s4 + $0x38] sm:$0xff]
    %v5724 = vld [vmem:[%s4 + $0x40] sm:$0xff]
    %v5725 = vld [vmem:[%s4 + $0x48] sm:$0xff]
    %v5726 = vld [vmem:[%s4 + $0x50] sm:$0xff]
    %v5727 = vld [vmem:[%s4 + $0x58] sm:$0xff]
    %v5728 = vld [vmem:[%s4 + $0x60] sm:$0xff]
    %v5729 = vld [vmem:[%s4 + $0x68] sm:$0xff]
    %v5730 = vld [vmem:[%s4 + $0x70] sm:$0xff]
    %v5731 = vld [vmem:[%s4 + $0x78] sm:$0xff]
    %v5732 = vld [vmem:[%s5] sm:$0x1]
    %v5734 = vlaneseq
    %v5735 = vshrl.u32 %v5734, 7
    %v5736 = vsub.s32 0, %v5735
    %v5737 = vrot.slane %v5732, %v5736
    %5739 = vmatprep.subr.mxu0 0.0
    %5740 = vmatpush1.msra.mxu0 %v5731
    %5741 = vmatprep.subr.mxu0 0.0
    %5742 = vmatpush1.msra.mxu0 %v5730
    %5743 = vmatprep.subr.mxu0 0.0
    %5744 = vmatpush1.msra.mxu0 %v5729
    %5745 = vmatprep.subr.mxu0 0.0
    %5746 = vmatpush1.msra.mxu0 %v5728
    %5747 = vmatprep.subr.mxu0 0.0
    %5748 = vmatpush1.msra.mxu0 %v5727
    %5749 = vmatprep.subr.mxu0 0.0
    %5750 = vmatpush1.msra.mxu0 %v5726
    %5751 = vmatprep.subr.mxu0 0.0
    %5752 = vmatpush1.msra.mxu0 %v5725
    %5753 = vmatprep.subr.mxu0 0.0
    %5754 = vmatpush1.msra.mxu0 %v5724
    %5755 = vmatprep.subr.mxu0 0.0
    %5756 = vmatpush1.msra.mxu0 %v5723
    %5757 = vmatprep.subr.mxu0 0.0
    %5758 = vmatpush1.msra.mxu0 %v5722
    %5759 = vmatprep.subr.mxu0 0.0
    %5760 = vmatpush1.msra.mxu0 %v5721
    %5761 = vmatprep.subr.mxu0 0.0
    %5762 = vmatpush1.msra.mxu0 %v5720
    %5763 = vmatprep.subr.mxu0 0.0
    %5764 = vmatpush1.msra.mxu0 %v5719
    %5765 = vmatprep.subr.mxu0 0.0
    %5766 = vmatpush1.msra.mxu0 %v5718
    %5767 = vmatprep.subr.mxu0 0.0
    %5768 = vmatpush1.msra.mxu0 %v5717
    %5769 = vmatprep.subr.mxu0 0.0
    %5770 = vmatpush1.msra.mxu0 %v5716
    %5771 = vmatprep.subr.mxu0 0.0
    %5772 = vmatpush2.msra.mxu0 0.0
    %5773 = vmatprep.subr.mxu0 0.0
    %5774 = vmatpush2.msra.mxu0 0.0
    %5775 = vmatprep.subr.mxu0 0.0
    %5776 = vmatpush2.msra.mxu0 0.0
    %5777 = vmatprep.subr.mxu0 0.0
    %5778 = vmatpush2.msra.mxu0 0.0
    %5779 = vmatprep.subr.mxu0 0.0
    %5780 = vmatpush2.msra.mxu0 0.0
    %5781 = vmatprep.subr.mxu0 0.0
    %5782 = vmatpush2.msra.mxu0 0.0
    %5783 = vmatprep.subr.mxu0 0.0
    %5784 = vmatpush2.msra.mxu0 0.0
    %5785 = vmatprep.subr.mxu0 0.0
    %5786 = vmatpush2.msra.mxu0 0.0
    %5787 = vmatprep.subr.mxu0 0.0
    %5788 = vmatpush2.msra.mxu0 0.0
    %5789 = vmatprep.subr.mxu0 0.0
    %5790 = vmatpush2.msra.mxu0 0.0
    %5791 = vmatprep.subr.mxu0 0.0
    %5792 = vmatpush2.msra.mxu0 0.0
    %5793 = vmatprep.subr.mxu0 0.0
    %5794 = vmatpush2.msra.mxu0 0.0
    %5795 = vmatprep.subr.mxu0 0.0
    %5796 = vmatpush2.msra.mxu0 0.0
    %5797 = vmatprep.subr.mxu0 0.0
    %5798 = vmatpush2.msra.mxu0 0.0
    %5799 = vmatprep.subr.mxu0 0.0
    %5800 = vmatpush2.msra.mxu0 0.0
    %5801 = vmatprep.subr.mxu0 0.0
    %5802 = vmatpush2.msra.mxu0 0.0
    %5803 = vmatprep.mubr.f32.mxu0 0.0
    %5804 = vmatmul.mubr.f32.gmra.mxu0 %v5715
    %v5805 = vpop.f32.mrf.mxu0
    %v5806 = vadd.f32 %v5737, %v5805
    %v5807 = vpop.f32.mrf.mxu0
    %5808 = vdwg.mxu0
    %5809 = vst [vmem:[#allocation6] sm:$0xff] %v5806
    // Predicated region
    $region30: #{tpu_custom_call.1} parent=1 // pred_check
      _
    $region31: #{tpu_custom_call.1} parent=1 // pred_check_branch
      %5811 = sbr.rel (0) target = $region33
    $region32: #{tpu_custom_call.1} parent=1 // pred_region
      %s5813 = ssub.s32 128, 128
      %5814 = vsyncadd [#allocation5], %s5813
      %s5816 = sshll.u32 [#allocation6], 4
      %s5817 = int_to_ptr.vmem [resolvable:$true] %s5816
      %5819 = dma.vmem_to_hbm [thread:$0]  %s5817, 128, %s6, [#allocation5]
    $region33: #{tpu_custom_call.1} parent=1 // pred_fallthru
      _
    // Predicated region
    $region34: #{tpu_custom_call.1} parent=1 // pred_check
      _
    $region35: #{tpu_custom_call.1} parent=1 // pred_check_branch
      %5821 = sbr.rel (0) target = $region37
    $region36: #{tpu_custom_call.1} parent=1 // pred_region
      %5822 = dma.done [#allocation5], 128
    $region37: #{tpu_custom_call.1} parent=1 // pred_fallthru
      _
    %5823 = vsyncpa [#allocation4], 1
    %5824 = vsyncpa [#allocation5], 1

</llo_original>
